<compile_context>
chip_gen: v6e
topology: v6e:2x2x1
jax: 0.10.0
libtpu: 0.0.40
codegen_flags: <defaults>
</compile_context>

<pallas_src>
import functools

import jax
import jax.numpy as jnp
from jax.experimental import pallas as pl
from jax.experimental.pallas import tpu as pltpu

F32 = jnp.float32


# ----------------------------------------------------------------------------
# Fused kernel: all transformer layers + mean pooling, grid over batch tiles.
# ----------------------------------------------------------------------------
def _fused_transformer_kernel(x_ref, wqkv_ref, wo_ref, w1_ref, w2_ref,
                              bqkv_ref, b1_ref, bvec_ref, o_ref,
                              *, num_heads, num_layers, eps):
    Bt, S, E = x_ref.shape
    hd = E // num_heads
    scale = 1.0 / float(hd) ** 0.5
    R = Bt * S

    def layernorm(z, g, b):
        mu = jnp.mean(z, axis=-1, keepdims=True)
        zc = z - mu
        var = jnp.mean(zc * zc, axis=-1, keepdims=True)
        return zc * jax.lax.rsqrt(var + eps) * g + b

    x = x_ref[...].astype(F32).reshape(R, E)

    for l in range(num_layers):                      # static unroll, L small
        wqkv = wqkv_ref[l]                           # (E, 3E)
        wo = wo_ref[l]                               # (E, E)
        w1 = w1_ref[l]                               # (E, F)
        w2 = w2_ref[l]                               # (F, E)
        bqkv = bqkv_ref[l]                           # (1, 3E)
        b1 = b1_ref[l]                               # (1, F)
        bvec = bvec_ref[l]                           # (6, E): bo,b2,g1,be1,g2,be2

        # ---- fused QKV projection over all Bt*S rows (single MXU matmul) ----
        qkv = jnp.dot(x, wqkv, preferred_element_type=F32) + bqkv   # (R, 3E)
        q4 = qkv[:, 0 * E:1 * E].reshape(Bt, S, num_heads, hd)
        k4 = qkv[:, 1 * E:2 * E].reshape(Bt, S, num_heads, hd)
        v4 = qkv[:, 2 * E:3 * E].reshape(Bt, S, num_heads, hd)

        # ---- attention: heads batched via einsum, tiny static loop over Bt ----
        parts = []
        for b in range(Bt):
            s_bh = jnp.einsum('shd,thd->hst', q4[b], k4[b],
                              preferred_element_type=F32) * scale   # (H, S, S)
            s_bh = s_bh - jnp.max(s_bh, axis=-1, keepdims=True)
            p = jnp.exp(s_bh)
            denom = jnp.sum(p, axis=-1, keepdims=True)
            p = p * pl.reciprocal(denom, approx=True)               # EUP slot
            o_b = jnp.einsum('hst,thd->shd', p, v4[b],
                             preferred_element_type=F32)            # (S, H, hd)
            parts.append(o_b.reshape(S, E))
        attn = parts[0] if Bt == 1 else jnp.concatenate(parts, axis=0)  # (R, E)

        # ---- output projection + residual + LayerNorm1 ----
        attn = jnp.dot(attn, wo, preferred_element_type=F32) + bvec[0:1]
        x = layernorm(x + attn, bvec[2:3], bvec[3:4])

        # ---- feed-forward + residual + LayerNorm2 ----
        h = jnp.dot(x, w1, preferred_element_type=F32) + b1
        h = jnp.maximum(h, 0.0)
        ff = jnp.dot(h, w2, preferred_element_type=F32) + bvec[1:2]
        x = layernorm(x + ff, bvec[4:5], bvec[5:6])

    # ---- mean over the sequence axis (fused epilogue) ----
    pooled = jnp.mean(x.reshape(Bt, S, E), axis=1)                  # (Bt, E)
    o_ref[...] = pooled.astype(o_ref.dtype)


# ----------------------------------------------------------------------------
# Wrapper.
# ----------------------------------------------------------------------------
def complex_mha_aggregator_forward(x, kernel_params, reg_w=None, reg_b=None, *,
                                   num_heads, batch_tile=None,
                                   vmem_limit_bytes=None):
    B, S, E = x.shape
    Wqkv, Wo, W1, W2, Bqkv, B1, Bvec = kernel_params
    L = Wqkv.shape[0]
    Fd = W1.shape[-1]
    assert E % num_heads == 0

    if batch_tile is None:
        batch_tile = B
    assert B % batch_tile == 0
    assert batch_tile == B or batch_tile % 8 == 0  # output-block sublane rule

    kernel = functools.partial(_fused_transformer_kernel,
                               num_heads=num_heads, num_layers=L, eps=1e-5)

    def whole(shape):
        zeros = (0,) * len(shape)
        return pl.BlockSpec(shape, lambda i: zeros)   # constant block -> DMA'd once

    pooled = pl.pallas_call(
        kernel,
        out_shape=jax.ShapeDtypeStruct((B, E), x.dtype),
        grid=(B // batch_tile,),
        in_specs=[
            pl.BlockSpec((batch_tile, S, E), lambda i: (i, 0, 0)),
            whole((L, E, 3 * E)),
            whole((L, E, E)),
            whole((L, E, Fd)),
            whole((L, Fd, E)),
            whole((L, 1, 3 * E)),
            whole((L, 1, Fd)),
            whole((L, 6, E)),
        ],
        out_specs=pl.BlockSpec((batch_tile, E), lambda i: (i, 0)),
        compiler_params=pltpu.CompilerParams(
            dimension_semantics=("parallel",),
            vmem_limit_bytes=vmem_limit_bytes),
    )(x, Wqkv, Wo, W1, W2, Bqkv, B1, Bvec)

    if reg_w is not None:
        # E -> 1 regressor kept in XLA glue: keeps the Pallas output lane-dense
        # (B, E) instead of a width-1 masked store.
        return pooled @ reg_w.T + reg_b
    return pooled


# ----------------------------------------------------------------------------
# Parameters: generated in PyTorch layout, then packed for the kernel.
# ----------------------------------------------------------------------------
def init_torch_layout_params(key, embed_dim, ff_dim, num_layers):
    layers = []
    for _ in range(num_layers):
        key, *ks = jax.random.split(key, 13)
        s_e = 1.0 / (embed_dim ** 0.5)
        s_f = 1.0 / (ff_dim ** 0.5)
        layers.append(dict(
            in_proj_w=jax.random.normal(ks[0], (3 * embed_dim, embed_dim), F32) * s_e,
            in_proj_b=jax.random.normal(ks[1], (3 * embed_dim,), F32) * 0.02,
            out_proj_w=jax.random.normal(ks[2], (embed_dim, embed_dim), F32) * s_e,
            out_proj_b=jax.random.normal(ks[3], (embed_dim,), F32) * 0.02,
            lin1_w=jax.random.normal(ks[4], (ff_dim, embed_dim), F32) * s_e,
            lin1_b=jax.random.normal(ks[5], (ff_dim,), F32) * 0.02,
            lin2_w=jax.random.normal(ks[6], (embed_dim, ff_dim), F32) * s_f,
            lin2_b=jax.random.normal(ks[7], (embed_dim,), F32) * 0.02,
            ln1_g=1.0 + 0.1 * jax.random.normal(ks[8], (embed_dim,), F32),
            ln1_b=0.02 * jax.random.normal(ks[9], (embed_dim,), F32),
            ln2_g=1.0 + 0.1 * jax.random.normal(ks[10], (embed_dim,), F32),
            ln2_b=0.02 * jax.random.normal(ks[11], (embed_dim,), F32),
        ))
    key, k1, k2 = jax.random.split(key, 3)
    reg_w = jax.random.normal(k1, (1, embed_dim), F32) * 0.1   # torch Linear(E,1)
    reg_b = jax.random.normal(k2, (1,), F32) * 0.1
    return layers, reg_w, reg_b


def pack_kernel_params(layers):
    # torch in_proj_weight is (3E, E) row-chunked [q; k; v]; transpose gives the
    # right-multiply (E, 3E) with q/k/v in column chunks (matching kernel slices).
    Wqkv = jnp.stack([p['in_proj_w'].T for p in layers])            # (L, E, 3E)
    Bqkv = jnp.stack([p['in_proj_b'][None, :] for p in layers])     # (L, 1, 3E)
    Wo = jnp.stack([p['out_proj_w'].T for p in layers])             # (L, E, E)
    W1 = jnp.stack([p['lin1_w'].T for p in layers])                 # (L, E, F)
    B1 = jnp.stack([p['lin1_b'][None, :] for p in layers])          # (L, 1, F)
    W2 = jnp.stack([p['lin2_w'].T for p in layers])                 # (L, F, E)
    Bvec = jnp.stack([jnp.stack([p['out_proj_b'], p['lin2_b'],
                                 p['ln1_g'], p['ln1_b'],
                                 p['ln2_g'], p['ln2_b']]) for p in layers])  # (L,6,E)
    return Wqkv, Wo, W1, W2, Bqkv, B1, Bvec


# ----------------------------------------------------------------------------
# Pure-JAX reference (mirrors the PyTorch module exactly).
# ----------------------------------------------------------------------------
def _ref_forward(x, layers, reg_w, reg_b, num_heads, eps=1e-5):
    B, S, E = x.shape
    hd = E // num_heads

    def ln(z, g, b):
        mu = z.mean(-1, keepdims=True)
        var = ((z - mu) ** 2).mean(-1, keepdims=True)
        return (z - mu) / jnp.sqrt(var + eps) * g + b

    for p in layers:
        qkv = x @ p['in_proj_w'].T + p['in_proj_b']
        q, k, v = jnp.split(qkv, 3, axis=-1)
        q = q.reshape(B, S, num_heads, hd)
        k = k.reshape(B, S, num_heads, hd)
        v = v.reshape(B, S, num_heads, hd)
        s = jnp.einsum('bqhd,bkhd->bhqk', q, k) / jnp.sqrt(hd)
        a = jax.nn.softmax(s, axis=-1)
        o = jnp.einsum('bhqk,bkhd->bqhd', a, v).reshape(B, S, E)
        attn = o @ p['out_proj_w'].T + p['out_proj_b']
        x = ln(x + attn, p['ln1_g'], p['ln1_b'])
        h = jax.nn.relu(x @ p['lin1_w'].T + p['lin1_b'])
        ff = h @ p['lin2_w'].T + p['lin2_b']
        x = ln(x + ff, p['ln2_g'], p['ln2_b'])
    m = x.mean(axis=1)
    if reg_w is not None:
        return m @ reg_w.T + reg_b
    return m


if __name__ == "__main__":
    B, S, E, H = 2, 8, 32, 4       # batch, seq, embed_dim, num_heads
    FF = 64                        # module default ff_dim=2048; small for demo
    L = 2                          # num_layers

    key = jax.random.PRNGKey(0)
    key, xk = jax.random.split(key)
    x = jax.random.normal(xk, (B, S, E), F32)

    layers, reg_w, reg_b = init_torch_layout_params(key, E, FF, L)
    kparams = pack_kernel_params(layers)

    out = complex_mha_aggregator_forward(x, kparams, reg_w, reg_b, num_heads=H)
    out = jax.block_until_ready(out)

    ref = _ref_forward(x, layers, reg_w, reg_b, H)
    assert out.shape == (B, 1), out.shape
    # approx reciprocal in the softmax -> slightly relaxed tolerance vs f32 ref
    assert jnp.allclose(out, ref, rtol=2e-3, atol=2e-3), (out, ref)

    print("KERNEL_OK")
</pallas_src>

<mosaic_0001>
module attributes {stable_mosaic.version = 11 : i64} {
  func.func @_fused_transformer_kernel(%arg0: i32, %arg1: memref<2x8x32xf32, #tpu.memory_space<vmem>>, %arg2: memref<2x32x96xf32, #tpu.memory_space<vmem>>, %arg3: memref<2x32x32xf32, #tpu.memory_space<vmem>>, %arg4: memref<2x32x64xf32, #tpu.memory_space<vmem>>, %arg5: memref<2x64x32xf32, #tpu.memory_space<vmem>>, %arg6: memref<2x1x96xf32, #tpu.memory_space<vmem>>, %arg7: memref<2x1x64xf32, #tpu.memory_space<vmem>>, %arg8: memref<2x6x32xf32, #tpu.memory_space<vmem>>, %arg9: memref<2x32xf32, #tpu.memory_space<vmem>>) attributes {dimension_semantics = [#tpu.dimension_semantics<parallel>], iteration_bounds = array<i64: 1>, scalar_prefetch = 0 : i64, scratch_operands = 0 : i64, tpu.core_type = #tpu.core_type<tc>, window_params = [{transform_indices = @transform_0, window_bounds = array<i64: 2, 8, 32>}, {pipeline_mode = #tpu.pipeline_mode<synchronous>, transform_indices = @transform_1, window_bounds = array<i64: 2, 32, 96>}, {pipeline_mode = #tpu.pipeline_mode<synchronous>, transform_indices = @transform_2, window_bounds = array<i64: 2, 32, 32>}, {pipeline_mode = #tpu.pipeline_mode<synchronous>, transform_indices = @transform_3, window_bounds = array<i64: 2, 32, 64>}, {pipeline_mode = #tpu.pipeline_mode<synchronous>, transform_indices = @transform_4, window_bounds = array<i64: 2, 64, 32>}, {pipeline_mode = #tpu.pipeline_mode<synchronous>, transform_indices = @transform_5, window_bounds = array<i64: 2, 1, 96>}, {pipeline_mode = #tpu.pipeline_mode<synchronous>, transform_indices = @transform_6, window_bounds = array<i64: 2, 1, 64>}, {pipeline_mode = #tpu.pipeline_mode<synchronous>, transform_indices = @transform_7, window_bounds = array<i64: 2, 6, 32>}, {transform_indices = @transform_8, window_bounds = array<i64: 2, 32>}]} {
    %c0 = arith.constant 0 : index
    %c0_0 = arith.constant 0 : index
    %c0_1 = arith.constant 0 : index
    %0 = vector.load %arg1[%c0, %c0_0, %c0_1] : memref<2x8x32xf32, #tpu.memory_space<vmem>>, vector<2x8x32xf32>
    %1 = vector.shape_cast %0 : vector<2x8x32xf32> to vector<16x32xf32>
    %c0_2 = arith.constant 0 : index
    %c0_3 = arith.constant 0 : index
    %c0_4 = arith.constant 0 : index
    %2 = vector.load %arg2[%c0_2, %c0_3, %c0_4] : memref<2x32x96xf32, #tpu.memory_space<vmem>>, vector<1x32x96xf32>
    %3 = vector.shape_cast %2 : vector<1x32x96xf32> to vector<32x96xf32>
    %c0_5 = arith.constant 0 : index
    %c0_6 = arith.constant 0 : index
    %c0_7 = arith.constant 0 : index
    %4 = vector.load %arg3[%c0_5, %c0_6, %c0_7] : memref<2x32x32xf32, #tpu.memory_space<vmem>>, vector<1x32x32xf32>
    %5 = vector.shape_cast %4 : vector<1x32x32xf32> to vector<32x32xf32>
    %c0_8 = arith.constant 0 : index
    %c0_9 = arith.constant 0 : index
    %c0_10 = arith.constant 0 : index
    %6 = vector.load %arg4[%c0_8, %c0_9, %c0_10] : memref<2x32x64xf32, #tpu.memory_space<vmem>>, vector<1x32x64xf32>
    %7 = vector.shape_cast %6 : vector<1x32x64xf32> to vector<32x64xf32>
    %c0_11 = arith.constant 0 : index
    %c0_12 = arith.constant 0 : index
    %c0_13 = arith.constant 0 : index
    %8 = vector.load %arg5[%c0_11, %c0_12, %c0_13] : memref<2x64x32xf32, #tpu.memory_space<vmem>>, vector<1x64x32xf32>
    %9 = vector.shape_cast %8 : vector<1x64x32xf32> to vector<64x32xf32>
    %c0_14 = arith.constant 0 : index
    %c0_15 = arith.constant 0 : index
    %c0_16 = arith.constant 0 : index
    %10 = vector.load %arg6[%c0_14, %c0_15, %c0_16] : memref<2x1x96xf32, #tpu.memory_space<vmem>>, vector<1x1x96xf32>
    %11 = vector.shape_cast %10 : vector<1x1x96xf32> to vector<1x96xf32>
    %c0_17 = arith.constant 0 : index
    %c0_18 = arith.constant 0 : index
    %c0_19 = arith.constant 0 : index
    %12 = vector.load %arg7[%c0_17, %c0_18, %c0_19] : memref<2x1x64xf32, #tpu.memory_space<vmem>>, vector<1x1x64xf32>
    %13 = vector.shape_cast %12 : vector<1x1x64xf32> to vector<1x64xf32>
    %c0_20 = arith.constant 0 : index
    %c0_21 = arith.constant 0 : index
    %c0_22 = arith.constant 0 : index
    %14 = vector.load %arg8[%c0_20, %c0_21, %c0_22] : memref<2x6x32xf32, #tpu.memory_space<vmem>>, vector<1x6x32xf32>
    %15 = vector.shape_cast %14 : vector<1x6x32xf32> to vector<6x32xf32>
    %cst = arith.constant dense<0.000000e+00> : vector<16x96xf32>
    %16 = tpu.matmul %1, %3, %cst {dimension_numbers = #tpu.dot_dimension_numbers<[1], [0], [0], [1], [0, 0, 1, 1], [], []>} : vector<16x32xf32>, vector<32x96xf32>, vector<16x96xf32> -> vector<16x96xf32>
    %17 = vector.broadcast %11 : vector<1x96xf32> to vector<16x96xf32>
    %18 = arith.addf %16, %17 : vector<16x96xf32>
    %19 = vector.extract_strided_slice %18 {offsets = [0, 0], sizes = [16, 32], strides = [1, 1]} : vector<16x96xf32> to vector<16x32xf32>
    %20 = vector.shape_cast %19 : vector<16x32xf32> to vector<2x8x4x8xf32>
    %21 = vector.extract_strided_slice %18 {offsets = [0, 32], sizes = [16, 32], strides = [1, 1]} : vector<16x96xf32> to vector<16x32xf32>
    %22 = vector.shape_cast %21 : vector<16x32xf32> to vector<2x8x4x8xf32>
    %23 = vector.extract_strided_slice %18 {offsets = [0, 64], sizes = [16, 32], strides = [1, 1]} : vector<16x96xf32> to vector<16x32xf32>
    %24 = vector.shape_cast %23 : vector<16x32xf32> to vector<2x8x4x8xf32>
    %25 = vector.extract_strided_slice %20 {offsets = [0, 0, 0, 0], sizes = [1, 8, 4, 8], strides = [1, 1, 1, 1]} : vector<2x8x4x8xf32> to vector<1x8x4x8xf32>
    %26 = vector.shape_cast %25 : vector<1x8x4x8xf32> to vector<8x4x8xf32>
    %27 = vector.extract_strided_slice %22 {offsets = [0, 0, 0, 0], sizes = [1, 8, 4, 8], strides = [1, 1, 1, 1]} : vector<2x8x4x8xf32> to vector<1x8x4x8xf32>
    %28 = vector.shape_cast %27 : vector<1x8x4x8xf32> to vector<8x4x8xf32>
    "tpu.trace_start"() <{level = 10 : i32, message = "shd,thd->hst"}> : () -> ()
    %cst_23 = arith.constant dense<0.000000e+00> : vector<4x8x8xf32>
    %29 = tpu.matmul %26, %28, %cst_23 {dimension_numbers = #tpu.dot_dimension_numbers<[2], [2], [0], [0], [0, 1, 0, 0, 1, 0], [1], [1]>} : vector<8x4x8xf32>, vector<8x4x8xf32>, vector<4x8x8xf32> -> vector<4x8x8xf32>
    "tpu.trace_stop"() : () -> ()
    %cst_24 = arith.constant 0.353553385 : f32
    %30 = vector.broadcast %cst_24 : f32 to vector<4x8x8xf32>
    %31 = arith.mulf %29, %30 : vector<4x8x8xf32>
    %cst_25 = arith.constant dense<0xFF800000> : vector<4x8xf32>
    %32 = vector.multi_reduction <maximumf>, %31, %cst_25 [2] : vector<4x8x8xf32> to vector<4x8xf32>
    %33 = vector.shape_cast %32 : vector<4x8xf32> to vector<4x8x1xf32>
    %34 = vector.broadcast %33 : vector<4x8x1xf32> to vector<4x8x8xf32>
    %35 = arith.subf %31, %34 : vector<4x8x8xf32>
    %36 = math.exp %35 : vector<4x8x8xf32>
    %cst_26 = arith.constant dense<0.000000e+00> : vector<4x8xf32>
    %37 = vector.multi_reduction <add>, %36, %cst_26 [2] : vector<4x8x8xf32> to vector<4x8xf32>
    %38 = vector.shape_cast %37 : vector<4x8xf32> to vector<4x8x1xf32>
    %39 = tpu.reciprocal %38 {approx = true} : vector<4x8x1xf32> -> vector<4x8x1xf32>
    %40 = vector.broadcast %39 : vector<4x8x1xf32> to vector<4x8x8xf32>
    %41 = arith.mulf %36, %40 : vector<4x8x8xf32>
    %42 = vector.extract_strided_slice %24 {offsets = [0, 0, 0, 0], sizes = [1, 8, 4, 8], strides = [1, 1, 1, 1]} : vector<2x8x4x8xf32> to vector<1x8x4x8xf32>
    %43 = vector.shape_cast %42 : vector<1x8x4x8xf32> to vector<8x4x8xf32>
    "tpu.trace_start"() <{level = 10 : i32, message = "hst,thd->shd"}> : () -> ()
    %cst_27 = arith.constant dense<0.000000e+00> : vector<4x8x8xf32>
    %44 = tpu.matmul %43, %41, %cst_27 {dimension_numbers = #tpu.dot_dimension_numbers<[0], [2], [2], [1], [0, 1, 0, 2, 1, 1], [1], [0]>} : vector<8x4x8xf32>, vector<4x8x8xf32>, vector<4x8x8xf32> -> vector<4x8x8xf32>
    %45 = tpu.transpose %44, [2, 0, 1] : vector<4x8x8xf32> -> vector<8x4x8xf32>
    "tpu.trace_stop"() : () -> ()
    %46 = vector.shape_cast %45 : vector<8x4x8xf32> to vector<8x32xf32>
    %47 = vector.extract_strided_slice %20 {offsets = [1, 0, 0, 0], sizes = [1, 8, 4, 8], strides = [1, 1, 1, 1]} : vector<2x8x4x8xf32> to vector<1x8x4x8xf32>
    %48 = vector.shape_cast %47 : vector<1x8x4x8xf32> to vector<8x4x8xf32>
    %49 = vector.extract_strided_slice %22 {offsets = [1, 0, 0, 0], sizes = [1, 8, 4, 8], strides = [1, 1, 1, 1]} : vector<2x8x4x8xf32> to vector<1x8x4x8xf32>
    %50 = vector.shape_cast %49 : vector<1x8x4x8xf32> to vector<8x4x8xf32>
    "tpu.trace_start"() <{level = 10 : i32, message = "shd,thd->hst"}> : () -> ()
    %cst_28 = arith.constant dense<0.000000e+00> : vector<4x8x8xf32>
    %51 = tpu.matmul %48, %50, %cst_28 {dimension_numbers = #tpu.dot_dimension_numbers<[2], [2], [0], [0], [0, 1, 0, 0, 1, 0], [1], [1]>} : vector<8x4x8xf32>, vector<8x4x8xf32>, vector<4x8x8xf32> -> vector<4x8x8xf32>
    "tpu.trace_stop"() : () -> ()
    %cst_29 = arith.constant 0.353553385 : f32
    %52 = vector.broadcast %cst_29 : f32 to vector<4x8x8xf32>
    %53 = arith.mulf %51, %52 : vector<4x8x8xf32>
    %cst_30 = arith.constant dense<0xFF800000> : vector<4x8xf32>
    %54 = vector.multi_reduction <maximumf>, %53, %cst_30 [2] : vector<4x8x8xf32> to vector<4x8xf32>
    %55 = vector.shape_cast %54 : vector<4x8xf32> to vector<4x8x1xf32>
    %56 = vector.broadcast %55 : vector<4x8x1xf32> to vector<4x8x8xf32>
    %57 = arith.subf %53, %56 : vector<4x8x8xf32>
    %58 = math.exp %57 : vector<4x8x8xf32>
    %cst_31 = arith.constant dense<0.000000e+00> : vector<4x8xf32>
    %59 = vector.multi_reduction <add>, %58, %cst_31 [2] : vector<4x8x8xf32> to vector<4x8xf32>
    %60 = vector.shape_cast %59 : vector<4x8xf32> to vector<4x8x1xf32>
    %61 = tpu.reciprocal %60 {approx = true} : vector<4x8x1xf32> -> vector<4x8x1xf32>
    %62 = vector.broadcast %61 : vector<4x8x1xf32> to vector<4x8x8xf32>
    %63 = arith.mulf %58, %62 : vector<4x8x8xf32>
    %64 = vector.extract_strided_slice %24 {offsets = [1, 0, 0, 0], sizes = [1, 8, 4, 8], strides = [1, 1, 1, 1]} : vector<2x8x4x8xf32> to vector<1x8x4x8xf32>
    %65 = vector.shape_cast %64 : vector<1x8x4x8xf32> to vector<8x4x8xf32>
    "tpu.trace_start"() <{level = 10 : i32, message = "hst,thd->shd"}> : () -> ()
    %cst_32 = arith.constant dense<0.000000e+00> : vector<4x8x8xf32>
    %66 = tpu.matmul %65, %63, %cst_32 {dimension_numbers = #tpu.dot_dimension_numbers<[0], [2], [2], [1], [0, 1, 0, 2, 1, 1], [1], [0]>} : vector<8x4x8xf32>, vector<4x8x8xf32>, vector<4x8x8xf32> -> vector<4x8x8xf32>
    %67 = tpu.transpose %66, [2, 0, 1] : vector<4x8x8xf32> -> vector<8x4x8xf32>
    "tpu.trace_stop"() : () -> ()
    %68 = vector.shape_cast %67 : vector<8x4x8xf32> to vector<8x32xf32>
    %69 = tpu.concatenate %46, %68 in 0 : vector<8x32xf32>, vector<8x32xf32> -> vector<16x32xf32>
    %cst_33 = arith.constant dense<0.000000e+00> : vector<16x32xf32>
    %70 = tpu.matmul %69, %5, %cst_33 {dimension_numbers = #tpu.dot_dimension_numbers<[1], [0], [0], [1], [0, 0, 1, 1], [], []>} : vector<16x32xf32>, vector<32x32xf32>, vector<16x32xf32> -> vector<16x32xf32>
    %71 = vector.extract_strided_slice %15 {offsets = [0, 0], sizes = [1, 32], strides = [1, 1]} : vector<6x32xf32> to vector<1x32xf32>
    %72 = vector.broadcast %71 : vector<1x32xf32> to vector<16x32xf32>
    %73 = arith.addf %70, %72 : vector<16x32xf32>
    %74 = arith.addf %1, %73 : vector<16x32xf32>
    %75 = vector.extract_strided_slice %15 {offsets = [2, 0], sizes = [1, 32], strides = [1, 1]} : vector<6x32xf32> to vector<1x32xf32>
    %76 = vector.extract_strided_slice %15 {offsets = [3, 0], sizes = [1, 32], strides = [1, 1]} : vector<6x32xf32> to vector<1x32xf32>
    %cst_34 = arith.constant dense<0.000000e+00> : vector<16xf32>
    %77 = vector.multi_reduction <add>, %74, %cst_34 [1] : vector<16x32xf32> to vector<16xf32>
    %78 = vector.shape_cast %77 : vector<16xf32> to vector<16x1xf32>
    %cst_35 = arith.constant 3.200000e+01 : f32
    %79 = vector.broadcast %cst_35 : f32 to vector<16x1xf32>
    %80 = arith.divf %78, %79 : vector<16x1xf32>
    %81 = vector.broadcast %80 : vector<16x1xf32> to vector<16x32xf32>
    %82 = arith.subf %74, %81 : vector<16x32xf32>
    %83 = arith.mulf %82, %82 : vector<16x32xf32>
    %cst_36 = arith.constant dense<0.000000e+00> : vector<16xf32>
    %84 = vector.multi_reduction <add>, %83, %cst_36 [1] : vector<16x32xf32> to vector<16xf32>
    %85 = vector.shape_cast %84 : vector<16xf32> to vector<16x1xf32>
    %cst_37 = arith.constant 3.200000e+01 : f32
    %86 = vector.broadcast %cst_37 : f32 to vector<16x1xf32>
    %87 = arith.divf %85, %86 : vector<16x1xf32>
    %cst_38 = arith.constant 9.99999974E-6 : f32
    %88 = vector.broadcast %cst_38 : f32 to vector<16x1xf32>
    %89 = arith.addf %87, %88 : vector<16x1xf32>
    %90 = math.rsqrt %89 : vector<16x1xf32>
    %91 = vector.broadcast %90 : vector<16x1xf32> to vector<16x32xf32>
    %92 = arith.mulf %82, %91 : vector<16x32xf32>
    %93 = vector.broadcast %75 : vector<1x32xf32> to vector<16x32xf32>
    %94 = arith.mulf %92, %93 : vector<16x32xf32>
    %95 = vector.broadcast %76 : vector<1x32xf32> to vector<16x32xf32>
    %96 = arith.addf %94, %95 : vector<16x32xf32>
    %cst_39 = arith.constant dense<0.000000e+00> : vector<16x64xf32>
    %97 = tpu.matmul %96, %7, %cst_39 {dimension_numbers = #tpu.dot_dimension_numbers<[1], [0], [0], [1], [0, 0, 1, 1], [], []>} : vector<16x32xf32>, vector<32x64xf32>, vector<16x64xf32> -> vector<16x64xf32>
    %98 = vector.broadcast %13 : vector<1x64xf32> to vector<16x64xf32>
    %99 = arith.addf %97, %98 : vector<16x64xf32>
    %cst_40 = arith.constant 0.000000e+00 : f32
    %100 = vector.broadcast %cst_40 : f32 to vector<16x64xf32>
    %101 = arith.maximumf %99, %100 : vector<16x64xf32>
    %cst_41 = arith.constant dense<0.000000e+00> : vector<16x32xf32>
    %102 = tpu.matmul %101, %9, %cst_41 {dimension_numbers = #tpu.dot_dimension_numbers<[1], [0], [0], [1], [0, 0, 1, 1], [], []>} : vector<16x64xf32>, vector<64x32xf32>, vector<16x32xf32> -> vector<16x32xf32>
    %103 = vector.extract_strided_slice %15 {offsets = [1, 0], sizes = [1, 32], strides = [1, 1]} : vector<6x32xf32> to vector<1x32xf32>
    %104 = vector.broadcast %103 : vector<1x32xf32> to vector<16x32xf32>
    %105 = arith.addf %102, %104 : vector<16x32xf32>
    %106 = arith.addf %96, %105 : vector<16x32xf32>
    %107 = vector.extract_strided_slice %15 {offsets = [4, 0], sizes = [1, 32], strides = [1, 1]} : vector<6x32xf32> to vector<1x32xf32>
    %108 = vector.extract_strided_slice %15 {offsets = [5, 0], sizes = [1, 32], strides = [1, 1]} : vector<6x32xf32> to vector<1x32xf32>
    %cst_42 = arith.constant dense<0.000000e+00> : vector<16xf32>
    %109 = vector.multi_reduction <add>, %106, %cst_42 [1] : vector<16x32xf32> to vector<16xf32>
    %110 = vector.shape_cast %109 : vector<16xf32> to vector<16x1xf32>
    %cst_43 = arith.constant 3.200000e+01 : f32
    %111 = vector.broadcast %cst_43 : f32 to vector<16x1xf32>
    %112 = arith.divf %110, %111 : vector<16x1xf32>
    %113 = vector.broadcast %112 : vector<16x1xf32> to vector<16x32xf32>
    %114 = arith.subf %106, %113 : vector<16x32xf32>
    %115 = arith.mulf %114, %114 : vector<16x32xf32>
    %cst_44 = arith.constant dense<0.000000e+00> : vector<16xf32>
    %116 = vector.multi_reduction <add>, %115, %cst_44 [1] : vector<16x32xf32> to vector<16xf32>
    %117 = vector.shape_cast %116 : vector<16xf32> to vector<16x1xf32>
    %cst_45 = arith.constant 3.200000e+01 : f32
    %118 = vector.broadcast %cst_45 : f32 to vector<16x1xf32>
    %119 = arith.divf %117, %118 : vector<16x1xf32>
    %cst_46 = arith.constant 9.99999974E-6 : f32
    %120 = vector.broadcast %cst_46 : f32 to vector<16x1xf32>
    %121 = arith.addf %119, %120 : vector<16x1xf32>
    %122 = math.rsqrt %121 : vector<16x1xf32>
    %123 = vector.broadcast %122 : vector<16x1xf32> to vector<16x32xf32>
    %124 = arith.mulf %114, %123 : vector<16x32xf32>
    %125 = vector.broadcast %107 : vector<1x32xf32> to vector<16x32xf32>
    %126 = arith.mulf %124, %125 : vector<16x32xf32>
    %127 = vector.broadcast %108 : vector<1x32xf32> to vector<16x32xf32>
    %128 = arith.addf %126, %127 : vector<16x32xf32>
    %c1 = arith.constant 1 : index
    %c0_47 = arith.constant 0 : index
    %c0_48 = arith.constant 0 : index
    %129 = vector.load %arg2[%c1, %c0_47, %c0_48] : memref<2x32x96xf32, #tpu.memory_space<vmem>>, vector<1x32x96xf32>
    %130 = vector.shape_cast %129 : vector<1x32x96xf32> to vector<32x96xf32>
    %c1_49 = arith.constant 1 : index
    %c0_50 = arith.constant 0 : index
    %c0_51 = arith.constant 0 : index
    %131 = vector.load %arg3[%c1_49, %c0_50, %c0_51] : memref<2x32x32xf32, #tpu.memory_space<vmem>>, vector<1x32x32xf32>
    %132 = vector.shape_cast %131 : vector<1x32x32xf32> to vector<32x32xf32>
    %c1_52 = arith.constant 1 : index
    %c0_53 = arith.constant 0 : index
    %c0_54 = arith.constant 0 : index
    %133 = vector.load %arg4[%c1_52, %c0_53, %c0_54] : memref<2x32x64xf32, #tpu.memory_space<vmem>>, vector<1x32x64xf32>
    %134 = vector.shape_cast %133 : vector<1x32x64xf32> to vector<32x64xf32>
    %c1_55 = arith.constant 1 : index
    %c0_56 = arith.constant 0 : index
    %c0_57 = arith.constant 0 : index
    %135 = vector.load %arg5[%c1_55, %c0_56, %c0_57] : memref<2x64x32xf32, #tpu.memory_space<vmem>>, vector<1x64x32xf32>
    %136 = vector.shape_cast %135 : vector<1x64x32xf32> to vector<64x32xf32>
    %c1_58 = arith.constant 1 : index
    %c0_59 = arith.constant 0 : index
    %c0_60 = arith.constant 0 : index
    %137 = vector.load %arg6[%c1_58, %c0_59, %c0_60] : memref<2x1x96xf32, #tpu.memory_space<vmem>>, vector<1x1x96xf32>
    %138 = vector.shape_cast %137 : vector<1x1x96xf32> to vector<1x96xf32>
    %c1_61 = arith.constant 1 : index
    %c0_62 = arith.constant 0 : index
    %c0_63 = arith.constant 0 : index
    %139 = vector.load %arg7[%c1_61, %c0_62, %c0_63] : memref<2x1x64xf32, #tpu.memory_space<vmem>>, vector<1x1x64xf32>
    %140 = vector.shape_cast %139 : vector<1x1x64xf32> to vector<1x64xf32>
    %c1_64 = arith.constant 1 : index
    %c0_65 = arith.constant 0 : index
    %c0_66 = arith.constant 0 : index
    %141 = vector.load %arg8[%c1_64, %c0_65, %c0_66] : memref<2x6x32xf32, #tpu.memory_space<vmem>>, vector<1x6x32xf32>
    %142 = vector.shape_cast %141 : vector<1x6x32xf32> to vector<6x32xf32>
    %cst_67 = arith.constant dense<0.000000e+00> : vector<16x96xf32>
    %143 = tpu.matmul %128, %130, %cst_67 {dimension_numbers = #tpu.dot_dimension_numbers<[1], [0], [0], [1], [0, 0, 1, 1], [], []>} : vector<16x32xf32>, vector<32x96xf32>, vector<16x96xf32> -> vector<16x96xf32>
    %144 = vector.broadcast %138 : vector<1x96xf32> to vector<16x96xf32>
    %145 = arith.addf %143, %144 : vector<16x96xf32>
    %146 = vector.extract_strided_slice %145 {offsets = [0, 0], sizes = [16, 32], strides = [1, 1]} : vector<16x96xf32> to vector<16x32xf32>
    %147 = vector.shape_cast %146 : vector<16x32xf32> to vector<2x8x4x8xf32>
    %148 = vector.extract_strided_slice %145 {offsets = [0, 32], sizes = [16, 32], strides = [1, 1]} : vector<16x96xf32> to vector<16x32xf32>
    %149 = vector.shape_cast %148 : vector<16x32xf32> to vector<2x8x4x8xf32>
    %150 = vector.extract_strided_slice %145 {offsets = [0, 64], sizes = [16, 32], strides = [1, 1]} : vector<16x96xf32> to vector<16x32xf32>
    %151 = vector.shape_cast %150 : vector<16x32xf32> to vector<2x8x4x8xf32>
    %152 = vector.extract_strided_slice %147 {offsets = [0, 0, 0, 0], sizes = [1, 8, 4, 8], strides = [1, 1, 1, 1]} : vector<2x8x4x8xf32> to vector<1x8x4x8xf32>
    %153 = vector.shape_cast %152 : vector<1x8x4x8xf32> to vector<8x4x8xf32>
    %154 = vector.extract_strided_slice %149 {offsets = [0, 0, 0, 0], sizes = [1, 8, 4, 8], strides = [1, 1, 1, 1]} : vector<2x8x4x8xf32> to vector<1x8x4x8xf32>
    %155 = vector.shape_cast %154 : vector<1x8x4x8xf32> to vector<8x4x8xf32>
    "tpu.trace_start"() <{level = 10 : i32, message = "shd,thd->hst"}> : () -> ()
    %cst_68 = arith.constant dense<0.000000e+00> : vector<4x8x8xf32>
    %156 = tpu.matmul %153, %155, %cst_68 {dimension_numbers = #tpu.dot_dimension_numbers<[2], [2], [0], [0], [0, 1, 0, 0, 1, 0], [1], [1]>} : vector<8x4x8xf32>, vector<8x4x8xf32>, vector<4x8x8xf32> -> vector<4x8x8xf32>
    "tpu.trace_stop"() : () -> ()
    %cst_69 = arith.constant 0.353553385 : f32
    %157 = vector.broadcast %cst_69 : f32 to vector<4x8x8xf32>
    %158 = arith.mulf %156, %157 : vector<4x8x8xf32>
    %cst_70 = arith.constant dense<0xFF800000> : vector<4x8xf32>
    %159 = vector.multi_reduction <maximumf>, %158, %cst_70 [2] : vector<4x8x8xf32> to vector<4x8xf32>
    %160 = vector.shape_cast %159 : vector<4x8xf32> to vector<4x8x1xf32>
    %161 = vector.broadcast %160 : vector<4x8x1xf32> to vector<4x8x8xf32>
    %162 = arith.subf %158, %161 : vector<4x8x8xf32>
    %163 = math.exp %162 : vector<4x8x8xf32>
    %cst_71 = arith.constant dense<0.000000e+00> : vector<4x8xf32>
    %164 = vector.multi_reduction <add>, %163, %cst_71 [2] : vector<4x8x8xf32> to vector<4x8xf32>
    %165 = vector.shape_cast %164 : vector<4x8xf32> to vector<4x8x1xf32>
    %166 = tpu.reciprocal %165 {approx = true} : vector<4x8x1xf32> -> vector<4x8x1xf32>
    %167 = vector.broadcast %166 : vector<4x8x1xf32> to vector<4x8x8xf32>
    %168 = arith.mulf %163, %167 : vector<4x8x8xf32>
    %169 = vector.extract_strided_slice %151 {offsets = [0, 0, 0, 0], sizes = [1, 8, 4, 8], strides = [1, 1, 1, 1]} : vector<2x8x4x8xf32> to vector<1x8x4x8xf32>
    %170 = vector.shape_cast %169 : vector<1x8x4x8xf32> to vector<8x4x8xf32>
    "tpu.trace_start"() <{level = 10 : i32, message = "hst,thd->shd"}> : () -> ()
    %cst_72 = arith.constant dense<0.000000e+00> : vector<4x8x8xf32>
    %171 = tpu.matmul %170, %168, %cst_72 {dimension_numbers = #tpu.dot_dimension_numbers<[0], [2], [2], [1], [0, 1, 0, 2, 1, 1], [1], [0]>} : vector<8x4x8xf32>, vector<4x8x8xf32>, vector<4x8x8xf32> -> vector<4x8x8xf32>
    %172 = tpu.transpose %171, [2, 0, 1] : vector<4x8x8xf32> -> vector<8x4x8xf32>
    "tpu.trace_stop"() : () -> ()
    %173 = vector.shape_cast %172 : vector<8x4x8xf32> to vector<8x32xf32>
    %174 = vector.extract_strided_slice %147 {offsets = [1, 0, 0, 0], sizes = [1, 8, 4, 8], strides = [1, 1, 1, 1]} : vector<2x8x4x8xf32> to vector<1x8x4x8xf32>
    %175 = vector.shape_cast %174 : vector<1x8x4x8xf32> to vector<8x4x8xf32>
    %176 = vector.extract_strided_slice %149 {offsets = [1, 0, 0, 0], sizes = [1, 8, 4, 8], strides = [1, 1, 1, 1]} : vector<2x8x4x8xf32> to vector<1x8x4x8xf32>
    %177 = vector.shape_cast %176 : vector<1x8x4x8xf32> to vector<8x4x8xf32>
    "tpu.trace_start"() <{level = 10 : i32, message = "shd,thd->hst"}> : () -> ()
    %cst_73 = arith.constant dense<0.000000e+00> : vector<4x8x8xf32>
    %178 = tpu.matmul %175, %177, %cst_73 {dimension_numbers = #tpu.dot_dimension_numbers<[2], [2], [0], [0], [0, 1, 0, 0, 1, 0], [1], [1]>} : vector<8x4x8xf32>, vector<8x4x8xf32>, vector<4x8x8xf32> -> vector<4x8x8xf32>
    "tpu.trace_stop"() : () -> ()
    %cst_74 = arith.constant 0.353553385 : f32
    %179 = vector.broadcast %cst_74 : f32 to vector<4x8x8xf32>
    %180 = arith.mulf %178, %179 : vector<4x8x8xf32>
    %cst_75 = arith.constant dense<0xFF800000> : vector<4x8xf32>
    %181 = vector.multi_reduction <maximumf>, %180, %cst_75 [2] : vector<4x8x8xf32> to vector<4x8xf32>
    %182 = vector.shape_cast %181 : vector<4x8xf32> to vector<4x8x1xf32>
    %183 = vector.broadcast %182 : vector<4x8x1xf32> to vector<4x8x8xf32>
    %184 = arith.subf %180, %183 : vector<4x8x8xf32>
    %185 = math.exp %184 : vector<4x8x8xf32>
    %cst_76 = arith.constant dense<0.000000e+00> : vector<4x8xf32>
    %186 = vector.multi_reduction <add>, %185, %cst_76 [2] : vector<4x8x8xf32> to vector<4x8xf32>
    %187 = vector.shape_cast %186 : vector<4x8xf32> to vector<4x8x1xf32>
    %188 = tpu.reciprocal %187 {approx = true} : vector<4x8x1xf32> -> vector<4x8x1xf32>
    %189 = vector.broadcast %188 : vector<4x8x1xf32> to vector<4x8x8xf32>
    %190 = arith.mulf %185, %189 : vector<4x8x8xf32>
    %191 = vector.extract_strided_slice %151 {offsets = [1, 0, 0, 0], sizes = [1, 8, 4, 8], strides = [1, 1, 1, 1]} : vector<2x8x4x8xf32> to vector<1x8x4x8xf32>
    %192 = vector.shape_cast %191 : vector<1x8x4x8xf32> to vector<8x4x8xf32>
    "tpu.trace_start"() <{level = 10 : i32, message = "hst,thd->shd"}> : () -> ()
    %cst_77 = arith.constant dense<0.000000e+00> : vector<4x8x8xf32>
    %193 = tpu.matmul %192, %190, %cst_77 {dimension_numbers = #tpu.dot_dimension_numbers<[0], [2], [2], [1], [0, 1, 0, 2, 1, 1], [1], [0]>} : vector<8x4x8xf32>, vector<4x8x8xf32>, vector<4x8x8xf32> -> vector<4x8x8xf32>
    %194 = tpu.transpose %193, [2, 0, 1] : vector<4x8x8xf32> -> vector<8x4x8xf32>
    "tpu.trace_stop"() : () -> ()
    %195 = vector.shape_cast %194 : vector<8x4x8xf32> to vector<8x32xf32>
    %196 = tpu.concatenate %173, %195 in 0 : vector<8x32xf32>, vector<8x32xf32> -> vector<16x32xf32>
    %cst_78 = arith.constant dense<0.000000e+00> : vector<16x32xf32>
    %197 = tpu.matmul %196, %132, %cst_78 {dimension_numbers = #tpu.dot_dimension_numbers<[1], [0], [0], [1], [0, 0, 1, 1], [], []>} : vector<16x32xf32>, vector<32x32xf32>, vector<16x32xf32> -> vector<16x32xf32>
    %198 = vector.extract_strided_slice %142 {offsets = [0, 0], sizes = [1, 32], strides = [1, 1]} : vector<6x32xf32> to vector<1x32xf32>
    %199 = vector.broadcast %198 : vector<1x32xf32> to vector<16x32xf32>
    %200 = arith.addf %197, %199 : vector<16x32xf32>
    %201 = arith.addf %128, %200 : vector<16x32xf32>
    %202 = vector.extract_strided_slice %142 {offsets = [2, 0], sizes = [1, 32], strides = [1, 1]} : vector<6x32xf32> to vector<1x32xf32>
    %203 = vector.extract_strided_slice %142 {offsets = [3, 0], sizes = [1, 32], strides = [1, 1]} : vector<6x32xf32> to vector<1x32xf32>
    %cst_79 = arith.constant dense<0.000000e+00> : vector<16xf32>
    %204 = vector.multi_reduction <add>, %201, %cst_79 [1] : vector<16x32xf32> to vector<16xf32>
    %205 = vector.shape_cast %204 : vector<16xf32> to vector<16x1xf32>
    %cst_80 = arith.constant 3.200000e+01 : f32
    %206 = vector.broadcast %cst_80 : f32 to vector<16x1xf32>
    %207 = arith.divf %205, %206 : vector<16x1xf32>
    %208 = vector.broadcast %207 : vector<16x1xf32> to vector<16x32xf32>
    %209 = arith.subf %201, %208 : vector<16x32xf32>
    %210 = arith.mulf %209, %209 : vector<16x32xf32>
    %cst_81 = arith.constant dense<0.000000e+00> : vector<16xf32>
    %211 = vector.multi_reduction <add>, %210, %cst_81 [1] : vector<16x32xf32> to vector<16xf32>
    %212 = vector.shape_cast %211 : vector<16xf32> to vector<16x1xf32>
    %cst_82 = arith.constant 3.200000e+01 : f32
    %213 = vector.broadcast %cst_82 : f32 to vector<16x1xf32>
    %214 = arith.divf %212, %213 : vector<16x1xf32>
    %cst_83 = arith.constant 9.99999974E-6 : f32
    %215 = vector.broadcast %cst_83 : f32 to vector<16x1xf32>
    %216 = arith.addf %214, %215 : vector<16x1xf32>
    %217 = math.rsqrt %216 : vector<16x1xf32>
    %218 = vector.broadcast %217 : vector<16x1xf32> to vector<16x32xf32>
    %219 = arith.mulf %209, %218 : vector<16x32xf32>
    %220 = vector.broadcast %202 : vector<1x32xf32> to vector<16x32xf32>
    %221 = arith.mulf %219, %220 : vector<16x32xf32>
    %222 = vector.broadcast %203 : vector<1x32xf32> to vector<16x32xf32>
    %223 = arith.addf %221, %222 : vector<16x32xf32>
    %cst_84 = arith.constant dense<0.000000e+00> : vector<16x64xf32>
    %224 = tpu.matmul %223, %134, %cst_84 {dimension_numbers = #tpu.dot_dimension_numbers<[1], [0], [0], [1], [0, 0, 1, 1], [], []>} : vector<16x32xf32>, vector<32x64xf32>, vector<16x64xf32> -> vector<16x64xf32>
    %225 = vector.broadcast %140 : vector<1x64xf32> to vector<16x64xf32>
    %226 = arith.addf %224, %225 : vector<16x64xf32>
    %cst_85 = arith.constant 0.000000e+00 : f32
    %227 = vector.broadcast %cst_85 : f32 to vector<16x64xf32>
    %228 = arith.maximumf %226, %227 : vector<16x64xf32>
    %cst_86 = arith.constant dense<0.000000e+00> : vector<16x32xf32>
    %229 = tpu.matmul %228, %136, %cst_86 {dimension_numbers = #tpu.dot_dimension_numbers<[1], [0], [0], [1], [0, 0, 1, 1], [], []>} : vector<16x64xf32>, vector<64x32xf32>, vector<16x32xf32> -> vector<16x32xf32>
    %230 = vector.extract_strided_slice %142 {offsets = [1, 0], sizes = [1, 32], strides = [1, 1]} : vector<6x32xf32> to vector<1x32xf32>
    %231 = vector.broadcast %230 : vector<1x32xf32> to vector<16x32xf32>
    %232 = arith.addf %229, %231 : vector<16x32xf32>
    %233 = arith.addf %223, %232 : vector<16x32xf32>
    %234 = vector.extract_strided_slice %142 {offsets = [4, 0], sizes = [1, 32], strides = [1, 1]} : vector<6x32xf32> to vector<1x32xf32>
    %235 = vector.extract_strided_slice %142 {offsets = [5, 0], sizes = [1, 32], strides = [1, 1]} : vector<6x32xf32> to vector<1x32xf32>
    %cst_87 = arith.constant dense<0.000000e+00> : vector<16xf32>
    %236 = vector.multi_reduction <add>, %233, %cst_87 [1] : vector<16x32xf32> to vector<16xf32>
    %237 = vector.shape_cast %236 : vector<16xf32> to vector<16x1xf32>
    %cst_88 = arith.constant 3.200000e+01 : f32
    %238 = vector.broadcast %cst_88 : f32 to vector<16x1xf32>
    %239 = arith.divf %237, %238 : vector<16x1xf32>
    %240 = vector.broadcast %239 : vector<16x1xf32> to vector<16x32xf32>
    %241 = arith.subf %233, %240 : vector<16x32xf32>
    %242 = arith.mulf %241, %241 : vector<16x32xf32>
    %cst_89 = arith.constant dense<0.000000e+00> : vector<16xf32>
    %243 = vector.multi_reduction <add>, %242, %cst_89 [1] : vector<16x32xf32> to vector<16xf32>
    %244 = vector.shape_cast %243 : vector<16xf32> to vector<16x1xf32>
    %cst_90 = arith.constant 3.200000e+01 : f32
    %245 = vector.broadcast %cst_90 : f32 to vector<16x1xf32>
    %246 = arith.divf %244, %245 : vector<16x1xf32>
    %cst_91 = arith.constant 9.99999974E-6 : f32
    %247 = vector.broadcast %cst_91 : f32 to vector<16x1xf32>
    %248 = arith.addf %246, %247 : vector<16x1xf32>
    %249 = math.rsqrt %248 : vector<16x1xf32>
    %250 = vector.broadcast %249 : vector<16x1xf32> to vector<16x32xf32>
    %251 = arith.mulf %241, %250 : vector<16x32xf32>
    %252 = vector.broadcast %234 : vector<1x32xf32> to vector<16x32xf32>
    %253 = arith.mulf %251, %252 : vector<16x32xf32>
    %254 = vector.broadcast %235 : vector<1x32xf32> to vector<16x32xf32>
    %255 = arith.addf %253, %254 : vector<16x32xf32>
    %256 = vector.shape_cast %255 : vector<16x32xf32> to vector<2x8x32xf32>
    %cst_92 = arith.constant dense<0.000000e+00> : vector<2x32xf32>
    %257 = vector.multi_reduction <add>, %256, %cst_92 [1] : vector<2x8x32xf32> to vector<2x32xf32>
    %cst_93 = arith.constant 8.000000e+00 : f32
    %258 = vector.broadcast %cst_93 : f32 to vector<2x32xf32>
    %259 = arith.divf %257, %258 : vector<2x32xf32>
    %c0_94 = arith.constant 0 : index
    %c0_95 = arith.constant 0 : index
    %260 = vector.load %arg9[%c0_94, %c0_95] : memref<2x32xf32, #tpu.memory_space<vmem>>, vector<2x32xf32>
    tpu.vector_store %arg9[%c0_94, %c0_95], %259 {strides = array<i32>} : memref<2x32xf32, #tpu.memory_space<vmem>>, vector<2x32xf32>,
    return
  }
  func.func @transform_0(%arg0: i32) -> (i32, i32, i32) {
    %c0_i32 = arith.constant 0 : i32
    %c0_i32_0 = arith.constant 0 : i32
    %c0_i32_1 = arith.constant 0 : i32
    return %arg0, %c0_i32, %c0_i32_0 : i32, i32, i32
  }
  func.func @transform_1(%arg0: i32) -> (i32, i32, i32) {
    %c0_i32 = arith.constant 0 : i32
    %c0_i32_0 = arith.constant 0 : i32
    %c0_i32_1 = arith.constant 0 : i32
    %c0_i32_2 = arith.constant 0 : i32
    return %c0_i32, %c0_i32_0, %c0_i32_1 : i32, i32, i32
  }
  func.func @transform_2(%arg0: i32) -> (i32, i32, i32) {
    %c0_i32 = arith.constant 0 : i32
    %c0_i32_0 = arith.constant 0 : i32
    %c0_i32_1 = arith.constant 0 : i32
    %c0_i32_2 = arith.constant 0 : i32
    return %c0_i32, %c0_i32_0, %c0_i32_1 : i32, i32, i32
  }
  func.func @transform_3(%arg0: i32) -> (i32, i32, i32) {
    %c0_i32 = arith.constant 0 : i32
    %c0_i32_0 = arith.constant 0 : i32
    %c0_i32_1 = arith.constant 0 : i32
    %c0_i32_2 = arith.constant 0 : i32
    return %c0_i32, %c0_i32_0, %c0_i32_1 : i32, i32, i32
  }
  func.func @transform_4(%arg0: i32) -> (i32, i32, i32) {
    %c0_i32 = arith.constant 0 : i32
    %c0_i32_0 = arith.constant 0 : i32
    %c0_i32_1 = arith.constant 0 : i32
    %c0_i32_2 = arith.constant 0 : i32
    return %c0_i32, %c0_i32_0, %c0_i32_1 : i32, i32, i32
  }
  func.func @transform_5(%arg0: i32) -> (i32, i32, i32) {
    %c0_i32 = arith.constant 0 : i32
    %c0_i32_0 = arith.constant 0 : i32
    %c0_i32_1 = arith.constant 0 : i32
    %c0_i32_2 = arith.constant 0 : i32
    return %c0_i32, %c0_i32_0, %c0_i32_1 : i32, i32, i32
  }
  func.func @transform_6(%arg0: i32) -> (i32, i32, i32) {
    %c0_i32 = arith.constant 0 : i32
    %c0_i32_0 = arith.constant 0 : i32
    %c0_i32_1 = arith.constant 0 : i32
    %c0_i32_2 = arith.constant 0 : i32
    return %c0_i32, %c0_i32_0, %c0_i32_1 : i32, i32, i32
  }
  func.func @transform_7(%arg0: i32) -> (i32, i32, i32) {
    %c0_i32 = arith.constant 0 : i32
    %c0_i32_0 = arith.constant 0 : i32
    %c0_i32_1 = arith.constant 0 : i32
    %c0_i32_2 = arith.constant 0 : i32
    return %c0_i32, %c0_i32_0, %c0_i32_1 : i32, i32, i32
  }
  func.func @transform_8(%arg0: i32) -> (i32, i32) {
    %c0_i32 = arith.constant 0 : i32
    %c0_i32_0 = arith.constant 0 : i32
    return %arg0, %c0_i32 : i32, i32
  }
}

</mosaic_0001>

<llo_original>
// kernel: tpu_custom_call.1
$region0: #{tpu_custom_call.1}
  #allocation0 [shape = 'u32[]', space=smem, size = 0x4, offset = 0x4, fixed_abs, tag = 'smem constant byte address 0x4 - core index']
  #allocation1 [shape = 'u32[144,128]{1,0:T(1,128)}', space=vmem, size = 0x12000, scoped, tag = 'internal scratch']
  %s0 = inlined_call_operand.vmem [shape: f32[2,8,32], index: 0, kind: input, shape index: {}]
  %s1 = inlined_call_operand.vmem [shape: f32[2,32,96], index: 1, kind: input, shape index: {}]
  %s2 = inlined_call_operand.vmem [shape: f32[2,32,32], index: 2, kind: input, shape index: {}]
  %s3 = inlined_call_operand.vmem [shape: f32[2,32,64], index: 3, kind: input, shape index: {}]
  %s4 = inlined_call_operand.vmem [shape: f32[2,64,32], index: 4, kind: input, shape index: {}]
  %s5 = inlined_call_operand.vmem [shape: f32[2,1,96], index: 5, kind: input, shape index: {}]
  %s6 = inlined_call_operand.vmem [shape: f32[2,1,64], index: 6, kind: input, shape index: {}]
  %s7 = inlined_call_operand.vmem [shape: f32[2,6,32], index: 7, kind: input, shape index: {}]
  %s8 = inlined_call_operand.hbm [shape: f32[2,32], index: 8, kind: output, shape index: {}]
  %s9 = sld [smem:[#allocation0]]
  $region42: #{tpu_custom_call.1} parent=0
    _
  %s11 = ssub.s32 1, %s9
  %s12 = scalar_select 0, %s11, %s9
  $region1: #{tpu_custom_call.1} parent=0
    #allocation2 [shape = 'u8[1024]{0}', space=vmem, size = 0x400, scoped, tag = 'output window, operand 0, single buffered']
    #allocation3 [shape = 's32[1]{0}', space=sflag, size = 0x4, scoped, tag = 'scoped memory for tpu_custom_call.1']
    %13 = vsyncpa [#allocation3], 0
    // Predicated region
    $region2: #{tpu_custom_call.1} parent=1 // pred_check
      _
    $region3: #{tpu_custom_call.1} parent=1 // pred_check_branch
      %15 = sbr.rel (0) target = $region5
    $region4: #{tpu_custom_call.1} parent=1 // pred_region
      _
    $region5: #{tpu_custom_call.1} parent=1 // pred_fallthru
      _
    // Predicated region
    $region6: #{tpu_custom_call.1} parent=1 // pred_check
      _
    $region7: #{tpu_custom_call.1} parent=1 // pred_check_branch
      %17 = sbr.rel (0) target = $region9
    $region8: #{tpu_custom_call.1} parent=1 // pred_region
      _
    $region9: #{tpu_custom_call.1} parent=1 // pred_fallthru
      _
    // Predicated region
    $region10: #{tpu_custom_call.1} parent=1 // pred_check
      _
    $region11: #{tpu_custom_call.1} parent=1 // pred_check_branch
      %19 = sbr.rel (0) target = $region13
    $region12: #{tpu_custom_call.1} parent=1 // pred_region
      _
    $region13: #{tpu_custom_call.1} parent=1 // pred_fallthru
      _
    // Predicated region
    $region14: #{tpu_custom_call.1} parent=1 // pred_check
      _
    $region15: #{tpu_custom_call.1} parent=1 // pred_check_branch
      %21 = sbr.rel (0) target = $region17
    $region16: #{tpu_custom_call.1} parent=1 // pred_region
      _
    $region17: #{tpu_custom_call.1} parent=1 // pred_fallthru
      _
    // Predicated region
    $region18: #{tpu_custom_call.1} parent=1 // pred_check
      _
    $region19: #{tpu_custom_call.1} parent=1 // pred_check_branch
      %23 = sbr.rel (0) target = $region21
    $region20: #{tpu_custom_call.1} parent=1 // pred_region
      _
    $region21: #{tpu_custom_call.1} parent=1 // pred_fallthru
      _
    // Predicated region
    $region22: #{tpu_custom_call.1} parent=1 // pred_check
      _
    $region23: #{tpu_custom_call.1} parent=1 // pred_check_branch
      %25 = sbr.rel (0) target = $region25
    $region24: #{tpu_custom_call.1} parent=1 // pred_region
      _
    $region25: #{tpu_custom_call.1} parent=1 // pred_fallthru
      _
    // Predicated region
    $region26: #{tpu_custom_call.1} parent=1 // pred_check
      _
    $region27: #{tpu_custom_call.1} parent=1 // pred_check_branch
      %27 = sbr.rel (0) target = $region29
    $region28: #{tpu_custom_call.1} parent=1 // pred_region
      _
    $region29: #{tpu_custom_call.1} parent=1 // pred_fallthru
      _
    // Predicated region
    $region30: #{tpu_custom_call.1} parent=1 // pred_check
      _
    $region31: #{tpu_custom_call.1} parent=1 // pred_check_branch
      %29 = sbr.rel (0) target = $region33
    $region32: #{tpu_custom_call.1} parent=1 // pred_region
      _
    $region33: #{tpu_custom_call.1} parent=1 // pred_fallthru
      _
    %v30 = vld [vmem:[%s0] sm:$0xff]
    %v31 = vld [vmem:[%s0 + $0x8] sm:$0xff]
    %v32 = vld [vmem:[%s1] sm:$0xff]
    %v33 = vld [vmem:[%s1 + $0x8] sm:$0xff]
    %v34 = vld [vmem:[%s1 + $0x10] sm:$0xff]
    %v35 = vld [vmem:[%s1 + $0x18] sm:$0xff]
    %v36 = vld [vmem:[%s2] sm:$0xff]
    %v37 = vld [vmem:[%s2 + $0x8] sm:$0xff]
    %v38 = vld [vmem:[%s2 + $0x10] sm:$0xff]
    %v39 = vld [vmem:[%s2 + $0x18] sm:$0xff]
    %v40 = vld [vmem:[%s3] sm:$0xff]
    %v41 = vld [vmem:[%s3 + $0x8] sm:$0xff]
    %v42 = vld [vmem:[%s3 + $0x10] sm:$0xff]
    %v43 = vld [vmem:[%s3 + $0x18] sm:$0xff]
    %v44 = vld [vmem:[%s4] sm:$0xff]
    %v45 = vld [vmem:[%s4 + $0x8] sm:$0xff]
    %v46 = vld [vmem:[%s4 + $0x10] sm:$0xff]
    %v47 = vld [vmem:[%s4 + $0x18] sm:$0xff]
    %v48 = vld [vmem:[%s4 + $0x20] sm:$0xff]
    %v49 = vld [vmem:[%s4 + $0x28] sm:$0xff]
    %v50 = vld [vmem:[%s4 + $0x30] sm:$0xff]
    %v51 = vld [vmem:[%s4 + $0x38] sm:$0xff]
    %v52 = vld [vmem:[%s5] sm:$0x1]
    %v53 = vld [vmem:[%s6] sm:$0x1]
    %v54 = vld [vmem:[%s7] sm:$0x3f]
    %v56 = vlaneseq
    %v57 = vshrl.u32 %v56, 7
    %v58 = vsub.s32 0, %v57
    %v59 = vrot.slane %v52, %v58
    %vm61 = vcmask 261120
    %v63 = vsel %vm61, %v30, 0
    %v66 = vsel %vm61, %v31, 0
    %68 = vmatprep.subr.mxu0 0.0
    %69 = vmatpush1.msra.mxu0 0.0
    %70 = vmatprep.subr.mxu0 0.0
    %71 = vmatpush1.msra.mxu0 0.0
    %72 = vmatprep.subr.mxu0 0.0
    %73 = vmatpush1.msra.mxu0 0.0
    %74 = vmatprep.subr.mxu0 0.0
    %75 = vmatpush1.msra.mxu0 0.0
    %76 = vmatprep.subr.mxu0 0.0
    %77 = vmatpush1.msra.mxu0 0.0
    %78 = vmatprep.subr.mxu0 0.0
    %79 = vmatpush1.msra.mxu0 0.0
    %80 = vmatprep.subr.mxu0 0.0
    %81 = vmatpush1.msra.mxu0 0.0
    %82 = vmatprep.subr.mxu0 0.0
    %83 = vmatpush1.msra.mxu0 0.0
    %84 = vmatprep.subr.mxu0 0.0
    %85 = vmatpush1.msra.mxu0 0.0
    %86 = vmatprep.subr.mxu0 0.0
    %87 = vmatpush1.msra.mxu0 0.0
    %88 = vmatprep.subr.mxu0 0.0
    %89 = vmatpush1.msra.mxu0 0.0
    %90 = vmatprep.subr.mxu0 0.0
    %91 = vmatpush1.msra.mxu0 0.0
    %92 = vmatprep.subr.mxu0 0.0
    %93 = vmatpush1.msra.mxu0 %v35
    %94 = vmatprep.subr.mxu0 0.0
    %95 = vmatpush1.msra.mxu0 %v34
    %96 = vmatprep.subr.mxu0 0.0
    %97 = vmatpush1.msra.mxu0 %v33
    %98 = vmatprep.subr.mxu0 0.0
    %99 = vmatpush1.msra.mxu0 %v32
    %100 = vmatprep.subr.mxu0 0.0
    %101 = vmatpush2.msra.mxu0 0.0
    %102 = vmatprep.subr.mxu0 0.0
    %103 = vmatpush2.msra.mxu0 0.0
    %104 = vmatprep.subr.mxu0 0.0
    %105 = vmatpush2.msra.mxu0 0.0
    %106 = vmatprep.subr.mxu0 0.0
    %107 = vmatpush2.msra.mxu0 0.0
    %108 = vmatprep.subr.mxu0 0.0
    %109 = vmatpush2.msra.mxu0 0.0
    %110 = vmatprep.subr.mxu0 0.0
    %111 = vmatpush2.msra.mxu0 0.0
    %112 = vmatprep.subr.mxu0 0.0
    %113 = vmatpush2.msra.mxu0 0.0
    %114 = vmatprep.subr.mxu0 0.0
    %115 = vmatpush2.msra.mxu0 0.0
    %116 = vmatprep.subr.mxu0 0.0
    %117 = vmatpush2.msra.mxu0 0.0
    %118 = vmatprep.subr.mxu0 0.0
    %119 = vmatpush2.msra.mxu0 0.0
    %120 = vmatprep.subr.mxu0 0.0
    %121 = vmatpush2.msra.mxu0 0.0
    %122 = vmatprep.subr.mxu0 0.0
    %123 = vmatpush2.msra.mxu0 0.0
    %124 = vmatprep.subr.mxu0 0.0
    %125 = vmatpush2.msra.mxu0 0.0
    %126 = vmatprep.subr.mxu0 0.0
    %127 = vmatpush2.msra.mxu0 0.0
    %128 = vmatprep.subr.mxu0 0.0
    %129 = vmatpush2.msra.mxu0 0.0
    %130 = vmatprep.subr.mxu0 0.0
    %131 = vmatpush2.msra.mxu0 0.0
    %132 = vmatprep.mubr.f32.mxu0 0.0
    %133 = vmatmul.mubr.f32.gmra.mxu0 %v63
    %v134 = vpop.f32.mrf.mxu0
    %v135 = vadd.f32 %v59, %v134
    %v136 = vpop.f32.mrf.mxu0
    %137 = vmatprep.mubr.f32.mxu0 0.0
    %138 = vmatmul.mubr.f32.gmra.mxu0 %v66
    %v139 = vpop.f32.mrf.mxu0
    %v140 = vadd.f32 %v59, %v139
    %v141 = vpop.f32.mrf.mxu0
    %142 = vdwg.mxu0
    %145 = vrot.lane.b32.xlu0 %v135, 120
    %v146 = vpop.permute.xlu0 %145
    %147 = vrot.lane.b32.xlu0 %v140, 120
    %v148 = vpop.permute.xlu0 %147
    %151 = vrot.lane.b32.xlu0 %v135, 112
    %v152 = vpop.permute.xlu0 %151
    %153 = vrot.lane.b32.xlu0 %v140, 112
    %v154 = vpop.permute.xlu0 %153
    %157 = vrot.lane.b32.xlu0 %v135, 104
    %v158 = vpop.permute.xlu0 %157
    %159 = vrot.lane.b32.xlu0 %v140, 104
    %v160 = vpop.permute.xlu0 %159
    %v163 = vcombine.low %v135, %v152
    %v164 = vcombine.high %v135, %v152
    %v166 = vunpack.c.l.s4 1983009808
    %v167 = vunpack.c.0.s8 %v166
    %v168 = vlaneseq
    %v169 = vshrl.u32 %v168, 7
    %v170 = vsub.s32 %v167, %v169
    %v171 = vrot.slane %v163, %v170
    %v173 = vunpack.c.l.s4 1983009808
    %v174 = vunpack.c.0.s8 %v173
    %v175 = vlaneseq
    %v176 = vshrl.u32 %v175, 7
    %v177 = vsub.s32 %v174, %v176
    %v178 = vrot.slane %v164, %v177
    %v179 = vcombine.low %v146, %v158
    %v180 = vcombine.high %v146, %v158
    %v182 = vunpack.c.l.s4 1983009808
    %v183 = vunpack.c.0.s8 %v182
    %v184 = vlaneseq
    %v185 = vshrl.u32 %v184, 7
    %v186 = vsub.s32 %v183, %v185
    %v187 = vrot.slane %v179, %v186
    %v189 = vunpack.c.l.s4 1983009808
    %v190 = vunpack.c.0.s8 %v189
    %v191 = vlaneseq
    %v192 = vshrl.u32 %v191, 7
    %v193 = vsub.s32 %v190, %v192
    %v194 = vrot.slane %v180, %v193
    %v195 = vcombine.low %v171, %v187
    %v196 = vcombine.high %v171, %v187
    %v198 = vunpack.c.l.s4 1934713408
    %v199 = vunpack.c.0.s8 %v198
    %v200 = vlaneseq
    %v201 = vshrl.u32 %v200, 7
    %v202 = vsub.s32 %v199, %v201
    %v203 = vrot.slane %v195, %v202
    %v205 = vunpack.c.l.s4 1934713408
    %v206 = vunpack.c.0.s8 %v205
    %v207 = vlaneseq
    %v208 = vshrl.u32 %v207, 7
    %v209 = vsub.s32 %v206, %v208
    %v210 = vrot.slane %v196, %v209
    %v211 = vcombine.low %v178, %v194
    %v212 = vcombine.high %v178, %v194
    %v214 = vunpack.c.l.s4 1934713408
    %v215 = vunpack.c.0.s8 %v214
    %v216 = vlaneseq
    %v217 = vshrl.u32 %v216, 7
    %v218 = vsub.s32 %v215, %v217
    %v219 = vrot.slane %v211, %v218
    %v221 = vunpack.c.l.s4 1934713408
    %v222 = vunpack.c.0.s8 %v221
    %v223 = vlaneseq
    %v224 = vshrl.u32 %v223, 7
    %v225 = vsub.s32 %v222, %v224
    %v226 = vrot.slane %v212, %v225
    %v227 = vcombine.high %v203, 0.0
    %v228 = vcombine.high %v210, 0.0
    %v229 = vcombine.high %v219, 0.0
    %v230 = vcombine.high %v226, 0.0
    %v231 = vcombine.low %v140, %v154
    %v232 = vcombine.high %v140, %v154
    %v234 = vunpack.c.l.s4 1983009808
    %v235 = vunpack.c.0.s8 %v234
    %v236 = vlaneseq
    %v237 = vshrl.u32 %v236, 7
    %v238 = vsub.s32 %v235, %v237
    %v239 = vrot.slane %v231, %v238
    %v241 = vunpack.c.l.s4 1983009808
    %v242 = vunpack.c.0.s8 %v241
    %v243 = vlaneseq
    %v244 = vshrl.u32 %v243, 7
    %v245 = vsub.s32 %v242, %v244
    %v246 = vrot.slane %v232, %v245
    %v247 = vcombine.low %v148, %v160
    %v248 = vcombine.high %v148, %v160
    %v250 = vunpack.c.l.s4 1983009808
    %v251 = vunpack.c.0.s8 %v250
    %v252 = vlaneseq
    %v253 = vshrl.u32 %v252, 7
    %v254 = vsub.s32 %v251, %v253
    %v255 = vrot.slane %v247, %v254
    %v257 = vunpack.c.l.s4 1983009808
    %v258 = vunpack.c.0.s8 %v257
    %v259 = vlaneseq
    %v260 = vshrl.u32 %v259, 7
    %v261 = vsub.s32 %v258, %v260
    %v262 = vrot.slane %v248, %v261
    %v263 = vcombine.low %v239, %v255
    %v264 = vcombine.high %v239, %v255
    %v266 = vunpack.c.l.s4 1934713408
    %v267 = vunpack.c.0.s8 %v266
    %v268 = vlaneseq
    %v269 = vshrl.u32 %v268, 7
    %v270 = vsub.s32 %v267, %v269
    %v271 = vrot.slane %v263, %v270
    %v273 = vunpack.c.l.s4 1934713408
    %v274 = vunpack.c.0.s8 %v273
    %v275 = vlaneseq
    %v276 = vshrl.u32 %v275, 7
    %v277 = vsub.s32 %v274, %v276
    %v278 = vrot.slane %v264, %v277
    %v279 = vcombine.low %v246, %v262
    %v280 = vcombine.high %v246, %v262
    %v282 = vunpack.c.l.s4 1934713408
    %v283 = vunpack.c.0.s8 %v282
    %v284 = vlaneseq
    %v285 = vshrl.u32 %v284, 7
    %v286 = vsub.s32 %v283, %v285
    %v287 = vrot.slane %v279, %v286
    %v289 = vunpack.c.l.s4 1934713408
    %v290 = vunpack.c.0.s8 %v289
    %v291 = vlaneseq
    %v292 = vshrl.u32 %v291, 7
    %v293 = vsub.s32 %v290, %v292
    %v294 = vrot.slane %v280, %v293
    %v295 = vcombine.high %v271, 0.0
    %v296 = vcombine.high %v278, 0.0
    %v297 = vcombine.high %v287, 0.0
    %v298 = vcombine.high %v294, 0.0
    %299 = vrot.lane.b32.xlu0 %v135, 96
    %v300 = vpop.permute.xlu0 %299
    %301 = vrot.lane.b32.xlu0 %v140, 96
    %v302 = vpop.permute.xlu0 %301
    %303 = vrot.lane.b32.xlu0 %v146, 96
    %v304 = vpop.permute.xlu0 %303
    %305 = vrot.lane.b32.xlu0 %v148, 96
    %v306 = vpop.permute.xlu0 %305
    %307 = vrot.lane.b32.xlu0 %v152, 96
    %v308 = vpop.permute.xlu0 %307
    %309 = vrot.lane.b32.xlu0 %v154, 96
    %v310 = vpop.permute.xlu0 %309
    %311 = vrot.lane.b32.xlu0 %v158, 96
    %v312 = vpop.permute.xlu0 %311
    %313 = vrot.lane.b32.xlu0 %v160, 96
    %v314 = vpop.permute.xlu0 %313
    %v323 = vcombine.low %v300, %v308
    %v324 = vcombine.high %v300, %v308
    %v326 = vunpack.c.l.s4 1983009808
    %v327 = vunpack.c.0.s8 %v326
    %v328 = vlaneseq
    %v329 = vshrl.u32 %v328, 7
    %v330 = vsub.s32 %v327, %v329
    %v331 = vrot.slane %v323, %v330
    %v333 = vunpack.c.l.s4 1983009808
    %v334 = vunpack.c.0.s8 %v333
    %v335 = vlaneseq
    %v336 = vshrl.u32 %v335, 7
    %v337 = vsub.s32 %v334, %v336
    %v338 = vrot.slane %v324, %v337
    %v339 = vcombine.low %v304, %v312
    %v340 = vcombine.high %v304, %v312
    %v342 = vunpack.c.l.s4 1983009808
    %v343 = vunpack.c.0.s8 %v342
    %v344 = vlaneseq
    %v345 = vshrl.u32 %v344, 7
    %v346 = vsub.s32 %v343, %v345
    %v347 = vrot.slane %v339, %v346
    %v349 = vunpack.c.l.s4 1983009808
    %v350 = vunpack.c.0.s8 %v349
    %v351 = vlaneseq
    %v352 = vshrl.u32 %v351, 7
    %v353 = vsub.s32 %v350, %v352
    %v354 = vrot.slane %v340, %v353
    %v355 = vcombine.low %v331, %v347
    %v356 = vcombine.high %v331, %v347
    %v358 = vunpack.c.l.s4 1934713408
    %v359 = vunpack.c.0.s8 %v358
    %v360 = vlaneseq
    %v361 = vshrl.u32 %v360, 7
    %v362 = vsub.s32 %v359, %v361
    %v363 = vrot.slane %v355, %v362
    %v365 = vunpack.c.l.s4 1934713408
    %v366 = vunpack.c.0.s8 %v365
    %v367 = vlaneseq
    %v368 = vshrl.u32 %v367, 7
    %v369 = vsub.s32 %v366, %v368
    %v370 = vrot.slane %v356, %v369
    %v371 = vcombine.low %v338, %v354
    %v372 = vcombine.high %v338, %v354
    %v374 = vunpack.c.l.s4 1934713408
    %v375 = vunpack.c.0.s8 %v374
    %v376 = vlaneseq
    %v377 = vshrl.u32 %v376, 7
    %v378 = vsub.s32 %v375, %v377
    %v379 = vrot.slane %v371, %v378
    %v381 = vunpack.c.l.s4 1934713408
    %v382 = vunpack.c.0.s8 %v381
    %v383 = vlaneseq
    %v384 = vshrl.u32 %v383, 7
    %v385 = vsub.s32 %v382, %v384
    %v386 = vrot.slane %v372, %v385
    %v387 = vcombine.high %v363, 0.0
    %v388 = vcombine.high %v370, 0.0
    %v389 = vcombine.high %v379, 0.0
    %v390 = vcombine.high %v386, 0.0
    %v391 = vcombine.low %v302, %v310
    %v392 = vcombine.high %v302, %v310
    %v394 = vunpack.c.l.s4 1983009808
    %v395 = vunpack.c.0.s8 %v394
    %v396 = vlaneseq
    %v397 = vshrl.u32 %v396, 7
    %v398 = vsub.s32 %v395, %v397
    %v399 = vrot.slane %v391, %v398
    %v401 = vunpack.c.l.s4 1983009808
    %v402 = vunpack.c.0.s8 %v401
    %v403 = vlaneseq
    %v404 = vshrl.u32 %v403, 7
    %v405 = vsub.s32 %v402, %v404
    %v406 = vrot.slane %v392, %v405
    %v407 = vcombine.low %v306, %v314
    %v408 = vcombine.high %v306, %v314
    %v410 = vunpack.c.l.s4 1983009808
    %v411 = vunpack.c.0.s8 %v410
    %v412 = vlaneseq
    %v413 = vshrl.u32 %v412, 7
    %v414 = vsub.s32 %v411, %v413
    %v415 = vrot.slane %v407, %v414
    %v417 = vunpack.c.l.s4 1983009808
    %v418 = vunpack.c.0.s8 %v417
    %v419 = vlaneseq
    %v420 = vshrl.u32 %v419, 7
    %v421 = vsub.s32 %v418, %v420
    %v422 = vrot.slane %v408, %v421
    %v423 = vcombine.low %v399, %v415
    %v424 = vcombine.high %v399, %v415
    %v426 = vunpack.c.l.s4 1934713408
    %v427 = vunpack.c.0.s8 %v426
    %v428 = vlaneseq
    %v429 = vshrl.u32 %v428, 7
    %v430 = vsub.s32 %v427, %v429
    %v431 = vrot.slane %v423, %v430
    %v433 = vunpack.c.l.s4 1934713408
    %v434 = vunpack.c.0.s8 %v433
    %v435 = vlaneseq
    %v436 = vshrl.u32 %v435, 7
    %v437 = vsub.s32 %v434, %v436
    %v438 = vrot.slane %v424, %v437
    %v439 = vcombine.low %v406, %v422
    %v440 = vcombine.high %v406, %v422
    %v442 = vunpack.c.l.s4 1934713408
    %v443 = vunpack.c.0.s8 %v442
    %v444 = vlaneseq
    %v445 = vshrl.u32 %v444, 7
    %v446 = vsub.s32 %v443, %v445
    %v447 = vrot.slane %v439, %v446
    %v449 = vunpack.c.l.s4 1934713408
    %v450 = vunpack.c.0.s8 %v449
    %v451 = vlaneseq
    %v452 = vshrl.u32 %v451, 7
    %v453 = vsub.s32 %v450, %v452
    %v454 = vrot.slane %v440, %v453
    %v455 = vcombine.high %v431, 0.0
    %v456 = vcombine.high %v438, 0.0
    %v457 = vcombine.high %v447, 0.0
    %v458 = vcombine.high %v454, 0.0
    %459 = vrot.lane.b32.xlu0 %v135, 64
    %v460 = vpop.permute.xlu0 %459
    %461 = vrot.lane.b32.xlu0 %v140, 64
    %v462 = vpop.permute.xlu0 %461
    %463 = vrot.lane.b32.xlu0 %v146, 64
    %v464 = vpop.permute.xlu0 %463
    %465 = vrot.lane.b32.xlu0 %v148, 64
    %v466 = vpop.permute.xlu0 %465
    %467 = vrot.lane.b32.xlu0 %v152, 64
    %v468 = vpop.permute.xlu0 %467
    %469 = vrot.lane.b32.xlu0 %v154, 64
    %v470 = vpop.permute.xlu0 %469
    %471 = vrot.lane.b32.xlu0 %v158, 64
    %v472 = vpop.permute.xlu0 %471
    %473 = vrot.lane.b32.xlu0 %v160, 64
    %v474 = vpop.permute.xlu0 %473
    %v483 = vcombine.low %v460, %v468
    %v484 = vcombine.high %v460, %v468
    %v486 = vunpack.c.l.s4 1983009808
    %v487 = vunpack.c.0.s8 %v486
    %v488 = vlaneseq
    %v489 = vshrl.u32 %v488, 7
    %v490 = vsub.s32 %v487, %v489
    %v491 = vrot.slane %v483, %v490
    %v493 = vunpack.c.l.s4 1983009808
    %v494 = vunpack.c.0.s8 %v493
    %v495 = vlaneseq
    %v496 = vshrl.u32 %v495, 7
    %v497 = vsub.s32 %v494, %v496
    %v498 = vrot.slane %v484, %v497
    %v499 = vcombine.low %v464, %v472
    %v500 = vcombine.high %v464, %v472
    %v502 = vunpack.c.l.s4 1983009808
    %v503 = vunpack.c.0.s8 %v502
    %v504 = vlaneseq
    %v505 = vshrl.u32 %v504, 7
    %v506 = vsub.s32 %v503, %v505
    %v507 = vrot.slane %v499, %v506
    %v509 = vunpack.c.l.s4 1983009808
    %v510 = vunpack.c.0.s8 %v509
    %v511 = vlaneseq
    %v512 = vshrl.u32 %v511, 7
    %v513 = vsub.s32 %v510, %v512
    %v514 = vrot.slane %v500, %v513
    %v515 = vcombine.low %v491, %v507
    %v516 = vcombine.high %v491, %v507
    %v518 = vunpack.c.l.s4 1934713408
    %v519 = vunpack.c.0.s8 %v518
    %v520 = vlaneseq
    %v521 = vshrl.u32 %v520, 7
    %v522 = vsub.s32 %v519, %v521
    %v523 = vrot.slane %v515, %v522
    %v525 = vunpack.c.l.s4 1934713408
    %v526 = vunpack.c.0.s8 %v525
    %v527 = vlaneseq
    %v528 = vshrl.u32 %v527, 7
    %v529 = vsub.s32 %v526, %v528
    %v530 = vrot.slane %v516, %v529
    %v531 = vcombine.low %v498, %v514
    %v532 = vcombine.high %v498, %v514
    %v534 = vunpack.c.l.s4 1934713408
    %v535 = vunpack.c.0.s8 %v534
    %v536 = vlaneseq
    %v537 = vshrl.u32 %v536, 7
    %v538 = vsub.s32 %v535, %v537
    %v539 = vrot.slane %v531, %v538
    %v541 = vunpack.c.l.s4 1934713408
    %v542 = vunpack.c.0.s8 %v541
    %v543 = vlaneseq
    %v544 = vshrl.u32 %v543, 7
    %v545 = vsub.s32 %v542, %v544
    %v546 = vrot.slane %v532, %v545
    %v547 = vcombine.high %v523, 0.0
    %v548 = vcombine.high %v530, 0.0
    %v549 = vcombine.high %v539, 0.0
    %v550 = vcombine.high %v546, 0.0
    %v551 = vcombine.low %v462, %v470
    %v552 = vcombine.high %v462, %v470
    %v554 = vunpack.c.l.s4 1983009808
    %v555 = vunpack.c.0.s8 %v554
    %v556 = vlaneseq
    %v557 = vshrl.u32 %v556, 7
    %v558 = vsub.s32 %v555, %v557
    %v559 = vrot.slane %v551, %v558
    %v561 = vunpack.c.l.s4 1983009808
    %v562 = vunpack.c.0.s8 %v561
    %v563 = vlaneseq
    %v564 = vshrl.u32 %v563, 7
    %v565 = vsub.s32 %v562, %v564
    %v566 = vrot.slane %v552, %v565
    %v567 = vcombine.low %v466, %v474
    %v568 = vcombine.high %v466, %v474
    %v570 = vunpack.c.l.s4 1983009808
    %v571 = vunpack.c.0.s8 %v570
    %v572 = vlaneseq
    %v573 = vshrl.u32 %v572, 7
    %v574 = vsub.s32 %v571, %v573
    %v575 = vrot.slane %v567, %v574
    %v577 = vunpack.c.l.s4 1983009808
    %v578 = vunpack.c.0.s8 %v577
    %v579 = vlaneseq
    %v580 = vshrl.u32 %v579, 7
    %v581 = vsub.s32 %v578, %v580
    %v582 = vrot.slane %v568, %v581
    %v583 = vcombine.low %v559, %v575
    %v584 = vcombine.high %v559, %v575
    %v586 = vunpack.c.l.s4 1934713408
    %v587 = vunpack.c.0.s8 %v586
    %v588 = vlaneseq
    %v589 = vshrl.u32 %v588, 7
    %v590 = vsub.s32 %v587, %v589
    %v591 = vrot.slane %v583, %v590
    %v593 = vunpack.c.l.s4 1934713408
    %v594 = vunpack.c.0.s8 %v593
    %v595 = vlaneseq
    %v596 = vshrl.u32 %v595, 7
    %v597 = vsub.s32 %v594, %v596
    %v598 = vrot.slane %v584, %v597
    %v599 = vcombine.low %v566, %v582
    %v600 = vcombine.high %v566, %v582
    %v602 = vunpack.c.l.s4 1934713408
    %v603 = vunpack.c.0.s8 %v602
    %v604 = vlaneseq
    %v605 = vshrl.u32 %v604, 7
    %v606 = vsub.s32 %v603, %v605
    %v607 = vrot.slane %v599, %v606
    %v609 = vunpack.c.l.s4 1934713408
    %v610 = vunpack.c.0.s8 %v609
    %v611 = vlaneseq
    %v612 = vshrl.u32 %v611, 7
    %v613 = vsub.s32 %v610, %v612
    %v614 = vrot.slane %v600, %v613
    %v615 = vcombine.high %v591, 0.0
    %v616 = vcombine.high %v598, 0.0
    %v617 = vcombine.high %v607, 0.0
    %v618 = vcombine.high %v614, 0.0
    %v619 = vcombine.low %v203, %v210
    %v621 = vunpack.c.l.s4 1983009808
    %v622 = vunpack.c.0.s8 %v621
    %v623 = vlaneseq
    %v624 = vshrl.u32 %v623, 7
    %v625 = vsub.s32 %v622, %v624
    %v626 = vrot.slane %v619, %v625
    %v627 = vcombine.low %v227, %v228
    %v629 = vunpack.c.l.s4 1983009808
    %v630 = vunpack.c.0.s8 %v629
    %v631 = vlaneseq
    %v632 = vshrl.u32 %v631, 7
    %v633 = vsub.s32 %v630, %v632
    %v634 = vrot.slane %v627, %v633
    %v635 = vcombine.low %v219, %v226
    %v637 = vunpack.c.l.s4 1983009808
    %v638 = vunpack.c.0.s8 %v637
    %v639 = vlaneseq
    %v640 = vshrl.u32 %v639, 7
    %v641 = vsub.s32 %v638, %v640
    %v642 = vrot.slane %v635, %v641
    %v643 = vcombine.low %v229, %v230
    %v645 = vunpack.c.l.s4 1983009808
    %v646 = vunpack.c.0.s8 %v645
    %v647 = vlaneseq
    %v648 = vshrl.u32 %v647, 7
    %v649 = vsub.s32 %v646, %v648
    %v650 = vrot.slane %v643, %v649
    %v651 = vcombine.low %v626, %v634
    %v652 = vcombine.high %v626, %v634
    %v654 = vunpack.c.l.s4 1934713408
    %v655 = vunpack.c.0.s8 %v654
    %v656 = vlaneseq
    %v657 = vshrl.u32 %v656, 7
    %v658 = vsub.s32 %v655, %v657
    %v659 = vrot.slane %v651, %v658
    %v661 = vunpack.c.l.s4 1934713408
    %v662 = vunpack.c.0.s8 %v661
    %v663 = vlaneseq
    %v664 = vshrl.u32 %v663, 7
    %v665 = vsub.s32 %v662, %v664
    %v666 = vrot.slane %v652, %v665
    %v667 = vcombine.low %v642, %v650
    %v668 = vcombine.high %v642, %v650
    %v670 = vunpack.c.l.s4 1934713408
    %v671 = vunpack.c.0.s8 %v670
    %v672 = vlaneseq
    %v673 = vshrl.u32 %v672, 7
    %v674 = vsub.s32 %v671, %v673
    %v675 = vrot.slane %v667, %v674
    %v677 = vunpack.c.l.s4 1934713408
    %v678 = vunpack.c.0.s8 %v677
    %v679 = vlaneseq
    %v680 = vshrl.u32 %v679, 7
    %v681 = vsub.s32 %v678, %v680
    %v682 = vrot.slane %v668, %v681
    %v683 = vcombine.low %v659, %v675
    %v684 = vcombine.high %v659, %v675
    %v685 = vcombine.low %v666, %v682
    %v686 = vcombine.high %v666, %v682
    %687 = vxpose.xlu0.b32.start [1/16] %v363, 128
    %688 = vxpose.xlu0.b32.cont [2/16] 0.0, 128
    %689 = vxpose.xlu0.b32.cont [3/16] 0.0, 128
    %690 = vxpose.xlu0.b32.cont [4/16] 0.0, 128
    %691 = vxpose.xlu0.b32.cont [5/16] 0.0, 128
    %692 = vxpose.xlu0.b32.cont [6/16] 0.0, 128
    %693 = vxpose.xlu0.b32.cont [7/16] 0.0, 128
    %694 = vxpose.xlu0.b32.cont [8/16] 0.0, 128
    %695 = vxpose.xlu0.b32.cont [9/16] 0.0, 128
    %696 = vxpose.xlu0.b32.cont [10/16] 0.0, 128
    %697 = vxpose.xlu0.b32.cont [11/16] 0.0, 128
    %698 = vxpose.xlu0.b32.cont [12/16] 0.0, 128
    %699 = vxpose.xlu0.b32.cont [13/16] 0.0, 128
    %700 = vxpose.xlu0.b32.cont [14/16] 0.0, 128
    %701 = vxpose.xlu0.b32.cont [15/16] 0.0, 128
    %702 = vxpose.xlu0.b32.end [16/16] 0.0, 128
    %v703 = vpop.trf.xlu0
    %v704 = vpop.trf.xlu0
    %v705 = vpop.trf.xlu0
    %v706 = vpop.trf.xlu0
    %v707 = vpop.trf.xlu0
    %v708 = vpop.trf.xlu0
    %v709 = vpop.trf.xlu0
    %v710 = vpop.trf.xlu0
    %v711 = vpop.trf.xlu0
    %v712 = vpop.trf.xlu0
    %v713 = vpop.trf.xlu0
    %v714 = vpop.trf.xlu0
    %v715 = vpop.trf.xlu0
    %v716 = vpop.trf.xlu0
    %v717 = vpop.trf.xlu0
    %v718 = vpop.trf.xlu0
    %719 = vxpose.xlu0.b32.start [1/16] %v387, 128
    %720 = vxpose.xlu0.b32.cont [2/16] 0.0, 128
    %721 = vxpose.xlu0.b32.cont [3/16] 0.0, 128
    %722 = vxpose.xlu0.b32.cont [4/16] 0.0, 128
    %723 = vxpose.xlu0.b32.cont [5/16] 0.0, 128
    %724 = vxpose.xlu0.b32.cont [6/16] 0.0, 128
    %725 = vxpose.xlu0.b32.cont [7/16] 0.0, 128
    %726 = vxpose.xlu0.b32.cont [8/16] 0.0, 128
    %727 = vxpose.xlu0.b32.cont [9/16] 0.0, 128
    %728 = vxpose.xlu0.b32.cont [10/16] 0.0, 128
    %729 = vxpose.xlu0.b32.cont [11/16] 0.0, 128
    %730 = vxpose.xlu0.b32.cont [12/16] 0.0, 128
    %731 = vxpose.xlu0.b32.cont [13/16] 0.0, 128
    %732 = vxpose.xlu0.b32.cont [14/16] 0.0, 128
    %733 = vxpose.xlu0.b32.cont [15/16] 0.0, 128
    %734 = vxpose.xlu0.b32.end [16/16] 0.0, 128
    %v735 = vpop.trf.xlu0
    %v736 = vpop.trf.xlu0
    %v737 = vpop.trf.xlu0
    %v738 = vpop.trf.xlu0
    %v739 = vpop.trf.xlu0
    %v740 = vpop.trf.xlu0
    %v741 = vpop.trf.xlu0
    %v742 = vpop.trf.xlu0
    %v743 = vpop.trf.xlu0
    %v744 = vpop.trf.xlu0
    %v745 = vpop.trf.xlu0
    %v746 = vpop.trf.xlu0
    %v747 = vpop.trf.xlu0
    %v748 = vpop.trf.xlu0
    %v749 = vpop.trf.xlu0
    %v750 = vpop.trf.xlu0
    %751 = vxpose.xlu0.b32.start [1/16] %v370, 128
    %752 = vxpose.xlu0.b32.cont [2/16] 0.0, 128
    %753 = vxpose.xlu0.b32.cont [3/16] 0.0, 128
    %754 = vxpose.xlu0.b32.cont [4/16] 0.0, 128
    %755 = vxpose.xlu0.b32.cont [5/16] 0.0, 128
    %756 = vxpose.xlu0.b32.cont [6/16] 0.0, 128
    %757 = vxpose.xlu0.b32.cont [7/16] 0.0, 128
    %758 = vxpose.xlu0.b32.cont [8/16] 0.0, 128
    %759 = vxpose.xlu0.b32.cont [9/16] 0.0, 128
    %760 = vxpose.xlu0.b32.cont [10/16] 0.0, 128
    %761 = vxpose.xlu0.b32.cont [11/16] 0.0, 128
    %762 = vxpose.xlu0.b32.cont [12/16] 0.0, 128
    %763 = vxpose.xlu0.b32.cont [13/16] 0.0, 128
    %764 = vxpose.xlu0.b32.cont [14/16] 0.0, 128
    %765 = vxpose.xlu0.b32.cont [15/16] 0.0, 128
    %766 = vxpose.xlu0.b32.end [16/16] 0.0, 128
    %v767 = vpop.trf.xlu0
    %v768 = vpop.trf.xlu0
    %v769 = vpop.trf.xlu0
    %v770 = vpop.trf.xlu0
    %v771 = vpop.trf.xlu0
    %v772 = vpop.trf.xlu0
    %v773 = vpop.trf.xlu0
    %v774 = vpop.trf.xlu0
    %v775 = vpop.trf.xlu0
    %v776 = vpop.trf.xlu0
    %v777 = vpop.trf.xlu0
    %v778 = vpop.trf.xlu0
    %v779 = vpop.trf.xlu0
    %v780 = vpop.trf.xlu0
    %v781 = vpop.trf.xlu0
    %v782 = vpop.trf.xlu0
    %783 = vxpose.xlu0.b32.start [1/16] %v388, 128
    %784 = vxpose.xlu0.b32.cont [2/16] 0.0, 128
    %785 = vxpose.xlu0.b32.cont [3/16] 0.0, 128
    %786 = vxpose.xlu0.b32.cont [4/16] 0.0, 128
    %787 = vxpose.xlu0.b32.cont [5/16] 0.0, 128
    %788 = vxpose.xlu0.b32.cont [6/16] 0.0, 128
    %789 = vxpose.xlu0.b32.cont [7/16] 0.0, 128
    %790 = vxpose.xlu0.b32.cont [8/16] 0.0, 128
    %791 = vxpose.xlu0.b32.cont [9/16] 0.0, 128
    %792 = vxpose.xlu0.b32.cont [10/16] 0.0, 128
    %793 = vxpose.xlu0.b32.cont [11/16] 0.0, 128
    %794 = vxpose.xlu0.b32.cont [12/16] 0.0, 128
    %795 = vxpose.xlu0.b32.cont [13/16] 0.0, 128
    %796 = vxpose.xlu0.b32.cont [14/16] 0.0, 128
    %797 = vxpose.xlu0.b32.cont [15/16] 0.0, 128
    %798 = vxpose.xlu0.b32.end [16/16] 0.0, 128
    %v799 = vpop.trf.xlu0
    %v800 = vpop.trf.xlu0
    %v801 = vpop.trf.xlu0
    %v802 = vpop.trf.xlu0
    %v803 = vpop.trf.xlu0
    %v804 = vpop.trf.xlu0
    %v805 = vpop.trf.xlu0
    %v806 = vpop.trf.xlu0
    %v807 = vpop.trf.xlu0
    %v808 = vpop.trf.xlu0
    %v809 = vpop.trf.xlu0
    %v810 = vpop.trf.xlu0
    %v811 = vpop.trf.xlu0
    %v812 = vpop.trf.xlu0
    %v813 = vpop.trf.xlu0
    %v814 = vpop.trf.xlu0
    %815 = vxpose.xlu0.b32.start [1/16] %v379, 128
    %816 = vxpose.xlu0.b32.cont [2/16] 0.0, 128
    %817 = vxpose.xlu0.b32.cont [3/16] 0.0, 128
    %818 = vxpose.xlu0.b32.cont [4/16] 0.0, 128
    %819 = vxpose.xlu0.b32.cont [5/16] 0.0, 128
    %820 = vxpose.xlu0.b32.cont [6/16] 0.0, 128
    %821 = vxpose.xlu0.b32.cont [7/16] 0.0, 128
    %822 = vxpose.xlu0.b32.cont [8/16] 0.0, 128
    %823 = vxpose.xlu0.b32.cont [9/16] 0.0, 128
    %824 = vxpose.xlu0.b32.cont [10/16] 0.0, 128
    %825 = vxpose.xlu0.b32.cont [11/16] 0.0, 128
    %826 = vxpose.xlu0.b32.cont [12/16] 0.0, 128
    %827 = vxpose.xlu0.b32.cont [13/16] 0.0, 128
    %828 = vxpose.xlu0.b32.cont [14/16] 0.0, 128
    %829 = vxpose.xlu0.b32.cont [15/16] 0.0, 128
    %830 = vxpose.xlu0.b32.end [16/16] 0.0, 128
    %v831 = vpop.trf.xlu0
    %v832 = vpop.trf.xlu0
    %v833 = vpop.trf.xlu0
    %v834 = vpop.trf.xlu0
    %v835 = vpop.trf.xlu0
    %v836 = vpop.trf.xlu0
    %v837 = vpop.trf.xlu0
    %v838 = vpop.trf.xlu0
    %v839 = vpop.trf.xlu0
    %v840 = vpop.trf.xlu0
    %v841 = vpop.trf.xlu0
    %v842 = vpop.trf.xlu0
    %v843 = vpop.trf.xlu0
    %v844 = vpop.trf.xlu0
    %v845 = vpop.trf.xlu0
    %v846 = vpop.trf.xlu0
    %847 = vxpose.xlu0.b32.start [1/16] %v389, 128
    %848 = vxpose.xlu0.b32.cont [2/16] 0.0, 128
    %849 = vxpose.xlu0.b32.cont [3/16] 0.0, 128
    %850 = vxpose.xlu0.b32.cont [4/16] 0.0, 128
    %851 = vxpose.xlu0.b32.cont [5/16] 0.0, 128
    %852 = vxpose.xlu0.b32.cont [6/16] 0.0, 128
    %853 = vxpose.xlu0.b32.cont [7/16] 0.0, 128
    %854 = vxpose.xlu0.b32.cont [8/16] 0.0, 128
    %855 = vxpose.xlu0.b32.cont [9/16] 0.0, 128
    %856 = vxpose.xlu0.b32.cont [10/16] 0.0, 128
    %857 = vxpose.xlu0.b32.cont [11/16] 0.0, 128
    %858 = vxpose.xlu0.b32.cont [12/16] 0.0, 128
    %859 = vxpose.xlu0.b32.cont [13/16] 0.0, 128
    %860 = vxpose.xlu0.b32.cont [14/16] 0.0, 128
    %861 = vxpose.xlu0.b32.cont [15/16] 0.0, 128
    %862 = vxpose.xlu0.b32.end [16/16] 0.0, 128
    %v863 = vpop.trf.xlu0
    %v864 = vpop.trf.xlu0
    %v865 = vpop.trf.xlu0
    %v866 = vpop.trf.xlu0
    %v867 = vpop.trf.xlu0
    %v868 = vpop.trf.xlu0
    %v869 = vpop.trf.xlu0
    %v870 = vpop.trf.xlu0
    %v871 = vpop.trf.xlu0
    %v872 = vpop.trf.xlu0
    %v873 = vpop.trf.xlu0
    %v874 = vpop.trf.xlu0
    %v875 = vpop.trf.xlu0
    %v876 = vpop.trf.xlu0
    %v877 = vpop.trf.xlu0
    %v878 = vpop.trf.xlu0
    %879 = vxpose.xlu0.b32.start [1/16] %v386, 128
    %880 = vxpose.xlu0.b32.cont [2/16] 0.0, 128
    %881 = vxpose.xlu0.b32.cont [3/16] 0.0, 128
    %882 = vxpose.xlu0.b32.cont [4/16] 0.0, 128
    %883 = vxpose.xlu0.b32.cont [5/16] 0.0, 128
    %884 = vxpose.xlu0.b32.cont [6/16] 0.0, 128
    %885 = vxpose.xlu0.b32.cont [7/16] 0.0, 128
    %886 = vxpose.xlu0.b32.cont [8/16] 0.0, 128
    %887 = vxpose.xlu0.b32.cont [9/16] 0.0, 128
    %888 = vxpose.xlu0.b32.cont [10/16] 0.0, 128
    %889 = vxpose.xlu0.b32.cont [11/16] 0.0, 128
    %890 = vxpose.xlu0.b32.cont [12/16] 0.0, 128
    %891 = vxpose.xlu0.b32.cont [13/16] 0.0, 128
    %892 = vxpose.xlu0.b32.cont [14/16] 0.0, 128
    %893 = vxpose.xlu0.b32.cont [15/16] 0.0, 128
    %894 = vxpose.xlu0.b32.end [16/16] 0.0, 128
    %v895 = vpop.trf.xlu0
    %v896 = vpop.trf.xlu0
    %v897 = vpop.trf.xlu0
    %v898 = vpop.trf.xlu0
    %v899 = vpop.trf.xlu0
    %v900 = vpop.trf.xlu0
    %v901 = vpop.trf.xlu0
    %v902 = vpop.trf.xlu0
    %v903 = vpop.trf.xlu0
    %v904 = vpop.trf.xlu0
    %v905 = vpop.trf.xlu0
    %v906 = vpop.trf.xlu0
    %v907 = vpop.trf.xlu0
    %v908 = vpop.trf.xlu0
    %v909 = vpop.trf.xlu0
    %v910 = vpop.trf.xlu0
    %911 = vxpose.xlu0.b32.start [1/16] %v390, 128
    %912 = vxpose.xlu0.b32.cont [2/16] 0.0, 128
    %913 = vxpose.xlu0.b32.cont [3/16] 0.0, 128
    %914 = vxpose.xlu0.b32.cont [4/16] 0.0, 128
    %915 = vxpose.xlu0.b32.cont [5/16] 0.0, 128
    %916 = vxpose.xlu0.b32.cont [6/16] 0.0, 128
    %917 = vxpose.xlu0.b32.cont [7/16] 0.0, 128
    %918 = vxpose.xlu0.b32.cont [8/16] 0.0, 128
    %919 = vxpose.xlu0.b32.cont [9/16] 0.0, 128
    %920 = vxpose.xlu0.b32.cont [10/16] 0.0, 128
    %921 = vxpose.xlu0.b32.cont [11/16] 0.0, 128
    %922 = vxpose.xlu0.b32.cont [12/16] 0.0, 128
    %923 = vxpose.xlu0.b32.cont [13/16] 0.0, 128
    %924 = vxpose.xlu0.b32.cont [14/16] 0.0, 128
    %925 = vxpose.xlu0.b32.cont [15/16] 0.0, 128
    %926 = vxpose.xlu0.b32.end [16/16] 0.0, 128
    %v927 = vpop.trf.xlu0
    %v928 = vpop.trf.xlu0
    %v929 = vpop.trf.xlu0
    %v930 = vpop.trf.xlu0
    %v931 = vpop.trf.xlu0
    %v932 = vpop.trf.xlu0
    %v933 = vpop.trf.xlu0
    %v934 = vpop.trf.xlu0
    %v935 = vpop.trf.xlu0
    %v936 = vpop.trf.xlu0
    %v937 = vpop.trf.xlu0
    %v938 = vpop.trf.xlu0
    %v939 = vpop.trf.xlu0
    %v940 = vpop.trf.xlu0
    %v941 = vpop.trf.xlu0
    %v942 = vpop.trf.xlu0
    %v943 = vcombine.low %v703, %v767
    %v944 = vcombine.high %v703, %v767
    %v946 = vunpack.c.l.s4 1983009808
    %v947 = vunpack.c.0.s8 %v946
    %v948 = vlaneseq
    %v949 = vshrl.u32 %v948, 7
    %v950 = vsub.s32 %v947, %v949
    %v951 = vrot.slane %v943, %v950
    %v953 = vunpack.c.l.s4 1983009808
    %v954 = vunpack.c.0.s8 %v953
    %v955 = vlaneseq
    %v956 = vshrl.u32 %v955, 7
    %v957 = vsub.s32 %v954, %v956
    %v958 = vrot.slane %v944, %v957
    %v959 = vcombine.low %v735, %v799
    %v960 = vcombine.high %v735, %v799
    %v962 = vunpack.c.l.s4 1983009808
    %v963 = vunpack.c.0.s8 %v962
    %v964 = vlaneseq
    %v965 = vshrl.u32 %v964, 7
    %v966 = vsub.s32 %v963, %v965
    %v967 = vrot.slane %v959, %v966
    %v969 = vunpack.c.l.s4 1983009808
    %v970 = vunpack.c.0.s8 %v969
    %v971 = vlaneseq
    %v972 = vshrl.u32 %v971, 7
    %v973 = vsub.s32 %v970, %v972
    %v974 = vrot.slane %v960, %v973
    %v975 = vcombine.low %v831, %v895
    %v976 = vcombine.high %v831, %v895
    %v978 = vunpack.c.l.s4 1983009808
    %v979 = vunpack.c.0.s8 %v978
    %v980 = vlaneseq
    %v981 = vshrl.u32 %v980, 7
    %v982 = vsub.s32 %v979, %v981
    %v983 = vrot.slane %v975, %v982
    %v985 = vunpack.c.l.s4 1983009808
    %v986 = vunpack.c.0.s8 %v985
    %v987 = vlaneseq
    %v988 = vshrl.u32 %v987, 7
    %v989 = vsub.s32 %v986, %v988
    %v990 = vrot.slane %v976, %v989
    %v991 = vcombine.low %v863, %v927
    %v992 = vcombine.high %v863, %v927
    %v994 = vunpack.c.l.s4 1983009808
    %v995 = vunpack.c.0.s8 %v994
    %v996 = vlaneseq
    %v997 = vshrl.u32 %v996, 7
    %v998 = vsub.s32 %v995, %v997
    %v999 = vrot.slane %v991, %v998
    %v1001 = vunpack.c.l.s4 1983009808
    %v1002 = vunpack.c.0.s8 %v1001
    %v1003 = vlaneseq
    %v1004 = vshrl.u32 %v1003, 7
    %v1005 = vsub.s32 %v1002, %v1004
    %v1006 = vrot.slane %v992, %v1005
    %v1007 = vcombine.low %v951, %v967
    %v1008 = vcombine.high %v951, %v967
    %v1010 = vunpack.c.l.s4 1934713408
    %v1011 = vunpack.c.0.s8 %v1010
    %v1012 = vlaneseq
    %v1013 = vshrl.u32 %v1012, 7
    %v1014 = vsub.s32 %v1011, %v1013
    %v1015 = vrot.slane %v1007, %v1014
    %v1017 = vunpack.c.l.s4 1934713408
    %v1018 = vunpack.c.0.s8 %v1017
    %v1019 = vlaneseq
    %v1020 = vshrl.u32 %v1019, 7
    %v1021 = vsub.s32 %v1018, %v1020
    %v1022 = vrot.slane %v1008, %v1021
    %v1023 = vcombine.low %v958, %v974
    %v1024 = vcombine.high %v958, %v974
    %v1026 = vunpack.c.l.s4 1934713408
    %v1027 = vunpack.c.0.s8 %v1026
    %v1028 = vlaneseq
    %v1029 = vshrl.u32 %v1028, 7
    %v1030 = vsub.s32 %v1027, %v1029
    %v1031 = vrot.slane %v1023, %v1030
    %v1033 = vunpack.c.l.s4 1934713408
    %v1034 = vunpack.c.0.s8 %v1033
    %v1035 = vlaneseq
    %v1036 = vshrl.u32 %v1035, 7
    %v1037 = vsub.s32 %v1034, %v1036
    %v1038 = vrot.slane %v1024, %v1037
    %v1039 = vcombine.low %v983, %v999
    %v1040 = vcombine.high %v983, %v999
    %v1042 = vunpack.c.l.s4 1934713408
    %v1043 = vunpack.c.0.s8 %v1042
    %v1044 = vlaneseq
    %v1045 = vshrl.u32 %v1044, 7
    %v1046 = vsub.s32 %v1043, %v1045
    %v1047 = vrot.slane %v1039, %v1046
    %v1049 = vunpack.c.l.s4 1934713408
    %v1050 = vunpack.c.0.s8 %v1049
    %v1051 = vlaneseq
    %v1052 = vshrl.u32 %v1051, 7
    %v1053 = vsub.s32 %v1050, %v1052
    %v1054 = vrot.slane %v1040, %v1053
    %v1055 = vcombine.low %v990, %v1006
    %v1056 = vcombine.high %v990, %v1006
    %v1058 = vunpack.c.l.s4 1934713408
    %v1059 = vunpack.c.0.s8 %v1058
    %v1060 = vlaneseq
    %v1061 = vshrl.u32 %v1060, 7
    %v1062 = vsub.s32 %v1059, %v1061
    %v1063 = vrot.slane %v1055, %v1062
    %v1065 = vunpack.c.l.s4 1934713408
    %v1066 = vunpack.c.0.s8 %v1065
    %v1067 = vlaneseq
    %v1068 = vshrl.u32 %v1067, 7
    %v1069 = vsub.s32 %v1066, %v1068
    %v1070 = vrot.slane %v1056, %v1069
    %v1071 = vcombine.low %v1015, %v1047
    %v1072 = vcombine.high %v1015, %v1047
    %v1073 = vcombine.low %v1022, %v1054
    %v1074 = vcombine.high %v1022, %v1054
    %v1075 = vcombine.low %v1031, %v1063
    %v1076 = vcombine.high %v1031, %v1063
    %v1077 = vcombine.low %v1038, %v1070
    %v1078 = vcombine.high %v1038, %v1070
    %1079 = vxpose.xlu0.b32.start [1/16] %v1071, 128
    %1080 = vxpose.xlu0.b32.cont [2/16] 0.0, 128
    %1081 = vxpose.xlu0.b32.cont [3/16] 0.0, 128
    %1082 = vxpose.xlu0.b32.cont [4/16] 0.0, 128
    %1083 = vxpose.xlu0.b32.cont [5/16] 0.0, 128
    %1084 = vxpose.xlu0.b32.cont [6/16] 0.0, 128
    %1085 = vxpose.xlu0.b32.cont [7/16] 0.0, 128
    %1086 = vxpose.xlu0.b32.cont [8/16] 0.0, 128
    %1087 = vxpose.xlu0.b32.cont [9/16] 0.0, 128
    %1088 = vxpose.xlu0.b32.cont [10/16] 0.0, 128
    %1089 = vxpose.xlu0.b32.cont [11/16] 0.0, 128
    %1090 = vxpose.xlu0.b32.cont [12/16] 0.0, 128
    %1091 = vxpose.xlu0.b32.cont [13/16] 0.0, 128
    %1092 = vxpose.xlu0.b32.cont [14/16] 0.0, 128
    %1093 = vxpose.xlu0.b32.cont [15/16] 0.0, 128
    %1094 = vxpose.xlu0.b32.end [16/16] 0.0, 128
    %v1095 = vpop.trf.xlu0
    %v1096 = vpop.trf.xlu0
    %v1097 = vpop.trf.xlu0
    %v1098 = vpop.trf.xlu0
    %v1099 = vpop.trf.xlu0
    %v1100 = vpop.trf.xlu0
    %v1101 = vpop.trf.xlu0
    %v1102 = vpop.trf.xlu0
    %v1103 = vpop.trf.xlu0
    %v1104 = vpop.trf.xlu0
    %v1105 = vpop.trf.xlu0
    %v1106 = vpop.trf.xlu0
    %v1107 = vpop.trf.xlu0
    %v1108 = vpop.trf.xlu0
    %v1109 = vpop.trf.xlu0
    %v1110 = vpop.trf.xlu0
    %1111 = vxpose.xlu0.b32.start [1/16] %v1072, 128
    %1112 = vxpose.xlu0.b32.cont [2/16] 0.0, 128
    %1113 = vxpose.xlu0.b32.cont [3/16] 0.0, 128
    %1114 = vxpose.xlu0.b32.cont [4/16] 0.0, 128
    %1115 = vxpose.xlu0.b32.cont [5/16] 0.0, 128
    %1116 = vxpose.xlu0.b32.cont [6/16] 0.0, 128
    %1117 = vxpose.xlu0.b32.cont [7/16] 0.0, 128
    %1118 = vxpose.xlu0.b32.cont [8/16] 0.0, 128
    %1119 = vxpose.xlu0.b32.cont [9/16] 0.0, 128
    %1120 = vxpose.xlu0.b32.cont [10/16] 0.0, 128
    %1121 = vxpose.xlu0.b32.cont [11/16] 0.0, 128
    %1122 = vxpose.xlu0.b32.cont [12/16] 0.0, 128
    %1123 = vxpose.xlu0.b32.cont [13/16] 0.0, 128
    %1124 = vxpose.xlu0.b32.cont [14/16] 0.0, 128
    %1125 = vxpose.xlu0.b32.cont [15/16] 0.0, 128
    %1126 = vxpose.xlu0.b32.end [16/16] 0.0, 128
    %v1127 = vpop.trf.xlu0
    %v1128 = vpop.trf.xlu0
    %v1129 = vpop.trf.xlu0
    %v1130 = vpop.trf.xlu0
    %v1131 = vpop.trf.xlu0
    %v1132 = vpop.trf.xlu0
    %v1133 = vpop.trf.xlu0
    %v1134 = vpop.trf.xlu0
    %v1135 = vpop.trf.xlu0
    %v1136 = vpop.trf.xlu0
    %v1137 = vpop.trf.xlu0
    %v1138 = vpop.trf.xlu0
    %v1139 = vpop.trf.xlu0
    %v1140 = vpop.trf.xlu0
    %v1141 = vpop.trf.xlu0
    %v1142 = vpop.trf.xlu0
    %1143 = vxpose.xlu0.b32.start [1/16] %v1073, 128
    %1144 = vxpose.xlu0.b32.cont [2/16] 0.0, 128
    %1145 = vxpose.xlu0.b32.cont [3/16] 0.0, 128
    %1146 = vxpose.xlu0.b32.cont [4/16] 0.0, 128
    %1147 = vxpose.xlu0.b32.cont [5/16] 0.0, 128
    %1148 = vxpose.xlu0.b32.cont [6/16] 0.0, 128
    %1149 = vxpose.xlu0.b32.cont [7/16] 0.0, 128
    %1150 = vxpose.xlu0.b32.cont [8/16] 0.0, 128
    %1151 = vxpose.xlu0.b32.cont [9/16] 0.0, 128
    %1152 = vxpose.xlu0.b32.cont [10/16] 0.0, 128
    %1153 = vxpose.xlu0.b32.cont [11/16] 0.0, 128
    %1154 = vxpose.xlu0.b32.cont [12/16] 0.0, 128
    %1155 = vxpose.xlu0.b32.cont [13/16] 0.0, 128
    %1156 = vxpose.xlu0.b32.cont [14/16] 0.0, 128
    %1157 = vxpose.xlu0.b32.cont [15/16] 0.0, 128
    %1158 = vxpose.xlu0.b32.end [16/16] 0.0, 128
    %v1159 = vpop.trf.xlu0
    %v1160 = vpop.trf.xlu0
    %v1161 = vpop.trf.xlu0
    %v1162 = vpop.trf.xlu0
    %v1163 = vpop.trf.xlu0
    %v1164 = vpop.trf.xlu0
    %v1165 = vpop.trf.xlu0
    %v1166 = vpop.trf.xlu0
    %v1167 = vpop.trf.xlu0
    %v1168 = vpop.trf.xlu0
    %v1169 = vpop.trf.xlu0
    %v1170 = vpop.trf.xlu0
    %v1171 = vpop.trf.xlu0
    %v1172 = vpop.trf.xlu0
    %v1173 = vpop.trf.xlu0
    %v1174 = vpop.trf.xlu0
    %1175 = vxpose.xlu0.b32.start [1/16] %v1074, 128
    %1176 = vxpose.xlu0.b32.cont [2/16] 0.0, 128
    %1177 = vxpose.xlu0.b32.cont [3/16] 0.0, 128
    %1178 = vxpose.xlu0.b32.cont [4/16] 0.0, 128
    %1179 = vxpose.xlu0.b32.cont [5/16] 0.0, 128
    %1180 = vxpose.xlu0.b32.cont [6/16] 0.0, 128
    %1181 = vxpose.xlu0.b32.cont [7/16] 0.0, 128
    %1182 = vxpose.xlu0.b32.cont [8/16] 0.0, 128
    %1183 = vxpose.xlu0.b32.cont [9/16] 0.0, 128
    %1184 = vxpose.xlu0.b32.cont [10/16] 0.0, 128
    %1185 = vxpose.xlu0.b32.cont [11/16] 0.0, 128
    %1186 = vxpose.xlu0.b32.cont [12/16] 0.0, 128
    %1187 = vxpose.xlu0.b32.cont [13/16] 0.0, 128
    %1188 = vxpose.xlu0.b32.cont [14/16] 0.0, 128
    %1189 = vxpose.xlu0.b32.cont [15/16] 0.0, 128
    %1190 = vxpose.xlu0.b32.end [16/16] 0.0, 128
    %v1191 = vpop.trf.xlu0
    %v1192 = vpop.trf.xlu0
    %v1193 = vpop.trf.xlu0
    %v1194 = vpop.trf.xlu0
    %v1195 = vpop.trf.xlu0
    %v1196 = vpop.trf.xlu0
    %v1197 = vpop.trf.xlu0
    %v1198 = vpop.trf.xlu0
    %v1199 = vpop.trf.xlu0
    %v1200 = vpop.trf.xlu0
    %v1201 = vpop.trf.xlu0
    %v1202 = vpop.trf.xlu0
    %v1203 = vpop.trf.xlu0
    %v1204 = vpop.trf.xlu0
    %v1205 = vpop.trf.xlu0
    %v1206 = vpop.trf.xlu0
    %1207 = vxpose.xlu0.b32.start [1/16] %v1075, 128
    %1208 = vxpose.xlu0.b32.cont [2/16] 0.0, 128
    %1209 = vxpose.xlu0.b32.cont [3/16] 0.0, 128
    %1210 = vxpose.xlu0.b32.cont [4/16] 0.0, 128
    %1211 = vxpose.xlu0.b32.cont [5/16] 0.0, 128
    %1212 = vxpose.xlu0.b32.cont [6/16] 0.0, 128
    %1213 = vxpose.xlu0.b32.cont [7/16] 0.0, 128
    %1214 = vxpose.xlu0.b32.cont [8/16] 0.0, 128
    %1215 = vxpose.xlu0.b32.cont [9/16] 0.0, 128
    %1216 = vxpose.xlu0.b32.cont [10/16] 0.0, 128
    %1217 = vxpose.xlu0.b32.cont [11/16] 0.0, 128
    %1218 = vxpose.xlu0.b32.cont [12/16] 0.0, 128
    %1219 = vxpose.xlu0.b32.cont [13/16] 0.0, 128
    %1220 = vxpose.xlu0.b32.cont [14/16] 0.0, 128
    %1221 = vxpose.xlu0.b32.cont [15/16] 0.0, 128
    %1222 = vxpose.xlu0.b32.end [16/16] 0.0, 128
    %v1223 = vpop.trf.xlu0
    %v1224 = vpop.trf.xlu0
    %v1225 = vpop.trf.xlu0
    %v1226 = vpop.trf.xlu0
    %v1227 = vpop.trf.xlu0
    %v1228 = vpop.trf.xlu0
    %v1229 = vpop.trf.xlu0
    %v1230 = vpop.trf.xlu0
    %v1231 = vpop.trf.xlu0
    %v1232 = vpop.trf.xlu0
    %v1233 = vpop.trf.xlu0
    %v1234 = vpop.trf.xlu0
    %v1235 = vpop.trf.xlu0
    %v1236 = vpop.trf.xlu0
    %v1237 = vpop.trf.xlu0
    %v1238 = vpop.trf.xlu0
    %1239 = vxpose.xlu0.b32.start [1/16] %v1076, 128
    %1240 = vxpose.xlu0.b32.cont [2/16] 0.0, 128
    %1241 = vxpose.xlu0.b32.cont [3/16] 0.0, 128
    %1242 = vxpose.xlu0.b32.cont [4/16] 0.0, 128
    %1243 = vxpose.xlu0.b32.cont [5/16] 0.0, 128
    %1244 = vxpose.xlu0.b32.cont [6/16] 0.0, 128
    %1245 = vxpose.xlu0.b32.cont [7/16] 0.0, 128
    %1246 = vxpose.xlu0.b32.cont [8/16] 0.0, 128
    %1247 = vxpose.xlu0.b32.cont [9/16] 0.0, 128
    %1248 = vxpose.xlu0.b32.cont [10/16] 0.0, 128
    %1249 = vxpose.xlu0.b32.cont [11/16] 0.0, 128
    %1250 = vxpose.xlu0.b32.cont [12/16] 0.0, 128
    %1251 = vxpose.xlu0.b32.cont [13/16] 0.0, 128
    %1252 = vxpose.xlu0.b32.cont [14/16] 0.0, 128
    %1253 = vxpose.xlu0.b32.cont [15/16] 0.0, 128
    %1254 = vxpose.xlu0.b32.end [16/16] 0.0, 128
    %v1255 = vpop.trf.xlu0
    %v1256 = vpop.trf.xlu0
    %v1257 = vpop.trf.xlu0
    %v1258 = vpop.trf.xlu0
    %v1259 = vpop.trf.xlu0
    %v1260 = vpop.trf.xlu0
    %v1261 = vpop.trf.xlu0
    %v1262 = vpop.trf.xlu0
    %v1263 = vpop.trf.xlu0
    %v1264 = vpop.trf.xlu0
    %v1265 = vpop.trf.xlu0
    %v1266 = vpop.trf.xlu0
    %v1267 = vpop.trf.xlu0
    %v1268 = vpop.trf.xlu0
    %v1269 = vpop.trf.xlu0
    %v1270 = vpop.trf.xlu0
    %1271 = vxpose.xlu0.b32.start [1/16] %v1077, 128
    %1272 = vxpose.xlu0.b32.cont [2/16] 0.0, 128
    %1273 = vxpose.xlu0.b32.cont [3/16] 0.0, 128
    %1274 = vxpose.xlu0.b32.cont [4/16] 0.0, 128
    %1275 = vxpose.xlu0.b32.cont [5/16] 0.0, 128
    %1276 = vxpose.xlu0.b32.cont [6/16] 0.0, 128
    %1277 = vxpose.xlu0.b32.cont [7/16] 0.0, 128
    %1278 = vxpose.xlu0.b32.cont [8/16] 0.0, 128
    %1279 = vxpose.xlu0.b32.cont [9/16] 0.0, 128
    %1280 = vxpose.xlu0.b32.cont [10/16] 0.0, 128
    %1281 = vxpose.xlu0.b32.cont [11/16] 0.0, 128
    %1282 = vxpose.xlu0.b32.cont [12/16] 0.0, 128
    %1283 = vxpose.xlu0.b32.cont [13/16] 0.0, 128
    %1284 = vxpose.xlu0.b32.cont [14/16] 0.0, 128
    %1285 = vxpose.xlu0.b32.cont [15/16] 0.0, 128
    %1286 = vxpose.xlu0.b32.end [16/16] 0.0, 128
    %v1287 = vpop.trf.xlu0
    %v1288 = vpop.trf.xlu0
    %v1289 = vpop.trf.xlu0
    %v1290 = vpop.trf.xlu0
    %v1291 = vpop.trf.xlu0
    %v1292 = vpop.trf.xlu0
    %v1293 = vpop.trf.xlu0
    %v1294 = vpop.trf.xlu0
    %v1295 = vpop.trf.xlu0
    %v1296 = vpop.trf.xlu0
    %v1297 = vpop.trf.xlu0
    %v1298 = vpop.trf.xlu0
    %v1299 = vpop.trf.xlu0
    %v1300 = vpop.trf.xlu0
    %v1301 = vpop.trf.xlu0
    %v1302 = vpop.trf.xlu0
    %1303 = vxpose.xlu0.b32.start [1/16] %v1078, 128
    %1304 = vxpose.xlu0.b32.cont [2/16] 0.0, 128
    %1305 = vxpose.xlu0.b32.cont [3/16] 0.0, 128
    %1306 = vxpose.xlu0.b32.cont [4/16] 0.0, 128
    %1307 = vxpose.xlu0.b32.cont [5/16] 0.0, 128
    %1308 = vxpose.xlu0.b32.cont [6/16] 0.0, 128
    %1309 = vxpose.xlu0.b32.cont [7/16] 0.0, 128
    %1310 = vxpose.xlu0.b32.cont [8/16] 0.0, 128
    %1311 = vxpose.xlu0.b32.cont [9/16] 0.0, 128
    %1312 = vxpose.xlu0.b32.cont [10/16] 0.0, 128
    %1313 = vxpose.xlu0.b32.cont [11/16] 0.0, 128
    %1314 = vxpose.xlu0.b32.cont [12/16] 0.0, 128
    %1315 = vxpose.xlu0.b32.cont [13/16] 0.0, 128
    %1316 = vxpose.xlu0.b32.cont [14/16] 0.0, 128
    %1317 = vxpose.xlu0.b32.cont [15/16] 0.0, 128
    %1318 = vxpose.xlu0.b32.end [16/16] 0.0, 128
    %v1319 = vpop.trf.xlu0
    %v1320 = vpop.trf.xlu0
    %v1321 = vpop.trf.xlu0
    %v1322 = vpop.trf.xlu0
    %v1323 = vpop.trf.xlu0
    %v1324 = vpop.trf.xlu0
    %v1325 = vpop.trf.xlu0
    %v1326 = vpop.trf.xlu0
    %v1327 = vpop.trf.xlu0
    %v1328 = vpop.trf.xlu0
    %v1329 = vpop.trf.xlu0
    %v1330 = vpop.trf.xlu0
    %v1331 = vpop.trf.xlu0
    %v1332 = vpop.trf.xlu0
    %v1333 = vpop.trf.xlu0
    %v1334 = vpop.trf.xlu0
    %v1335 = vcombine.low %v1095, %v1159
    %v1337 = vunpack.c.l.s4 1983009808
    %v1338 = vunpack.c.0.s8 %v1337
    %v1339 = vlaneseq
    %v1340 = vshrl.u32 %v1339, 7
    %v1341 = vsub.s32 %v1338, %v1340
    %v1342 = vrot.slane %v1335, %v1341
    %v1343 = vcombine.low %v1127, %v1191
    %v1345 = vunpack.c.l.s4 1983009808
    %v1346 = vunpack.c.0.s8 %v1345
    %v1347 = vlaneseq
    %v1348 = vshrl.u32 %v1347, 7
    %v1349 = vsub.s32 %v1346, %v1348
    %v1350 = vrot.slane %v1343, %v1349
    %v1351 = vcombine.low %v1223, %v1287
    %v1353 = vunpack.c.l.s4 1983009808
    %v1354 = vunpack.c.0.s8 %v1353
    %v1355 = vlaneseq
    %v1356 = vshrl.u32 %v1355, 7
    %v1357 = vsub.s32 %v1354, %v1356
    %v1358 = vrot.slane %v1351, %v1357
    %v1359 = vcombine.low %v1255, %v1319
    %v1361 = vunpack.c.l.s4 1983009808
    %v1362 = vunpack.c.0.s8 %v1361
    %v1363 = vlaneseq
    %v1364 = vshrl.u32 %v1363, 7
    %v1365 = vsub.s32 %v1362, %v1364
    %v1366 = vrot.slane %v1359, %v1365
    %v1367 = vcombine.low %v1342, %v1350
    %v1368 = vcombine.high %v1342, %v1350
    %v1370 = vunpack.c.l.s4 1934713408
    %v1371 = vunpack.c.0.s8 %v1370
    %v1372 = vlaneseq
    %v1373 = vshrl.u32 %v1372, 7
    %v1374 = vsub.s32 %v1371, %v1373
    %v1375 = vrot.slane %v1367, %v1374
    %v1377 = vunpack.c.l.s4 1934713408
    %v1378 = vunpack.c.0.s8 %v1377
    %v1379 = vlaneseq
    %v1380 = vshrl.u32 %v1379, 7
    %v1381 = vsub.s32 %v1378, %v1380
    %v1382 = vrot.slane %v1368, %v1381
    %v1383 = vcombine.low %v1358, %v1366
    %v1384 = vcombine.high %v1358, %v1366
    %v1386 = vunpack.c.l.s4 1934713408
    %v1387 = vunpack.c.0.s8 %v1386
    %v1388 = vlaneseq
    %v1389 = vshrl.u32 %v1388, 7
    %v1390 = vsub.s32 %v1387, %v1389
    %v1391 = vrot.slane %v1383, %v1390
    %v1393 = vunpack.c.l.s4 1934713408
    %v1394 = vunpack.c.0.s8 %v1393
    %v1395 = vlaneseq
    %v1396 = vshrl.u32 %v1395, 7
    %v1397 = vsub.s32 %v1394, %v1396
    %v1398 = vrot.slane %v1384, %v1397
    %v1399 = vcombine.low %v1375, %v1391
    %v1400 = vcombine.high %v1375, %v1391
    %v1401 = vcombine.low %v1382, %v1398
    %v1402 = vcombine.high %v1382, %v1398
    %vm1403 = vcmask 64512
    %v1405 = vsel %vm1403, %v683, 0
    %1407 = vmatprep.subr.mxu0 0.0
    %1408 = vmatpush1.msra.mxu0 0.0
    %1409 = vmatprep.subr.mxu0 0.0
    %1410 = vmatpush1.msra.mxu0 0.0
    %1411 = vmatprep.subr.mxu0 0.0
    %1412 = vmatpush1.msra.mxu0 0.0
    %1413 = vmatprep.subr.mxu0 0.0
    %1414 = vmatpush1.msra.mxu0 0.0
    %1415 = vmatprep.subr.mxu0 0.0
    %1416 = vmatpush1.msra.mxu0 0.0
    %1417 = vmatprep.subr.mxu0 0.0
    %1418 = vmatpush1.msra.mxu0 0.0
    %1419 = vmatprep.subr.mxu0 0.0
    %1420 = vmatpush1.msra.mxu0 0.0
    %1421 = vmatprep.subr.mxu0 0.0
    %1422 = vmatpush1.msra.mxu0 0.0
    %1423 = vmatprep.subr.mxu0 0.0
    %1424 = vmatpush1.msra.mxu0 0.0
    %1425 = vmatprep.subr.mxu0 0.0
    %1426 = vmatpush1.msra.mxu0 0.0
    %1427 = vmatprep.subr.mxu0 0.0
    %1428 = vmatpush1.msra.mxu0 0.0
    %1429 = vmatprep.subr.mxu0 0.0
    %1430 = vmatpush1.msra.mxu0 0.0
    %1431 = vmatprep.subr.mxu0 0.0
    %1432 = vmatpush1.msra.mxu0 0.0
    %1433 = vmatprep.subr.mxu0 0.0
    %1434 = vmatpush1.msra.mxu0 0.0
    %1435 = vmatprep.subr.mxu0 0.0
    %1436 = vmatpush1.msra.mxu0 0.0
    %1437 = vmatprep.subr.mxu0 0.0
    %1438 = vmatpush1.msra.mxu0 %v1399
    %1439 = vmatprep.subr.mxu0 0.0
    %1440 = vmatpush2.msra.mxu0 0.0
    %1441 = vmatprep.subr.mxu0 0.0
    %1442 = vmatpush2.msra.mxu0 0.0
    %1443 = vmatprep.subr.mxu0 0.0
    %1444 = vmatpush2.msra.mxu0 0.0
    %1445 = vmatprep.subr.mxu0 0.0
    %1446 = vmatpush2.msra.mxu0 0.0
    %1447 = vmatprep.subr.mxu0 0.0
    %1448 = vmatpush2.msra.mxu0 0.0
    %1449 = vmatprep.subr.mxu0 0.0
    %1450 = vmatpush2.msra.mxu0 0.0
    %1451 = vmatprep.subr.mxu0 0.0
    %1452 = vmatpush2.msra.mxu0 0.0
    %1453 = vmatprep.subr.mxu0 0.0
    %1454 = vmatpush2.msra.mxu0 0.0
    %1455 = vmatprep.subr.mxu0 0.0
    %1456 = vmatpush2.msra.mxu0 0.0
    %1457 = vmatprep.subr.mxu0 0.0
    %1458 = vmatpush2.msra.mxu0 0.0
    %1459 = vmatprep.subr.mxu0 0.0
    %1460 = vmatpush2.msra.mxu0 0.0
    %1461 = vmatprep.subr.mxu0 0.0
    %1462 = vmatpush2.msra.mxu0 0.0
    %1463 = vmatprep.subr.mxu0 0.0
    %1464 = vmatpush2.msra.mxu0 0.0
    %1465 = vmatprep.subr.mxu0 0.0
    %1466 = vmatpush2.msra.mxu0 0.0
    %1467 = vmatprep.subr.mxu0 0.0
    %1468 = vmatpush2.msra.mxu0 0.0
    %1469 = vmatprep.subr.mxu0 0.0
    %1470 = vmatpush2.msra.mxu0 0.0
    %1471 = vmatprep.mubr.f32.mxu0 0.0
    %1472 = vmatmul.mubr.f32.gmra.mxu0 %v1405
    %v1473 = vpop.f32.mrf.mxu0
    %v1474 = vadd.f32 0.0, %v1473
    %v1475 = vpop.f32.mrf.mxu0
    %1476 = vdwg.mxu0
    %v1478 = vsel %vm1403, %v684, 0
    %1480 = vmatprep.subr.mxu0 0.0
    %1481 = vmatpush1.msra.mxu0 0.0
    %1482 = vmatprep.subr.mxu0 0.0
    %1483 = vmatpush1.msra.mxu0 0.0
    %1484 = vmatprep.subr.mxu0 0.0
    %1485 = vmatpush1.msra.mxu0 0.0
    %1486 = vmatprep.subr.mxu0 0.0
    %1487 = vmatpush1.msra.mxu0 0.0
    %1488 = vmatprep.subr.mxu0 0.0
    %1489 = vmatpush1.msra.mxu0 0.0
    %1490 = vmatprep.subr.mxu0 0.0
    %1491 = vmatpush1.msra.mxu0 0.0
    %1492 = vmatprep.subr.mxu0 0.0
    %1493 = vmatpush1.msra.mxu0 0.0
    %1494 = vmatprep.subr.mxu0 0.0
    %1495 = vmatpush1.msra.mxu0 0.0
    %1496 = vmatprep.subr.mxu0 0.0
    %1497 = vmatpush1.msra.mxu0 0.0
    %1498 = vmatprep.subr.mxu0 0.0
    %1499 = vmatpush1.msra.mxu0 0.0
    %1500 = vmatprep.subr.mxu0 0.0
    %1501 = vmatpush1.msra.mxu0 0.0
    %1502 = vmatprep.subr.mxu0 0.0
    %1503 = vmatpush1.msra.mxu0 0.0
    %1504 = vmatprep.subr.mxu0 0.0
    %1505 = vmatpush1.msra.mxu0 0.0
    %1506 = vmatprep.subr.mxu0 0.0
    %1507 = vmatpush1.msra.mxu0 0.0
    %1508 = vmatprep.subr.mxu0 0.0
    %1509 = vmatpush1.msra.mxu0 0.0
    %1510 = vmatprep.subr.mxu0 0.0
    %1511 = vmatpush1.msra.mxu0 %v1400
    %1512 = vmatprep.subr.mxu0 0.0
    %1513 = vmatpush2.msra.mxu0 0.0
    %1514 = vmatprep.subr.mxu0 0.0
    %1515 = vmatpush2.msra.mxu0 0.0
    %1516 = vmatprep.subr.mxu0 0.0
    %1517 = vmatpush2.msra.mxu0 0.0
    %1518 = vmatprep.subr.mxu0 0.0
    %1519 = vmatpush2.msra.mxu0 0.0
    %1520 = vmatprep.subr.mxu0 0.0
    %1521 = vmatpush2.msra.mxu0 0.0
    %1522 = vmatprep.subr.mxu0 0.0
    %1523 = vmatpush2.msra.mxu0 0.0
    %1524 = vmatprep.subr.mxu0 0.0
    %1525 = vmatpush2.msra.mxu0 0.0
    %1526 = vmatprep.subr.mxu0 0.0
    %1527 = vmatpush2.msra.mxu0 0.0
    %1528 = vmatprep.subr.mxu0 0.0
    %1529 = vmatpush2.msra.mxu0 0.0
    %1530 = vmatprep.subr.mxu0 0.0
    %1531 = vmatpush2.msra.mxu0 0.0
    %1532 = vmatprep.subr.mxu0 0.0
    %1533 = vmatpush2.msra.mxu0 0.0
    %1534 = vmatprep.subr.mxu0 0.0
    %1535 = vmatpush2.msra.mxu0 0.0
    %1536 = vmatprep.subr.mxu0 0.0
    %1537 = vmatpush2.msra.mxu0 0.0
    %1538 = vmatprep.subr.mxu0 0.0
    %1539 = vmatpush2.msra.mxu0 0.0
    %1540 = vmatprep.subr.mxu0 0.0
    %1541 = vmatpush2.msra.mxu0 0.0
    %1542 = vmatprep.subr.mxu0 0.0
    %1543 = vmatpush2.msra.mxu0 0.0
    %1544 = vmatprep.mubr.f32.mxu0 0.0
    %1545 = vmatmul.mubr.f32.gmra.mxu0 %v1478
    %v1546 = vpop.f32.mrf.mxu0
    %v1547 = vadd.f32 0.0, %v1546
    %v1548 = vpop.f32.mrf.mxu0
    %1549 = vdwg.mxu0
    %v1551 = vsel %vm1403, %v685, 0
    %1553 = vmatprep.subr.mxu0 0.0
    %1554 = vmatpush1.msra.mxu0 0.0
    %1555 = vmatprep.subr.mxu0 0.0
    %1556 = vmatpush1.msra.mxu0 0.0
    %1557 = vmatprep.subr.mxu0 0.0
    %1558 = vmatpush1.msra.mxu0 0.0
    %1559 = vmatprep.subr.mxu0 0.0
    %1560 = vmatpush1.msra.mxu0 0.0
    %1561 = vmatprep.subr.mxu0 0.0
    %1562 = vmatpush1.msra.mxu0 0.0
    %1563 = vmatprep.subr.mxu0 0.0
    %1564 = vmatpush1.msra.mxu0 0.0
    %1565 = vmatprep.subr.mxu0 0.0
    %1566 = vmatpush1.msra.mxu0 0.0
    %1567 = vmatprep.subr.mxu0 0.0
    %1568 = vmatpush1.msra.mxu0 0.0
    %1569 = vmatprep.subr.mxu0 0.0
    %1570 = vmatpush1.msra.mxu0 0.0
    %1571 = vmatprep.subr.mxu0 0.0
    %1572 = vmatpush1.msra.mxu0 0.0
    %1573 = vmatprep.subr.mxu0 0.0
    %1574 = vmatpush1.msra.mxu0 0.0
    %1575 = vmatprep.subr.mxu0 0.0
    %1576 = vmatpush1.msra.mxu0 0.0
    %1577 = vmatprep.subr.mxu0 0.0
    %1578 = vmatpush1.msra.mxu0 0.0
    %1579 = vmatprep.subr.mxu0 0.0
    %1580 = vmatpush1.msra.mxu0 0.0
    %1581 = vmatprep.subr.mxu0 0.0
    %1582 = vmatpush1.msra.mxu0 0.0
    %1583 = vmatprep.subr.mxu0 0.0
    %1584 = vmatpush1.msra.mxu0 %v1401
    %1585 = vmatprep.subr.mxu0 0.0
    %1586 = vmatpush2.msra.mxu0 0.0
    %1587 = vmatprep.subr.mxu0 0.0
    %1588 = vmatpush2.msra.mxu0 0.0
    %1589 = vmatprep.subr.mxu0 0.0
    %1590 = vmatpush2.msra.mxu0 0.0
    %1591 = vmatprep.subr.mxu0 0.0
    %1592 = vmatpush2.msra.mxu0 0.0
    %1593 = vmatprep.subr.mxu0 0.0
    %1594 = vmatpush2.msra.mxu0 0.0
    %1595 = vmatprep.subr.mxu0 0.0
    %1596 = vmatpush2.msra.mxu0 0.0
    %1597 = vmatprep.subr.mxu0 0.0
    %1598 = vmatpush2.msra.mxu0 0.0
    %1599 = vmatprep.subr.mxu0 0.0
    %1600 = vmatpush2.msra.mxu0 0.0
    %1601 = vmatprep.subr.mxu0 0.0
    %1602 = vmatpush2.msra.mxu0 0.0
    %1603 = vmatprep.subr.mxu0 0.0
    %1604 = vmatpush2.msra.mxu0 0.0
    %1605 = vmatprep.subr.mxu0 0.0
    %1606 = vmatpush2.msra.mxu0 0.0
    %1607 = vmatprep.subr.mxu0 0.0
    %1608 = vmatpush2.msra.mxu0 0.0
    %1609 = vmatprep.subr.mxu0 0.0
    %1610 = vmatpush2.msra.mxu0 0.0
    %1611 = vmatprep.subr.mxu0 0.0
    %1612 = vmatpush2.msra.mxu0 0.0
    %1613 = vmatprep.subr.mxu0 0.0
    %1614 = vmatpush2.msra.mxu0 0.0
    %1615 = vmatprep.subr.mxu0 0.0
    %1616 = vmatpush2.msra.mxu0 0.0
    %1617 = vmatprep.mubr.f32.mxu0 0.0
    %1618 = vmatmul.mubr.f32.gmra.mxu0 %v1551
    %v1619 = vpop.f32.mrf.mxu0
    %v1620 = vadd.f32 0.0, %v1619
    %v1621 = vpop.f32.mrf.mxu0
    %1622 = vdwg.mxu0
    %v1624 = vsel %vm1403, %v686, 0
    %1626 = vmatprep.subr.mxu0 0.0
    %1627 = vmatpush1.msra.mxu0 0.0
    %1628 = vmatprep.subr.mxu0 0.0
    %1629 = vmatpush1.msra.mxu0 0.0
    %1630 = vmatprep.subr.mxu0 0.0
    %1631 = vmatpush1.msra.mxu0 0.0
    %1632 = vmatprep.subr.mxu0 0.0
    %1633 = vmatpush1.msra.mxu0 0.0
    %1634 = vmatprep.subr.mxu0 0.0
    %1635 = vmatpush1.msra.mxu0 0.0
    %1636 = vmatprep.subr.mxu0 0.0
    %1637 = vmatpush1.msra.mxu0 0.0
    %1638 = vmatprep.subr.mxu0 0.0
    %1639 = vmatpush1.msra.mxu0 0.0
    %1640 = vmatprep.subr.mxu0 0.0
    %1641 = vmatpush1.msra.mxu0 0.0
    %1642 = vmatprep.subr.mxu0 0.0
    %1643 = vmatpush1.msra.mxu0 0.0
    %1644 = vmatprep.subr.mxu0 0.0
    %1645 = vmatpush1.msra.mxu0 0.0
    %1646 = vmatprep.subr.mxu0 0.0
    %1647 = vmatpush1.msra.mxu0 0.0
    %1648 = vmatprep.subr.mxu0 0.0
    %1649 = vmatpush1.msra.mxu0 0.0
    %1650 = vmatprep.subr.mxu0 0.0
    %1651 = vmatpush1.msra.mxu0 0.0
    %1652 = vmatprep.subr.mxu0 0.0
    %1653 = vmatpush1.msra.mxu0 0.0
    %1654 = vmatprep.subr.mxu0 0.0
    %1655 = vmatpush1.msra.mxu0 0.0
    %1656 = vmatprep.subr.mxu0 0.0
    %1657 = vmatpush1.msra.mxu0 %v1402
    %1658 = vmatprep.subr.mxu0 0.0
    %1659 = vmatpush2.msra.mxu0 0.0
    %1660 = vmatprep.subr.mxu0 0.0
    %1661 = vmatpush2.msra.mxu0 0.0
    %1662 = vmatprep.subr.mxu0 0.0
    %1663 = vmatpush2.msra.mxu0 0.0
    %1664 = vmatprep.subr.mxu0 0.0
    %1665 = vmatpush2.msra.mxu0 0.0
    %1666 = vmatprep.subr.mxu0 0.0
    %1667 = vmatpush2.msra.mxu0 0.0
    %1668 = vmatprep.subr.mxu0 0.0
    %1669 = vmatpush2.msra.mxu0 0.0
    %1670 = vmatprep.subr.mxu0 0.0
    %1671 = vmatpush2.msra.mxu0 0.0
    %1672 = vmatprep.subr.mxu0 0.0
    %1673 = vmatpush2.msra.mxu0 0.0
    %1674 = vmatprep.subr.mxu0 0.0
    %1675 = vmatpush2.msra.mxu0 0.0
    %1676 = vmatprep.subr.mxu0 0.0
    %1677 = vmatpush2.msra.mxu0 0.0
    %1678 = vmatprep.subr.mxu0 0.0
    %1679 = vmatpush2.msra.mxu0 0.0
    %1680 = vmatprep.subr.mxu0 0.0
    %1681 = vmatpush2.msra.mxu0 0.0
    %1682 = vmatprep.subr.mxu0 0.0
    %1683 = vmatpush2.msra.mxu0 0.0
    %1684 = vmatprep.subr.mxu0 0.0
    %1685 = vmatpush2.msra.mxu0 0.0
    %1686 = vmatprep.subr.mxu0 0.0
    %1687 = vmatpush2.msra.mxu0 0.0
    %1688 = vmatprep.subr.mxu0 0.0
    %1689 = vmatpush2.msra.mxu0 0.0
    %1690 = vmatprep.mubr.f32.mxu0 0.0
    %1691 = vmatmul.mubr.f32.gmra.mxu0 %v1624
    %v1692 = vpop.f32.mrf.mxu0
    %v1693 = vadd.f32 0.0, %v1692
    %v1694 = vpop.f32.mrf.mxu0
    %1695 = vdwg.mxu0
    %v1696 = vmul.f32 %v1474, 0.35355338
    %v1697 = vmul.f32 %v1547, 0.35355338
    %v1698 = vmul.f32 %v1620, 0.35355338
    %v1699 = vmul.f32 %v1693, 0.35355338
    %v1700 = vsel %vm1403, %v1696, -inf
    %1701 = vmax.xlane.f32.xlu0 %v1700
    %v1702 = vpop.xlane.xlu0 %1701
    %v1703 = vsel %vm1403, %v1697, -inf
    %1704 = vmax.xlane.f32.xlu0 %v1703
    %v1705 = vpop.xlane.xlu0 %1704
    %v1706 = vsel %vm1403, %v1698, -inf
    %1707 = vmax.xlane.f32.xlu0 %v1706
    %v1708 = vpop.xlane.xlu0 %1707
    %v1709 = vsel %vm1403, %v1699, -inf
    %1710 = vmax.xlane.f32.xlu0 %v1709
    %v1711 = vpop.xlane.xlu0 %1710
    %v1712 = vsub.f32 %v1696, %v1702
    %v1713 = vsub.f32 %v1697, %v1705
    %v1714 = vsub.f32 %v1698, %v1708
    %v1715 = vsub.f32 %v1699, %v1711
    %v1716 = vmul.f32 %v1712, 1.442695
    %v1717 = vpow.pop %v1716
    %v1718 = vmul.f32 %v1713, 1.442695
    %v1719 = vpow.pop %v1718
    %v1720 = vmul.f32 %v1714, 1.442695
    %v1721 = vpow.pop %v1720
    %v1722 = vmul.f32 %v1715, 1.442695
    %v1723 = vpow.pop %v1722
    %v1724 = vsel %vm1403, %v1717, 0.0
    %1725 = vadd.xlane.f32.xlu0 %v1724
    %v1726 = vpop.xlane.xlu0 %1725
    %v1727 = vsel %vm1403, %v1719, 0.0
    %1728 = vadd.xlane.f32.xlu0 %v1727
    %v1729 = vpop.xlane.xlu0 %1728
    %v1730 = vsel %vm1403, %v1721, 0.0
    %1731 = vadd.xlane.f32.xlu0 %v1730
    %v1732 = vpop.xlane.xlu0 %1731
    %v1733 = vsel %vm1403, %v1723, 0.0
    %1734 = vadd.xlane.f32.xlu0 %v1733
    %v1735 = vpop.xlane.xlu0 %1734
    %v1736 = vrcp.pop %v1726
    %v1737 = vrcp.pop %v1729
    %v1738 = vrcp.pop %v1732
    %v1739 = vrcp.pop %v1735
    %v1740 = vmul.f32 %v1717, %v1736
    %v1741 = vmul.f32 %v1719, %v1737
    %v1742 = vmul.f32 %v1721, %v1738
    %v1743 = vmul.f32 %v1723, %v1739
    %1744 = vxpose.xlu0.b32.start [1/16] %v523, 128
    %1745 = vxpose.xlu0.b32.cont [2/16] 0.0, 128
    %1746 = vxpose.xlu0.b32.cont [3/16] 0.0, 128
    %1747 = vxpose.xlu0.b32.cont [4/16] 0.0, 128
    %1748 = vxpose.xlu0.b32.cont [5/16] 0.0, 128
    %1749 = vxpose.xlu0.b32.cont [6/16] 0.0, 128
    %1750 = vxpose.xlu0.b32.cont [7/16] 0.0, 128
    %1751 = vxpose.xlu0.b32.cont [8/16] 0.0, 128
    %1752 = vxpose.xlu0.b32.cont [9/16] 0.0, 128
    %1753 = vxpose.xlu0.b32.cont [10/16] 0.0, 128
    %1754 = vxpose.xlu0.b32.cont [11/16] 0.0, 128
    %1755 = vxpose.xlu0.b32.cont [12/16] 0.0, 128
    %1756 = vxpose.xlu0.b32.cont [13/16] 0.0, 128
    %1757 = vxpose.xlu0.b32.cont [14/16] 0.0, 128
    %1758 = vxpose.xlu0.b32.cont [15/16] 0.0, 128
    %1759 = vxpose.xlu0.b32.end [16/16] 0.0, 128
    %v1760 = vpop.trf.xlu0
    %v1761 = vpop.trf.xlu0
    %v1762 = vpop.trf.xlu0
    %v1763 = vpop.trf.xlu0
    %v1764 = vpop.trf.xlu0
    %v1765 = vpop.trf.xlu0
    %v1766 = vpop.trf.xlu0
    %v1767 = vpop.trf.xlu0
    %v1768 = vpop.trf.xlu0
    %v1769 = vpop.trf.xlu0
    %v1770 = vpop.trf.xlu0
    %v1771 = vpop.trf.xlu0
    %v1772 = vpop.trf.xlu0
    %v1773 = vpop.trf.xlu0
    %v1774 = vpop.trf.xlu0
    %v1775 = vpop.trf.xlu0
    %1776 = vxpose.xlu0.b32.start [1/16] %v547, 128
    %1777 = vxpose.xlu0.b32.cont [2/16] 0.0, 128
    %1778 = vxpose.xlu0.b32.cont [3/16] 0.0, 128
    %1779 = vxpose.xlu0.b32.cont [4/16] 0.0, 128
    %1780 = vxpose.xlu0.b32.cont [5/16] 0.0, 128
    %1781 = vxpose.xlu0.b32.cont [6/16] 0.0, 128
    %1782 = vxpose.xlu0.b32.cont [7/16] 0.0, 128
    %1783 = vxpose.xlu0.b32.cont [8/16] 0.0, 128
    %1784 = vxpose.xlu0.b32.cont [9/16] 0.0, 128
    %1785 = vxpose.xlu0.b32.cont [10/16] 0.0, 128
    %1786 = vxpose.xlu0.b32.cont [11/16] 0.0, 128
    %1787 = vxpose.xlu0.b32.cont [12/16] 0.0, 128
    %1788 = vxpose.xlu0.b32.cont [13/16] 0.0, 128
    %1789 = vxpose.xlu0.b32.cont [14/16] 0.0, 128
    %1790 = vxpose.xlu0.b32.cont [15/16] 0.0, 128
    %1791 = vxpose.xlu0.b32.end [16/16] 0.0, 128
    %v1792 = vpop.trf.xlu0
    %v1793 = vpop.trf.xlu0
    %v1794 = vpop.trf.xlu0
    %v1795 = vpop.trf.xlu0
    %v1796 = vpop.trf.xlu0
    %v1797 = vpop.trf.xlu0
    %v1798 = vpop.trf.xlu0
    %v1799 = vpop.trf.xlu0
    %v1800 = vpop.trf.xlu0
    %v1801 = vpop.trf.xlu0
    %v1802 = vpop.trf.xlu0
    %v1803 = vpop.trf.xlu0
    %v1804 = vpop.trf.xlu0
    %v1805 = vpop.trf.xlu0
    %v1806 = vpop.trf.xlu0
    %v1807 = vpop.trf.xlu0
    %1808 = vxpose.xlu0.b32.start [1/16] %v530, 128
    %1809 = vxpose.xlu0.b32.cont [2/16] 0.0, 128
    %1810 = vxpose.xlu0.b32.cont [3/16] 0.0, 128
    %1811 = vxpose.xlu0.b32.cont [4/16] 0.0, 128
    %1812 = vxpose.xlu0.b32.cont [5/16] 0.0, 128
    %1813 = vxpose.xlu0.b32.cont [6/16] 0.0, 128
    %1814 = vxpose.xlu0.b32.cont [7/16] 0.0, 128
    %1815 = vxpose.xlu0.b32.cont [8/16] 0.0, 128
    %1816 = vxpose.xlu0.b32.cont [9/16] 0.0, 128
    %1817 = vxpose.xlu0.b32.cont [10/16] 0.0, 128
    %1818 = vxpose.xlu0.b32.cont [11/16] 0.0, 128
    %1819 = vxpose.xlu0.b32.cont [12/16] 0.0, 128
    %1820 = vxpose.xlu0.b32.cont [13/16] 0.0, 128
    %1821 = vxpose.xlu0.b32.cont [14/16] 0.0, 128
    %1822 = vxpose.xlu0.b32.cont [15/16] 0.0, 128
    %1823 = vxpose.xlu0.b32.end [16/16] 0.0, 128
    %v1824 = vpop.trf.xlu0
    %v1825 = vpop.trf.xlu0
    %v1826 = vpop.trf.xlu0
    %v1827 = vpop.trf.xlu0
    %v1828 = vpop.trf.xlu0
    %v1829 = vpop.trf.xlu0
    %v1830 = vpop.trf.xlu0
    %v1831 = vpop.trf.xlu0
    %v1832 = vpop.trf.xlu0
    %v1833 = vpop.trf.xlu0
    %v1834 = vpop.trf.xlu0
    %v1835 = vpop.trf.xlu0
    %v1836 = vpop.trf.xlu0
    %v1837 = vpop.trf.xlu0
    %v1838 = vpop.trf.xlu0
    %v1839 = vpop.trf.xlu0
    %1840 = vxpose.xlu0.b32.start [1/16] %v548, 128
    %1841 = vxpose.xlu0.b32.cont [2/16] 0.0, 128
    %1842 = vxpose.xlu0.b32.cont [3/16] 0.0, 128
    %1843 = vxpose.xlu0.b32.cont [4/16] 0.0, 128
    %1844 = vxpose.xlu0.b32.cont [5/16] 0.0, 128
    %1845 = vxpose.xlu0.b32.cont [6/16] 0.0, 128
    %1846 = vxpose.xlu0.b32.cont [7/16] 0.0, 128
    %1847 = vxpose.xlu0.b32.cont [8/16] 0.0, 128
    %1848 = vxpose.xlu0.b32.cont [9/16] 0.0, 128
    %1849 = vxpose.xlu0.b32.cont [10/16] 0.0, 128
    %1850 = vxpose.xlu0.b32.cont [11/16] 0.0, 128
    %1851 = vxpose.xlu0.b32.cont [12/16] 0.0, 128
    %1852 = vxpose.xlu0.b32.cont [13/16] 0.0, 128
    %1853 = vxpose.xlu0.b32.cont [14/16] 0.0, 128
    %1854 = vxpose.xlu0.b32.cont [15/16] 0.0, 128
    %1855 = vxpose.xlu0.b32.end [16/16] 0.0, 128
    %v1856 = vpop.trf.xlu0
    %v1857 = vpop.trf.xlu0
    %v1858 = vpop.trf.xlu0
    %v1859 = vpop.trf.xlu0
    %v1860 = vpop.trf.xlu0
    %v1861 = vpop.trf.xlu0
    %v1862 = vpop.trf.xlu0
    %v1863 = vpop.trf.xlu0
    %v1864 = vpop.trf.xlu0
    %v1865 = vpop.trf.xlu0
    %v1866 = vpop.trf.xlu0
    %v1867 = vpop.trf.xlu0
    %v1868 = vpop.trf.xlu0
    %v1869 = vpop.trf.xlu0
    %v1870 = vpop.trf.xlu0
    %v1871 = vpop.trf.xlu0
    %1872 = vxpose.xlu0.b32.start [1/16] %v539, 128
    %1873 = vxpose.xlu0.b32.cont [2/16] 0.0, 128
    %1874 = vxpose.xlu0.b32.cont [3/16] 0.0, 128
    %1875 = vxpose.xlu0.b32.cont [4/16] 0.0, 128
    %1876 = vxpose.xlu0.b32.cont [5/16] 0.0, 128
    %1877 = vxpose.xlu0.b32.cont [6/16] 0.0, 128
    %1878 = vxpose.xlu0.b32.cont [7/16] 0.0, 128
    %1879 = vxpose.xlu0.b32.cont [8/16] 0.0, 128
    %1880 = vxpose.xlu0.b32.cont [9/16] 0.0, 128
    %1881 = vxpose.xlu0.b32.cont [10/16] 0.0, 128
    %1882 = vxpose.xlu0.b32.cont [11/16] 0.0, 128
    %1883 = vxpose.xlu0.b32.cont [12/16] 0.0, 128
    %1884 = vxpose.xlu0.b32.cont [13/16] 0.0, 128
    %1885 = vxpose.xlu0.b32.cont [14/16] 0.0, 128
    %1886 = vxpose.xlu0.b32.cont [15/16] 0.0, 128
    %1887 = vxpose.xlu0.b32.end [16/16] 0.0, 128
    %v1888 = vpop.trf.xlu0
    %v1889 = vpop.trf.xlu0
    %v1890 = vpop.trf.xlu0
    %v1891 = vpop.trf.xlu0
    %v1892 = vpop.trf.xlu0
    %v1893 = vpop.trf.xlu0
    %v1894 = vpop.trf.xlu0
    %v1895 = vpop.trf.xlu0
    %v1896 = vpop.trf.xlu0
    %v1897 = vpop.trf.xlu0
    %v1898 = vpop.trf.xlu0
    %v1899 = vpop.trf.xlu0
    %v1900 = vpop.trf.xlu0
    %v1901 = vpop.trf.xlu0
    %v1902 = vpop.trf.xlu0
    %v1903 = vpop.trf.xlu0
    %1904 = vxpose.xlu0.b32.start [1/16] %v549, 128
    %1905 = vxpose.xlu0.b32.cont [2/16] 0.0, 128
    %1906 = vxpose.xlu0.b32.cont [3/16] 0.0, 128
    %1907 = vxpose.xlu0.b32.cont [4/16] 0.0, 128
    %1908 = vxpose.xlu0.b32.cont [5/16] 0.0, 128
    %1909 = vxpose.xlu0.b32.cont [6/16] 0.0, 128
    %1910 = vxpose.xlu0.b32.cont [7/16] 0.0, 128
    %1911 = vxpose.xlu0.b32.cont [8/16] 0.0, 128
    %1912 = vxpose.xlu0.b32.cont [9/16] 0.0, 128
    %1913 = vxpose.xlu0.b32.cont [10/16] 0.0, 128
    %1914 = vxpose.xlu0.b32.cont [11/16] 0.0, 128
    %1915 = vxpose.xlu0.b32.cont [12/16] 0.0, 128
    %1916 = vxpose.xlu0.b32.cont [13/16] 0.0, 128
    %1917 = vxpose.xlu0.b32.cont [14/16] 0.0, 128
    %1918 = vxpose.xlu0.b32.cont [15/16] 0.0, 128
    %1919 = vxpose.xlu0.b32.end [16/16] 0.0, 128
    %v1920 = vpop.trf.xlu0
    %v1921 = vpop.trf.xlu0
    %v1922 = vpop.trf.xlu0
    %v1923 = vpop.trf.xlu0
    %v1924 = vpop.trf.xlu0
    %v1925 = vpop.trf.xlu0
    %v1926 = vpop.trf.xlu0
    %v1927 = vpop.trf.xlu0
    %v1928 = vpop.trf.xlu0
    %v1929 = vpop.trf.xlu0
    %v1930 = vpop.trf.xlu0
    %v1931 = vpop.trf.xlu0
    %v1932 = vpop.trf.xlu0
    %v1933 = vpop.trf.xlu0
    %v1934 = vpop.trf.xlu0
    %v1935 = vpop.trf.xlu0
    %1936 = vxpose.xlu0.b32.start [1/16] %v546, 128
    %1937 = vxpose.xlu0.b32.cont [2/16] 0.0, 128
    %1938 = vxpose.xlu0.b32.cont [3/16] 0.0, 128
    %1939 = vxpose.xlu0.b32.cont [4/16] 0.0, 128
    %1940 = vxpose.xlu0.b32.cont [5/16] 0.0, 128
    %1941 = vxpose.xlu0.b32.cont [6/16] 0.0, 128
    %1942 = vxpose.xlu0.b32.cont [7/16] 0.0, 128
    %1943 = vxpose.xlu0.b32.cont [8/16] 0.0, 128
    %1944 = vxpose.xlu0.b32.cont [9/16] 0.0, 128
    %1945 = vxpose.xlu0.b32.cont [10/16] 0.0, 128
    %1946 = vxpose.xlu0.b32.cont [11/16] 0.0, 128
    %1947 = vxpose.xlu0.b32.cont [12/16] 0.0, 128
    %1948 = vxpose.xlu0.b32.cont [13/16] 0.0, 128
    %1949 = vxpose.xlu0.b32.cont [14/16] 0.0, 128
    %1950 = vxpose.xlu0.b32.cont [15/16] 0.0, 128
    %1951 = vxpose.xlu0.b32.end [16/16] 0.0, 128
    %v1952 = vpop.trf.xlu0
    %v1953 = vpop.trf.xlu0
    %v1954 = vpop.trf.xlu0
    %v1955 = vpop.trf.xlu0
    %v1956 = vpop.trf.xlu0
    %v1957 = vpop.trf.xlu0
    %v1958 = vpop.trf.xlu0
    %v1959 = vpop.trf.xlu0
    %v1960 = vpop.trf.xlu0
    %v1961 = vpop.trf.xlu0
    %v1962 = vpop.trf.xlu0
    %v1963 = vpop.trf.xlu0
    %v1964 = vpop.trf.xlu0
    %v1965 = vpop.trf.xlu0
    %v1966 = vpop.trf.xlu0
    %v1967 = vpop.trf.xlu0
    %1968 = vxpose.xlu0.b32.start [1/16] %v550, 128
    %1969 = vxpose.xlu0.b32.cont [2/16] 0.0, 128
    %1970 = vxpose.xlu0.b32.cont [3/16] 0.0, 128
    %1971 = vxpose.xlu0.b32.cont [4/16] 0.0, 128
    %1972 = vxpose.xlu0.b32.cont [5/16] 0.0, 128
    %1973 = vxpose.xlu0.b32.cont [6/16] 0.0, 128
    %1974 = vxpose.xlu0.b32.cont [7/16] 0.0, 128
    %1975 = vxpose.xlu0.b32.cont [8/16] 0.0, 128
    %1976 = vxpose.xlu0.b32.cont [9/16] 0.0, 128
    %1977 = vxpose.xlu0.b32.cont [10/16] 0.0, 128
    %1978 = vxpose.xlu0.b32.cont [11/16] 0.0, 128
    %1979 = vxpose.xlu0.b32.cont [12/16] 0.0, 128
    %1980 = vxpose.xlu0.b32.cont [13/16] 0.0, 128
    %1981 = vxpose.xlu0.b32.cont [14/16] 0.0, 128
    %1982 = vxpose.xlu0.b32.cont [15/16] 0.0, 128
    %1983 = vxpose.xlu0.b32.end [16/16] 0.0, 128
    %v1984 = vpop.trf.xlu0
    %v1985 = vpop.trf.xlu0
    %v1986 = vpop.trf.xlu0
    %v1987 = vpop.trf.xlu0
    %v1988 = vpop.trf.xlu0
    %v1989 = vpop.trf.xlu0
    %v1990 = vpop.trf.xlu0
    %v1991 = vpop.trf.xlu0
    %v1992 = vpop.trf.xlu0
    %v1993 = vpop.trf.xlu0
    %v1994 = vpop.trf.xlu0
    %v1995 = vpop.trf.xlu0
    %v1996 = vpop.trf.xlu0
    %v1997 = vpop.trf.xlu0
    %v1998 = vpop.trf.xlu0
    %v1999 = vpop.trf.xlu0
    %v2000 = vcombine.low %v1760, %v1824
    %v2001 = vcombine.high %v1760, %v1824
    %v2003 = vunpack.c.l.s4 1983009808
    %v2004 = vunpack.c.0.s8 %v2003
    %v2005 = vlaneseq
    %v2006 = vshrl.u32 %v2005, 7
    %v2007 = vsub.s32 %v2004, %v2006
    %v2008 = vrot.slane %v2000, %v2007
    %v2010 = vunpack.c.l.s4 1983009808
    %v2011 = vunpack.c.0.s8 %v2010
    %v2012 = vlaneseq
    %v2013 = vshrl.u32 %v2012, 7
    %v2014 = vsub.s32 %v2011, %v2013
    %v2015 = vrot.slane %v2001, %v2014
    %v2016 = vcombine.low %v1792, %v1856
    %v2017 = vcombine.high %v1792, %v1856
    %v2019 = vunpack.c.l.s4 1983009808
    %v2020 = vunpack.c.0.s8 %v2019
    %v2021 = vlaneseq
    %v2022 = vshrl.u32 %v2021, 7
    %v2023 = vsub.s32 %v2020, %v2022
    %v2024 = vrot.slane %v2016, %v2023
    %v2026 = vunpack.c.l.s4 1983009808
    %v2027 = vunpack.c.0.s8 %v2026
    %v2028 = vlaneseq
    %v2029 = vshrl.u32 %v2028, 7
    %v2030 = vsub.s32 %v2027, %v2029
    %v2031 = vrot.slane %v2017, %v2030
    %v2032 = vcombine.low %v1888, %v1952
    %v2033 = vcombine.high %v1888, %v1952
    %v2035 = vunpack.c.l.s4 1983009808
    %v2036 = vunpack.c.0.s8 %v2035
    %v2037 = vlaneseq
    %v2038 = vshrl.u32 %v2037, 7
    %v2039 = vsub.s32 %v2036, %v2038
    %v2040 = vrot.slane %v2032, %v2039
    %v2042 = vunpack.c.l.s4 1983009808
    %v2043 = vunpack.c.0.s8 %v2042
    %v2044 = vlaneseq
    %v2045 = vshrl.u32 %v2044, 7
    %v2046 = vsub.s32 %v2043, %v2045
    %v2047 = vrot.slane %v2033, %v2046
    %v2048 = vcombine.low %v1920, %v1984
    %v2049 = vcombine.high %v1920, %v1984
    %v2051 = vunpack.c.l.s4 1983009808
    %v2052 = vunpack.c.0.s8 %v2051
    %v2053 = vlaneseq
    %v2054 = vshrl.u32 %v2053, 7
    %v2055 = vsub.s32 %v2052, %v2054
    %v2056 = vrot.slane %v2048, %v2055
    %v2058 = vunpack.c.l.s4 1983009808
    %v2059 = vunpack.c.0.s8 %v2058
    %v2060 = vlaneseq
    %v2061 = vshrl.u32 %v2060, 7
    %v2062 = vsub.s32 %v2059, %v2061
    %v2063 = vrot.slane %v2049, %v2062
    %v2064 = vcombine.low %v2008, %v2024
    %v2065 = vcombine.high %v2008, %v2024
    %v2067 = vunpack.c.l.s4 1934713408
    %v2068 = vunpack.c.0.s8 %v2067
    %v2069 = vlaneseq
    %v2070 = vshrl.u32 %v2069, 7
    %v2071 = vsub.s32 %v2068, %v2070
    %v2072 = vrot.slane %v2064, %v2071
    %v2074 = vunpack.c.l.s4 1934713408
    %v2075 = vunpack.c.0.s8 %v2074
    %v2076 = vlaneseq
    %v2077 = vshrl.u32 %v2076, 7
    %v2078 = vsub.s32 %v2075, %v2077
    %v2079 = vrot.slane %v2065, %v2078
    %v2080 = vcombine.low %v2015, %v2031
    %v2081 = vcombine.high %v2015, %v2031
    %v2083 = vunpack.c.l.s4 1934713408
    %v2084 = vunpack.c.0.s8 %v2083
    %v2085 = vlaneseq
    %v2086 = vshrl.u32 %v2085, 7
    %v2087 = vsub.s32 %v2084, %v2086
    %v2088 = vrot.slane %v2080, %v2087
    %v2090 = vunpack.c.l.s4 1934713408
    %v2091 = vunpack.c.0.s8 %v2090
    %v2092 = vlaneseq
    %v2093 = vshrl.u32 %v2092, 7
    %v2094 = vsub.s32 %v2091, %v2093
    %v2095 = vrot.slane %v2081, %v2094
    %v2096 = vcombine.low %v2040, %v2056
    %v2097 = vcombine.high %v2040, %v2056
    %v2099 = vunpack.c.l.s4 1934713408
    %v2100 = vunpack.c.0.s8 %v2099
    %v2101 = vlaneseq
    %v2102 = vshrl.u32 %v2101, 7
    %v2103 = vsub.s32 %v2100, %v2102
    %v2104 = vrot.slane %v2096, %v2103
    %v2106 = vunpack.c.l.s4 1934713408
    %v2107 = vunpack.c.0.s8 %v2106
    %v2108 = vlaneseq
    %v2109 = vshrl.u32 %v2108, 7
    %v2110 = vsub.s32 %v2107, %v2109
    %v2111 = vrot.slane %v2097, %v2110
    %v2112 = vcombine.low %v2047, %v2063
    %v2113 = vcombine.high %v2047, %v2063
    %v2115 = vunpack.c.l.s4 1934713408
    %v2116 = vunpack.c.0.s8 %v2115
    %v2117 = vlaneseq
    %v2118 = vshrl.u32 %v2117, 7
    %v2119 = vsub.s32 %v2116, %v2118
    %v2120 = vrot.slane %v2112, %v2119
    %v2122 = vunpack.c.l.s4 1934713408
    %v2123 = vunpack.c.0.s8 %v2122
    %v2124 = vlaneseq
    %v2125 = vshrl.u32 %v2124, 7
    %v2126 = vsub.s32 %v2123, %v2125
    %v2127 = vrot.slane %v2113, %v2126
    %v2128 = vcombine.low %v2072, %v2104
    %v2129 = vcombine.high %v2072, %v2104
    %v2130 = vcombine.low %v2079, %v2111
    %v2131 = vcombine.high %v2079, %v2111
    %v2132 = vcombine.low %v2088, %v2120
    %v2133 = vcombine.high %v2088, %v2120
    %v2134 = vcombine.low %v2095, %v2127
    %v2135 = vcombine.high %v2095, %v2127
    %2136 = vxpose.xlu0.b32.start [1/16] %v2128, 128
    %2137 = vxpose.xlu0.b32.cont [2/16] 0.0, 128
    %2138 = vxpose.xlu0.b32.cont [3/16] 0.0, 128
    %2139 = vxpose.xlu0.b32.cont [4/16] 0.0, 128
    %2140 = vxpose.xlu0.b32.cont [5/16] 0.0, 128
    %2141 = vxpose.xlu0.b32.cont [6/16] 0.0, 128
    %2142 = vxpose.xlu0.b32.cont [7/16] 0.0, 128
    %2143 = vxpose.xlu0.b32.cont [8/16] 0.0, 128
    %2144 = vxpose.xlu0.b32.cont [9/16] 0.0, 128
    %2145 = vxpose.xlu0.b32.cont [10/16] 0.0, 128
    %2146 = vxpose.xlu0.b32.cont [11/16] 0.0, 128
    %2147 = vxpose.xlu0.b32.cont [12/16] 0.0, 128
    %2148 = vxpose.xlu0.b32.cont [13/16] 0.0, 128
    %2149 = vxpose.xlu0.b32.cont [14/16] 0.0, 128
    %2150 = vxpose.xlu0.b32.cont [15/16] 0.0, 128
    %2151 = vxpose.xlu0.b32.end [16/16] 0.0, 128
    %v2152 = vpop.trf.xlu0
    %v2153 = vpop.trf.xlu0
    %v2154 = vpop.trf.xlu0
    %v2155 = vpop.trf.xlu0
    %v2156 = vpop.trf.xlu0
    %v2157 = vpop.trf.xlu0
    %v2158 = vpop.trf.xlu0
    %v2159 = vpop.trf.xlu0
    %v2160 = vpop.trf.xlu0
    %v2161 = vpop.trf.xlu0
    %v2162 = vpop.trf.xlu0
    %v2163 = vpop.trf.xlu0
    %v2164 = vpop.trf.xlu0
    %v2165 = vpop.trf.xlu0
    %v2166 = vpop.trf.xlu0
    %v2167 = vpop.trf.xlu0
    %2168 = vxpose.xlu0.b32.start [1/16] %v2129, 128
    %2169 = vxpose.xlu0.b32.cont [2/16] 0.0, 128
    %2170 = vxpose.xlu0.b32.cont [3/16] 0.0, 128
    %2171 = vxpose.xlu0.b32.cont [4/16] 0.0, 128
    %2172 = vxpose.xlu0.b32.cont [5/16] 0.0, 128
    %2173 = vxpose.xlu0.b32.cont [6/16] 0.0, 128
    %2174 = vxpose.xlu0.b32.cont [7/16] 0.0, 128
    %2175 = vxpose.xlu0.b32.cont [8/16] 0.0, 128
    %2176 = vxpose.xlu0.b32.cont [9/16] 0.0, 128
    %2177 = vxpose.xlu0.b32.cont [10/16] 0.0, 128
    %2178 = vxpose.xlu0.b32.cont [11/16] 0.0, 128
    %2179 = vxpose.xlu0.b32.cont [12/16] 0.0, 128
    %2180 = vxpose.xlu0.b32.cont [13/16] 0.0, 128
    %2181 = vxpose.xlu0.b32.cont [14/16] 0.0, 128
    %2182 = vxpose.xlu0.b32.cont [15/16] 0.0, 128
    %2183 = vxpose.xlu0.b32.end [16/16] 0.0, 128
    %v2184 = vpop.trf.xlu0
    %v2185 = vpop.trf.xlu0
    %v2186 = vpop.trf.xlu0
    %v2187 = vpop.trf.xlu0
    %v2188 = vpop.trf.xlu0
    %v2189 = vpop.trf.xlu0
    %v2190 = vpop.trf.xlu0
    %v2191 = vpop.trf.xlu0
    %v2192 = vpop.trf.xlu0
    %v2193 = vpop.trf.xlu0
    %v2194 = vpop.trf.xlu0
    %v2195 = vpop.trf.xlu0
    %v2196 = vpop.trf.xlu0
    %v2197 = vpop.trf.xlu0
    %v2198 = vpop.trf.xlu0
    %v2199 = vpop.trf.xlu0
    %2200 = vxpose.xlu0.b32.start [1/16] %v2130, 128
    %2201 = vxpose.xlu0.b32.cont [2/16] 0.0, 128
    %2202 = vxpose.xlu0.b32.cont [3/16] 0.0, 128
    %2203 = vxpose.xlu0.b32.cont [4/16] 0.0, 128
    %2204 = vxpose.xlu0.b32.cont [5/16] 0.0, 128
    %2205 = vxpose.xlu0.b32.cont [6/16] 0.0, 128
    %2206 = vxpose.xlu0.b32.cont [7/16] 0.0, 128
    %2207 = vxpose.xlu0.b32.cont [8/16] 0.0, 128
    %2208 = vxpose.xlu0.b32.cont [9/16] 0.0, 128
    %2209 = vxpose.xlu0.b32.cont [10/16] 0.0, 128
    %2210 = vxpose.xlu0.b32.cont [11/16] 0.0, 128
    %2211 = vxpose.xlu0.b32.cont [12/16] 0.0, 128
    %2212 = vxpose.xlu0.b32.cont [13/16] 0.0, 128
    %2213 = vxpose.xlu0.b32.cont [14/16] 0.0, 128
    %2214 = vxpose.xlu0.b32.cont [15/16] 0.0, 128
    %2215 = vxpose.xlu0.b32.end [16/16] 0.0, 128
    %v2216 = vpop.trf.xlu0
    %v2217 = vpop.trf.xlu0
    %v2218 = vpop.trf.xlu0
    %v2219 = vpop.trf.xlu0
    %v2220 = vpop.trf.xlu0
    %v2221 = vpop.trf.xlu0
    %v2222 = vpop.trf.xlu0
    %v2223 = vpop.trf.xlu0
    %v2224 = vpop.trf.xlu0
    %v2225 = vpop.trf.xlu0
    %v2226 = vpop.trf.xlu0
    %v2227 = vpop.trf.xlu0
    %v2228 = vpop.trf.xlu0
    %v2229 = vpop.trf.xlu0
    %v2230 = vpop.trf.xlu0
    %v2231 = vpop.trf.xlu0
    %2232 = vxpose.xlu0.b32.start [1/16] %v2131, 128
    %2233 = vxpose.xlu0.b32.cont [2/16] 0.0, 128
    %2234 = vxpose.xlu0.b32.cont [3/16] 0.0, 128
    %2235 = vxpose.xlu0.b32.cont [4/16] 0.0, 128
    %2236 = vxpose.xlu0.b32.cont [5/16] 0.0, 128
    %2237 = vxpose.xlu0.b32.cont [6/16] 0.0, 128
    %2238 = vxpose.xlu0.b32.cont [7/16] 0.0, 128
    %2239 = vxpose.xlu0.b32.cont [8/16] 0.0, 128
    %2240 = vxpose.xlu0.b32.cont [9/16] 0.0, 128
    %2241 = vxpose.xlu0.b32.cont [10/16] 0.0, 128
    %2242 = vxpose.xlu0.b32.cont [11/16] 0.0, 128
    %2243 = vxpose.xlu0.b32.cont [12/16] 0.0, 128
    %2244 = vxpose.xlu0.b32.cont [13/16] 0.0, 128
    %2245 = vxpose.xlu0.b32.cont [14/16] 0.0, 128
    %2246 = vxpose.xlu0.b32.cont [15/16] 0.0, 128
    %2247 = vxpose.xlu0.b32.end [16/16] 0.0, 128
    %v2248 = vpop.trf.xlu0
    %v2249 = vpop.trf.xlu0
    %v2250 = vpop.trf.xlu0
    %v2251 = vpop.trf.xlu0
    %v2252 = vpop.trf.xlu0
    %v2253 = vpop.trf.xlu0
    %v2254 = vpop.trf.xlu0
    %v2255 = vpop.trf.xlu0
    %v2256 = vpop.trf.xlu0
    %v2257 = vpop.trf.xlu0
    %v2258 = vpop.trf.xlu0
    %v2259 = vpop.trf.xlu0
    %v2260 = vpop.trf.xlu0
    %v2261 = vpop.trf.xlu0
    %v2262 = vpop.trf.xlu0
    %v2263 = vpop.trf.xlu0
    %2264 = vxpose.xlu0.b32.start [1/16] %v2132, 128
    %2265 = vxpose.xlu0.b32.cont [2/16] 0.0, 128
    %2266 = vxpose.xlu0.b32.cont [3/16] 0.0, 128
    %2267 = vxpose.xlu0.b32.cont [4/16] 0.0, 128
    %2268 = vxpose.xlu0.b32.cont [5/16] 0.0, 128
    %2269 = vxpose.xlu0.b32.cont [6/16] 0.0, 128
    %2270 = vxpose.xlu0.b32.cont [7/16] 0.0, 128
    %2271 = vxpose.xlu0.b32.cont [8/16] 0.0, 128
    %2272 = vxpose.xlu0.b32.cont [9/16] 0.0, 128
    %2273 = vxpose.xlu0.b32.cont [10/16] 0.0, 128
    %2274 = vxpose.xlu0.b32.cont [11/16] 0.0, 128
    %2275 = vxpose.xlu0.b32.cont [12/16] 0.0, 128
    %2276 = vxpose.xlu0.b32.cont [13/16] 0.0, 128
    %2277 = vxpose.xlu0.b32.cont [14/16] 0.0, 128
    %2278 = vxpose.xlu0.b32.cont [15/16] 0.0, 128
    %2279 = vxpose.xlu0.b32.end [16/16] 0.0, 128
    %v2280 = vpop.trf.xlu0
    %v2281 = vpop.trf.xlu0
    %v2282 = vpop.trf.xlu0
    %v2283 = vpop.trf.xlu0
    %v2284 = vpop.trf.xlu0
    %v2285 = vpop.trf.xlu0
    %v2286 = vpop.trf.xlu0
    %v2287 = vpop.trf.xlu0
    %v2288 = vpop.trf.xlu0
    %v2289 = vpop.trf.xlu0
    %v2290 = vpop.trf.xlu0
    %v2291 = vpop.trf.xlu0
    %v2292 = vpop.trf.xlu0
    %v2293 = vpop.trf.xlu0
    %v2294 = vpop.trf.xlu0
    %v2295 = vpop.trf.xlu0
    %2296 = vxpose.xlu0.b32.start [1/16] %v2133, 128
    %2297 = vxpose.xlu0.b32.cont [2/16] 0.0, 128
    %2298 = vxpose.xlu0.b32.cont [3/16] 0.0, 128
    %2299 = vxpose.xlu0.b32.cont [4/16] 0.0, 128
    %2300 = vxpose.xlu0.b32.cont [5/16] 0.0, 128
    %2301 = vxpose.xlu0.b32.cont [6/16] 0.0, 128
    %2302 = vxpose.xlu0.b32.cont [7/16] 0.0, 128
    %2303 = vxpose.xlu0.b32.cont [8/16] 0.0, 128
    %2304 = vxpose.xlu0.b32.cont [9/16] 0.0, 128
    %2305 = vxpose.xlu0.b32.cont [10/16] 0.0, 128
    %2306 = vxpose.xlu0.b32.cont [11/16] 0.0, 128
    %2307 = vxpose.xlu0.b32.cont [12/16] 0.0, 128
    %2308 = vxpose.xlu0.b32.cont [13/16] 0.0, 128
    %2309 = vxpose.xlu0.b32.cont [14/16] 0.0, 128
    %2310 = vxpose.xlu0.b32.cont [15/16] 0.0, 128
    %2311 = vxpose.xlu0.b32.end [16/16] 0.0, 128
    %v2312 = vpop.trf.xlu0
    %v2313 = vpop.trf.xlu0
    %v2314 = vpop.trf.xlu0
    %v2315 = vpop.trf.xlu0
    %v2316 = vpop.trf.xlu0
    %v2317 = vpop.trf.xlu0
    %v2318 = vpop.trf.xlu0
    %v2319 = vpop.trf.xlu0
    %v2320 = vpop.trf.xlu0
    %v2321 = vpop.trf.xlu0
    %v2322 = vpop.trf.xlu0
    %v2323 = vpop.trf.xlu0
    %v2324 = vpop.trf.xlu0
    %v2325 = vpop.trf.xlu0
    %v2326 = vpop.trf.xlu0
    %v2327 = vpop.trf.xlu0
    %2328 = vxpose.xlu0.b32.start [1/16] %v2134, 128
    %2329 = vxpose.xlu0.b32.cont [2/16] 0.0, 128
    %2330 = vxpose.xlu0.b32.cont [3/16] 0.0, 128
    %2331 = vxpose.xlu0.b32.cont [4/16] 0.0, 128
    %2332 = vxpose.xlu0.b32.cont [5/16] 0.0, 128
    %2333 = vxpose.xlu0.b32.cont [6/16] 0.0, 128
    %2334 = vxpose.xlu0.b32.cont [7/16] 0.0, 128
    %2335 = vxpose.xlu0.b32.cont [8/16] 0.0, 128
    %2336 = vxpose.xlu0.b32.cont [9/16] 0.0, 128
    %2337 = vxpose.xlu0.b32.cont [10/16] 0.0, 128
    %2338 = vxpose.xlu0.b32.cont [11/16] 0.0, 128
    %2339 = vxpose.xlu0.b32.cont [12/16] 0.0, 128
    %2340 = vxpose.xlu0.b32.cont [13/16] 0.0, 128
    %2341 = vxpose.xlu0.b32.cont [14/16] 0.0, 128
    %2342 = vxpose.xlu0.b32.cont [15/16] 0.0, 128
    %2343 = vxpose.xlu0.b32.end [16/16] 0.0, 128
    %v2344 = vpop.trf.xlu0
    %v2345 = vpop.trf.xlu0
    %v2346 = vpop.trf.xlu0
    %v2347 = vpop.trf.xlu0
    %v2348 = vpop.trf.xlu0
    %v2349 = vpop.trf.xlu0
    %v2350 = vpop.trf.xlu0
    %v2351 = vpop.trf.xlu0
    %v2352 = vpop.trf.xlu0
    %v2353 = vpop.trf.xlu0
    %v2354 = vpop.trf.xlu0
    %v2355 = vpop.trf.xlu0
    %v2356 = vpop.trf.xlu0
    %v2357 = vpop.trf.xlu0
    %v2358 = vpop.trf.xlu0
    %v2359 = vpop.trf.xlu0
    %2360 = vxpose.xlu0.b32.start [1/16] %v2135, 128
    %2361 = vxpose.xlu0.b32.cont [2/16] 0.0, 128
    %2362 = vxpose.xlu0.b32.cont [3/16] 0.0, 128
    %2363 = vxpose.xlu0.b32.cont [4/16] 0.0, 128
    %2364 = vxpose.xlu0.b32.cont [5/16] 0.0, 128
    %2365 = vxpose.xlu0.b32.cont [6/16] 0.0, 128
    %2366 = vxpose.xlu0.b32.cont [7/16] 0.0, 128
    %2367 = vxpose.xlu0.b32.cont [8/16] 0.0, 128
    %2368 = vxpose.xlu0.b32.cont [9/16] 0.0, 128
    %2369 = vxpose.xlu0.b32.cont [10/16] 0.0, 128
    %2370 = vxpose.xlu0.b32.cont [11/16] 0.0, 128
    %2371 = vxpose.xlu0.b32.cont [12/16] 0.0, 128
    %2372 = vxpose.xlu0.b32.cont [13/16] 0.0, 128
    %2373 = vxpose.xlu0.b32.cont [14/16] 0.0, 128
    %2374 = vxpose.xlu0.b32.cont [15/16] 0.0, 128
    %2375 = vxpose.xlu0.b32.end [16/16] 0.0, 128
    %v2376 = vpop.trf.xlu0
    %v2377 = vpop.trf.xlu0
    %v2378 = vpop.trf.xlu0
    %v2379 = vpop.trf.xlu0
    %v2380 = vpop.trf.xlu0
    %v2381 = vpop.trf.xlu0
    %v2382 = vpop.trf.xlu0
    %v2383 = vpop.trf.xlu0
    %v2384 = vpop.trf.xlu0
    %v2385 = vpop.trf.xlu0
    %v2386 = vpop.trf.xlu0
    %v2387 = vpop.trf.xlu0
    %v2388 = vpop.trf.xlu0
    %v2389 = vpop.trf.xlu0
    %v2390 = vpop.trf.xlu0
    %v2391 = vpop.trf.xlu0
    %v2392 = vcombine.low %v2152, %v2216
    %v2394 = vunpack.c.l.s4 1983009808
    %v2395 = vunpack.c.0.s8 %v2394
    %v2396 = vlaneseq
    %v2397 = vshrl.u32 %v2396, 7
    %v2398 = vsub.s32 %v2395, %v2397
    %v2399 = vrot.slane %v2392, %v2398
    %v2400 = vcombine.low %v2184, %v2248
    %v2402 = vunpack.c.l.s4 1983009808
    %v2403 = vunpack.c.0.s8 %v2402
    %v2404 = vlaneseq
    %v2405 = vshrl.u32 %v2404, 7
    %v2406 = vsub.s32 %v2403, %v2405
    %v2407 = vrot.slane %v2400, %v2406
    %v2408 = vcombine.low %v2280, %v2344
    %v2410 = vunpack.c.l.s4 1983009808
    %v2411 = vunpack.c.0.s8 %v2410
    %v2412 = vlaneseq
    %v2413 = vshrl.u32 %v2412, 7
    %v2414 = vsub.s32 %v2411, %v2413
    %v2415 = vrot.slane %v2408, %v2414
    %v2416 = vcombine.low %v2312, %v2376
    %v2418 = vunpack.c.l.s4 1983009808
    %v2419 = vunpack.c.0.s8 %v2418
    %v2420 = vlaneseq
    %v2421 = vshrl.u32 %v2420, 7
    %v2422 = vsub.s32 %v2419, %v2421
    %v2423 = vrot.slane %v2416, %v2422
    %v2424 = vcombine.low %v2399, %v2407
    %v2425 = vcombine.high %v2399, %v2407
    %v2427 = vunpack.c.l.s4 1934713408
    %v2428 = vunpack.c.0.s8 %v2427
    %v2429 = vlaneseq
    %v2430 = vshrl.u32 %v2429, 7
    %v2431 = vsub.s32 %v2428, %v2430
    %v2432 = vrot.slane %v2424, %v2431
    %v2434 = vunpack.c.l.s4 1934713408
    %v2435 = vunpack.c.0.s8 %v2434
    %v2436 = vlaneseq
    %v2437 = vshrl.u32 %v2436, 7
    %v2438 = vsub.s32 %v2435, %v2437
    %v2439 = vrot.slane %v2425, %v2438
    %v2440 = vcombine.low %v2415, %v2423
    %v2441 = vcombine.high %v2415, %v2423
    %v2443 = vunpack.c.l.s4 1934713408
    %v2444 = vunpack.c.0.s8 %v2443
    %v2445 = vlaneseq
    %v2446 = vshrl.u32 %v2445, 7
    %v2447 = vsub.s32 %v2444, %v2446
    %v2448 = vrot.slane %v2440, %v2447
    %v2450 = vunpack.c.l.s4 1934713408
    %v2451 = vunpack.c.0.s8 %v2450
    %v2452 = vlaneseq
    %v2453 = vshrl.u32 %v2452, 7
    %v2454 = vsub.s32 %v2451, %v2453
    %v2455 = vrot.slane %v2441, %v2454
    %v2456 = vcombine.low %v2432, %v2448
    %v2457 = vcombine.high %v2432, %v2448
    %v2458 = vcombine.low %v2439, %v2455
    %v2459 = vcombine.high %v2439, %v2455
    %v2461 = vsel %vm1403, %v2456, 0
    %v2464 = vsel %vm1403, %v1740, 0
    %2466 = vmatprep.subr.mxu0 0.0
    %2467 = vmatpush1.xpose.msra.mxu0 0.0
    %2468 = vmatprep.subr.mxu0 0.0
    %2469 = vmatpush1.xpose.msra.mxu0 0.0
    %2470 = vmatprep.subr.mxu0 0.0
    %2471 = vmatpush1.xpose.msra.mxu0 0.0
    %2472 = vmatprep.subr.mxu0 0.0
    %2473 = vmatpush1.xpose.msra.mxu0 0.0
    %2474 = vmatprep.subr.mxu0 0.0
    %2475 = vmatpush1.xpose.msra.mxu0 0.0
    %2476 = vmatprep.subr.mxu0 0.0
    %2477 = vmatpush1.xpose.msra.mxu0 0.0
    %2478 = vmatprep.subr.mxu0 0.0
    %2479 = vmatpush1.xpose.msra.mxu0 0.0
    %2480 = vmatprep.subr.mxu0 0.0
    %2481 = vmatpush1.xpose.msra.mxu0 0.0
    %2482 = vmatprep.subr.mxu0 0.0
    %2483 = vmatpush1.xpose.msra.mxu0 0.0
    %2484 = vmatprep.subr.mxu0 0.0
    %2485 = vmatpush1.xpose.msra.mxu0 0.0
    %2486 = vmatprep.subr.mxu0 0.0
    %2487 = vmatpush1.xpose.msra.mxu0 0.0
    %2488 = vmatprep.subr.mxu0 0.0
    %2489 = vmatpush1.xpose.msra.mxu0 0.0
    %2490 = vmatprep.subr.mxu0 0.0
    %2491 = vmatpush1.xpose.msra.mxu0 0.0
    %2492 = vmatprep.subr.mxu0 0.0
    %2493 = vmatpush1.xpose.msra.mxu0 0.0
    %2494 = vmatprep.subr.mxu0 0.0
    %2495 = vmatpush1.xpose.msra.mxu0 0.0
    %2496 = vmatprep.subr.mxu0 0.0
    %2497 = vmatpush1.xpose.msra.mxu0 %v2464
    %2498 = vmatprep.subr.mxu0 0.0
    %2499 = vmatpush2.xpose.msra.mxu0 0.0
    %2500 = vmatprep.subr.mxu0 0.0
    %2501 = vmatpush2.xpose.msra.mxu0 0.0
    %2502 = vmatprep.subr.mxu0 0.0
    %2503 = vmatpush2.xpose.msra.mxu0 0.0
    %2504 = vmatprep.subr.mxu0 0.0
    %2505 = vmatpush2.xpose.msra.mxu0 0.0
    %2506 = vmatprep.subr.mxu0 0.0
    %2507 = vmatpush2.xpose.msra.mxu0 0.0
    %2508 = vmatprep.subr.mxu0 0.0
    %2509 = vmatpush2.xpose.msra.mxu0 0.0
    %2510 = vmatprep.subr.mxu0 0.0
    %2511 = vmatpush2.xpose.msra.mxu0 0.0
    %2512 = vmatprep.subr.mxu0 0.0
    %2513 = vmatpush2.xpose.msra.mxu0 0.0
    %2514 = vmatprep.subr.mxu0 0.0
    %2515 = vmatpush2.xpose.msra.mxu0 0.0
    %2516 = vmatprep.subr.mxu0 0.0
    %2517 = vmatpush2.xpose.msra.mxu0 0.0
    %2518 = vmatprep.subr.mxu0 0.0
    %2519 = vmatpush2.xpose.msra.mxu0 0.0
    %2520 = vmatprep.subr.mxu0 0.0
    %2521 = vmatpush2.xpose.msra.mxu0 0.0
    %2522 = vmatprep.subr.mxu0 0.0
    %2523 = vmatpush2.xpose.msra.mxu0 0.0
    %2524 = vmatprep.subr.mxu0 0.0
    %2525 = vmatpush2.xpose.msra.mxu0 0.0
    %2526 = vmatprep.subr.mxu0 0.0
    %2527 = vmatpush2.xpose.msra.mxu0 0.0
    %2528 = vmatprep.subr.mxu0 0.0
    %2529 = vmatpush2.xpose.msra.mxu0 0.0
    %2530 = vmatprep.mubr.f32.mxu0 0.0
    %2531 = vmatmul.mubr.f32.gmra.mxu0 %v2461
    %v2532 = vpop.f32.mrf.mxu0
    %v2533 = vadd.f32 0.0, %v2532
    %v2534 = vpop.f32.mrf.mxu0
    %2535 = vdwg.mxu0
    %v2537 = vsel %vm1403, %v2457, 0
    %v2540 = vsel %vm1403, %v1741, 0
    %2542 = vmatprep.subr.mxu0 0.0
    %2543 = vmatpush1.xpose.msra.mxu0 0.0
    %2544 = vmatprep.subr.mxu0 0.0
    %2545 = vmatpush1.xpose.msra.mxu0 0.0
    %2546 = vmatprep.subr.mxu0 0.0
    %2547 = vmatpush1.xpose.msra.mxu0 0.0
    %2548 = vmatprep.subr.mxu0 0.0
    %2549 = vmatpush1.xpose.msra.mxu0 0.0
    %2550 = vmatprep.subr.mxu0 0.0
    %2551 = vmatpush1.xpose.msra.mxu0 0.0
    %2552 = vmatprep.subr.mxu0 0.0
    %2553 = vmatpush1.xpose.msra.mxu0 0.0
    %2554 = vmatprep.subr.mxu0 0.0
    %2555 = vmatpush1.xpose.msra.mxu0 0.0
    %2556 = vmatprep.subr.mxu0 0.0
    %2557 = vmatpush1.xpose.msra.mxu0 0.0
    %2558 = vmatprep.subr.mxu0 0.0
    %2559 = vmatpush1.xpose.msra.mxu0 0.0
    %2560 = vmatprep.subr.mxu0 0.0
    %2561 = vmatpush1.xpose.msra.mxu0 0.0
    %2562 = vmatprep.subr.mxu0 0.0
    %2563 = vmatpush1.xpose.msra.mxu0 0.0
    %2564 = vmatprep.subr.mxu0 0.0
    %2565 = vmatpush1.xpose.msra.mxu0 0.0
    %2566 = vmatprep.subr.mxu0 0.0
    %2567 = vmatpush1.xpose.msra.mxu0 0.0
    %2568 = vmatprep.subr.mxu0 0.0
    %2569 = vmatpush1.xpose.msra.mxu0 0.0
    %2570 = vmatprep.subr.mxu0 0.0
    %2571 = vmatpush1.xpose.msra.mxu0 0.0
    %2572 = vmatprep.subr.mxu0 0.0
    %2573 = vmatpush1.xpose.msra.mxu0 %v2540
    %2574 = vmatprep.subr.mxu0 0.0
    %2575 = vmatpush2.xpose.msra.mxu0 0.0
    %2576 = vmatprep.subr.mxu0 0.0
    %2577 = vmatpush2.xpose.msra.mxu0 0.0
    %2578 = vmatprep.subr.mxu0 0.0
    %2579 = vmatpush2.xpose.msra.mxu0 0.0
    %2580 = vmatprep.subr.mxu0 0.0
    %2581 = vmatpush2.xpose.msra.mxu0 0.0
    %2582 = vmatprep.subr.mxu0 0.0
    %2583 = vmatpush2.xpose.msra.mxu0 0.0
    %2584 = vmatprep.subr.mxu0 0.0
    %2585 = vmatpush2.xpose.msra.mxu0 0.0
    %2586 = vmatprep.subr.mxu0 0.0
    %2587 = vmatpush2.xpose.msra.mxu0 0.0
    %2588 = vmatprep.subr.mxu0 0.0
    %2589 = vmatpush2.xpose.msra.mxu0 0.0
    %2590 = vmatprep.subr.mxu0 0.0
    %2591 = vmatpush2.xpose.msra.mxu0 0.0
    %2592 = vmatprep.subr.mxu0 0.0
    %2593 = vmatpush2.xpose.msra.mxu0 0.0
    %2594 = vmatprep.subr.mxu0 0.0
    %2595 = vmatpush2.xpose.msra.mxu0 0.0
    %2596 = vmatprep.subr.mxu0 0.0
    %2597 = vmatpush2.xpose.msra.mxu0 0.0
    %2598 = vmatprep.subr.mxu0 0.0
    %2599 = vmatpush2.xpose.msra.mxu0 0.0
    %2600 = vmatprep.subr.mxu0 0.0
    %2601 = vmatpush2.xpose.msra.mxu0 0.0
    %2602 = vmatprep.subr.mxu0 0.0
    %2603 = vmatpush2.xpose.msra.mxu0 0.0
    %2604 = vmatprep.subr.mxu0 0.0
    %2605 = vmatpush2.xpose.msra.mxu0 0.0
    %2606 = vmatprep.mubr.f32.mxu0 0.0
    %2607 = vmatmul.mubr.f32.gmra.mxu0 %v2537
    %v2608 = vpop.f32.mrf.mxu0
    %v2609 = vadd.f32 0.0, %v2608
    %v2610 = vpop.f32.mrf.mxu0
    %2611 = vdwg.mxu0
    %v2613 = vsel %vm1403, %v2458, 0
    %v2616 = vsel %vm1403, %v1742, 0
    %2618 = vmatprep.subr.mxu0 0.0
    %2619 = vmatpush1.xpose.msra.mxu0 0.0
    %2620 = vmatprep.subr.mxu0 0.0
    %2621 = vmatpush1.xpose.msra.mxu0 0.0
    %2622 = vmatprep.subr.mxu0 0.0
    %2623 = vmatpush1.xpose.msra.mxu0 0.0
    %2624 = vmatprep.subr.mxu0 0.0
    %2625 = vmatpush1.xpose.msra.mxu0 0.0
    %2626 = vmatprep.subr.mxu0 0.0
    %2627 = vmatpush1.xpose.msra.mxu0 0.0
    %2628 = vmatprep.subr.mxu0 0.0
    %2629 = vmatpush1.xpose.msra.mxu0 0.0
    %2630 = vmatprep.subr.mxu0 0.0
    %2631 = vmatpush1.xpose.msra.mxu0 0.0
    %2632 = vmatprep.subr.mxu0 0.0
    %2633 = vmatpush1.xpose.msra.mxu0 0.0
    %2634 = vmatprep.subr.mxu0 0.0
    %2635 = vmatpush1.xpose.msra.mxu0 0.0
    %2636 = vmatprep.subr.mxu0 0.0
    %2637 = vmatpush1.xpose.msra.mxu0 0.0
    %2638 = vmatprep.subr.mxu0 0.0
    %2639 = vmatpush1.xpose.msra.mxu0 0.0
    %2640 = vmatprep.subr.mxu0 0.0
    %2641 = vmatpush1.xpose.msra.mxu0 0.0
    %2642 = vmatprep.subr.mxu0 0.0
    %2643 = vmatpush1.xpose.msra.mxu0 0.0
    %2644 = vmatprep.subr.mxu0 0.0
    %2645 = vmatpush1.xpose.msra.mxu0 0.0
    %2646 = vmatprep.subr.mxu0 0.0
    %2647 = vmatpush1.xpose.msra.mxu0 0.0
    %2648 = vmatprep.subr.mxu0 0.0
    %2649 = vmatpush1.xpose.msra.mxu0 %v2616
    %2650 = vmatprep.subr.mxu0 0.0
    %2651 = vmatpush2.xpose.msra.mxu0 0.0
    %2652 = vmatprep.subr.mxu0 0.0
    %2653 = vmatpush2.xpose.msra.mxu0 0.0
    %2654 = vmatprep.subr.mxu0 0.0
    %2655 = vmatpush2.xpose.msra.mxu0 0.0
    %2656 = vmatprep.subr.mxu0 0.0
    %2657 = vmatpush2.xpose.msra.mxu0 0.0
    %2658 = vmatprep.subr.mxu0 0.0
    %2659 = vmatpush2.xpose.msra.mxu0 0.0
    %2660 = vmatprep.subr.mxu0 0.0
    %2661 = vmatpush2.xpose.msra.mxu0 0.0
    %2662 = vmatprep.subr.mxu0 0.0
    %2663 = vmatpush2.xpose.msra.mxu0 0.0
    %2664 = vmatprep.subr.mxu0 0.0
    %2665 = vmatpush2.xpose.msra.mxu0 0.0
    %2666 = vmatprep.subr.mxu0 0.0
    %2667 = vmatpush2.xpose.msra.mxu0 0.0
    %2668 = vmatprep.subr.mxu0 0.0
    %2669 = vmatpush2.xpose.msra.mxu0 0.0
    %2670 = vmatprep.subr.mxu0 0.0
    %2671 = vmatpush2.xpose.msra.mxu0 0.0
    %2672 = vmatprep.subr.mxu0 0.0
    %2673 = vmatpush2.xpose.msra.mxu0 0.0
    %2674 = vmatprep.subr.mxu0 0.0
    %2675 = vmatpush2.xpose.msra.mxu0 0.0
    %2676 = vmatprep.subr.mxu0 0.0
    %2677 = vmatpush2.xpose.msra.mxu0 0.0
    %2678 = vmatprep.subr.mxu0 0.0
    %2679 = vmatpush2.xpose.msra.mxu0 0.0
    %2680 = vmatprep.subr.mxu0 0.0
    %2681 = vmatpush2.xpose.msra.mxu0 0.0
    %2682 = vmatprep.mubr.f32.mxu0 0.0
    %2683 = vmatmul.mubr.f32.gmra.mxu0 %v2613
    %v2684 = vpop.f32.mrf.mxu0
    %v2685 = vadd.f32 0.0, %v2684
    %v2686 = vpop.f32.mrf.mxu0
    %2687 = vdwg.mxu0
    %v2689 = vsel %vm1403, %v2459, 0
    %v2692 = vsel %vm1403, %v1743, 0
    %2694 = vmatprep.subr.mxu0 0.0
    %2695 = vmatpush1.xpose.msra.mxu0 0.0
    %2696 = vmatprep.subr.mxu0 0.0
    %2697 = vmatpush1.xpose.msra.mxu0 0.0
    %2698 = vmatprep.subr.mxu0 0.0
    %2699 = vmatpush1.xpose.msra.mxu0 0.0
    %2700 = vmatprep.subr.mxu0 0.0
    %2701 = vmatpush1.xpose.msra.mxu0 0.0
    %2702 = vmatprep.subr.mxu0 0.0
    %2703 = vmatpush1.xpose.msra.mxu0 0.0
    %2704 = vmatprep.subr.mxu0 0.0
    %2705 = vmatpush1.xpose.msra.mxu0 0.0
    %2706 = vmatprep.subr.mxu0 0.0
    %2707 = vmatpush1.xpose.msra.mxu0 0.0
    %2708 = vmatprep.subr.mxu0 0.0
    %2709 = vmatpush1.xpose.msra.mxu0 0.0
    %2710 = vmatprep.subr.mxu0 0.0
    %2711 = vmatpush1.xpose.msra.mxu0 0.0
    %2712 = vmatprep.subr.mxu0 0.0
    %2713 = vmatpush1.xpose.msra.mxu0 0.0
    %2714 = vmatprep.subr.mxu0 0.0
    %2715 = vmatpush1.xpose.msra.mxu0 0.0
    %2716 = vmatprep.subr.mxu0 0.0
    %2717 = vmatpush1.xpose.msra.mxu0 0.0
    %2718 = vmatprep.subr.mxu0 0.0
    %2719 = vmatpush1.xpose.msra.mxu0 0.0
    %2720 = vmatprep.subr.mxu0 0.0
    %2721 = vmatpush1.xpose.msra.mxu0 0.0
    %2722 = vmatprep.subr.mxu0 0.0
    %2723 = vmatpush1.xpose.msra.mxu0 0.0
    %2724 = vmatprep.subr.mxu0 0.0
    %2725 = vmatpush1.xpose.msra.mxu0 %v2692
    %2726 = vmatprep.subr.mxu0 0.0
    %2727 = vmatpush2.xpose.msra.mxu0 0.0
    %2728 = vmatprep.subr.mxu0 0.0
    %2729 = vmatpush2.xpose.msra.mxu0 0.0
    %2730 = vmatprep.subr.mxu0 0.0
    %2731 = vmatpush2.xpose.msra.mxu0 0.0
    %2732 = vmatprep.subr.mxu0 0.0
    %2733 = vmatpush2.xpose.msra.mxu0 0.0
    %2734 = vmatprep.subr.mxu0 0.0
    %2735 = vmatpush2.xpose.msra.mxu0 0.0
    %2736 = vmatprep.subr.mxu0 0.0
    %2737 = vmatpush2.xpose.msra.mxu0 0.0
    %2738 = vmatprep.subr.mxu0 0.0
    %2739 = vmatpush2.xpose.msra.mxu0 0.0
    %2740 = vmatprep.subr.mxu0 0.0
    %2741 = vmatpush2.xpose.msra.mxu0 0.0
    %2742 = vmatprep.subr.mxu0 0.0
    %2743 = vmatpush2.xpose.msra.mxu0 0.0
    %2744 = vmatprep.subr.mxu0 0.0
    %2745 = vmatpush2.xpose.msra.mxu0 0.0
    %2746 = vmatprep.subr.mxu0 0.0
    %2747 = vmatpush2.xpose.msra.mxu0 0.0
    %2748 = vmatprep.subr.mxu0 0.0
    %2749 = vmatpush2.xpose.msra.mxu0 0.0
    %2750 = vmatprep.subr.mxu0 0.0
    %2751 = vmatpush2.xpose.msra.mxu0 0.0
    %2752 = vmatprep.subr.mxu0 0.0
    %2753 = vmatpush2.xpose.msra.mxu0 0.0
    %2754 = vmatprep.subr.mxu0 0.0
    %2755 = vmatpush2.xpose.msra.mxu0 0.0
    %2756 = vmatprep.subr.mxu0 0.0
    %2757 = vmatpush2.xpose.msra.mxu0 0.0
    %2758 = vmatprep.mubr.f32.mxu0 0.0
    %2759 = vmatmul.mubr.f32.gmra.mxu0 %v2689
    %v2760 = vpop.f32.mrf.mxu0
    %v2761 = vadd.f32 0.0, %v2760
    %v2762 = vpop.f32.mrf.mxu0
    %2763 = vdwg.mxu0
    %2764 = vxpose.xlu0.b32.start [1/16] %v2533, 128
    %2765 = vxpose.xlu0.b32.cont [2/16] 0.0, 128
    %2766 = vxpose.xlu0.b32.cont [3/16] 0.0, 128
    %2767 = vxpose.xlu0.b32.cont [4/16] 0.0, 128
    %2768 = vxpose.xlu0.b32.cont [5/16] 0.0, 128
    %2769 = vxpose.xlu0.b32.cont [6/16] 0.0, 128
    %2770 = vxpose.xlu0.b32.cont [7/16] 0.0, 128
    %2771 = vxpose.xlu0.b32.cont [8/16] 0.0, 128
    %2772 = vxpose.xlu0.b32.cont [9/16] 0.0, 128
    %2773 = vxpose.xlu0.b32.cont [10/16] 0.0, 128
    %2774 = vxpose.xlu0.b32.cont [11/16] 0.0, 128
    %2775 = vxpose.xlu0.b32.cont [12/16] 0.0, 128
    %2776 = vxpose.xlu0.b32.cont [13/16] 0.0, 128
    %2777 = vxpose.xlu0.b32.cont [14/16] 0.0, 128
    %2778 = vxpose.xlu0.b32.cont [15/16] 0.0, 128
    %2779 = vxpose.xlu0.b32.end [16/16] 0.0, 128
    %v2780 = vpop.trf.xlu0
    %v2781 = vpop.trf.xlu0
    %v2782 = vpop.trf.xlu0
    %v2783 = vpop.trf.xlu0
    %v2784 = vpop.trf.xlu0
    %v2785 = vpop.trf.xlu0
    %v2786 = vpop.trf.xlu0
    %v2787 = vpop.trf.xlu0
    %v2788 = vpop.trf.xlu0
    %v2789 = vpop.trf.xlu0
    %v2790 = vpop.trf.xlu0
    %v2791 = vpop.trf.xlu0
    %v2792 = vpop.trf.xlu0
    %v2793 = vpop.trf.xlu0
    %v2794 = vpop.trf.xlu0
    %v2795 = vpop.trf.xlu0
    %2796 = vxpose.xlu0.b32.start [1/16] %v2609, 128
    %2797 = vxpose.xlu0.b32.cont [2/16] 0.0, 128
    %2798 = vxpose.xlu0.b32.cont [3/16] 0.0, 128
    %2799 = vxpose.xlu0.b32.cont [4/16] 0.0, 128
    %2800 = vxpose.xlu0.b32.cont [5/16] 0.0, 128
    %2801 = vxpose.xlu0.b32.cont [6/16] 0.0, 128
    %2802 = vxpose.xlu0.b32.cont [7/16] 0.0, 128
    %2803 = vxpose.xlu0.b32.cont [8/16] 0.0, 128
    %2804 = vxpose.xlu0.b32.cont [9/16] 0.0, 128
    %2805 = vxpose.xlu0.b32.cont [10/16] 0.0, 128
    %2806 = vxpose.xlu0.b32.cont [11/16] 0.0, 128
    %2807 = vxpose.xlu0.b32.cont [12/16] 0.0, 128
    %2808 = vxpose.xlu0.b32.cont [13/16] 0.0, 128
    %2809 = vxpose.xlu0.b32.cont [14/16] 0.0, 128
    %2810 = vxpose.xlu0.b32.cont [15/16] 0.0, 128
    %2811 = vxpose.xlu0.b32.end [16/16] 0.0, 128
    %v2812 = vpop.trf.xlu0
    %v2813 = vpop.trf.xlu0
    %v2814 = vpop.trf.xlu0
    %v2815 = vpop.trf.xlu0
    %v2816 = vpop.trf.xlu0
    %v2817 = vpop.trf.xlu0
    %v2818 = vpop.trf.xlu0
    %v2819 = vpop.trf.xlu0
    %v2820 = vpop.trf.xlu0
    %v2821 = vpop.trf.xlu0
    %v2822 = vpop.trf.xlu0
    %v2823 = vpop.trf.xlu0
    %v2824 = vpop.trf.xlu0
    %v2825 = vpop.trf.xlu0
    %v2826 = vpop.trf.xlu0
    %v2827 = vpop.trf.xlu0
    %2828 = vxpose.xlu0.b32.start [1/16] %v2685, 128
    %2829 = vxpose.xlu0.b32.cont [2/16] 0.0, 128
    %2830 = vxpose.xlu0.b32.cont [3/16] 0.0, 128
    %2831 = vxpose.xlu0.b32.cont [4/16] 0.0, 128
    %2832 = vxpose.xlu0.b32.cont [5/16] 0.0, 128
    %2833 = vxpose.xlu0.b32.cont [6/16] 0.0, 128
    %2834 = vxpose.xlu0.b32.cont [7/16] 0.0, 128
    %2835 = vxpose.xlu0.b32.cont [8/16] 0.0, 128
    %2836 = vxpose.xlu0.b32.cont [9/16] 0.0, 128
    %2837 = vxpose.xlu0.b32.cont [10/16] 0.0, 128
    %2838 = vxpose.xlu0.b32.cont [11/16] 0.0, 128
    %2839 = vxpose.xlu0.b32.cont [12/16] 0.0, 128
    %2840 = vxpose.xlu0.b32.cont [13/16] 0.0, 128
    %2841 = vxpose.xlu0.b32.cont [14/16] 0.0, 128
    %2842 = vxpose.xlu0.b32.cont [15/16] 0.0, 128
    %2843 = vxpose.xlu0.b32.end [16/16] 0.0, 128
    %v2844 = vpop.trf.xlu0
    %v2845 = vpop.trf.xlu0
    %v2846 = vpop.trf.xlu0
    %v2847 = vpop.trf.xlu0
    %v2848 = vpop.trf.xlu0
    %v2849 = vpop.trf.xlu0
    %v2850 = vpop.trf.xlu0
    %v2851 = vpop.trf.xlu0
    %v2852 = vpop.trf.xlu0
    %v2853 = vpop.trf.xlu0
    %v2854 = vpop.trf.xlu0
    %v2855 = vpop.trf.xlu0
    %v2856 = vpop.trf.xlu0
    %v2857 = vpop.trf.xlu0
    %v2858 = vpop.trf.xlu0
    %v2859 = vpop.trf.xlu0
    %2860 = vxpose.xlu0.b32.start [1/16] %v2761, 128
    %2861 = vxpose.xlu0.b32.cont [2/16] 0.0, 128
    %2862 = vxpose.xlu0.b32.cont [3/16] 0.0, 128
    %2863 = vxpose.xlu0.b32.cont [4/16] 0.0, 128
    %2864 = vxpose.xlu0.b32.cont [5/16] 0.0, 128
    %2865 = vxpose.xlu0.b32.cont [6/16] 0.0, 128
    %2866 = vxpose.xlu0.b32.cont [7/16] 0.0, 128
    %2867 = vxpose.xlu0.b32.cont [8/16] 0.0, 128
    %2868 = vxpose.xlu0.b32.cont [9/16] 0.0, 128
    %2869 = vxpose.xlu0.b32.cont [10/16] 0.0, 128
    %2870 = vxpose.xlu0.b32.cont [11/16] 0.0, 128
    %2871 = vxpose.xlu0.b32.cont [12/16] 0.0, 128
    %2872 = vxpose.xlu0.b32.cont [13/16] 0.0, 128
    %2873 = vxpose.xlu0.b32.cont [14/16] 0.0, 128
    %2874 = vxpose.xlu0.b32.cont [15/16] 0.0, 128
    %2875 = vxpose.xlu0.b32.end [16/16] 0.0, 128
    %v2876 = vpop.trf.xlu0
    %v2877 = vpop.trf.xlu0
    %v2878 = vpop.trf.xlu0
    %v2879 = vpop.trf.xlu0
    %v2880 = vpop.trf.xlu0
    %v2881 = vpop.trf.xlu0
    %v2882 = vpop.trf.xlu0
    %v2883 = vpop.trf.xlu0
    %v2884 = vpop.trf.xlu0
    %v2885 = vpop.trf.xlu0
    %v2886 = vpop.trf.xlu0
    %v2887 = vpop.trf.xlu0
    %v2888 = vpop.trf.xlu0
    %v2889 = vpop.trf.xlu0
    %v2890 = vpop.trf.xlu0
    %v2891 = vpop.trf.xlu0
    %v2892 = vcombine.low %v2780, %v2844
    %v2893 = vcombine.high %v2780, %v2844
    %v2895 = vunpack.c.l.s4 1983009808
    %v2896 = vunpack.c.0.s8 %v2895
    %v2897 = vlaneseq
    %v2898 = vshrl.u32 %v2897, 7
    %v2899 = vsub.s32 %v2896, %v2898
    %v2900 = vrot.slane %v2892, %v2899
    %v2902 = vunpack.c.l.s4 1983009808
    %v2903 = vunpack.c.0.s8 %v2902
    %v2904 = vlaneseq
    %v2905 = vshrl.u32 %v2904, 7
    %v2906 = vsub.s32 %v2903, %v2905
    %v2907 = vrot.slane %v2893, %v2906
    %v2908 = vcombine.low %v2812, %v2876
    %v2909 = vcombine.high %v2812, %v2876
    %v2911 = vunpack.c.l.s4 1983009808
    %v2912 = vunpack.c.0.s8 %v2911
    %v2913 = vlaneseq
    %v2914 = vshrl.u32 %v2913, 7
    %v2915 = vsub.s32 %v2912, %v2914
    %v2916 = vrot.slane %v2908, %v2915
    %v2918 = vunpack.c.l.s4 1983009808
    %v2919 = vunpack.c.0.s8 %v2918
    %v2920 = vlaneseq
    %v2921 = vshrl.u32 %v2920, 7
    %v2922 = vsub.s32 %v2919, %v2921
    %v2923 = vrot.slane %v2909, %v2922
    %v2924 = vcombine.low %v2900, %v2916
    %v2925 = vcombine.high %v2900, %v2916
    %v2927 = vunpack.c.l.s4 1934713408
    %v2928 = vunpack.c.0.s8 %v2927
    %v2929 = vlaneseq
    %v2930 = vshrl.u32 %v2929, 7
    %v2931 = vsub.s32 %v2928, %v2930
    %v2932 = vrot.slane %v2924, %v2931
    %v2934 = vunpack.c.l.s4 1934713408
    %v2935 = vunpack.c.0.s8 %v2934
    %v2936 = vlaneseq
    %v2937 = vshrl.u32 %v2936, 7
    %v2938 = vsub.s32 %v2935, %v2937
    %v2939 = vrot.slane %v2925, %v2938
    %v2940 = vcombine.low %v2907, %v2923
    %v2941 = vcombine.high %v2907, %v2923
    %v2943 = vunpack.c.l.s4 1934713408
    %v2944 = vunpack.c.0.s8 %v2943
    %v2945 = vlaneseq
    %v2946 = vshrl.u32 %v2945, 7
    %v2947 = vsub.s32 %v2944, %v2946
    %v2948 = vrot.slane %v2940, %v2947
    %v2950 = vunpack.c.l.s4 1934713408
    %v2951 = vunpack.c.0.s8 %v2950
    %v2952 = vlaneseq
    %v2953 = vshrl.u32 %v2952, 7
    %v2954 = vsub.s32 %v2951, %v2953
    %v2955 = vrot.slane %v2941, %v2954
    %v2956 = vcombine.high %v2932, 0.0
    %v2957 = vcombine.high %v2939, 0.0
    %v2958 = vcombine.high %v2948, 0.0
    %v2959 = vcombine.high %v2955, 0.0
    %v2960 = vcombine.low %v2932, %v2939
    %v2962 = vunpack.c.l.s4 1983009808
    %v2963 = vunpack.c.0.s8 %v2962
    %v2964 = vlaneseq
    %v2965 = vshrl.u32 %v2964, 7
    %v2966 = vsub.s32 %v2963, %v2965
    %v2967 = vrot.slane %v2960, %v2966
    %v2968 = vcombine.low %v2956, %v2957
    %v2970 = vunpack.c.l.s4 1983009808
    %v2971 = vunpack.c.0.s8 %v2970
    %v2972 = vlaneseq
    %v2973 = vshrl.u32 %v2972, 7
    %v2974 = vsub.s32 %v2971, %v2973
    %v2975 = vrot.slane %v2968, %v2974
    %v2976 = vcombine.low %v2948, %v2955
    %v2978 = vunpack.c.l.s4 1983009808
    %v2979 = vunpack.c.0.s8 %v2978
    %v2980 = vlaneseq
    %v2981 = vshrl.u32 %v2980, 7
    %v2982 = vsub.s32 %v2979, %v2981
    %v2983 = vrot.slane %v2976, %v2982
    %v2984 = vcombine.low %v2958, %v2959
    %v2986 = vunpack.c.l.s4 1983009808
    %v2987 = vunpack.c.0.s8 %v2986
    %v2988 = vlaneseq
    %v2989 = vshrl.u32 %v2988, 7
    %v2990 = vsub.s32 %v2987, %v2989
    %v2991 = vrot.slane %v2984, %v2990
    %v2992 = vcombine.low %v2967, %v2975
    %v2993 = vcombine.high %v2967, %v2975
    %v2995 = vunpack.c.l.s4 1934713408
    %v2996 = vunpack.c.0.s8 %v2995
    %v2997 = vlaneseq
    %v2998 = vshrl.u32 %v2997, 7
    %v2999 = vsub.s32 %v2996, %v2998
    %v3000 = vrot.slane %v2992, %v2999
    %v3002 = vunpack.c.l.s4 1934713408
    %v3003 = vunpack.c.0.s8 %v3002
    %v3004 = vlaneseq
    %v3005 = vshrl.u32 %v3004, 7
    %v3006 = vsub.s32 %v3003, %v3005
    %v3007 = vrot.slane %v2993, %v3006
    %v3008 = vcombine.low %v2983, %v2991
    %v3009 = vcombine.high %v2983, %v2991
    %v3011 = vunpack.c.l.s4 1934713408
    %v3012 = vunpack.c.0.s8 %v3011
    %v3013 = vlaneseq
    %v3014 = vshrl.u32 %v3013, 7
    %v3015 = vsub.s32 %v3012, %v3014
    %v3016 = vrot.slane %v3008, %v3015
    %v3018 = vunpack.c.l.s4 1934713408
    %v3019 = vunpack.c.0.s8 %v3018
    %v3020 = vlaneseq
    %v3021 = vshrl.u32 %v3020, 7
    %v3022 = vsub.s32 %v3019, %v3021
    %v3023 = vrot.slane %v3009, %v3022
    %v3024 = vcombine.low %v3000, %v3016
    %v3025 = vcombine.high %v3000, %v3016
    %v3026 = vcombine.low %v3007, %v3023
    %v3027 = vcombine.high %v3007, %v3023
    %3029 = vrot.lane.b32.xlu0 %v3025, 8
    %v3030 = vpop.permute.xlu0 %3029
    %3033 = vrot.lane.b32.xlu0 %v3026, 16
    %v3034 = vpop.permute.xlu0 %3033
    %3037 = vrot.lane.b32.xlu0 %v3027, 24
    %v3038 = vpop.permute.xlu0 %3037
    %v3040 = vsel %vm1403, %v3024, %v3030
    %vm3041 = vcmask 130048
    %v3042 = vsel %vm3041, %v3040, %v3034
    %vm3043 = vcmask 195584
    %v3044 = vsel %vm3043, %v3042, %v3038
    %v3045 = vcombine.low %v271, %v278
    %v3047 = vunpack.c.l.s4 1983009808
    %v3048 = vunpack.c.0.s8 %v3047
    %v3049 = vlaneseq
    %v3050 = vshrl.u32 %v3049, 7
    %v3051 = vsub.s32 %v3048, %v3050
    %v3052 = vrot.slane %v3045, %v3051
    %v3053 = vcombine.low %v295, %v296
    %v3055 = vunpack.c.l.s4 1983009808
    %v3056 = vunpack.c.0.s8 %v3055
    %v3057 = vlaneseq
    %v3058 = vshrl.u32 %v3057, 7
    %v3059 = vsub.s32 %v3056, %v3058
    %v3060 = vrot.slane %v3053, %v3059
    %v3061 = vcombine.low %v287, %v294
    %v3063 = vunpack.c.l.s4 1983009808
    %v3064 = vunpack.c.0.s8 %v3063
    %v3065 = vlaneseq
    %v3066 = vshrl.u32 %v3065, 7
    %v3067 = vsub.s32 %v3064, %v3066
    %v3068 = vrot.slane %v3061, %v3067
    %v3069 = vcombine.low %v297, %v298
    %v3071 = vunpack.c.l.s4 1983009808
    %v3072 = vunpack.c.0.s8 %v3071
    %v3073 = vlaneseq
    %v3074 = vshrl.u32 %v3073, 7
    %v3075 = vsub.s32 %v3072, %v3074
    %v3076 = vrot.slane %v3069, %v3075
    %v3077 = vcombine.low %v3052, %v3060
    %v3078 = vcombine.high %v3052, %v3060
    %v3080 = vunpack.c.l.s4 1934713408
    %v3081 = vunpack.c.0.s8 %v3080
    %v3082 = vlaneseq
    %v3083 = vshrl.u32 %v3082, 7
    %v3084 = vsub.s32 %v3081, %v3083
    %v3085 = vrot.slane %v3077, %v3084
    %v3087 = vunpack.c.l.s4 1934713408
    %v3088 = vunpack.c.0.s8 %v3087
    %v3089 = vlaneseq
    %v3090 = vshrl.u32 %v3089, 7
    %v3091 = vsub.s32 %v3088, %v3090
    %v3092 = vrot.slane %v3078, %v3091
    %v3093 = vcombine.low %v3068, %v3076
    %v3094 = vcombine.high %v3068, %v3076
    %v3096 = vunpack.c.l.s4 1934713408
    %v3097 = vunpack.c.0.s8 %v3096
    %v3098 = vlaneseq
    %v3099 = vshrl.u32 %v3098, 7
    %v3100 = vsub.s32 %v3097, %v3099
    %v3101 = vrot.slane %v3093, %v3100
    %v3103 = vunpack.c.l.s4 1934713408
    %v3104 = vunpack.c.0.s8 %v3103
    %v3105 = vlaneseq
    %v3106 = vshrl.u32 %v3105, 7
    %v3107 = vsub.s32 %v3104, %v3106
    %v3108 = vrot.slane %v3094, %v3107
    %v3109 = vcombine.low %v3085, %v3101
    %v3110 = vcombine.high %v3085, %v3101
    %v3111 = vcombine.low %v3092, %v3108
    %v3112 = vcombine.high %v3092, %v3108
    %3113 = vxpose.xlu0.b32.start [1/16] %v431, 128
    %3114 = vxpose.xlu0.b32.cont [2/16] 0.0, 128
    %3115 = vxpose.xlu0.b32.cont [3/16] 0.0, 128
    %3116 = vxpose.xlu0.b32.cont [4/16] 0.0, 128
    %3117 = vxpose.xlu0.b32.cont [5/16] 0.0, 128
    %3118 = vxpose.xlu0.b32.cont [6/16] 0.0, 128
    %3119 = vxpose.xlu0.b32.cont [7/16] 0.0, 128
    %3120 = vxpose.xlu0.b32.cont [8/16] 0.0, 128
    %3121 = vxpose.xlu0.b32.cont [9/16] 0.0, 128
    %3122 = vxpose.xlu0.b32.cont [10/16] 0.0, 128
    %3123 = vxpose.xlu0.b32.cont [11/16] 0.0, 128
    %3124 = vxpose.xlu0.b32.cont [12/16] 0.0, 128
    %3125 = vxpose.xlu0.b32.cont [13/16] 0.0, 128
    %3126 = vxpose.xlu0.b32.cont [14/16] 0.0, 128
    %3127 = vxpose.xlu0.b32.cont [15/16] 0.0, 128
    %3128 = vxpose.xlu0.b32.end [16/16] 0.0, 128
    %v3129 = vpop.trf.xlu0
    %v3130 = vpop.trf.xlu0
    %v3131 = vpop.trf.xlu0
    %v3132 = vpop.trf.xlu0
    %v3133 = vpop.trf.xlu0
    %v3134 = vpop.trf.xlu0
    %v3135 = vpop.trf.xlu0
    %v3136 = vpop.trf.xlu0
    %v3137 = vpop.trf.xlu0
    %v3138 = vpop.trf.xlu0
    %v3139 = vpop.trf.xlu0
    %v3140 = vpop.trf.xlu0
    %v3141 = vpop.trf.xlu0
    %v3142 = vpop.trf.xlu0
    %v3143 = vpop.trf.xlu0
    %v3144 = vpop.trf.xlu0
    %3145 = vxpose.xlu0.b32.start [1/16] %v455, 128
    %3146 = vxpose.xlu0.b32.cont [2/16] 0.0, 128
    %3147 = vxpose.xlu0.b32.cont [3/16] 0.0, 128
    %3148 = vxpose.xlu0.b32.cont [4/16] 0.0, 128
    %3149 = vxpose.xlu0.b32.cont [5/16] 0.0, 128
    %3150 = vxpose.xlu0.b32.cont [6/16] 0.0, 128
    %3151 = vxpose.xlu0.b32.cont [7/16] 0.0, 128
    %3152 = vxpose.xlu0.b32.cont [8/16] 0.0, 128
    %3153 = vxpose.xlu0.b32.cont [9/16] 0.0, 128
    %3154 = vxpose.xlu0.b32.cont [10/16] 0.0, 128
    %3155 = vxpose.xlu0.b32.cont [11/16] 0.0, 128
    %3156 = vxpose.xlu0.b32.cont [12/16] 0.0, 128
    %3157 = vxpose.xlu0.b32.cont [13/16] 0.0, 128
    %3158 = vxpose.xlu0.b32.cont [14/16] 0.0, 128
    %3159 = vxpose.xlu0.b32.cont [15/16] 0.0, 128
    %3160 = vxpose.xlu0.b32.end [16/16] 0.0, 128
    %v3161 = vpop.trf.xlu0
    %v3162 = vpop.trf.xlu0
    %v3163 = vpop.trf.xlu0
    %v3164 = vpop.trf.xlu0
    %v3165 = vpop.trf.xlu0
    %v3166 = vpop.trf.xlu0
    %v3167 = vpop.trf.xlu0
    %v3168 = vpop.trf.xlu0
    %v3169 = vpop.trf.xlu0
    %v3170 = vpop.trf.xlu0
    %v3171 = vpop.trf.xlu0
    %v3172 = vpop.trf.xlu0
    %v3173 = vpop.trf.xlu0
    %v3174 = vpop.trf.xlu0
    %v3175 = vpop.trf.xlu0
    %v3176 = vpop.trf.xlu0
    %3177 = vxpose.xlu0.b32.start [1/16] %v438, 128
    %3178 = vxpose.xlu0.b32.cont [2/16] 0.0, 128
    %3179 = vxpose.xlu0.b32.cont [3/16] 0.0, 128
    %3180 = vxpose.xlu0.b32.cont [4/16] 0.0, 128
    %3181 = vxpose.xlu0.b32.cont [5/16] 0.0, 128
    %3182 = vxpose.xlu0.b32.cont [6/16] 0.0, 128
    %3183 = vxpose.xlu0.b32.cont [7/16] 0.0, 128
    %3184 = vxpose.xlu0.b32.cont [8/16] 0.0, 128
    %3185 = vxpose.xlu0.b32.cont [9/16] 0.0, 128
    %3186 = vxpose.xlu0.b32.cont [10/16] 0.0, 128
    %3187 = vxpose.xlu0.b32.cont [11/16] 0.0, 128
    %3188 = vxpose.xlu0.b32.cont [12/16] 0.0, 128
    %3189 = vxpose.xlu0.b32.cont [13/16] 0.0, 128
    %3190 = vxpose.xlu0.b32.cont [14/16] 0.0, 128
    %3191 = vxpose.xlu0.b32.cont [15/16] 0.0, 128
    %3192 = vxpose.xlu0.b32.end [16/16] 0.0, 128
    %v3193 = vpop.trf.xlu0
    %v3194 = vpop.trf.xlu0
    %v3195 = vpop.trf.xlu0
    %v3196 = vpop.trf.xlu0
    %v3197 = vpop.trf.xlu0
    %v3198 = vpop.trf.xlu0
    %v3199 = vpop.trf.xlu0
    %v3200 = vpop.trf.xlu0
    %v3201 = vpop.trf.xlu0
    %v3202 = vpop.trf.xlu0
    %v3203 = vpop.trf.xlu0
    %v3204 = vpop.trf.xlu0
    %v3205 = vpop.trf.xlu0
    %v3206 = vpop.trf.xlu0
    %v3207 = vpop.trf.xlu0
    %v3208 = vpop.trf.xlu0
    %3209 = vxpose.xlu0.b32.start [1/16] %v456, 128
    %3210 = vxpose.xlu0.b32.cont [2/16] 0.0, 128
    %3211 = vxpose.xlu0.b32.cont [3/16] 0.0, 128
    %3212 = vxpose.xlu0.b32.cont [4/16] 0.0, 128
    %3213 = vxpose.xlu0.b32.cont [5/16] 0.0, 128
    %3214 = vxpose.xlu0.b32.cont [6/16] 0.0, 128
    %3215 = vxpose.xlu0.b32.cont [7/16] 0.0, 128
    %3216 = vxpose.xlu0.b32.cont [8/16] 0.0, 128
    %3217 = vxpose.xlu0.b32.cont [9/16] 0.0, 128
    %3218 = vxpose.xlu0.b32.cont [10/16] 0.0, 128
    %3219 = vxpose.xlu0.b32.cont [11/16] 0.0, 128
    %3220 = vxpose.xlu0.b32.cont [12/16] 0.0, 128
    %3221 = vxpose.xlu0.b32.cont [13/16] 0.0, 128
    %3222 = vxpose.xlu0.b32.cont [14/16] 0.0, 128
    %3223 = vxpose.xlu0.b32.cont [15/16] 0.0, 128
    %3224 = vxpose.xlu0.b32.end [16/16] 0.0, 128
    %v3225 = vpop.trf.xlu0
    %v3226 = vpop.trf.xlu0
    %v3227 = vpop.trf.xlu0
    %v3228 = vpop.trf.xlu0
    %v3229 = vpop.trf.xlu0
    %v3230 = vpop.trf.xlu0
    %v3231 = vpop.trf.xlu0
    %v3232 = vpop.trf.xlu0
    %v3233 = vpop.trf.xlu0
    %v3234 = vpop.trf.xlu0
    %v3235 = vpop.trf.xlu0
    %v3236 = vpop.trf.xlu0
    %v3237 = vpop.trf.xlu0
    %v3238 = vpop.trf.xlu0
    %v3239 = vpop.trf.xlu0
    %v3240 = vpop.trf.xlu0
    %3241 = vxpose.xlu0.b32.start [1/16] %v447, 128
    %3242 = vxpose.xlu0.b32.cont [2/16] 0.0, 128
    %3243 = vxpose.xlu0.b32.cont [3/16] 0.0, 128
    %3244 = vxpose.xlu0.b32.cont [4/16] 0.0, 128
    %3245 = vxpose.xlu0.b32.cont [5/16] 0.0, 128
    %3246 = vxpose.xlu0.b32.cont [6/16] 0.0, 128
    %3247 = vxpose.xlu0.b32.cont [7/16] 0.0, 128
    %3248 = vxpose.xlu0.b32.cont [8/16] 0.0, 128
    %3249 = vxpose.xlu0.b32.cont [9/16] 0.0, 128
    %3250 = vxpose.xlu0.b32.cont [10/16] 0.0, 128
    %3251 = vxpose.xlu0.b32.cont [11/16] 0.0, 128
    %3252 = vxpose.xlu0.b32.cont [12/16] 0.0, 128
    %3253 = vxpose.xlu0.b32.cont [13/16] 0.0, 128
    %3254 = vxpose.xlu0.b32.cont [14/16] 0.0, 128
    %3255 = vxpose.xlu0.b32.cont [15/16] 0.0, 128
    %3256 = vxpose.xlu0.b32.end [16/16] 0.0, 128
    %v3257 = vpop.trf.xlu0
    %v3258 = vpop.trf.xlu0
    %v3259 = vpop.trf.xlu0
    %v3260 = vpop.trf.xlu0
    %v3261 = vpop.trf.xlu0
    %v3262 = vpop.trf.xlu0
    %v3263 = vpop.trf.xlu0
    %v3264 = vpop.trf.xlu0
    %v3265 = vpop.trf.xlu0
    %v3266 = vpop.trf.xlu0
    %v3267 = vpop.trf.xlu0
    %v3268 = vpop.trf.xlu0
    %v3269 = vpop.trf.xlu0
    %v3270 = vpop.trf.xlu0
    %v3271 = vpop.trf.xlu0
    %v3272 = vpop.trf.xlu0
    %3273 = vxpose.xlu0.b32.start [1/16] %v457, 128
    %3274 = vxpose.xlu0.b32.cont [2/16] 0.0, 128
    %3275 = vxpose.xlu0.b32.cont [3/16] 0.0, 128
    %3276 = vxpose.xlu0.b32.cont [4/16] 0.0, 128
    %3277 = vxpose.xlu0.b32.cont [5/16] 0.0, 128
    %3278 = vxpose.xlu0.b32.cont [6/16] 0.0, 128
    %3279 = vxpose.xlu0.b32.cont [7/16] 0.0, 128
    %3280 = vxpose.xlu0.b32.cont [8/16] 0.0, 128
    %3281 = vxpose.xlu0.b32.cont [9/16] 0.0, 128
    %3282 = vxpose.xlu0.b32.cont [10/16] 0.0, 128
    %3283 = vxpose.xlu0.b32.cont [11/16] 0.0, 128
    %3284 = vxpose.xlu0.b32.cont [12/16] 0.0, 128
    %3285 = vxpose.xlu0.b32.cont [13/16] 0.0, 128
    %3286 = vxpose.xlu0.b32.cont [14/16] 0.0, 128
    %3287 = vxpose.xlu0.b32.cont [15/16] 0.0, 128
    %3288 = vxpose.xlu0.b32.end [16/16] 0.0, 128
    %v3289 = vpop.trf.xlu0
    %v3290 = vpop.trf.xlu0
    %v3291 = vpop.trf.xlu0
    %v3292 = vpop.trf.xlu0
    %v3293 = vpop.trf.xlu0
    %v3294 = vpop.trf.xlu0
    %v3295 = vpop.trf.xlu0
    %v3296 = vpop.trf.xlu0
    %v3297 = vpop.trf.xlu0
    %v3298 = vpop.trf.xlu0
    %v3299 = vpop.trf.xlu0
    %v3300 = vpop.trf.xlu0
    %v3301 = vpop.trf.xlu0
    %v3302 = vpop.trf.xlu0
    %v3303 = vpop.trf.xlu0
    %v3304 = vpop.trf.xlu0
    %3305 = vxpose.xlu0.b32.start [1/16] %v454, 128
    %3306 = vxpose.xlu0.b32.cont [2/16] 0.0, 128
    %3307 = vxpose.xlu0.b32.cont [3/16] 0.0, 128
    %3308 = vxpose.xlu0.b32.cont [4/16] 0.0, 128
    %3309 = vxpose.xlu0.b32.cont [5/16] 0.0, 128
    %3310 = vxpose.xlu0.b32.cont [6/16] 0.0, 128
    %3311 = vxpose.xlu0.b32.cont [7/16] 0.0, 128
    %3312 = vxpose.xlu0.b32.cont [8/16] 0.0, 128
    %3313 = vxpose.xlu0.b32.cont [9/16] 0.0, 128
    %3314 = vxpose.xlu0.b32.cont [10/16] 0.0, 128
    %3315 = vxpose.xlu0.b32.cont [11/16] 0.0, 128
    %3316 = vxpose.xlu0.b32.cont [12/16] 0.0, 128
    %3317 = vxpose.xlu0.b32.cont [13/16] 0.0, 128
    %3318 = vxpose.xlu0.b32.cont [14/16] 0.0, 128
    %3319 = vxpose.xlu0.b32.cont [15/16] 0.0, 128
    %3320 = vxpose.xlu0.b32.end [16/16] 0.0, 128
    %v3321 = vpop.trf.xlu0
    %v3322 = vpop.trf.xlu0
    %v3323 = vpop.trf.xlu0
    %v3324 = vpop.trf.xlu0
    %v3325 = vpop.trf.xlu0
    %v3326 = vpop.trf.xlu0
    %v3327 = vpop.trf.xlu0
    %v3328 = vpop.trf.xlu0
    %v3329 = vpop.trf.xlu0
    %v3330 = vpop.trf.xlu0
    %v3331 = vpop.trf.xlu0
    %v3332 = vpop.trf.xlu0
    %v3333 = vpop.trf.xlu0
    %v3334 = vpop.trf.xlu0
    %v3335 = vpop.trf.xlu0
    %v3336 = vpop.trf.xlu0
    %3337 = vxpose.xlu0.b32.start [1/16] %v458, 128
    %3338 = vxpose.xlu0.b32.cont [2/16] 0.0, 128
    %3339 = vxpose.xlu0.b32.cont [3/16] 0.0, 128
    %3340 = vxpose.xlu0.b32.cont [4/16] 0.0, 128
    %3341 = vxpose.xlu0.b32.cont [5/16] 0.0, 128
    %3342 = vxpose.xlu0.b32.cont [6/16] 0.0, 128
    %3343 = vxpose.xlu0.b32.cont [7/16] 0.0, 128
    %3344 = vxpose.xlu0.b32.cont [8/16] 0.0, 128
    %3345 = vxpose.xlu0.b32.cont [9/16] 0.0, 128
    %3346 = vxpose.xlu0.b32.cont [10/16] 0.0, 128
    %3347 = vxpose.xlu0.b32.cont [11/16] 0.0, 128
    %3348 = vxpose.xlu0.b32.cont [12/16] 0.0, 128
    %3349 = vxpose.xlu0.b32.cont [13/16] 0.0, 128
    %3350 = vxpose.xlu0.b32.cont [14/16] 0.0, 128
    %3351 = vxpose.xlu0.b32.cont [15/16] 0.0, 128
    %3352 = vxpose.xlu0.b32.end [16/16] 0.0, 128
    %v3353 = vpop.trf.xlu0
    %v3354 = vpop.trf.xlu0
    %v3355 = vpop.trf.xlu0
    %v3356 = vpop.trf.xlu0
    %v3357 = vpop.trf.xlu0
    %v3358 = vpop.trf.xlu0
    %v3359 = vpop.trf.xlu0
    %v3360 = vpop.trf.xlu0
    %v3361 = vpop.trf.xlu0
    %v3362 = vpop.trf.xlu0
    %v3363 = vpop.trf.xlu0
    %v3364 = vpop.trf.xlu0
    %v3365 = vpop.trf.xlu0
    %v3366 = vpop.trf.xlu0
    %v3367 = vpop.trf.xlu0
    %v3368 = vpop.trf.xlu0
    %v3369 = vcombine.low %v3129, %v3193
    %v3370 = vcombine.high %v3129, %v3193
    %v3372 = vunpack.c.l.s4 1983009808
    %v3373 = vunpack.c.0.s8 %v3372
    %v3374 = vlaneseq
    %v3375 = vshrl.u32 %v3374, 7
    %v3376 = vsub.s32 %v3373, %v3375
    %v3377 = vrot.slane %v3369, %v3376
    %v3379 = vunpack.c.l.s4 1983009808
    %v3380 = vunpack.c.0.s8 %v3379
    %v3381 = vlaneseq
    %v3382 = vshrl.u32 %v3381, 7
    %v3383 = vsub.s32 %v3380, %v3382
    %v3384 = vrot.slane %v3370, %v3383
    %v3385 = vcombine.low %v3161, %v3225
    %v3386 = vcombine.high %v3161, %v3225
    %v3388 = vunpack.c.l.s4 1983009808
    %v3389 = vunpack.c.0.s8 %v3388
    %v3390 = vlaneseq
    %v3391 = vshrl.u32 %v3390, 7
    %v3392 = vsub.s32 %v3389, %v3391
    %v3393 = vrot.slane %v3385, %v3392
    %v3395 = vunpack.c.l.s4 1983009808
    %v3396 = vunpack.c.0.s8 %v3395
    %v3397 = vlaneseq
    %v3398 = vshrl.u32 %v3397, 7
    %v3399 = vsub.s32 %v3396, %v3398
    %v3400 = vrot.slane %v3386, %v3399
    %v3401 = vcombine.low %v3257, %v3321
    %v3402 = vcombine.high %v3257, %v3321
    %v3404 = vunpack.c.l.s4 1983009808
    %v3405 = vunpack.c.0.s8 %v3404
    %v3406 = vlaneseq
    %v3407 = vshrl.u32 %v3406, 7
    %v3408 = vsub.s32 %v3405, %v3407
    %v3409 = vrot.slane %v3401, %v3408
    %v3411 = vunpack.c.l.s4 1983009808
    %v3412 = vunpack.c.0.s8 %v3411
    %v3413 = vlaneseq
    %v3414 = vshrl.u32 %v3413, 7
    %v3415 = vsub.s32 %v3412, %v3414
    %v3416 = vrot.slane %v3402, %v3415
    %v3417 = vcombine.low %v3289, %v3353
    %v3418 = vcombine.high %v3289, %v3353
    %v3420 = vunpack.c.l.s4 1983009808
    %v3421 = vunpack.c.0.s8 %v3420
    %v3422 = vlaneseq
    %v3423 = vshrl.u32 %v3422, 7
    %v3424 = vsub.s32 %v3421, %v3423
    %v3425 = vrot.slane %v3417, %v3424
    %v3427 = vunpack.c.l.s4 1983009808
    %v3428 = vunpack.c.0.s8 %v3427
    %v3429 = vlaneseq
    %v3430 = vshrl.u32 %v3429, 7
    %v3431 = vsub.s32 %v3428, %v3430
    %v3432 = vrot.slane %v3418, %v3431
    %v3433 = vcombine.low %v3377, %v3393
    %v3434 = vcombine.high %v3377, %v3393
    %v3436 = vunpack.c.l.s4 1934713408
    %v3437 = vunpack.c.0.s8 %v3436
    %v3438 = vlaneseq
    %v3439 = vshrl.u32 %v3438, 7
    %v3440 = vsub.s32 %v3437, %v3439
    %v3441 = vrot.slane %v3433, %v3440
    %v3443 = vunpack.c.l.s4 1934713408
    %v3444 = vunpack.c.0.s8 %v3443
    %v3445 = vlaneseq
    %v3446 = vshrl.u32 %v3445, 7
    %v3447 = vsub.s32 %v3444, %v3446
    %v3448 = vrot.slane %v3434, %v3447
    %v3449 = vcombine.low %v3384, %v3400
    %v3450 = vcombine.high %v3384, %v3400
    %v3452 = vunpack.c.l.s4 1934713408
    %v3453 = vunpack.c.0.s8 %v3452
    %v3454 = vlaneseq
    %v3455 = vshrl.u32 %v3454, 7
    %v3456 = vsub.s32 %v3453, %v3455
    %v3457 = vrot.slane %v3449, %v3456
    %v3459 = vunpack.c.l.s4 1934713408
    %v3460 = vunpack.c.0.s8 %v3459
    %v3461 = vlaneseq
    %v3462 = vshrl.u32 %v3461, 7
    %v3463 = vsub.s32 %v3460, %v3462
    %v3464 = vrot.slane %v3450, %v3463
    %v3465 = vcombine.low %v3409, %v3425
    %v3466 = vcombine.high %v3409, %v3425
    %v3468 = vunpack.c.l.s4 1934713408
    %v3469 = vunpack.c.0.s8 %v3468
    %v3470 = vlaneseq
    %v3471 = vshrl.u32 %v3470, 7
    %v3472 = vsub.s32 %v3469, %v3471
    %v3473 = vrot.slane %v3465, %v3472
    %v3475 = vunpack.c.l.s4 1934713408
    %v3476 = vunpack.c.0.s8 %v3475
    %v3477 = vlaneseq
    %v3478 = vshrl.u32 %v3477, 7
    %v3479 = vsub.s32 %v3476, %v3478
    %v3480 = vrot.slane %v3466, %v3479
    %v3481 = vcombine.low %v3416, %v3432
    %v3482 = vcombine.high %v3416, %v3432
    %v3484 = vunpack.c.l.s4 1934713408
    %v3485 = vunpack.c.0.s8 %v3484
    %v3486 = vlaneseq
    %v3487 = vshrl.u32 %v3486, 7
    %v3488 = vsub.s32 %v3485, %v3487
    %v3489 = vrot.slane %v3481, %v3488
    %v3491 = vunpack.c.l.s4 1934713408
    %v3492 = vunpack.c.0.s8 %v3491
    %v3493 = vlaneseq
    %v3494 = vshrl.u32 %v3493, 7
    %v3495 = vsub.s32 %v3492, %v3494
    %v3496 = vrot.slane %v3482, %v3495
    %v3497 = vcombine.low %v3441, %v3473
    %v3498 = vcombine.high %v3441, %v3473
    %v3499 = vcombine.low %v3448, %v3480
    %v3500 = vcombine.high %v3448, %v3480
    %v3501 = vcombine.low %v3457, %v3489
    %v3502 = vcombine.high %v3457, %v3489
    %v3503 = vcombine.low %v3464, %v3496
    %v3504 = vcombine.high %v3464, %v3496
    %3505 = vxpose.xlu0.b32.start [1/16] %v3497, 128
    %3506 = vxpose.xlu0.b32.cont [2/16] 0.0, 128
    %3507 = vxpose.xlu0.b32.cont [3/16] 0.0, 128
    %3508 = vxpose.xlu0.b32.cont [4/16] 0.0, 128
    %3509 = vxpose.xlu0.b32.cont [5/16] 0.0, 128
    %3510 = vxpose.xlu0.b32.cont [6/16] 0.0, 128
    %3511 = vxpose.xlu0.b32.cont [7/16] 0.0, 128
    %3512 = vxpose.xlu0.b32.cont [8/16] 0.0, 128
    %3513 = vxpose.xlu0.b32.cont [9/16] 0.0, 128
    %3514 = vxpose.xlu0.b32.cont [10/16] 0.0, 128
    %3515 = vxpose.xlu0.b32.cont [11/16] 0.0, 128
    %3516 = vxpose.xlu0.b32.cont [12/16] 0.0, 128
    %3517 = vxpose.xlu0.b32.cont [13/16] 0.0, 128
    %3518 = vxpose.xlu0.b32.cont [14/16] 0.0, 128
    %3519 = vxpose.xlu0.b32.cont [15/16] 0.0, 128
    %3520 = vxpose.xlu0.b32.end [16/16] 0.0, 128
    %v3521 = vpop.trf.xlu0
    %v3522 = vpop.trf.xlu0
    %v3523 = vpop.trf.xlu0
    %v3524 = vpop.trf.xlu0
    %v3525 = vpop.trf.xlu0
    %v3526 = vpop.trf.xlu0
    %v3527 = vpop.trf.xlu0
    %v3528 = vpop.trf.xlu0
    %v3529 = vpop.trf.xlu0
    %v3530 = vpop.trf.xlu0
    %v3531 = vpop.trf.xlu0
    %v3532 = vpop.trf.xlu0
    %v3533 = vpop.trf.xlu0
    %v3534 = vpop.trf.xlu0
    %v3535 = vpop.trf.xlu0
    %v3536 = vpop.trf.xlu0
    %3537 = vxpose.xlu0.b32.start [1/16] %v3498, 128
    %3538 = vxpose.xlu0.b32.cont [2/16] 0.0, 128
    %3539 = vxpose.xlu0.b32.cont [3/16] 0.0, 128
    %3540 = vxpose.xlu0.b32.cont [4/16] 0.0, 128
    %3541 = vxpose.xlu0.b32.cont [5/16] 0.0, 128
    %3542 = vxpose.xlu0.b32.cont [6/16] 0.0, 128
    %3543 = vxpose.xlu0.b32.cont [7/16] 0.0, 128
    %3544 = vxpose.xlu0.b32.cont [8/16] 0.0, 128
    %3545 = vxpose.xlu0.b32.cont [9/16] 0.0, 128
    %3546 = vxpose.xlu0.b32.cont [10/16] 0.0, 128
    %3547 = vxpose.xlu0.b32.cont [11/16] 0.0, 128
    %3548 = vxpose.xlu0.b32.cont [12/16] 0.0, 128
    %3549 = vxpose.xlu0.b32.cont [13/16] 0.0, 128
    %3550 = vxpose.xlu0.b32.cont [14/16] 0.0, 128
    %3551 = vxpose.xlu0.b32.cont [15/16] 0.0, 128
    %3552 = vxpose.xlu0.b32.end [16/16] 0.0, 128
    %v3553 = vpop.trf.xlu0
    %v3554 = vpop.trf.xlu0
    %v3555 = vpop.trf.xlu0
    %v3556 = vpop.trf.xlu0
    %v3557 = vpop.trf.xlu0
    %v3558 = vpop.trf.xlu0
    %v3559 = vpop.trf.xlu0
    %v3560 = vpop.trf.xlu0
    %v3561 = vpop.trf.xlu0
    %v3562 = vpop.trf.xlu0
    %v3563 = vpop.trf.xlu0
    %v3564 = vpop.trf.xlu0
    %v3565 = vpop.trf.xlu0
    %v3566 = vpop.trf.xlu0
    %v3567 = vpop.trf.xlu0
    %v3568 = vpop.trf.xlu0
    %3569 = vxpose.xlu0.b32.start [1/16] %v3499, 128
    %3570 = vxpose.xlu0.b32.cont [2/16] 0.0, 128
    %3571 = vxpose.xlu0.b32.cont [3/16] 0.0, 128
    %3572 = vxpose.xlu0.b32.cont [4/16] 0.0, 128
    %3573 = vxpose.xlu0.b32.cont [5/16] 0.0, 128
    %3574 = vxpose.xlu0.b32.cont [6/16] 0.0, 128
    %3575 = vxpose.xlu0.b32.cont [7/16] 0.0, 128
    %3576 = vxpose.xlu0.b32.cont [8/16] 0.0, 128
    %3577 = vxpose.xlu0.b32.cont [9/16] 0.0, 128
    %3578 = vxpose.xlu0.b32.cont [10/16] 0.0, 128
    %3579 = vxpose.xlu0.b32.cont [11/16] 0.0, 128
    %3580 = vxpose.xlu0.b32.cont [12/16] 0.0, 128
    %3581 = vxpose.xlu0.b32.cont [13/16] 0.0, 128
    %3582 = vxpose.xlu0.b32.cont [14/16] 0.0, 128
    %3583 = vxpose.xlu0.b32.cont [15/16] 0.0, 128
    %3584 = vxpose.xlu0.b32.end [16/16] 0.0, 128
    %v3585 = vpop.trf.xlu0
    %v3586 = vpop.trf.xlu0
    %v3587 = vpop.trf.xlu0
    %v3588 = vpop.trf.xlu0
    %v3589 = vpop.trf.xlu0
    %v3590 = vpop.trf.xlu0
    %v3591 = vpop.trf.xlu0
    %v3592 = vpop.trf.xlu0
    %v3593 = vpop.trf.xlu0
    %v3594 = vpop.trf.xlu0
    %v3595 = vpop.trf.xlu0
    %v3596 = vpop.trf.xlu0
    %v3597 = vpop.trf.xlu0
    %v3598 = vpop.trf.xlu0
    %v3599 = vpop.trf.xlu0
    %v3600 = vpop.trf.xlu0
    %3601 = vxpose.xlu0.b32.start [1/16] %v3500, 128
    %3602 = vxpose.xlu0.b32.cont [2/16] 0.0, 128
    %3603 = vxpose.xlu0.b32.cont [3/16] 0.0, 128
    %3604 = vxpose.xlu0.b32.cont [4/16] 0.0, 128
    %3605 = vxpose.xlu0.b32.cont [5/16] 0.0, 128
    %3606 = vxpose.xlu0.b32.cont [6/16] 0.0, 128
    %3607 = vxpose.xlu0.b32.cont [7/16] 0.0, 128
    %3608 = vxpose.xlu0.b32.cont [8/16] 0.0, 128
    %3609 = vxpose.xlu0.b32.cont [9/16] 0.0, 128
    %3610 = vxpose.xlu0.b32.cont [10/16] 0.0, 128
    %3611 = vxpose.xlu0.b32.cont [11/16] 0.0, 128
    %3612 = vxpose.xlu0.b32.cont [12/16] 0.0, 128
    %3613 = vxpose.xlu0.b32.cont [13/16] 0.0, 128
    %3614 = vxpose.xlu0.b32.cont [14/16] 0.0, 128
    %3615 = vxpose.xlu0.b32.cont [15/16] 0.0, 128
    %3616 = vxpose.xlu0.b32.end [16/16] 0.0, 128
    %v3617 = vpop.trf.xlu0
    %v3618 = vpop.trf.xlu0
    %v3619 = vpop.trf.xlu0
    %v3620 = vpop.trf.xlu0
    %v3621 = vpop.trf.xlu0
    %v3622 = vpop.trf.xlu0
    %v3623 = vpop.trf.xlu0
    %v3624 = vpop.trf.xlu0
    %v3625 = vpop.trf.xlu0
    %v3626 = vpop.trf.xlu0
    %v3627 = vpop.trf.xlu0
    %v3628 = vpop.trf.xlu0
    %v3629 = vpop.trf.xlu0
    %v3630 = vpop.trf.xlu0
    %v3631 = vpop.trf.xlu0
    %v3632 = vpop.trf.xlu0
    %3633 = vxpose.xlu0.b32.start [1/16] %v3501, 128
    %3634 = vxpose.xlu0.b32.cont [2/16] 0.0, 128
    %3635 = vxpose.xlu0.b32.cont [3/16] 0.0, 128
    %3636 = vxpose.xlu0.b32.cont [4/16] 0.0, 128
    %3637 = vxpose.xlu0.b32.cont [5/16] 0.0, 128
    %3638 = vxpose.xlu0.b32.cont [6/16] 0.0, 128
    %3639 = vxpose.xlu0.b32.cont [7/16] 0.0, 128
    %3640 = vxpose.xlu0.b32.cont [8/16] 0.0, 128
    %3641 = vxpose.xlu0.b32.cont [9/16] 0.0, 128
    %3642 = vxpose.xlu0.b32.cont [10/16] 0.0, 128
    %3643 = vxpose.xlu0.b32.cont [11/16] 0.0, 128
    %3644 = vxpose.xlu0.b32.cont [12/16] 0.0, 128
    %3645 = vxpose.xlu0.b32.cont [13/16] 0.0, 128
    %3646 = vxpose.xlu0.b32.cont [14/16] 0.0, 128
    %3647 = vxpose.xlu0.b32.cont [15/16] 0.0, 128
    %3648 = vxpose.xlu0.b32.end [16/16] 0.0, 128
    %v3649 = vpop.trf.xlu0
    %v3650 = vpop.trf.xlu0
    %v3651 = vpop.trf.xlu0
    %v3652 = vpop.trf.xlu0
    %v3653 = vpop.trf.xlu0
    %v3654 = vpop.trf.xlu0
    %v3655 = vpop.trf.xlu0
    %v3656 = vpop.trf.xlu0
    %v3657 = vpop.trf.xlu0
    %v3658 = vpop.trf.xlu0
    %v3659 = vpop.trf.xlu0
    %v3660 = vpop.trf.xlu0
    %v3661 = vpop.trf.xlu0
    %v3662 = vpop.trf.xlu0
    %v3663 = vpop.trf.xlu0
    %v3664 = vpop.trf.xlu0
    %3665 = vxpose.xlu0.b32.start [1/16] %v3502, 128
    %3666 = vxpose.xlu0.b32.cont [2/16] 0.0, 128
    %3667 = vxpose.xlu0.b32.cont [3/16] 0.0, 128
    %3668 = vxpose.xlu0.b32.cont [4/16] 0.0, 128
    %3669 = vxpose.xlu0.b32.cont [5/16] 0.0, 128
    %3670 = vxpose.xlu0.b32.cont [6/16] 0.0, 128
    %3671 = vxpose.xlu0.b32.cont [7/16] 0.0, 128
    %3672 = vxpose.xlu0.b32.cont [8/16] 0.0, 128
    %3673 = vxpose.xlu0.b32.cont [9/16] 0.0, 128
    %3674 = vxpose.xlu0.b32.cont [10/16] 0.0, 128
    %3675 = vxpose.xlu0.b32.cont [11/16] 0.0, 128
    %3676 = vxpose.xlu0.b32.cont [12/16] 0.0, 128
    %3677 = vxpose.xlu0.b32.cont [13/16] 0.0, 128
    %3678 = vxpose.xlu0.b32.cont [14/16] 0.0, 128
    %3679 = vxpose.xlu0.b32.cont [15/16] 0.0, 128
    %3680 = vxpose.xlu0.b32.end [16/16] 0.0, 128
    %v3681 = vpop.trf.xlu0
    %v3682 = vpop.trf.xlu0
    %v3683 = vpop.trf.xlu0
    %v3684 = vpop.trf.xlu0
    %v3685 = vpop.trf.xlu0
    %v3686 = vpop.trf.xlu0
    %v3687 = vpop.trf.xlu0
    %v3688 = vpop.trf.xlu0
    %v3689 = vpop.trf.xlu0
    %v3690 = vpop.trf.xlu0
    %v3691 = vpop.trf.xlu0
    %v3692 = vpop.trf.xlu0
    %v3693 = vpop.trf.xlu0
    %v3694 = vpop.trf.xlu0
    %v3695 = vpop.trf.xlu0
    %v3696 = vpop.trf.xlu0
    %3697 = vxpose.xlu0.b32.start [1/16] %v3503, 128
    %3698 = vxpose.xlu0.b32.cont [2/16] 0.0, 128
    %3699 = vxpose.xlu0.b32.cont [3/16] 0.0, 128
    %3700 = vxpose.xlu0.b32.cont [4/16] 0.0, 128
    %3701 = vxpose.xlu0.b32.cont [5/16] 0.0, 128
    %3702 = vxpose.xlu0.b32.cont [6/16] 0.0, 128
    %3703 = vxpose.xlu0.b32.cont [7/16] 0.0, 128
    %3704 = vxpose.xlu0.b32.cont [8/16] 0.0, 128
    %3705 = vxpose.xlu0.b32.cont [9/16] 0.0, 128
    %3706 = vxpose.xlu0.b32.cont [10/16] 0.0, 128
    %3707 = vxpose.xlu0.b32.cont [11/16] 0.0, 128
    %3708 = vxpose.xlu0.b32.cont [12/16] 0.0, 128
    %3709 = vxpose.xlu0.b32.cont [13/16] 0.0, 128
    %3710 = vxpose.xlu0.b32.cont [14/16] 0.0, 128
    %3711 = vxpose.xlu0.b32.cont [15/16] 0.0, 128
    %3712 = vxpose.xlu0.b32.end [16/16] 0.0, 128
    %v3713 = vpop.trf.xlu0
    %v3714 = vpop.trf.xlu0
    %v3715 = vpop.trf.xlu0
    %v3716 = vpop.trf.xlu0
    %v3717 = vpop.trf.xlu0
    %v3718 = vpop.trf.xlu0
    %v3719 = vpop.trf.xlu0
    %v3720 = vpop.trf.xlu0
    %v3721 = vpop.trf.xlu0
    %v3722 = vpop.trf.xlu0
    %v3723 = vpop.trf.xlu0
    %v3724 = vpop.trf.xlu0
    %v3725 = vpop.trf.xlu0
    %v3726 = vpop.trf.xlu0
    %v3727 = vpop.trf.xlu0
    %v3728 = vpop.trf.xlu0
    %3729 = vxpose.xlu0.b32.start [1/16] %v3504, 128
    %3730 = vxpose.xlu0.b32.cont [2/16] 0.0, 128
    %3731 = vxpose.xlu0.b32.cont [3/16] 0.0, 128
    %3732 = vxpose.xlu0.b32.cont [4/16] 0.0, 128
    %3733 = vxpose.xlu0.b32.cont [5/16] 0.0, 128
    %3734 = vxpose.xlu0.b32.cont [6/16] 0.0, 128
    %3735 = vxpose.xlu0.b32.cont [7/16] 0.0, 128
    %3736 = vxpose.xlu0.b32.cont [8/16] 0.0, 128
    %3737 = vxpose.xlu0.b32.cont [9/16] 0.0, 128
    %3738 = vxpose.xlu0.b32.cont [10/16] 0.0, 128
    %3739 = vxpose.xlu0.b32.cont [11/16] 0.0, 128
    %3740 = vxpose.xlu0.b32.cont [12/16] 0.0, 128
    %3741 = vxpose.xlu0.b32.cont [13/16] 0.0, 128
    %3742 = vxpose.xlu0.b32.cont [14/16] 0.0, 128
    %3743 = vxpose.xlu0.b32.cont [15/16] 0.0, 128
    %3744 = vxpose.xlu0.b32.end [16/16] 0.0, 128
    %v3745 = vpop.trf.xlu0
    %v3746 = vpop.trf.xlu0
    %v3747 = vpop.trf.xlu0
    %v3748 = vpop.trf.xlu0
    %v3749 = vpop.trf.xlu0
    %v3750 = vpop.trf.xlu0
    %v3751 = vpop.trf.xlu0
    %v3752 = vpop.trf.xlu0
    %v3753 = vpop.trf.xlu0
    %v3754 = vpop.trf.xlu0
    %v3755 = vpop.trf.xlu0
    %v3756 = vpop.trf.xlu0
    %v3757 = vpop.trf.xlu0
    %v3758 = vpop.trf.xlu0
    %v3759 = vpop.trf.xlu0
    %v3760 = vpop.trf.xlu0
    %v3761 = vcombine.low %v3521, %v3585
    %v3763 = vunpack.c.l.s4 1983009808
    %v3764 = vunpack.c.0.s8 %v3763
    %v3765 = vlaneseq
    %v3766 = vshrl.u32 %v3765, 7
    %v3767 = vsub.s32 %v3764, %v3766
    %v3768 = vrot.slane %v3761, %v3767
    %v3769 = vcombine.low %v3553, %v3617
    %v3771 = vunpack.c.l.s4 1983009808
    %v3772 = vunpack.c.0.s8 %v3771
    %v3773 = vlaneseq
    %v3774 = vshrl.u32 %v3773, 7
    %v3775 = vsub.s32 %v3772, %v3774
    %v3776 = vrot.slane %v3769, %v3775
    %v3777 = vcombine.low %v3649, %v3713
    %v3779 = vunpack.c.l.s4 1983009808
    %v3780 = vunpack.c.0.s8 %v3779
    %v3781 = vlaneseq
    %v3782 = vshrl.u32 %v3781, 7
    %v3783 = vsub.s32 %v3780, %v3782
    %v3784 = vrot.slane %v3777, %v3783
    %v3785 = vcombine.low %v3681, %v3745
    %v3787 = vunpack.c.l.s4 1983009808
    %v3788 = vunpack.c.0.s8 %v3787
    %v3789 = vlaneseq
    %v3790 = vshrl.u32 %v3789, 7
    %v3791 = vsub.s32 %v3788, %v3790
    %v3792 = vrot.slane %v3785, %v3791
    %v3793 = vcombine.low %v3768, %v3776
    %v3794 = vcombine.high %v3768, %v3776
    %v3796 = vunpack.c.l.s4 1934713408
    %v3797 = vunpack.c.0.s8 %v3796
    %v3798 = vlaneseq
    %v3799 = vshrl.u32 %v3798, 7
    %v3800 = vsub.s32 %v3797, %v3799
    %v3801 = vrot.slane %v3793, %v3800
    %v3803 = vunpack.c.l.s4 1934713408
    %v3804 = vunpack.c.0.s8 %v3803
    %v3805 = vlaneseq
    %v3806 = vshrl.u32 %v3805, 7
    %v3807 = vsub.s32 %v3804, %v3806
    %v3808 = vrot.slane %v3794, %v3807
    %v3809 = vcombine.low %v3784, %v3792
    %v3810 = vcombine.high %v3784, %v3792
    %v3812 = vunpack.c.l.s4 1934713408
    %v3813 = vunpack.c.0.s8 %v3812
    %v3814 = vlaneseq
    %v3815 = vshrl.u32 %v3814, 7
    %v3816 = vsub.s32 %v3813, %v3815
    %v3817 = vrot.slane %v3809, %v3816
    %v3819 = vunpack.c.l.s4 1934713408
    %v3820 = vunpack.c.0.s8 %v3819
    %v3821 = vlaneseq
    %v3822 = vshrl.u32 %v3821, 7
    %v3823 = vsub.s32 %v3820, %v3822
    %v3824 = vrot.slane %v3810, %v3823
    %v3825 = vcombine.low %v3801, %v3817
    %v3826 = vcombine.high %v3801, %v3817
    %v3827 = vcombine.low %v3808, %v3824
    %v3828 = vcombine.high %v3808, %v3824
    %v3830 = vsel %vm1403, %v3109, 0
    %3832 = vmatprep.subr.mxu0 0.0
    %3833 = vmatpush1.msra.mxu0 0.0
    %3834 = vmatprep.subr.mxu0 0.0
    %3835 = vmatpush1.msra.mxu0 0.0
    %3836 = vmatprep.subr.mxu0 0.0
    %3837 = vmatpush1.msra.mxu0 0.0
    %3838 = vmatprep.subr.mxu0 0.0
    %3839 = vmatpush1.msra.mxu0 0.0
    %3840 = vmatprep.subr.mxu0 0.0
    %3841 = vmatpush1.msra.mxu0 0.0
    %3842 = vmatprep.subr.mxu0 0.0
    %3843 = vmatpush1.msra.mxu0 0.0
    %3844 = vmatprep.subr.mxu0 0.0
    %3845 = vmatpush1.msra.mxu0 0.0
    %3846 = vmatprep.subr.mxu0 0.0
    %3847 = vmatpush1.msra.mxu0 0.0
    %3848 = vmatprep.subr.mxu0 0.0
    %3849 = vmatpush1.msra.mxu0 0.0
    %3850 = vmatprep.subr.mxu0 0.0
    %3851 = vmatpush1.msra.mxu0 0.0
    %3852 = vmatprep.subr.mxu0 0.0
    %3853 = vmatpush1.msra.mxu0 0.0
    %3854 = vmatprep.subr.mxu0 0.0
    %3855 = vmatpush1.msra.mxu0 0.0
    %3856 = vmatprep.subr.mxu0 0.0
    %3857 = vmatpush1.msra.mxu0 0.0
    %3858 = vmatprep.subr.mxu0 0.0
    %3859 = vmatpush1.msra.mxu0 0.0
    %3860 = vmatprep.subr.mxu0 0.0
    %3861 = vmatpush1.msra.mxu0 0.0
    %3862 = vmatprep.subr.mxu0 0.0
    %3863 = vmatpush1.msra.mxu0 %v3825
    %3864 = vmatprep.subr.mxu0 0.0
    %3865 = vmatpush2.msra.mxu0 0.0
    %3866 = vmatprep.subr.mxu0 0.0
    %3867 = vmatpush2.msra.mxu0 0.0
    %3868 = vmatprep.subr.mxu0 0.0
    %3869 = vmatpush2.msra.mxu0 0.0
    %3870 = vmatprep.subr.mxu0 0.0
    %3871 = vmatpush2.msra.mxu0 0.0
    %3872 = vmatprep.subr.mxu0 0.0
    %3873 = vmatpush2.msra.mxu0 0.0
    %3874 = vmatprep.subr.mxu0 0.0
    %3875 = vmatpush2.msra.mxu0 0.0
    %3876 = vmatprep.subr.mxu0 0.0
    %3877 = vmatpush2.msra.mxu0 0.0
    %3878 = vmatprep.subr.mxu0 0.0
    %3879 = vmatpush2.msra.mxu0 0.0
    %3880 = vmatprep.subr.mxu0 0.0
    %3881 = vmatpush2.msra.mxu0 0.0
    %3882 = vmatprep.subr.mxu0 0.0
    %3883 = vmatpush2.msra.mxu0 0.0
    %3884 = vmatprep.subr.mxu0 0.0
    %3885 = vmatpush2.msra.mxu0 0.0
    %3886 = vmatprep.subr.mxu0 0.0
    %3887 = vmatpush2.msra.mxu0 0.0
    %3888 = vmatprep.subr.mxu0 0.0
    %3889 = vmatpush2.msra.mxu0 0.0
    %3890 = vmatprep.subr.mxu0 0.0
    %3891 = vmatpush2.msra.mxu0 0.0
    %3892 = vmatprep.subr.mxu0 0.0
    %3893 = vmatpush2.msra.mxu0 0.0
    %3894 = vmatprep.subr.mxu0 0.0
    %3895 = vmatpush2.msra.mxu0 0.0
    %3896 = vmatprep.mubr.f32.mxu0 0.0
    %3897 = vmatmul.mubr.f32.gmra.mxu0 %v3830
    %v3898 = vpop.f32.mrf.mxu0
    %v3899 = vadd.f32 0.0, %v3898
    %v3900 = vpop.f32.mrf.mxu0
    %3901 = vdwg.mxu0
    %v3903 = vsel %vm1403, %v3110, 0
    %3905 = vmatprep.subr.mxu0 0.0
    %3906 = vmatpush1.msra.mxu0 0.0
    %3907 = vmatprep.subr.mxu0 0.0
    %3908 = vmatpush1.msra.mxu0 0.0
    %3909 = vmatprep.subr.mxu0 0.0
    %3910 = vmatpush1.msra.mxu0 0.0
    %3911 = vmatprep.subr.mxu0 0.0
    %3912 = vmatpush1.msra.mxu0 0.0
    %3913 = vmatprep.subr.mxu0 0.0
    %3914 = vmatpush1.msra.mxu0 0.0
    %3915 = vmatprep.subr.mxu0 0.0
    %3916 = vmatpush1.msra.mxu0 0.0
    %3917 = vmatprep.subr.mxu0 0.0
    %3918 = vmatpush1.msra.mxu0 0.0
    %3919 = vmatprep.subr.mxu0 0.0
    %3920 = vmatpush1.msra.mxu0 0.0
    %3921 = vmatprep.subr.mxu0 0.0
    %3922 = vmatpush1.msra.mxu0 0.0
    %3923 = vmatprep.subr.mxu0 0.0
    %3924 = vmatpush1.msra.mxu0 0.0
    %3925 = vmatprep.subr.mxu0 0.0
    %3926 = vmatpush1.msra.mxu0 0.0
    %3927 = vmatprep.subr.mxu0 0.0
    %3928 = vmatpush1.msra.mxu0 0.0
    %3929 = vmatprep.subr.mxu0 0.0
    %3930 = vmatpush1.msra.mxu0 0.0
    %3931 = vmatprep.subr.mxu0 0.0
    %3932 = vmatpush1.msra.mxu0 0.0
    %3933 = vmatprep.subr.mxu0 0.0
    %3934 = vmatpush1.msra.mxu0 0.0
    %3935 = vmatprep.subr.mxu0 0.0
    %3936 = vmatpush1.msra.mxu0 %v3826
    %3937 = vmatprep.subr.mxu0 0.0
    %3938 = vmatpush2.msra.mxu0 0.0
    %3939 = vmatprep.subr.mxu0 0.0
    %3940 = vmatpush2.msra.mxu0 0.0
    %3941 = vmatprep.subr.mxu0 0.0
    %3942 = vmatpush2.msra.mxu0 0.0
    %3943 = vmatprep.subr.mxu0 0.0
    %3944 = vmatpush2.msra.mxu0 0.0
    %3945 = vmatprep.subr.mxu0 0.0
    %3946 = vmatpush2.msra.mxu0 0.0
    %3947 = vmatprep.subr.mxu0 0.0
    %3948 = vmatpush2.msra.mxu0 0.0
    %3949 = vmatprep.subr.mxu0 0.0
    %3950 = vmatpush2.msra.mxu0 0.0
    %3951 = vmatprep.subr.mxu0 0.0
    %3952 = vmatpush2.msra.mxu0 0.0
    %3953 = vmatprep.subr.mxu0 0.0
    %3954 = vmatpush2.msra.mxu0 0.0
    %3955 = vmatprep.subr.mxu0 0.0
    %3956 = vmatpush2.msra.mxu0 0.0
    %3957 = vmatprep.subr.mxu0 0.0
    %3958 = vmatpush2.msra.mxu0 0.0
    %3959 = vmatprep.subr.mxu0 0.0
    %3960 = vmatpush2.msra.mxu0 0.0
    %3961 = vmatprep.subr.mxu0 0.0
    %3962 = vmatpush2.msra.mxu0 0.0
    %3963 = vmatprep.subr.mxu0 0.0
    %3964 = vmatpush2.msra.mxu0 0.0
    %3965 = vmatprep.subr.mxu0 0.0
    %3966 = vmatpush2.msra.mxu0 0.0
    %3967 = vmatprep.subr.mxu0 0.0
    %3968 = vmatpush2.msra.mxu0 0.0
    %3969 = vmatprep.mubr.f32.mxu0 0.0
    %3970 = vmatmul.mubr.f32.gmra.mxu0 %v3903
    %v3971 = vpop.f32.mrf.mxu0
    %v3972 = vadd.f32 0.0, %v3971
    %v3973 = vpop.f32.mrf.mxu0
    %3974 = vdwg.mxu0
    %v3976 = vsel %vm1403, %v3111, 0
    %3978 = vmatprep.subr.mxu0 0.0
    %3979 = vmatpush1.msra.mxu0 0.0
    %3980 = vmatprep.subr.mxu0 0.0
    %3981 = vmatpush1.msra.mxu0 0.0
    %3982 = vmatprep.subr.mxu0 0.0
    %3983 = vmatpush1.msra.mxu0 0.0
    %3984 = vmatprep.subr.mxu0 0.0
    %3985 = vmatpush1.msra.mxu0 0.0
    %3986 = vmatprep.subr.mxu0 0.0
    %3987 = vmatpush1.msra.mxu0 0.0
    %3988 = vmatprep.subr.mxu0 0.0
    %3989 = vmatpush1.msra.mxu0 0.0
    %3990 = vmatprep.subr.mxu0 0.0
    %3991 = vmatpush1.msra.mxu0 0.0
    %3992 = vmatprep.subr.mxu0 0.0
    %3993 = vmatpush1.msra.mxu0 0.0
    %3994 = vmatprep.subr.mxu0 0.0
    %3995 = vmatpush1.msra.mxu0 0.0
    %3996 = vmatprep.subr.mxu0 0.0
    %3997 = vmatpush1.msra.mxu0 0.0
    %3998 = vmatprep.subr.mxu0 0.0
    %3999 = vmatpush1.msra.mxu0 0.0
    %4000 = vmatprep.subr.mxu0 0.0
    %4001 = vmatpush1.msra.mxu0 0.0
    %4002 = vmatprep.subr.mxu0 0.0
    %4003 = vmatpush1.msra.mxu0 0.0
    %4004 = vmatprep.subr.mxu0 0.0
    %4005 = vmatpush1.msra.mxu0 0.0
    %4006 = vmatprep.subr.mxu0 0.0
    %4007 = vmatpush1.msra.mxu0 0.0
    %4008 = vmatprep.subr.mxu0 0.0
    %4009 = vmatpush1.msra.mxu0 %v3827
    %4010 = vmatprep.subr.mxu0 0.0
    %4011 = vmatpush2.msra.mxu0 0.0
    %4012 = vmatprep.subr.mxu0 0.0
    %4013 = vmatpush2.msra.mxu0 0.0
    %4014 = vmatprep.subr.mxu0 0.0
    %4015 = vmatpush2.msra.mxu0 0.0
    %4016 = vmatprep.subr.mxu0 0.0
    %4017 = vmatpush2.msra.mxu0 0.0
    %4018 = vmatprep.subr.mxu0 0.0
    %4019 = vmatpush2.msra.mxu0 0.0
    %4020 = vmatprep.subr.mxu0 0.0
    %4021 = vmatpush2.msra.mxu0 0.0
    %4022 = vmatprep.subr.mxu0 0.0
    %4023 = vmatpush2.msra.mxu0 0.0
    %4024 = vmatprep.subr.mxu0 0.0
    %4025 = vmatpush2.msra.mxu0 0.0
    %4026 = vmatprep.subr.mxu0 0.0
    %4027 = vmatpush2.msra.mxu0 0.0
    %4028 = vmatprep.subr.mxu0 0.0
    %4029 = vmatpush2.msra.mxu0 0.0
    %4030 = vmatprep.subr.mxu0 0.0
    %4031 = vmatpush2.msra.mxu0 0.0
    %4032 = vmatprep.subr.mxu0 0.0
    %4033 = vmatpush2.msra.mxu0 0.0
    %4034 = vmatprep.subr.mxu0 0.0
    %4035 = vmatpush2.msra.mxu0 0.0
    %4036 = vmatprep.subr.mxu0 0.0
    %4037 = vmatpush2.msra.mxu0 0.0
    %4038 = vmatprep.subr.mxu0 0.0
    %4039 = vmatpush2.msra.mxu0 0.0
    %4040 = vmatprep.subr.mxu0 0.0
    %4041 = vmatpush2.msra.mxu0 0.0
    %4042 = vmatprep.mubr.f32.mxu0 0.0
    %4043 = vmatmul.mubr.f32.gmra.mxu0 %v3976
    %v4044 = vpop.f32.mrf.mxu0
    %v4045 = vadd.f32 0.0, %v4044
    %v4046 = vpop.f32.mrf.mxu0
    %4047 = vdwg.mxu0
    %v4049 = vsel %vm1403, %v3112, 0
    %4051 = vmatprep.subr.mxu0 0.0
    %4052 = vmatpush1.msra.mxu0 0.0
    %4053 = vmatprep.subr.mxu0 0.0
    %4054 = vmatpush1.msra.mxu0 0.0
    %4055 = vmatprep.subr.mxu0 0.0
    %4056 = vmatpush1.msra.mxu0 0.0
    %4057 = vmatprep.subr.mxu0 0.0
    %4058 = vmatpush1.msra.mxu0 0.0
    %4059 = vmatprep.subr.mxu0 0.0
    %4060 = vmatpush1.msra.mxu0 0.0
    %4061 = vmatprep.subr.mxu0 0.0
    %4062 = vmatpush1.msra.mxu0 0.0
    %4063 = vmatprep.subr.mxu0 0.0
    %4064 = vmatpush1.msra.mxu0 0.0
    %4065 = vmatprep.subr.mxu0 0.0
    %4066 = vmatpush1.msra.mxu0 0.0
    %4067 = vmatprep.subr.mxu0 0.0
    %4068 = vmatpush1.msra.mxu0 0.0
    %4069 = vmatprep.subr.mxu0 0.0
    %4070 = vmatpush1.msra.mxu0 0.0
    %4071 = vmatprep.subr.mxu0 0.0
    %4072 = vmatpush1.msra.mxu0 0.0
    %4073 = vmatprep.subr.mxu0 0.0
    %4074 = vmatpush1.msra.mxu0 0.0
    %4075 = vmatprep.subr.mxu0 0.0
    %4076 = vmatpush1.msra.mxu0 0.0
    %4077 = vmatprep.subr.mxu0 0.0
    %4078 = vmatpush1.msra.mxu0 0.0
    %4079 = vmatprep.subr.mxu0 0.0
    %4080 = vmatpush1.msra.mxu0 0.0
    %4081 = vmatprep.subr.mxu0 0.0
    %4082 = vmatpush1.msra.mxu0 %v3828
    %4083 = vmatprep.subr.mxu0 0.0
    %4084 = vmatpush2.msra.mxu0 0.0
    %4085 = vmatprep.subr.mxu0 0.0
    %4086 = vmatpush2.msra.mxu0 0.0
    %4087 = vmatprep.subr.mxu0 0.0
    %4088 = vmatpush2.msra.mxu0 0.0
    %4089 = vmatprep.subr.mxu0 0.0
    %4090 = vmatpush2.msra.mxu0 0.0
    %4091 = vmatprep.subr.mxu0 0.0
    %4092 = vmatpush2.msra.mxu0 0.0
    %4093 = vmatprep.subr.mxu0 0.0
    %4094 = vmatpush2.msra.mxu0 0.0
    %4095 = vmatprep.subr.mxu0 0.0
    %4096 = vmatpush2.msra.mxu0 0.0
    %4097 = vmatprep.subr.mxu0 0.0
    %4098 = vmatpush2.msra.mxu0 0.0
    %4099 = vmatprep.subr.mxu0 0.0
    %4100 = vmatpush2.msra.mxu0 0.0
    %4101 = vmatprep.subr.mxu0 0.0
    %4102 = vmatpush2.msra.mxu0 0.0
    %4103 = vmatprep.subr.mxu0 0.0
    %4104 = vmatpush2.msra.mxu0 0.0
    %4105 = vmatprep.subr.mxu0 0.0
    %4106 = vmatpush2.msra.mxu0 0.0
    %4107 = vmatprep.subr.mxu0 0.0
    %4108 = vmatpush2.msra.mxu0 0.0
    %4109 = vmatprep.subr.mxu0 0.0
    %4110 = vmatpush2.msra.mxu0 0.0
    %4111 = vmatprep.subr.mxu0 0.0
    %4112 = vmatpush2.msra.mxu0 0.0
    %4113 = vmatprep.subr.mxu0 0.0
    %4114 = vmatpush2.msra.mxu0 0.0
    %4115 = vmatprep.mubr.f32.mxu0 0.0
    %4116 = vmatmul.mubr.f32.gmra.mxu0 %v4049
    %v4117 = vpop.f32.mrf.mxu0
    %v4118 = vadd.f32 0.0, %v4117
    %v4119 = vpop.f32.mrf.mxu0
    %4120 = vdwg.mxu0
    %v4121 = vmul.f32 %v3899, 0.35355338
    %v4122 = vmul.f32 %v3972, 0.35355338
    %v4123 = vmul.f32 %v4045, 0.35355338
    %v4124 = vmul.f32 %v4118, 0.35355338
    %v4125 = vsel %vm1403, %v4121, -inf
    %4126 = vmax.xlane.f32.xlu0 %v4125
    %v4127 = vpop.xlane.xlu0 %4126
    %v4128 = vsel %vm1403, %v4122, -inf
    %4129 = vmax.xlane.f32.xlu0 %v4128
    %v4130 = vpop.xlane.xlu0 %4129
    %v4131 = vsel %vm1403, %v4123, -inf
    %4132 = vmax.xlane.f32.xlu0 %v4131
    %v4133 = vpop.xlane.xlu0 %4132
    %v4134 = vsel %vm1403, %v4124, -inf
    %4135 = vmax.xlane.f32.xlu0 %v4134
    %v4136 = vpop.xlane.xlu0 %4135
    %v4137 = vsub.f32 %v4121, %v4127
    %v4138 = vsub.f32 %v4122, %v4130
    %v4139 = vsub.f32 %v4123, %v4133
    %v4140 = vsub.f32 %v4124, %v4136
    %v4141 = vmul.f32 %v4137, 1.442695
    %v4142 = vpow.pop %v4141
    %v4143 = vmul.f32 %v4138, 1.442695
    %v4144 = vpow.pop %v4143
    %v4145 = vmul.f32 %v4139, 1.442695
    %v4146 = vpow.pop %v4145
    %v4147 = vmul.f32 %v4140, 1.442695
    %v4148 = vpow.pop %v4147
    %v4149 = vsel %vm1403, %v4142, 0.0
    %4150 = vadd.xlane.f32.xlu0 %v4149
    %v4151 = vpop.xlane.xlu0 %4150
    %v4152 = vsel %vm1403, %v4144, 0.0
    %4153 = vadd.xlane.f32.xlu0 %v4152
    %v4154 = vpop.xlane.xlu0 %4153
    %v4155 = vsel %vm1403, %v4146, 0.0
    %4156 = vadd.xlane.f32.xlu0 %v4155
    %v4157 = vpop.xlane.xlu0 %4156
    %v4158 = vsel %vm1403, %v4148, 0.0
    %4159 = vadd.xlane.f32.xlu0 %v4158
    %v4160 = vpop.xlane.xlu0 %4159
    %v4161 = vrcp.pop %v4151
    %v4162 = vrcp.pop %v4154
    %v4163 = vrcp.pop %v4157
    %v4164 = vrcp.pop %v4160
    %v4165 = vmul.f32 %v4142, %v4161
    %v4166 = vmul.f32 %v4144, %v4162
    %v4167 = vmul.f32 %v4146, %v4163
    %v4168 = vmul.f32 %v4148, %v4164
    %4169 = vxpose.xlu0.b32.start [1/16] %v591, 128
    %4170 = vxpose.xlu0.b32.cont [2/16] 0.0, 128
    %4171 = vxpose.xlu0.b32.cont [3/16] 0.0, 128
    %4172 = vxpose.xlu0.b32.cont [4/16] 0.0, 128
    %4173 = vxpose.xlu0.b32.cont [5/16] 0.0, 128
    %4174 = vxpose.xlu0.b32.cont [6/16] 0.0, 128
    %4175 = vxpose.xlu0.b32.cont [7/16] 0.0, 128
    %4176 = vxpose.xlu0.b32.cont [8/16] 0.0, 128
    %4177 = vxpose.xlu0.b32.cont [9/16] 0.0, 128
    %4178 = vxpose.xlu0.b32.cont [10/16] 0.0, 128
    %4179 = vxpose.xlu0.b32.cont [11/16] 0.0, 128
    %4180 = vxpose.xlu0.b32.cont [12/16] 0.0, 128
    %4181 = vxpose.xlu0.b32.cont [13/16] 0.0, 128
    %4182 = vxpose.xlu0.b32.cont [14/16] 0.0, 128
    %4183 = vxpose.xlu0.b32.cont [15/16] 0.0, 128
    %4184 = vxpose.xlu0.b32.end [16/16] 0.0, 128
    %v4185 = vpop.trf.xlu0
    %v4186 = vpop.trf.xlu0
    %v4187 = vpop.trf.xlu0
    %v4188 = vpop.trf.xlu0
    %v4189 = vpop.trf.xlu0
    %v4190 = vpop.trf.xlu0
    %v4191 = vpop.trf.xlu0
    %v4192 = vpop.trf.xlu0
    %v4193 = vpop.trf.xlu0
    %v4194 = vpop.trf.xlu0
    %v4195 = vpop.trf.xlu0
    %v4196 = vpop.trf.xlu0
    %v4197 = vpop.trf.xlu0
    %v4198 = vpop.trf.xlu0
    %v4199 = vpop.trf.xlu0
    %v4200 = vpop.trf.xlu0
    %4201 = vxpose.xlu0.b32.start [1/16] %v615, 128
    %4202 = vxpose.xlu0.b32.cont [2/16] 0.0, 128
    %4203 = vxpose.xlu0.b32.cont [3/16] 0.0, 128
    %4204 = vxpose.xlu0.b32.cont [4/16] 0.0, 128
    %4205 = vxpose.xlu0.b32.cont [5/16] 0.0, 128
    %4206 = vxpose.xlu0.b32.cont [6/16] 0.0, 128
    %4207 = vxpose.xlu0.b32.cont [7/16] 0.0, 128
    %4208 = vxpose.xlu0.b32.cont [8/16] 0.0, 128
    %4209 = vxpose.xlu0.b32.cont [9/16] 0.0, 128
    %4210 = vxpose.xlu0.b32.cont [10/16] 0.0, 128
    %4211 = vxpose.xlu0.b32.cont [11/16] 0.0, 128
    %4212 = vxpose.xlu0.b32.cont [12/16] 0.0, 128
    %4213 = vxpose.xlu0.b32.cont [13/16] 0.0, 128
    %4214 = vxpose.xlu0.b32.cont [14/16] 0.0, 128
    %4215 = vxpose.xlu0.b32.cont [15/16] 0.0, 128
    %4216 = vxpose.xlu0.b32.end [16/16] 0.0, 128
    %v4217 = vpop.trf.xlu0
    %v4218 = vpop.trf.xlu0
    %v4219 = vpop.trf.xlu0
    %v4220 = vpop.trf.xlu0
    %v4221 = vpop.trf.xlu0
    %v4222 = vpop.trf.xlu0
    %v4223 = vpop.trf.xlu0
    %v4224 = vpop.trf.xlu0
    %v4225 = vpop.trf.xlu0
    %v4226 = vpop.trf.xlu0
    %v4227 = vpop.trf.xlu0
    %v4228 = vpop.trf.xlu0
    %v4229 = vpop.trf.xlu0
    %v4230 = vpop.trf.xlu0
    %v4231 = vpop.trf.xlu0
    %v4232 = vpop.trf.xlu0
    %4233 = vxpose.xlu0.b32.start [1/16] %v598, 128
    %4234 = vxpose.xlu0.b32.cont [2/16] 0.0, 128
    %4235 = vxpose.xlu0.b32.cont [3/16] 0.0, 128
    %4236 = vxpose.xlu0.b32.cont [4/16] 0.0, 128
    %4237 = vxpose.xlu0.b32.cont [5/16] 0.0, 128
    %4238 = vxpose.xlu0.b32.cont [6/16] 0.0, 128
    %4239 = vxpose.xlu0.b32.cont [7/16] 0.0, 128
    %4240 = vxpose.xlu0.b32.cont [8/16] 0.0, 128
    %4241 = vxpose.xlu0.b32.cont [9/16] 0.0, 128
    %4242 = vxpose.xlu0.b32.cont [10/16] 0.0, 128
    %4243 = vxpose.xlu0.b32.cont [11/16] 0.0, 128
    %4244 = vxpose.xlu0.b32.cont [12/16] 0.0, 128
    %4245 = vxpose.xlu0.b32.cont [13/16] 0.0, 128
    %4246 = vxpose.xlu0.b32.cont [14/16] 0.0, 128
    %4247 = vxpose.xlu0.b32.cont [15/16] 0.0, 128
    %4248 = vxpose.xlu0.b32.end [16/16] 0.0, 128
    %v4249 = vpop.trf.xlu0
    %v4250 = vpop.trf.xlu0
    %v4251 = vpop.trf.xlu0
    %v4252 = vpop.trf.xlu0
    %v4253 = vpop.trf.xlu0
    %v4254 = vpop.trf.xlu0
    %v4255 = vpop.trf.xlu0
    %v4256 = vpop.trf.xlu0
    %v4257 = vpop.trf.xlu0
    %v4258 = vpop.trf.xlu0
    %v4259 = vpop.trf.xlu0
    %v4260 = vpop.trf.xlu0
    %v4261 = vpop.trf.xlu0
    %v4262 = vpop.trf.xlu0
    %v4263 = vpop.trf.xlu0
    %v4264 = vpop.trf.xlu0
    %4265 = vxpose.xlu0.b32.start [1/16] %v616, 128
    %4266 = vxpose.xlu0.b32.cont [2/16] 0.0, 128
    %4267 = vxpose.xlu0.b32.cont [3/16] 0.0, 128
    %4268 = vxpose.xlu0.b32.cont [4/16] 0.0, 128
    %4269 = vxpose.xlu0.b32.cont [5/16] 0.0, 128
    %4270 = vxpose.xlu0.b32.cont [6/16] 0.0, 128
    %4271 = vxpose.xlu0.b32.cont [7/16] 0.0, 128
    %4272 = vxpose.xlu0.b32.cont [8/16] 0.0, 128
    %4273 = vxpose.xlu0.b32.cont [9/16] 0.0, 128
    %4274 = vxpose.xlu0.b32.cont [10/16] 0.0, 128
    %4275 = vxpose.xlu0.b32.cont [11/16] 0.0, 128
    %4276 = vxpose.xlu0.b32.cont [12/16] 0.0, 128
    %4277 = vxpose.xlu0.b32.cont [13/16] 0.0, 128
    %4278 = vxpose.xlu0.b32.cont [14/16] 0.0, 128
    %4279 = vxpose.xlu0.b32.cont [15/16] 0.0, 128
    %4280 = vxpose.xlu0.b32.end [16/16] 0.0, 128
    %v4281 = vpop.trf.xlu0
    %v4282 = vpop.trf.xlu0
    %v4283 = vpop.trf.xlu0
    %v4284 = vpop.trf.xlu0
    %v4285 = vpop.trf.xlu0
    %v4286 = vpop.trf.xlu0
    %v4287 = vpop.trf.xlu0
    %v4288 = vpop.trf.xlu0
    %v4289 = vpop.trf.xlu0
    %v4290 = vpop.trf.xlu0
    %v4291 = vpop.trf.xlu0
    %v4292 = vpop.trf.xlu0
    %v4293 = vpop.trf.xlu0
    %v4294 = vpop.trf.xlu0
    %v4295 = vpop.trf.xlu0
    %v4296 = vpop.trf.xlu0
    %4297 = vxpose.xlu0.b32.start [1/16] %v607, 128
    %4298 = vxpose.xlu0.b32.cont [2/16] 0.0, 128
    %4299 = vxpose.xlu0.b32.cont [3/16] 0.0, 128
    %4300 = vxpose.xlu0.b32.cont [4/16] 0.0, 128
    %4301 = vxpose.xlu0.b32.cont [5/16] 0.0, 128
    %4302 = vxpose.xlu0.b32.cont [6/16] 0.0, 128
    %4303 = vxpose.xlu0.b32.cont [7/16] 0.0, 128
    %4304 = vxpose.xlu0.b32.cont [8/16] 0.0, 128
    %4305 = vxpose.xlu0.b32.cont [9/16] 0.0, 128
    %4306 = vxpose.xlu0.b32.cont [10/16] 0.0, 128
    %4307 = vxpose.xlu0.b32.cont [11/16] 0.0, 128
    %4308 = vxpose.xlu0.b32.cont [12/16] 0.0, 128
    %4309 = vxpose.xlu0.b32.cont [13/16] 0.0, 128
    %4310 = vxpose.xlu0.b32.cont [14/16] 0.0, 128
    %4311 = vxpose.xlu0.b32.cont [15/16] 0.0, 128
    %4312 = vxpose.xlu0.b32.end [16/16] 0.0, 128
    %v4313 = vpop.trf.xlu0
    %v4314 = vpop.trf.xlu0
    %v4315 = vpop.trf.xlu0
    %v4316 = vpop.trf.xlu0
    %v4317 = vpop.trf.xlu0
    %v4318 = vpop.trf.xlu0
    %v4319 = vpop.trf.xlu0
    %v4320 = vpop.trf.xlu0
    %v4321 = vpop.trf.xlu0
    %v4322 = vpop.trf.xlu0
    %v4323 = vpop.trf.xlu0
    %v4324 = vpop.trf.xlu0
    %v4325 = vpop.trf.xlu0
    %v4326 = vpop.trf.xlu0
    %v4327 = vpop.trf.xlu0
    %v4328 = vpop.trf.xlu0
    %4329 = vxpose.xlu0.b32.start [1/16] %v617, 128
    %4330 = vxpose.xlu0.b32.cont [2/16] 0.0, 128
    %4331 = vxpose.xlu0.b32.cont [3/16] 0.0, 128
    %4332 = vxpose.xlu0.b32.cont [4/16] 0.0, 128
    %4333 = vxpose.xlu0.b32.cont [5/16] 0.0, 128
    %4334 = vxpose.xlu0.b32.cont [6/16] 0.0, 128
    %4335 = vxpose.xlu0.b32.cont [7/16] 0.0, 128
    %4336 = vxpose.xlu0.b32.cont [8/16] 0.0, 128
    %4337 = vxpose.xlu0.b32.cont [9/16] 0.0, 128
    %4338 = vxpose.xlu0.b32.cont [10/16] 0.0, 128
    %4339 = vxpose.xlu0.b32.cont [11/16] 0.0, 128
    %4340 = vxpose.xlu0.b32.cont [12/16] 0.0, 128
    %4341 = vxpose.xlu0.b32.cont [13/16] 0.0, 128
    %4342 = vxpose.xlu0.b32.cont [14/16] 0.0, 128
    %4343 = vxpose.xlu0.b32.cont [15/16] 0.0, 128
    %4344 = vxpose.xlu0.b32.end [16/16] 0.0, 128
    %v4345 = vpop.trf.xlu0
    %v4346 = vpop.trf.xlu0
    %v4347 = vpop.trf.xlu0
    %v4348 = vpop.trf.xlu0
    %v4349 = vpop.trf.xlu0
    %v4350 = vpop.trf.xlu0
    %v4351 = vpop.trf.xlu0
    %v4352 = vpop.trf.xlu0
    %v4353 = vpop.trf.xlu0
    %v4354 = vpop.trf.xlu0
    %v4355 = vpop.trf.xlu0
    %v4356 = vpop.trf.xlu0
    %v4357 = vpop.trf.xlu0
    %v4358 = vpop.trf.xlu0
    %v4359 = vpop.trf.xlu0
    %v4360 = vpop.trf.xlu0
    %4361 = vxpose.xlu0.b32.start [1/16] %v614, 128
    %4362 = vxpose.xlu0.b32.cont [2/16] 0.0, 128
    %4363 = vxpose.xlu0.b32.cont [3/16] 0.0, 128
    %4364 = vxpose.xlu0.b32.cont [4/16] 0.0, 128
    %4365 = vxpose.xlu0.b32.cont [5/16] 0.0, 128
    %4366 = vxpose.xlu0.b32.cont [6/16] 0.0, 128
    %4367 = vxpose.xlu0.b32.cont [7/16] 0.0, 128
    %4368 = vxpose.xlu0.b32.cont [8/16] 0.0, 128
    %4369 = vxpose.xlu0.b32.cont [9/16] 0.0, 128
    %4370 = vxpose.xlu0.b32.cont [10/16] 0.0, 128
    %4371 = vxpose.xlu0.b32.cont [11/16] 0.0, 128
    %4372 = vxpose.xlu0.b32.cont [12/16] 0.0, 128
    %4373 = vxpose.xlu0.b32.cont [13/16] 0.0, 128
    %4374 = vxpose.xlu0.b32.cont [14/16] 0.0, 128
    %4375 = vxpose.xlu0.b32.cont [15/16] 0.0, 128
    %4376 = vxpose.xlu0.b32.end [16/16] 0.0, 128
    %v4377 = vpop.trf.xlu0
    %v4378 = vpop.trf.xlu0
    %v4379 = vpop.trf.xlu0
    %v4380 = vpop.trf.xlu0
    %v4381 = vpop.trf.xlu0
    %v4382 = vpop.trf.xlu0
    %v4383 = vpop.trf.xlu0
    %v4384 = vpop.trf.xlu0
    %v4385 = vpop.trf.xlu0
    %v4386 = vpop.trf.xlu0
    %v4387 = vpop.trf.xlu0
    %v4388 = vpop.trf.xlu0
    %v4389 = vpop.trf.xlu0
    %v4390 = vpop.trf.xlu0
    %v4391 = vpop.trf.xlu0
    %v4392 = vpop.trf.xlu0
    %4393 = vxpose.xlu0.b32.start [1/16] %v618, 128
    %4394 = vxpose.xlu0.b32.cont [2/16] 0.0, 128
    %4395 = vxpose.xlu0.b32.cont [3/16] 0.0, 128
    %4396 = vxpose.xlu0.b32.cont [4/16] 0.0, 128
    %4397 = vxpose.xlu0.b32.cont [5/16] 0.0, 128
    %4398 = vxpose.xlu0.b32.cont [6/16] 0.0, 128
    %4399 = vxpose.xlu0.b32.cont [7/16] 0.0, 128
    %4400 = vxpose.xlu0.b32.cont [8/16] 0.0, 128
    %4401 = vxpose.xlu0.b32.cont [9/16] 0.0, 128
    %4402 = vxpose.xlu0.b32.cont [10/16] 0.0, 128
    %4403 = vxpose.xlu0.b32.cont [11/16] 0.0, 128
    %4404 = vxpose.xlu0.b32.cont [12/16] 0.0, 128
    %4405 = vxpose.xlu0.b32.cont [13/16] 0.0, 128
    %4406 = vxpose.xlu0.b32.cont [14/16] 0.0, 128
    %4407 = vxpose.xlu0.b32.cont [15/16] 0.0, 128
    %4408 = vxpose.xlu0.b32.end [16/16] 0.0, 128
    %v4409 = vpop.trf.xlu0
    %v4410 = vpop.trf.xlu0
    %v4411 = vpop.trf.xlu0
    %v4412 = vpop.trf.xlu0
    %v4413 = vpop.trf.xlu0
    %v4414 = vpop.trf.xlu0
    %v4415 = vpop.trf.xlu0
    %v4416 = vpop.trf.xlu0
    %v4417 = vpop.trf.xlu0
    %v4418 = vpop.trf.xlu0
    %v4419 = vpop.trf.xlu0
    %v4420 = vpop.trf.xlu0
    %v4421 = vpop.trf.xlu0
    %v4422 = vpop.trf.xlu0
    %v4423 = vpop.trf.xlu0
    %v4424 = vpop.trf.xlu0
    %v4425 = vcombine.low %v4185, %v4249
    %v4426 = vcombine.high %v4185, %v4249
    %v4428 = vunpack.c.l.s4 1983009808
    %v4429 = vunpack.c.0.s8 %v4428
    %v4430 = vlaneseq
    %v4431 = vshrl.u32 %v4430, 7
    %v4432 = vsub.s32 %v4429, %v4431
    %v4433 = vrot.slane %v4425, %v4432
    %v4435 = vunpack.c.l.s4 1983009808
    %v4436 = vunpack.c.0.s8 %v4435
    %v4437 = vlaneseq
    %v4438 = vshrl.u32 %v4437, 7
    %v4439 = vsub.s32 %v4436, %v4438
    %v4440 = vrot.slane %v4426, %v4439
    %v4441 = vcombine.low %v4217, %v4281
    %v4442 = vcombine.high %v4217, %v4281
    %v4444 = vunpack.c.l.s4 1983009808
    %v4445 = vunpack.c.0.s8 %v4444
    %v4446 = vlaneseq
    %v4447 = vshrl.u32 %v4446, 7
    %v4448 = vsub.s32 %v4445, %v4447
    %v4449 = vrot.slane %v4441, %v4448
    %v4451 = vunpack.c.l.s4 1983009808
    %v4452 = vunpack.c.0.s8 %v4451
    %v4453 = vlaneseq
    %v4454 = vshrl.u32 %v4453, 7
    %v4455 = vsub.s32 %v4452, %v4454
    %v4456 = vrot.slane %v4442, %v4455
    %v4457 = vcombine.low %v4313, %v4377
    %v4458 = vcombine.high %v4313, %v4377
    %v4460 = vunpack.c.l.s4 1983009808
    %v4461 = vunpack.c.0.s8 %v4460
    %v4462 = vlaneseq
    %v4463 = vshrl.u32 %v4462, 7
    %v4464 = vsub.s32 %v4461, %v4463
    %v4465 = vrot.slane %v4457, %v4464
    %v4467 = vunpack.c.l.s4 1983009808
    %v4468 = vunpack.c.0.s8 %v4467
    %v4469 = vlaneseq
    %v4470 = vshrl.u32 %v4469, 7
    %v4471 = vsub.s32 %v4468, %v4470
    %v4472 = vrot.slane %v4458, %v4471
    %v4473 = vcombine.low %v4345, %v4409
    %v4474 = vcombine.high %v4345, %v4409
    %v4476 = vunpack.c.l.s4 1983009808
    %v4477 = vunpack.c.0.s8 %v4476
    %v4478 = vlaneseq
    %v4479 = vshrl.u32 %v4478, 7
    %v4480 = vsub.s32 %v4477, %v4479
    %v4481 = vrot.slane %v4473, %v4480
    %v4483 = vunpack.c.l.s4 1983009808
    %v4484 = vunpack.c.0.s8 %v4483
    %v4485 = vlaneseq
    %v4486 = vshrl.u32 %v4485, 7
    %v4487 = vsub.s32 %v4484, %v4486
    %v4488 = vrot.slane %v4474, %v4487
    %v4489 = vcombine.low %v4433, %v4449
    %v4490 = vcombine.high %v4433, %v4449
    %v4492 = vunpack.c.l.s4 1934713408
    %v4493 = vunpack.c.0.s8 %v4492
    %v4494 = vlaneseq
    %v4495 = vshrl.u32 %v4494, 7
    %v4496 = vsub.s32 %v4493, %v4495
    %v4497 = vrot.slane %v4489, %v4496
    %v4499 = vunpack.c.l.s4 1934713408
    %v4500 = vunpack.c.0.s8 %v4499
    %v4501 = vlaneseq
    %v4502 = vshrl.u32 %v4501, 7
    %v4503 = vsub.s32 %v4500, %v4502
    %v4504 = vrot.slane %v4490, %v4503
    %v4505 = vcombine.low %v4440, %v4456
    %v4506 = vcombine.high %v4440, %v4456
    %v4508 = vunpack.c.l.s4 1934713408
    %v4509 = vunpack.c.0.s8 %v4508
    %v4510 = vlaneseq
    %v4511 = vshrl.u32 %v4510, 7
    %v4512 = vsub.s32 %v4509, %v4511
    %v4513 = vrot.slane %v4505, %v4512
    %v4515 = vunpack.c.l.s4 1934713408
    %v4516 = vunpack.c.0.s8 %v4515
    %v4517 = vlaneseq
    %v4518 = vshrl.u32 %v4517, 7
    %v4519 = vsub.s32 %v4516, %v4518
    %v4520 = vrot.slane %v4506, %v4519
    %v4521 = vcombine.low %v4465, %v4481
    %v4522 = vcombine.high %v4465, %v4481
    %v4524 = vunpack.c.l.s4 1934713408
    %v4525 = vunpack.c.0.s8 %v4524
    %v4526 = vlaneseq
    %v4527 = vshrl.u32 %v4526, 7
    %v4528 = vsub.s32 %v4525, %v4527
    %v4529 = vrot.slane %v4521, %v4528
    %v4531 = vunpack.c.l.s4 1934713408
    %v4532 = vunpack.c.0.s8 %v4531
    %v4533 = vlaneseq
    %v4534 = vshrl.u32 %v4533, 7
    %v4535 = vsub.s32 %v4532, %v4534
    %v4536 = vrot.slane %v4522, %v4535
    %v4537 = vcombine.low %v4472, %v4488
    %v4538 = vcombine.high %v4472, %v4488
    %v4540 = vunpack.c.l.s4 1934713408
    %v4541 = vunpack.c.0.s8 %v4540
    %v4542 = vlaneseq
    %v4543 = vshrl.u32 %v4542, 7
    %v4544 = vsub.s32 %v4541, %v4543
    %v4545 = vrot.slane %v4537, %v4544
    %v4547 = vunpack.c.l.s4 1934713408
    %v4548 = vunpack.c.0.s8 %v4547
    %v4549 = vlaneseq
    %v4550 = vshrl.u32 %v4549, 7
    %v4551 = vsub.s32 %v4548, %v4550
    %v4552 = vrot.slane %v4538, %v4551
    %v4553 = vcombine.low %v4497, %v4529
    %v4554 = vcombine.high %v4497, %v4529
    %v4555 = vcombine.low %v4504, %v4536
    %v4556 = vcombine.high %v4504, %v4536
    %v4557 = vcombine.low %v4513, %v4545
    %v4558 = vcombine.high %v4513, %v4545
    %v4559 = vcombine.low %v4520, %v4552
    %v4560 = vcombine.high %v4520, %v4552
    %4561 = vxpose.xlu0.b32.start [1/16] %v4553, 128
    %4562 = vxpose.xlu0.b32.cont [2/16] 0.0, 128
    %4563 = vxpose.xlu0.b32.cont [3/16] 0.0, 128
    %4564 = vxpose.xlu0.b32.cont [4/16] 0.0, 128
    %4565 = vxpose.xlu0.b32.cont [5/16] 0.0, 128
    %4566 = vxpose.xlu0.b32.cont [6/16] 0.0, 128
    %4567 = vxpose.xlu0.b32.cont [7/16] 0.0, 128
    %4568 = vxpose.xlu0.b32.cont [8/16] 0.0, 128
    %4569 = vxpose.xlu0.b32.cont [9/16] 0.0, 128
    %4570 = vxpose.xlu0.b32.cont [10/16] 0.0, 128
    %4571 = vxpose.xlu0.b32.cont [11/16] 0.0, 128
    %4572 = vxpose.xlu0.b32.cont [12/16] 0.0, 128
    %4573 = vxpose.xlu0.b32.cont [13/16] 0.0, 128
    %4574 = vxpose.xlu0.b32.cont [14/16] 0.0, 128
    %4575 = vxpose.xlu0.b32.cont [15/16] 0.0, 128
    %4576 = vxpose.xlu0.b32.end [16/16] 0.0, 128
    %v4577 = vpop.trf.xlu0
    %v4578 = vpop.trf.xlu0
    %v4579 = vpop.trf.xlu0
    %v4580 = vpop.trf.xlu0
    %v4581 = vpop.trf.xlu0
    %v4582 = vpop.trf.xlu0
    %v4583 = vpop.trf.xlu0
    %v4584 = vpop.trf.xlu0
    %v4585 = vpop.trf.xlu0
    %v4586 = vpop.trf.xlu0
    %v4587 = vpop.trf.xlu0
    %v4588 = vpop.trf.xlu0
    %v4589 = vpop.trf.xlu0
    %v4590 = vpop.trf.xlu0
    %v4591 = vpop.trf.xlu0
    %v4592 = vpop.trf.xlu0
    %4593 = vxpose.xlu0.b32.start [1/16] %v4554, 128
    %4594 = vxpose.xlu0.b32.cont [2/16] 0.0, 128
    %4595 = vxpose.xlu0.b32.cont [3/16] 0.0, 128
    %4596 = vxpose.xlu0.b32.cont [4/16] 0.0, 128
    %4597 = vxpose.xlu0.b32.cont [5/16] 0.0, 128
    %4598 = vxpose.xlu0.b32.cont [6/16] 0.0, 128
    %4599 = vxpose.xlu0.b32.cont [7/16] 0.0, 128
    %4600 = vxpose.xlu0.b32.cont [8/16] 0.0, 128
    %4601 = vxpose.xlu0.b32.cont [9/16] 0.0, 128
    %4602 = vxpose.xlu0.b32.cont [10/16] 0.0, 128
    %4603 = vxpose.xlu0.b32.cont [11/16] 0.0, 128
    %4604 = vxpose.xlu0.b32.cont [12/16] 0.0, 128
    %4605 = vxpose.xlu0.b32.cont [13/16] 0.0, 128
    %4606 = vxpose.xlu0.b32.cont [14/16] 0.0, 128
    %4607 = vxpose.xlu0.b32.cont [15/16] 0.0, 128
    %4608 = vxpose.xlu0.b32.end [16/16] 0.0, 128
    %v4609 = vpop.trf.xlu0
    %v4610 = vpop.trf.xlu0
    %v4611 = vpop.trf.xlu0
    %v4612 = vpop.trf.xlu0
    %v4613 = vpop.trf.xlu0
    %v4614 = vpop.trf.xlu0
    %v4615 = vpop.trf.xlu0
    %v4616 = vpop.trf.xlu0
    %v4617 = vpop.trf.xlu0
    %v4618 = vpop.trf.xlu0
    %v4619 = vpop.trf.xlu0
    %v4620 = vpop.trf.xlu0
    %v4621 = vpop.trf.xlu0
    %v4622 = vpop.trf.xlu0
    %v4623 = vpop.trf.xlu0
    %v4624 = vpop.trf.xlu0
    %4625 = vxpose.xlu0.b32.start [1/16] %v4555, 128
    %4626 = vxpose.xlu0.b32.cont [2/16] 0.0, 128
    %4627 = vxpose.xlu0.b32.cont [3/16] 0.0, 128
    %4628 = vxpose.xlu0.b32.cont [4/16] 0.0, 128
    %4629 = vxpose.xlu0.b32.cont [5/16] 0.0, 128
    %4630 = vxpose.xlu0.b32.cont [6/16] 0.0, 128
    %4631 = vxpose.xlu0.b32.cont [7/16] 0.0, 128
    %4632 = vxpose.xlu0.b32.cont [8/16] 0.0, 128
    %4633 = vxpose.xlu0.b32.cont [9/16] 0.0, 128
    %4634 = vxpose.xlu0.b32.cont [10/16] 0.0, 128
    %4635 = vxpose.xlu0.b32.cont [11/16] 0.0, 128
    %4636 = vxpose.xlu0.b32.cont [12/16] 0.0, 128
    %4637 = vxpose.xlu0.b32.cont [13/16] 0.0, 128
    %4638 = vxpose.xlu0.b32.cont [14/16] 0.0, 128
    %4639 = vxpose.xlu0.b32.cont [15/16] 0.0, 128
    %4640 = vxpose.xlu0.b32.end [16/16] 0.0, 128
    %v4641 = vpop.trf.xlu0
    %v4642 = vpop.trf.xlu0
    %v4643 = vpop.trf.xlu0
    %v4644 = vpop.trf.xlu0
    %v4645 = vpop.trf.xlu0
    %v4646 = vpop.trf.xlu0
    %v4647 = vpop.trf.xlu0
    %v4648 = vpop.trf.xlu0
    %v4649 = vpop.trf.xlu0
    %v4650 = vpop.trf.xlu0
    %v4651 = vpop.trf.xlu0
    %v4652 = vpop.trf.xlu0
    %v4653 = vpop.trf.xlu0
    %v4654 = vpop.trf.xlu0
    %v4655 = vpop.trf.xlu0
    %v4656 = vpop.trf.xlu0
    %4657 = vxpose.xlu0.b32.start [1/16] %v4556, 128
    %4658 = vxpose.xlu0.b32.cont [2/16] 0.0, 128
    %4659 = vxpose.xlu0.b32.cont [3/16] 0.0, 128
    %4660 = vxpose.xlu0.b32.cont [4/16] 0.0, 128
    %4661 = vxpose.xlu0.b32.cont [5/16] 0.0, 128
    %4662 = vxpose.xlu0.b32.cont [6/16] 0.0, 128
    %4663 = vxpose.xlu0.b32.cont [7/16] 0.0, 128
    %4664 = vxpose.xlu0.b32.cont [8/16] 0.0, 128
    %4665 = vxpose.xlu0.b32.cont [9/16] 0.0, 128
    %4666 = vxpose.xlu0.b32.cont [10/16] 0.0, 128
    %4667 = vxpose.xlu0.b32.cont [11/16] 0.0, 128
    %4668 = vxpose.xlu0.b32.cont [12/16] 0.0, 128
    %4669 = vxpose.xlu0.b32.cont [13/16] 0.0, 128
    %4670 = vxpose.xlu0.b32.cont [14/16] 0.0, 128
    %4671 = vxpose.xlu0.b32.cont [15/16] 0.0, 128
    %4672 = vxpose.xlu0.b32.end [16/16] 0.0, 128
    %v4673 = vpop.trf.xlu0
    %v4674 = vpop.trf.xlu0
    %v4675 = vpop.trf.xlu0
    %v4676 = vpop.trf.xlu0
    %v4677 = vpop.trf.xlu0
    %v4678 = vpop.trf.xlu0
    %v4679 = vpop.trf.xlu0
    %v4680 = vpop.trf.xlu0
    %v4681 = vpop.trf.xlu0
    %v4682 = vpop.trf.xlu0
    %v4683 = vpop.trf.xlu0
    %v4684 = vpop.trf.xlu0
    %v4685 = vpop.trf.xlu0
    %v4686 = vpop.trf.xlu0
    %v4687 = vpop.trf.xlu0
    %v4688 = vpop.trf.xlu0
    %4689 = vxpose.xlu0.b32.start [1/16] %v4557, 128
    %4690 = vxpose.xlu0.b32.cont [2/16] 0.0, 128
    %4691 = vxpose.xlu0.b32.cont [3/16] 0.0, 128
    %4692 = vxpose.xlu0.b32.cont [4/16] 0.0, 128
    %4693 = vxpose.xlu0.b32.cont [5/16] 0.0, 128
    %4694 = vxpose.xlu0.b32.cont [6/16] 0.0, 128
    %4695 = vxpose.xlu0.b32.cont [7/16] 0.0, 128
    %4696 = vxpose.xlu0.b32.cont [8/16] 0.0, 128
    %4697 = vxpose.xlu0.b32.cont [9/16] 0.0, 128
    %4698 = vxpose.xlu0.b32.cont [10/16] 0.0, 128
    %4699 = vxpose.xlu0.b32.cont [11/16] 0.0, 128
    %4700 = vxpose.xlu0.b32.cont [12/16] 0.0, 128
    %4701 = vxpose.xlu0.b32.cont [13/16] 0.0, 128
    %4702 = vxpose.xlu0.b32.cont [14/16] 0.0, 128
    %4703 = vxpose.xlu0.b32.cont [15/16] 0.0, 128
    %4704 = vxpose.xlu0.b32.end [16/16] 0.0, 128
    %v4705 = vpop.trf.xlu0
    %v4706 = vpop.trf.xlu0
    %v4707 = vpop.trf.xlu0
    %v4708 = vpop.trf.xlu0
    %v4709 = vpop.trf.xlu0
    %v4710 = vpop.trf.xlu0
    %v4711 = vpop.trf.xlu0
    %v4712 = vpop.trf.xlu0
    %v4713 = vpop.trf.xlu0
    %v4714 = vpop.trf.xlu0
    %v4715 = vpop.trf.xlu0
    %v4716 = vpop.trf.xlu0
    %v4717 = vpop.trf.xlu0
    %v4718 = vpop.trf.xlu0
    %v4719 = vpop.trf.xlu0
    %v4720 = vpop.trf.xlu0
    %4721 = vxpose.xlu0.b32.start [1/16] %v4558, 128
    %4722 = vxpose.xlu0.b32.cont [2/16] 0.0, 128
    %4723 = vxpose.xlu0.b32.cont [3/16] 0.0, 128
    %4724 = vxpose.xlu0.b32.cont [4/16] 0.0, 128
    %4725 = vxpose.xlu0.b32.cont [5/16] 0.0, 128
    %4726 = vxpose.xlu0.b32.cont [6/16] 0.0, 128
    %4727 = vxpose.xlu0.b32.cont [7/16] 0.0, 128
    %4728 = vxpose.xlu0.b32.cont [8/16] 0.0, 128
    %4729 = vxpose.xlu0.b32.cont [9/16] 0.0, 128
    %4730 = vxpose.xlu0.b32.cont [10/16] 0.0, 128
    %4731 = vxpose.xlu0.b32.cont [11/16] 0.0, 128
    %4732 = vxpose.xlu0.b32.cont [12/16] 0.0, 128
    %4733 = vxpose.xlu0.b32.cont [13/16] 0.0, 128
    %4734 = vxpose.xlu0.b32.cont [14/16] 0.0, 128
    %4735 = vxpose.xlu0.b32.cont [15/16] 0.0, 128
    %4736 = vxpose.xlu0.b32.end [16/16] 0.0, 128
    %v4737 = vpop.trf.xlu0
    %v4738 = vpop.trf.xlu0
    %v4739 = vpop.trf.xlu0
    %v4740 = vpop.trf.xlu0
    %v4741 = vpop.trf.xlu0
    %v4742 = vpop.trf.xlu0
    %v4743 = vpop.trf.xlu0
    %v4744 = vpop.trf.xlu0
    %v4745 = vpop.trf.xlu0
    %v4746 = vpop.trf.xlu0
    %v4747 = vpop.trf.xlu0
    %v4748 = vpop.trf.xlu0
    %v4749 = vpop.trf.xlu0
    %v4750 = vpop.trf.xlu0
    %v4751 = vpop.trf.xlu0
    %v4752 = vpop.trf.xlu0
    %4753 = vxpose.xlu0.b32.start [1/16] %v4559, 128
    %4754 = vxpose.xlu0.b32.cont [2/16] 0.0, 128
    %4755 = vxpose.xlu0.b32.cont [3/16] 0.0, 128
    %4756 = vxpose.xlu0.b32.cont [4/16] 0.0, 128
    %4757 = vxpose.xlu0.b32.cont [5/16] 0.0, 128
    %4758 = vxpose.xlu0.b32.cont [6/16] 0.0, 128
    %4759 = vxpose.xlu0.b32.cont [7/16] 0.0, 128
    %4760 = vxpose.xlu0.b32.cont [8/16] 0.0, 128
    %4761 = vxpose.xlu0.b32.cont [9/16] 0.0, 128
    %4762 = vxpose.xlu0.b32.cont [10/16] 0.0, 128
    %4763 = vxpose.xlu0.b32.cont [11/16] 0.0, 128
    %4764 = vxpose.xlu0.b32.cont [12/16] 0.0, 128
    %4765 = vxpose.xlu0.b32.cont [13/16] 0.0, 128
    %4766 = vxpose.xlu0.b32.cont [14/16] 0.0, 128
    %4767 = vxpose.xlu0.b32.cont [15/16] 0.0, 128
    %4768 = vxpose.xlu0.b32.end [16/16] 0.0, 128
    %v4769 = vpop.trf.xlu0
    %v4770 = vpop.trf.xlu0
    %v4771 = vpop.trf.xlu0
    %v4772 = vpop.trf.xlu0
    %v4773 = vpop.trf.xlu0
    %v4774 = vpop.trf.xlu0
    %v4775 = vpop.trf.xlu0
    %v4776 = vpop.trf.xlu0
    %v4777 = vpop.trf.xlu0
    %v4778 = vpop.trf.xlu0
    %v4779 = vpop.trf.xlu0
    %v4780 = vpop.trf.xlu0
    %v4781 = vpop.trf.xlu0
    %v4782 = vpop.trf.xlu0
    %v4783 = vpop.trf.xlu0
    %v4784 = vpop.trf.xlu0
    %4785 = vxpose.xlu0.b32.start [1/16] %v4560, 128
    %4786 = vxpose.xlu0.b32.cont [2/16] 0.0, 128
    %4787 = vxpose.xlu0.b32.cont [3/16] 0.0, 128
    %4788 = vxpose.xlu0.b32.cont [4/16] 0.0, 128
    %4789 = vxpose.xlu0.b32.cont [5/16] 0.0, 128
    %4790 = vxpose.xlu0.b32.cont [6/16] 0.0, 128
    %4791 = vxpose.xlu0.b32.cont [7/16] 0.0, 128
    %4792 = vxpose.xlu0.b32.cont [8/16] 0.0, 128
    %4793 = vxpose.xlu0.b32.cont [9/16] 0.0, 128
    %4794 = vxpose.xlu0.b32.cont [10/16] 0.0, 128
    %4795 = vxpose.xlu0.b32.cont [11/16] 0.0, 128
    %4796 = vxpose.xlu0.b32.cont [12/16] 0.0, 128
    %4797 = vxpose.xlu0.b32.cont [13/16] 0.0, 128
    %4798 = vxpose.xlu0.b32.cont [14/16] 0.0, 128
    %4799 = vxpose.xlu0.b32.cont [15/16] 0.0, 128
    %4800 = vxpose.xlu0.b32.end [16/16] 0.0, 128
    %v4801 = vpop.trf.xlu0
    %v4802 = vpop.trf.xlu0
    %v4803 = vpop.trf.xlu0
    %v4804 = vpop.trf.xlu0
    %v4805 = vpop.trf.xlu0
    %v4806 = vpop.trf.xlu0
    %v4807 = vpop.trf.xlu0
    %v4808 = vpop.trf.xlu0
    %v4809 = vpop.trf.xlu0
    %v4810 = vpop.trf.xlu0
    %v4811 = vpop.trf.xlu0
    %v4812 = vpop.trf.xlu0
    %v4813 = vpop.trf.xlu0
    %v4814 = vpop.trf.xlu0
    %v4815 = vpop.trf.xlu0
    %v4816 = vpop.trf.xlu0
    %v4817 = vcombine.low %v4577, %v4641
    %v4819 = vunpack.c.l.s4 1983009808
    %v4820 = vunpack.c.0.s8 %v4819
    %v4821 = vlaneseq
    %v4822 = vshrl.u32 %v4821, 7
    %v4823 = vsub.s32 %v4820, %v4822
    %v4824 = vrot.slane %v4817, %v4823
    %v4825 = vcombine.low %v4609, %v4673
    %v4827 = vunpack.c.l.s4 1983009808
    %v4828 = vunpack.c.0.s8 %v4827
    %v4829 = vlaneseq
    %v4830 = vshrl.u32 %v4829, 7
    %v4831 = vsub.s32 %v4828, %v4830
    %v4832 = vrot.slane %v4825, %v4831
    %v4833 = vcombine.low %v4705, %v4769
    %v4835 = vunpack.c.l.s4 1983009808
    %v4836 = vunpack.c.0.s8 %v4835
    %v4837 = vlaneseq
    %v4838 = vshrl.u32 %v4837, 7
    %v4839 = vsub.s32 %v4836, %v4838
    %v4840 = vrot.slane %v4833, %v4839
    %v4841 = vcombine.low %v4737, %v4801
    %v4843 = vunpack.c.l.s4 1983009808
    %v4844 = vunpack.c.0.s8 %v4843
    %v4845 = vlaneseq
    %v4846 = vshrl.u32 %v4845, 7
    %v4847 = vsub.s32 %v4844, %v4846
    %v4848 = vrot.slane %v4841, %v4847
    %v4849 = vcombine.low %v4824, %v4832
    %v4850 = vcombine.high %v4824, %v4832
    %v4852 = vunpack.c.l.s4 1934713408
    %v4853 = vunpack.c.0.s8 %v4852
    %v4854 = vlaneseq
    %v4855 = vshrl.u32 %v4854, 7
    %v4856 = vsub.s32 %v4853, %v4855
    %v4857 = vrot.slane %v4849, %v4856
    %v4859 = vunpack.c.l.s4 1934713408
    %v4860 = vunpack.c.0.s8 %v4859
    %v4861 = vlaneseq
    %v4862 = vshrl.u32 %v4861, 7
    %v4863 = vsub.s32 %v4860, %v4862
    %v4864 = vrot.slane %v4850, %v4863
    %v4865 = vcombine.low %v4840, %v4848
    %v4866 = vcombine.high %v4840, %v4848
    %v4868 = vunpack.c.l.s4 1934713408
    %v4869 = vunpack.c.0.s8 %v4868
    %v4870 = vlaneseq
    %v4871 = vshrl.u32 %v4870, 7
    %v4872 = vsub.s32 %v4869, %v4871
    %v4873 = vrot.slane %v4865, %v4872
    %v4875 = vunpack.c.l.s4 1934713408
    %v4876 = vunpack.c.0.s8 %v4875
    %v4877 = vlaneseq
    %v4878 = vshrl.u32 %v4877, 7
    %v4879 = vsub.s32 %v4876, %v4878
    %v4880 = vrot.slane %v4866, %v4879
    %v4881 = vcombine.low %v4857, %v4873
    %v4882 = vcombine.high %v4857, %v4873
    %v4883 = vcombine.low %v4864, %v4880
    %v4884 = vcombine.high %v4864, %v4880
    %v4886 = vsel %vm1403, %v4881, 0
    %v4889 = vsel %vm1403, %v4165, 0
    %4891 = vmatprep.subr.mxu0 0.0
    %4892 = vmatpush1.xpose.msra.mxu0 0.0
    %4893 = vmatprep.subr.mxu0 0.0
    %4894 = vmatpush1.xpose.msra.mxu0 0.0
    %4895 = vmatprep.subr.mxu0 0.0
    %4896 = vmatpush1.xpose.msra.mxu0 0.0
    %4897 = vmatprep.subr.mxu0 0.0
    %4898 = vmatpush1.xpose.msra.mxu0 0.0
    %4899 = vmatprep.subr.mxu0 0.0
    %4900 = vmatpush1.xpose.msra.mxu0 0.0
    %4901 = vmatprep.subr.mxu0 0.0
    %4902 = vmatpush1.xpose.msra.mxu0 0.0
    %4903 = vmatprep.subr.mxu0 0.0
    %4904 = vmatpush1.xpose.msra.mxu0 0.0
    %4905 = vmatprep.subr.mxu0 0.0
    %4906 = vmatpush1.xpose.msra.mxu0 0.0
    %4907 = vmatprep.subr.mxu0 0.0
    %4908 = vmatpush1.xpose.msra.mxu0 0.0
    %4909 = vmatprep.subr.mxu0 0.0
    %4910 = vmatpush1.xpose.msra.mxu0 0.0
    %4911 = vmatprep.subr.mxu0 0.0
    %4912 = vmatpush1.xpose.msra.mxu0 0.0
    %4913 = vmatprep.subr.mxu0 0.0
    %4914 = vmatpush1.xpose.msra.mxu0 0.0
    %4915 = vmatprep.subr.mxu0 0.0
    %4916 = vmatpush1.xpose.msra.mxu0 0.0
    %4917 = vmatprep.subr.mxu0 0.0
    %4918 = vmatpush1.xpose.msra.mxu0 0.0
    %4919 = vmatprep.subr.mxu0 0.0
    %4920 = vmatpush1.xpose.msra.mxu0 0.0
    %4921 = vmatprep.subr.mxu0 0.0
    %4922 = vmatpush1.xpose.msra.mxu0 %v4889
    %4923 = vmatprep.subr.mxu0 0.0
    %4924 = vmatpush2.xpose.msra.mxu0 0.0
    %4925 = vmatprep.subr.mxu0 0.0
    %4926 = vmatpush2.xpose.msra.mxu0 0.0
    %4927 = vmatprep.subr.mxu0 0.0
    %4928 = vmatpush2.xpose.msra.mxu0 0.0
    %4929 = vmatprep.subr.mxu0 0.0
    %4930 = vmatpush2.xpose.msra.mxu0 0.0
    %4931 = vmatprep.subr.mxu0 0.0
    %4932 = vmatpush2.xpose.msra.mxu0 0.0
    %4933 = vmatprep.subr.mxu0 0.0
    %4934 = vmatpush2.xpose.msra.mxu0 0.0
    %4935 = vmatprep.subr.mxu0 0.0
    %4936 = vmatpush2.xpose.msra.mxu0 0.0
    %4937 = vmatprep.subr.mxu0 0.0
    %4938 = vmatpush2.xpose.msra.mxu0 0.0
    %4939 = vmatprep.subr.mxu0 0.0
    %4940 = vmatpush2.xpose.msra.mxu0 0.0
    %4941 = vmatprep.subr.mxu0 0.0
    %4942 = vmatpush2.xpose.msra.mxu0 0.0
    %4943 = vmatprep.subr.mxu0 0.0
    %4944 = vmatpush2.xpose.msra.mxu0 0.0
    %4945 = vmatprep.subr.mxu0 0.0
    %4946 = vmatpush2.xpose.msra.mxu0 0.0
    %4947 = vmatprep.subr.mxu0 0.0
    %4948 = vmatpush2.xpose.msra.mxu0 0.0
    %4949 = vmatprep.subr.mxu0 0.0
    %4950 = vmatpush2.xpose.msra.mxu0 0.0
    %4951 = vmatprep.subr.mxu0 0.0
    %4952 = vmatpush2.xpose.msra.mxu0 0.0
    %4953 = vmatprep.subr.mxu0 0.0
    %4954 = vmatpush2.xpose.msra.mxu0 0.0
    %4955 = vmatprep.mubr.f32.mxu0 0.0
    %4956 = vmatmul.mubr.f32.gmra.mxu0 %v4886
    %v4957 = vpop.f32.mrf.mxu0
    %v4958 = vadd.f32 0.0, %v4957
    %v4959 = vpop.f32.mrf.mxu0
    %4960 = vdwg.mxu0
    %v4962 = vsel %vm1403, %v4882, 0
    %v4965 = vsel %vm1403, %v4166, 0
    %4967 = vmatprep.subr.mxu0 0.0
    %4968 = vmatpush1.xpose.msra.mxu0 0.0
    %4969 = vmatprep.subr.mxu0 0.0
    %4970 = vmatpush1.xpose.msra.mxu0 0.0
    %4971 = vmatprep.subr.mxu0 0.0
    %4972 = vmatpush1.xpose.msra.mxu0 0.0
    %4973 = vmatprep.subr.mxu0 0.0
    %4974 = vmatpush1.xpose.msra.mxu0 0.0
    %4975 = vmatprep.subr.mxu0 0.0
    %4976 = vmatpush1.xpose.msra.mxu0 0.0
    %4977 = vmatprep.subr.mxu0 0.0
    %4978 = vmatpush1.xpose.msra.mxu0 0.0
    %4979 = vmatprep.subr.mxu0 0.0
    %4980 = vmatpush1.xpose.msra.mxu0 0.0
    %4981 = vmatprep.subr.mxu0 0.0
    %4982 = vmatpush1.xpose.msra.mxu0 0.0
    %4983 = vmatprep.subr.mxu0 0.0
    %4984 = vmatpush1.xpose.msra.mxu0 0.0
    %4985 = vmatprep.subr.mxu0 0.0
    %4986 = vmatpush1.xpose.msra.mxu0 0.0
    %4987 = vmatprep.subr.mxu0 0.0
    %4988 = vmatpush1.xpose.msra.mxu0 0.0
    %4989 = vmatprep.subr.mxu0 0.0
    %4990 = vmatpush1.xpose.msra.mxu0 0.0
    %4991 = vmatprep.subr.mxu0 0.0
    %4992 = vmatpush1.xpose.msra.mxu0 0.0
    %4993 = vmatprep.subr.mxu0 0.0
    %4994 = vmatpush1.xpose.msra.mxu0 0.0
    %4995 = vmatprep.subr.mxu0 0.0
    %4996 = vmatpush1.xpose.msra.mxu0 0.0
    %4997 = vmatprep.subr.mxu0 0.0
    %4998 = vmatpush1.xpose.msra.mxu0 %v4965
    %4999 = vmatprep.subr.mxu0 0.0
    %5000 = vmatpush2.xpose.msra.mxu0 0.0
    %5001 = vmatprep.subr.mxu0 0.0
    %5002 = vmatpush2.xpose.msra.mxu0 0.0
    %5003 = vmatprep.subr.mxu0 0.0
    %5004 = vmatpush2.xpose.msra.mxu0 0.0
    %5005 = vmatprep.subr.mxu0 0.0
    %5006 = vmatpush2.xpose.msra.mxu0 0.0
    %5007 = vmatprep.subr.mxu0 0.0
    %5008 = vmatpush2.xpose.msra.mxu0 0.0
    %5009 = vmatprep.subr.mxu0 0.0
    %5010 = vmatpush2.xpose.msra.mxu0 0.0
    %5011 = vmatprep.subr.mxu0 0.0
    %5012 = vmatpush2.xpose.msra.mxu0 0.0
    %5013 = vmatprep.subr.mxu0 0.0
    %5014 = vmatpush2.xpose.msra.mxu0 0.0
    %5015 = vmatprep.subr.mxu0 0.0
    %5016 = vmatpush2.xpose.msra.mxu0 0.0
    %5017 = vmatprep.subr.mxu0 0.0
    %5018 = vmatpush2.xpose.msra.mxu0 0.0
    %5019 = vmatprep.subr.mxu0 0.0
    %5020 = vmatpush2.xpose.msra.mxu0 0.0
    %5021 = vmatprep.subr.mxu0 0.0
    %5022 = vmatpush2.xpose.msra.mxu0 0.0
    %5023 = vmatprep.subr.mxu0 0.0
    %5024 = vmatpush2.xpose.msra.mxu0 0.0
    %5025 = vmatprep.subr.mxu0 0.0
    %5026 = vmatpush2.xpose.msra.mxu0 0.0
    %5027 = vmatprep.subr.mxu0 0.0
    %5028 = vmatpush2.xpose.msra.mxu0 0.0
    %5029 = vmatprep.subr.mxu0 0.0
    %5030 = vmatpush2.xpose.msra.mxu0 0.0
    %5031 = vmatprep.mubr.f32.mxu0 0.0
    %5032 = vmatmul.mubr.f32.gmra.mxu0 %v4962
    %v5033 = vpop.f32.mrf.mxu0
    %v5034 = vadd.f32 0.0, %v5033
    %v5035 = vpop.f32.mrf.mxu0
    %5036 = vdwg.mxu0
    %v5038 = vsel %vm1403, %v4883, 0
    %v5041 = vsel %vm1403, %v4167, 0
    %5043 = vmatprep.subr.mxu0 0.0
    %5044 = vmatpush1.xpose.msra.mxu0 0.0
    %5045 = vmatprep.subr.mxu0 0.0
    %5046 = vmatpush1.xpose.msra.mxu0 0.0
    %5047 = vmatprep.subr.mxu0 0.0
    %5048 = vmatpush1.xpose.msra.mxu0 0.0
    %5049 = vmatprep.subr.mxu0 0.0
    %5050 = vmatpush1.xpose.msra.mxu0 0.0
    %5051 = vmatprep.subr.mxu0 0.0
    %5052 = vmatpush1.xpose.msra.mxu0 0.0
    %5053 = vmatprep.subr.mxu0 0.0
    %5054 = vmatpush1.xpose.msra.mxu0 0.0
    %5055 = vmatprep.subr.mxu0 0.0
    %5056 = vmatpush1.xpose.msra.mxu0 0.0
    %5057 = vmatprep.subr.mxu0 0.0
    %5058 = vmatpush1.xpose.msra.mxu0 0.0
    %5059 = vmatprep.subr.mxu0 0.0
    %5060 = vmatpush1.xpose.msra.mxu0 0.0
    %5061 = vmatprep.subr.mxu0 0.0
    %5062 = vmatpush1.xpose.msra.mxu0 0.0
    %5063 = vmatprep.subr.mxu0 0.0
    %5064 = vmatpush1.xpose.msra.mxu0 0.0
    %5065 = vmatprep.subr.mxu0 0.0
    %5066 = vmatpush1.xpose.msra.mxu0 0.0
    %5067 = vmatprep.subr.mxu0 0.0
    %5068 = vmatpush1.xpose.msra.mxu0 0.0
    %5069 = vmatprep.subr.mxu0 0.0
    %5070 = vmatpush1.xpose.msra.mxu0 0.0
    %5071 = vmatprep.subr.mxu0 0.0
    %5072 = vmatpush1.xpose.msra.mxu0 0.0
    %5073 = vmatprep.subr.mxu0 0.0
    %5074 = vmatpush1.xpose.msra.mxu0 %v5041
    %5075 = vmatprep.subr.mxu0 0.0
    %5076 = vmatpush2.xpose.msra.mxu0 0.0
    %5077 = vmatprep.subr.mxu0 0.0
    %5078 = vmatpush2.xpose.msra.mxu0 0.0
    %5079 = vmatprep.subr.mxu0 0.0
    %5080 = vmatpush2.xpose.msra.mxu0 0.0
    %5081 = vmatprep.subr.mxu0 0.0
    %5082 = vmatpush2.xpose.msra.mxu0 0.0
    %5083 = vmatprep.subr.mxu0 0.0
    %5084 = vmatpush2.xpose.msra.mxu0 0.0
    %5085 = vmatprep.subr.mxu0 0.0
    %5086 = vmatpush2.xpose.msra.mxu0 0.0
    %5087 = vmatprep.subr.mxu0 0.0
    %5088 = vmatpush2.xpose.msra.mxu0 0.0
    %5089 = vmatprep.subr.mxu0 0.0
    %5090 = vmatpush2.xpose.msra.mxu0 0.0
    %5091 = vmatprep.subr.mxu0 0.0
    %5092 = vmatpush2.xpose.msra.mxu0 0.0
    %5093 = vmatprep.subr.mxu0 0.0
    %5094 = vmatpush2.xpose.msra.mxu0 0.0
    %5095 = vmatprep.subr.mxu0 0.0
    %5096 = vmatpush2.xpose.msra.mxu0 0.0
    %5097 = vmatprep.subr.mxu0 0.0
    %5098 = vmatpush2.xpose.msra.mxu0 0.0
    %5099 = vmatprep.subr.mxu0 0.0
    %5100 = vmatpush2.xpose.msra.mxu0 0.0
    %5101 = vmatprep.subr.mxu0 0.0
    %5102 = vmatpush2.xpose.msra.mxu0 0.0
    %5103 = vmatprep.subr.mxu0 0.0
    %5104 = vmatpush2.xpose.msra.mxu0 0.0
    %5105 = vmatprep.subr.mxu0 0.0
    %5106 = vmatpush2.xpose.msra.mxu0 0.0
    %5107 = vmatprep.mubr.f32.mxu0 0.0
    %5108 = vmatmul.mubr.f32.gmra.mxu0 %v5038
    %v5109 = vpop.f32.mrf.mxu0
    %v5110 = vadd.f32 0.0, %v5109
    %v5111 = vpop.f32.mrf.mxu0
    %5112 = vdwg.mxu0
    %v5114 = vsel %vm1403, %v4884, 0
    %v5117 = vsel %vm1403, %v4168, 0
    %5119 = vmatprep.subr.mxu0 0.0
    %5120 = vmatpush1.xpose.msra.mxu0 0.0
    %5121 = vmatprep.subr.mxu0 0.0
    %5122 = vmatpush1.xpose.msra.mxu0 0.0
    %5123 = vmatprep.subr.mxu0 0.0
    %5124 = vmatpush1.xpose.msra.mxu0 0.0
    %5125 = vmatprep.subr.mxu0 0.0
    %5126 = vmatpush1.xpose.msra.mxu0 0.0
    %5127 = vmatprep.subr.mxu0 0.0
    %5128 = vmatpush1.xpose.msra.mxu0 0.0
    %5129 = vmatprep.subr.mxu0 0.0
    %5130 = vmatpush1.xpose.msra.mxu0 0.0
    %5131 = vmatprep.subr.mxu0 0.0
    %5132 = vmatpush1.xpose.msra.mxu0 0.0
    %5133 = vmatprep.subr.mxu0 0.0
    %5134 = vmatpush1.xpose.msra.mxu0 0.0
    %5135 = vmatprep.subr.mxu0 0.0
    %5136 = vmatpush1.xpose.msra.mxu0 0.0
    %5137 = vmatprep.subr.mxu0 0.0
    %5138 = vmatpush1.xpose.msra.mxu0 0.0
    %5139 = vmatprep.subr.mxu0 0.0
    %5140 = vmatpush1.xpose.msra.mxu0 0.0
    %5141 = vmatprep.subr.mxu0 0.0
    %5142 = vmatpush1.xpose.msra.mxu0 0.0
    %5143 = vmatprep.subr.mxu0 0.0
    %5144 = vmatpush1.xpose.msra.mxu0 0.0
    %5145 = vmatprep.subr.mxu0 0.0
    %5146 = vmatpush1.xpose.msra.mxu0 0.0
    %5147 = vmatprep.subr.mxu0 0.0
    %5148 = vmatpush1.xpose.msra.mxu0 0.0
    %5149 = vmatprep.subr.mxu0 0.0
    %5150 = vmatpush1.xpose.msra.mxu0 %v5117
    %5151 = vmatprep.subr.mxu0 0.0
    %5152 = vmatpush2.xpose.msra.mxu0 0.0
    %5153 = vmatprep.subr.mxu0 0.0
    %5154 = vmatpush2.xpose.msra.mxu0 0.0
    %5155 = vmatprep.subr.mxu0 0.0
    %5156 = vmatpush2.xpose.msra.mxu0 0.0
    %5157 = vmatprep.subr.mxu0 0.0
    %5158 = vmatpush2.xpose.msra.mxu0 0.0
    %5159 = vmatprep.subr.mxu0 0.0
    %5160 = vmatpush2.xpose.msra.mxu0 0.0
    %5161 = vmatprep.subr.mxu0 0.0
    %5162 = vmatpush2.xpose.msra.mxu0 0.0
    %5163 = vmatprep.subr.mxu0 0.0
    %5164 = vmatpush2.xpose.msra.mxu0 0.0
    %5165 = vmatprep.subr.mxu0 0.0
    %5166 = vmatpush2.xpose.msra.mxu0 0.0
    %5167 = vmatprep.subr.mxu0 0.0
    %5168 = vmatpush2.xpose.msra.mxu0 0.0
    %5169 = vmatprep.subr.mxu0 0.0
    %5170 = vmatpush2.xpose.msra.mxu0 0.0
    %5171 = vmatprep.subr.mxu0 0.0
    %5172 = vmatpush2.xpose.msra.mxu0 0.0
    %5173 = vmatprep.subr.mxu0 0.0
    %5174 = vmatpush2.xpose.msra.mxu0 0.0
    %5175 = vmatprep.subr.mxu0 0.0
    %5176 = vmatpush2.xpose.msra.mxu0 0.0
    %5177 = vmatprep.subr.mxu0 0.0
    %5178 = vmatpush2.xpose.msra.mxu0 0.0
    %5179 = vmatprep.subr.mxu0 0.0
    %5180 = vmatpush2.xpose.msra.mxu0 0.0
    %5181 = vmatprep.subr.mxu0 0.0
    %5182 = vmatpush2.xpose.msra.mxu0 0.0
    %5183 = vmatprep.mubr.f32.mxu0 0.0
    %5184 = vmatmul.mubr.f32.gmra.mxu0 %v5114
    %v5185 = vpop.f32.mrf.mxu0
    %v5186 = vadd.f32 0.0, %v5185
    %v5187 = vpop.f32.mrf.mxu0
    %5188 = vdwg.mxu0
    %5189 = vxpose.xlu0.b32.start [1/16] %v4958, 128
    %5190 = vxpose.xlu0.b32.cont [2/16] 0.0, 128
    %5191 = vxpose.xlu0.b32.cont [3/16] 0.0, 128
    %5192 = vxpose.xlu0.b32.cont [4/16] 0.0, 128
    %5193 = vxpose.xlu0.b32.cont [5/16] 0.0, 128
    %5194 = vxpose.xlu0.b32.cont [6/16] 0.0, 128
    %5195 = vxpose.xlu0.b32.cont [7/16] 0.0, 128
    %5196 = vxpose.xlu0.b32.cont [8/16] 0.0, 128
    %5197 = vxpose.xlu0.b32.cont [9/16] 0.0, 128
    %5198 = vxpose.xlu0.b32.cont [10/16] 0.0, 128
    %5199 = vxpose.xlu0.b32.cont [11/16] 0.0, 128
    %5200 = vxpose.xlu0.b32.cont [12/16] 0.0, 128
    %5201 = vxpose.xlu0.b32.cont [13/16] 0.0, 128
    %5202 = vxpose.xlu0.b32.cont [14/16] 0.0, 128
    %5203 = vxpose.xlu0.b32.cont [15/16] 0.0, 128
    %5204 = vxpose.xlu0.b32.end [16/16] 0.0, 128
    %v5205 = vpop.trf.xlu0
    %v5206 = vpop.trf.xlu0
    %v5207 = vpop.trf.xlu0
    %v5208 = vpop.trf.xlu0
    %v5209 = vpop.trf.xlu0
    %v5210 = vpop.trf.xlu0
    %v5211 = vpop.trf.xlu0
    %v5212 = vpop.trf.xlu0
    %v5213 = vpop.trf.xlu0
    %v5214 = vpop.trf.xlu0
    %v5215 = vpop.trf.xlu0
    %v5216 = vpop.trf.xlu0
    %v5217 = vpop.trf.xlu0
    %v5218 = vpop.trf.xlu0
    %v5219 = vpop.trf.xlu0
    %v5220 = vpop.trf.xlu0
    %5221 = vxpose.xlu0.b32.start [1/16] %v5034, 128
    %5222 = vxpose.xlu0.b32.cont [2/16] 0.0, 128
    %5223 = vxpose.xlu0.b32.cont [3/16] 0.0, 128
    %5224 = vxpose.xlu0.b32.cont [4/16] 0.0, 128
    %5225 = vxpose.xlu0.b32.cont [5/16] 0.0, 128
    %5226 = vxpose.xlu0.b32.cont [6/16] 0.0, 128
    %5227 = vxpose.xlu0.b32.cont [7/16] 0.0, 128
    %5228 = vxpose.xlu0.b32.cont [8/16] 0.0, 128
    %5229 = vxpose.xlu0.b32.cont [9/16] 0.0, 128
    %5230 = vxpose.xlu0.b32.cont [10/16] 0.0, 128
    %5231 = vxpose.xlu0.b32.cont [11/16] 0.0, 128
    %5232 = vxpose.xlu0.b32.cont [12/16] 0.0, 128
    %5233 = vxpose.xlu0.b32.cont [13/16] 0.0, 128
    %5234 = vxpose.xlu0.b32.cont [14/16] 0.0, 128
    %5235 = vxpose.xlu0.b32.cont [15/16] 0.0, 128
    %5236 = vxpose.xlu0.b32.end [16/16] 0.0, 128
    %v5237 = vpop.trf.xlu0
    %v5238 = vpop.trf.xlu0
    %v5239 = vpop.trf.xlu0
    %v5240 = vpop.trf.xlu0
    %v5241 = vpop.trf.xlu0
    %v5242 = vpop.trf.xlu0
    %v5243 = vpop.trf.xlu0
    %v5244 = vpop.trf.xlu0
    %v5245 = vpop.trf.xlu0
    %v5246 = vpop.trf.xlu0
    %v5247 = vpop.trf.xlu0
    %v5248 = vpop.trf.xlu0
    %v5249 = vpop.trf.xlu0
    %v5250 = vpop.trf.xlu0
    %v5251 = vpop.trf.xlu0
    %v5252 = vpop.trf.xlu0
    %5253 = vxpose.xlu0.b32.start [1/16] %v5110, 128
    %5254 = vxpose.xlu0.b32.cont [2/16] 0.0, 128
    %5255 = vxpose.xlu0.b32.cont [3/16] 0.0, 128
    %5256 = vxpose.xlu0.b32.cont [4/16] 0.0, 128
    %5257 = vxpose.xlu0.b32.cont [5/16] 0.0, 128
    %5258 = vxpose.xlu0.b32.cont [6/16] 0.0, 128
    %5259 = vxpose.xlu0.b32.cont [7/16] 0.0, 128
    %5260 = vxpose.xlu0.b32.cont [8/16] 0.0, 128
    %5261 = vxpose.xlu0.b32.cont [9/16] 0.0, 128
    %5262 = vxpose.xlu0.b32.cont [10/16] 0.0, 128
    %5263 = vxpose.xlu0.b32.cont [11/16] 0.0, 128
    %5264 = vxpose.xlu0.b32.cont [12/16] 0.0, 128
    %5265 = vxpose.xlu0.b32.cont [13/16] 0.0, 128
    %5266 = vxpose.xlu0.b32.cont [14/16] 0.0, 128
    %5267 = vxpose.xlu0.b32.cont [15/16] 0.0, 128
    %5268 = vxpose.xlu0.b32.end [16/16] 0.0, 128
    %v5269 = vpop.trf.xlu0
    %v5270 = vpop.trf.xlu0
    %v5271 = vpop.trf.xlu0
    %v5272 = vpop.trf.xlu0
    %v5273 = vpop.trf.xlu0
    %v5274 = vpop.trf.xlu0
    %v5275 = vpop.trf.xlu0
    %v5276 = vpop.trf.xlu0
    %v5277 = vpop.trf.xlu0
    %v5278 = vpop.trf.xlu0
    %v5279 = vpop.trf.xlu0
    %v5280 = vpop.trf.xlu0
    %v5281 = vpop.trf.xlu0
    %v5282 = vpop.trf.xlu0
    %v5283 = vpop.trf.xlu0
    %v5284 = vpop.trf.xlu0
    %5285 = vxpose.xlu0.b32.start [1/16] %v5186, 128
    %5286 = vxpose.xlu0.b32.cont [2/16] 0.0, 128
    %5287 = vxpose.xlu0.b32.cont [3/16] 0.0, 128
    %5288 = vxpose.xlu0.b32.cont [4/16] 0.0, 128
    %5289 = vxpose.xlu0.b32.cont [5/16] 0.0, 128
    %5290 = vxpose.xlu0.b32.cont [6/16] 0.0, 128
    %5291 = vxpose.xlu0.b32.cont [7/16] 0.0, 128
    %5292 = vxpose.xlu0.b32.cont [8/16] 0.0, 128
    %5293 = vxpose.xlu0.b32.cont [9/16] 0.0, 128
    %5294 = vxpose.xlu0.b32.cont [10/16] 0.0, 128
    %5295 = vxpose.xlu0.b32.cont [11/16] 0.0, 128
    %5296 = vxpose.xlu0.b32.cont [12/16] 0.0, 128
    %5297 = vxpose.xlu0.b32.cont [13/16] 0.0, 128
    %5298 = vxpose.xlu0.b32.cont [14/16] 0.0, 128
    %5299 = vxpose.xlu0.b32.cont [15/16] 0.0, 128
    %5300 = vxpose.xlu0.b32.end [16/16] 0.0, 128
    %v5301 = vpop.trf.xlu0
    %v5302 = vpop.trf.xlu0
    %v5303 = vpop.trf.xlu0
    %v5304 = vpop.trf.xlu0
    %v5305 = vpop.trf.xlu0
    %v5306 = vpop.trf.xlu0
    %v5307 = vpop.trf.xlu0
    %v5308 = vpop.trf.xlu0
    %v5309 = vpop.trf.xlu0
    %v5310 = vpop.trf.xlu0
    %v5311 = vpop.trf.xlu0
    %v5312 = vpop.trf.xlu0
    %v5313 = vpop.trf.xlu0
    %v5314 = vpop.trf.xlu0
    %v5315 = vpop.trf.xlu0
    %v5316 = vpop.trf.xlu0
    %v5317 = vcombine.low %v5205, %v5269
    %v5318 = vcombine.high %v5205, %v5269
    %v5320 = vunpack.c.l.s4 1983009808
    %v5321 = vunpack.c.0.s8 %v5320
    %v5322 = vlaneseq
    %v5323 = vshrl.u32 %v5322, 7
    %v5324 = vsub.s32 %v5321, %v5323
    %v5325 = vrot.slane %v5317, %v5324
    %v5327 = vunpack.c.l.s4 1983009808
    %v5328 = vunpack.c.0.s8 %v5327
    %v5329 = vlaneseq
    %v5330 = vshrl.u32 %v5329, 7
    %v5331 = vsub.s32 %v5328, %v5330
    %v5332 = vrot.slane %v5318, %v5331
    %v5333 = vcombine.low %v5237, %v5301
    %v5334 = vcombine.high %v5237, %v5301
    %v5336 = vunpack.c.l.s4 1983009808
    %v5337 = vunpack.c.0.s8 %v5336
    %v5338 = vlaneseq
    %v5339 = vshrl.u32 %v5338, 7
    %v5340 = vsub.s32 %v5337, %v5339
    %v5341 = vrot.slane %v5333, %v5340
    %v5343 = vunpack.c.l.s4 1983009808
    %v5344 = vunpack.c.0.s8 %v5343
    %v5345 = vlaneseq
    %v5346 = vshrl.u32 %v5345, 7
    %v5347 = vsub.s32 %v5344, %v5346
    %v5348 = vrot.slane %v5334, %v5347
    %v5349 = vcombine.low %v5325, %v5341
    %v5350 = vcombine.high %v5325, %v5341
    %v5352 = vunpack.c.l.s4 1934713408
    %v5353 = vunpack.c.0.s8 %v5352
    %v5354 = vlaneseq
    %v5355 = vshrl.u32 %v5354, 7
    %v5356 = vsub.s32 %v5353, %v5355
    %v5357 = vrot.slane %v5349, %v5356
    %v5359 = vunpack.c.l.s4 1934713408
    %v5360 = vunpack.c.0.s8 %v5359
    %v5361 = vlaneseq
    %v5362 = vshrl.u32 %v5361, 7
    %v5363 = vsub.s32 %v5360, %v5362
    %v5364 = vrot.slane %v5350, %v5363
    %v5365 = vcombine.low %v5332, %v5348
    %v5366 = vcombine.high %v5332, %v5348
    %v5368 = vunpack.c.l.s4 1934713408
    %v5369 = vunpack.c.0.s8 %v5368
    %v5370 = vlaneseq
    %v5371 = vshrl.u32 %v5370, 7
    %v5372 = vsub.s32 %v5369, %v5371
    %v5373 = vrot.slane %v5365, %v5372
    %v5375 = vunpack.c.l.s4 1934713408
    %v5376 = vunpack.c.0.s8 %v5375
    %v5377 = vlaneseq
    %v5378 = vshrl.u32 %v5377, 7
    %v5379 = vsub.s32 %v5376, %v5378
    %v5380 = vrot.slane %v5366, %v5379
    %v5381 = vcombine.high %v5357, 0.0
    %v5382 = vcombine.high %v5364, 0.0
    %v5383 = vcombine.high %v5373, 0.0
    %v5384 = vcombine.high %v5380, 0.0
    %v5385 = vcombine.low %v5357, %v5364
    %v5387 = vunpack.c.l.s4 1983009808
    %v5388 = vunpack.c.0.s8 %v5387
    %v5389 = vlaneseq
    %v5390 = vshrl.u32 %v5389, 7
    %v5391 = vsub.s32 %v5388, %v5390
    %v5392 = vrot.slane %v5385, %v5391
    %v5393 = vcombine.low %v5381, %v5382
    %v5395 = vunpack.c.l.s4 1983009808
    %v5396 = vunpack.c.0.s8 %v5395
    %v5397 = vlaneseq
    %v5398 = vshrl.u32 %v5397, 7
    %v5399 = vsub.s32 %v5396, %v5398
    %v5400 = vrot.slane %v5393, %v5399
    %v5401 = vcombine.low %v5373, %v5380
    %v5403 = vunpack.c.l.s4 1983009808
    %v5404 = vunpack.c.0.s8 %v5403
    %v5405 = vlaneseq
    %v5406 = vshrl.u32 %v5405, 7
    %v5407 = vsub.s32 %v5404, %v5406
    %v5408 = vrot.slane %v5401, %v5407
    %v5409 = vcombine.low %v5383, %v5384
    %v5411 = vunpack.c.l.s4 1983009808
    %v5412 = vunpack.c.0.s8 %v5411
    %v5413 = vlaneseq
    %v5414 = vshrl.u32 %v5413, 7
    %v5415 = vsub.s32 %v5412, %v5414
    %v5416 = vrot.slane %v5409, %v5415
    %v5417 = vcombine.low %v5392, %v5400
    %v5418 = vcombine.high %v5392, %v5400
    %v5420 = vunpack.c.l.s4 1934713408
    %v5421 = vunpack.c.0.s8 %v5420
    %v5422 = vlaneseq
    %v5423 = vshrl.u32 %v5422, 7
    %v5424 = vsub.s32 %v5421, %v5423
    %v5425 = vrot.slane %v5417, %v5424
    %v5427 = vunpack.c.l.s4 1934713408
    %v5428 = vunpack.c.0.s8 %v5427
    %v5429 = vlaneseq
    %v5430 = vshrl.u32 %v5429, 7
    %v5431 = vsub.s32 %v5428, %v5430
    %v5432 = vrot.slane %v5418, %v5431
    %v5433 = vcombine.low %v5408, %v5416
    %v5434 = vcombine.high %v5408, %v5416
    %v5436 = vunpack.c.l.s4 1934713408
    %v5437 = vunpack.c.0.s8 %v5436
    %v5438 = vlaneseq
    %v5439 = vshrl.u32 %v5438, 7
    %v5440 = vsub.s32 %v5437, %v5439
    %v5441 = vrot.slane %v5433, %v5440
    %v5443 = vunpack.c.l.s4 1934713408
    %v5444 = vunpack.c.0.s8 %v5443
    %v5445 = vlaneseq
    %v5446 = vshrl.u32 %v5445, 7
    %v5447 = vsub.s32 %v5444, %v5446
    %v5448 = vrot.slane %v5434, %v5447
    %v5449 = vcombine.low %v5425, %v5441
    %v5450 = vcombine.high %v5425, %v5441
    %v5451 = vcombine.low %v5432, %v5448
    %v5452 = vcombine.high %v5432, %v5448
    %5454 = vrot.lane.b32.xlu0 %v5450, 8
    %v5455 = vpop.permute.xlu0 %5454
    %5458 = vrot.lane.b32.xlu0 %v5451, 16
    %v5459 = vpop.permute.xlu0 %5458
    %5462 = vrot.lane.b32.xlu0 %v5452, 24
    %v5463 = vpop.permute.xlu0 %5462
    %v5465 = vsel %vm1403, %v5449, %v5455
    %v5466 = vsel %vm3041, %v5465, %v5459
    %v5467 = vsel %vm3043, %v5466, %v5463
    %v5468 = vlaneseq
    %v5469 = vshrl.u32 %v5468, 7
    %v5470 = vsub.s32 0, %v5469
    %v5471 = vrot.slane %v54, %v5470
    %v5473 = vsel %vm61, %v3044, 0
    %v5476 = vsel %vm61, %v5467, 0
    %5478 = vmatprep.subr.mxu0 0.0
    %5479 = vmatpush1.msra.mxu0 0.0
    %5480 = vmatprep.subr.mxu0 0.0
    %5481 = vmatpush1.msra.mxu0 0.0
    %5482 = vmatprep.subr.mxu0 0.0
    %5483 = vmatpush1.msra.mxu0 0.0
    %5484 = vmatprep.subr.mxu0 0.0
    %5485 = vmatpush1.msra.mxu0 0.0
    %5486 = vmatprep.subr.mxu0 0.0
    %5487 = vmatpush1.msra.mxu0 0.0
    %5488 = vmatprep.subr.mxu0 0.0
    %5489 = vmatpush1.msra.mxu0 0.0
    %5490 = vmatprep.subr.mxu0 0.0
    %5491 = vmatpush1.msra.mxu0 0.0
    %5492 = vmatprep.subr.mxu0 0.0
    %5493 = vmatpush1.msra.mxu0 0.0
    %5494 = vmatprep.subr.mxu0 0.0
    %5495 = vmatpush1.msra.mxu0 0.0
    %5496 = vmatprep.subr.mxu0 0.0
    %5497 = vmatpush1.msra.mxu0 0.0
    %5498 = vmatprep.subr.mxu0 0.0
    %5499 = vmatpush1.msra.mxu0 0.0
    %5500 = vmatprep.subr.mxu0 0.0
    %5501 = vmatpush1.msra.mxu0 0.0
    %5502 = vmatprep.subr.mxu0 0.0
    %5503 = vmatpush1.msra.mxu0 %v39
    %5504 = vmatprep.subr.mxu0 0.0
    %5505 = vmatpush1.msra.mxu0 %v38
    %5506 = vmatprep.subr.mxu0 0.0
    %5507 = vmatpush1.msra.mxu0 %v37
    %5508 = vmatprep.subr.mxu0 0.0
    %5509 = vmatpush1.msra.mxu0 %v36
    %5510 = vmatprep.subr.mxu0 0.0
    %5511 = vmatpush2.msra.mxu0 0.0
    %5512 = vmatprep.subr.mxu0 0.0
    %5513 = vmatpush2.msra.mxu0 0.0
    %5514 = vmatprep.subr.mxu0 0.0
    %5515 = vmatpush2.msra.mxu0 0.0
    %5516 = vmatprep.subr.mxu0 0.0
    %5517 = vmatpush2.msra.mxu0 0.0
    %5518 = vmatprep.subr.mxu0 0.0
    %5519 = vmatpush2.msra.mxu0 0.0
    %5520 = vmatprep.subr.mxu0 0.0
    %5521 = vmatpush2.msra.mxu0 0.0
    %5522 = vmatprep.subr.mxu0 0.0
    %5523 = vmatpush2.msra.mxu0 0.0
    %5524 = vmatprep.subr.mxu0 0.0
    %5525 = vmatpush2.msra.mxu0 0.0
    %5526 = vmatprep.subr.mxu0 0.0
    %5527 = vmatpush2.msra.mxu0 0.0
    %5528 = vmatprep.subr.mxu0 0.0
    %5529 = vmatpush2.msra.mxu0 0.0
    %5530 = vmatprep.subr.mxu0 0.0
    %5531 = vmatpush2.msra.mxu0 0.0
    %5532 = vmatprep.subr.mxu0 0.0
    %5533 = vmatpush2.msra.mxu0 0.0
    %5534 = vmatprep.subr.mxu0 0.0
    %5535 = vmatpush2.msra.mxu0 0.0
    %5536 = vmatprep.subr.mxu0 0.0
    %5537 = vmatpush2.msra.mxu0 0.0
    %5538 = vmatprep.subr.mxu0 0.0
    %5539 = vmatpush2.msra.mxu0 0.0
    %5540 = vmatprep.subr.mxu0 0.0
    %5541 = vmatpush2.msra.mxu0 0.0
    %5542 = vmatprep.mubr.f32.mxu0 0.0
    %5543 = vmatmul.mubr.f32.gmra.mxu0 %v5473
    %v5544 = vpop.f32.mrf.mxu0
    %v5545 = vadd.f32 %v5471, %v5544
    %v5546 = vpop.f32.mrf.mxu0
    %5547 = vmatprep.mubr.f32.mxu0 0.0
    %5548 = vmatmul.mubr.f32.gmra.mxu0 %v5476
    %v5549 = vpop.f32.mrf.mxu0
    %v5550 = vadd.f32 %v5471, %v5549
    %v5551 = vpop.f32.mrf.mxu0
    %5552 = vdwg.mxu0
    %v5553 = vadd.f32 %v30, %v5545
    %v5554 = vadd.f32 %v31, %v5550
    %v5555 = vsel %vm61, %v5553, 0.0
    %5556 = vadd.xlane.f32.xlu0 %v5555
    %v5557 = vpop.xlane.xlu0 %5556
    %v5558 = vsel %vm61, %v5554, 0.0
    %5559 = vadd.xlane.f32.xlu0 %v5558
    %v5560 = vpop.xlane.xlu0 %5559
    %v5561 = vrcp.pop 32.0
    %v5562 = vmul.f32 %v5557, %v5561
    %v5563 = vmul.f32 %v5560, %v5561
    %v5564 = vsub.f32 %v5553, %v5562
    %v5565 = vsub.f32 %v5554, %v5563
    %v5566 = vmul.f32 %v5564, %v5564
    %v5567 = vmul.f32 %v5565, %v5565
    %v5568 = vsel %vm61, %v5566, 0.0
    %5569 = vadd.xlane.f32.xlu0 %v5568
    %v5570 = vpop.xlane.xlu0 %5569
    %v5571 = vsel %vm61, %v5567, 0.0
    %5572 = vadd.xlane.f32.xlu0 %v5571
    %v5573 = vpop.xlane.xlu0 %5572
    %v5574 = vmul.f32 %v5570, %v5561
    %v5575 = vmul.f32 %v5573, %v5561
    %v5576 = vadd.f32 %v5574, 1e-05
    %v5577 = vadd.f32 %v5575, 1e-05
    %v5578 = vrsqrt.pop %v5576
    %v5579 = vrsqrt.pop %v5577
    %v5580 = vmul.f32 %v5564, %v5578
    %v5581 = vmul.f32 %v5565, %v5579
    %v5582 = vlaneseq
    %v5583 = vshrl.u32 %v5582, 7
    %v5584 = vsub.s32 2, %v5583
    %v5585 = vrot.slane %v54, %v5584
    %v5586 = vmul.f32 %v5580, %v5585
    %v5587 = vmul.f32 %v5581, %v5585
    %v5588 = vlaneseq
    %v5589 = vshrl.u32 %v5588, 7
    %v5590 = vsub.s32 3, %v5589
    %v5591 = vrot.slane %v54, %v5590
    %v5592 = vadd.f32 %v5586, %v5591
    %v5593 = vadd.f32 %v5587, %v5591
    %v5595 = vlaneseq
    %v5596 = vshrl.u32 %v5595, 7
    %v5597 = vsub.s32 0, %v5596
    %v5598 = vrot.slane %v53, %v5597
    %v5601 = vsel %vm61, %v5592, 0
    %v5604 = vsel %vm61, %v5593, 0
    %5606 = vmatprep.subr.mxu0 0.0
    %5607 = vmatpush1.msra.mxu0 0.0
    %5608 = vmatprep.subr.mxu0 0.0
    %5609 = vmatpush1.msra.mxu0 0.0
    %5610 = vmatprep.subr.mxu0 0.0
    %5611 = vmatpush1.msra.mxu0 0.0
    %5612 = vmatprep.subr.mxu0 0.0
    %5613 = vmatpush1.msra.mxu0 0.0
    %5614 = vmatprep.subr.mxu0 0.0
    %5615 = vmatpush1.msra.mxu0 0.0
    %5616 = vmatprep.subr.mxu0 0.0
    %5617 = vmatpush1.msra.mxu0 0.0
    %5618 = vmatprep.subr.mxu0 0.0
    %5619 = vmatpush1.msra.mxu0 0.0
    %5620 = vmatprep.subr.mxu0 0.0
    %5621 = vmatpush1.msra.mxu0 0.0
    %5622 = vmatprep.subr.mxu0 0.0
    %5623 = vmatpush1.msra.mxu0 0.0
    %5624 = vmatprep.subr.mxu0 0.0
    %5625 = vmatpush1.msra.mxu0 0.0
    %5626 = vmatprep.subr.mxu0 0.0
    %5627 = vmatpush1.msra.mxu0 0.0
    %5628 = vmatprep.subr.mxu0 0.0
    %5629 = vmatpush1.msra.mxu0 0.0
    %5630 = vmatprep.subr.mxu0 0.0
    %5631 = vmatpush1.msra.mxu0 %v43
    %5632 = vmatprep.subr.mxu0 0.0
    %5633 = vmatpush1.msra.mxu0 %v42
    %5634 = vmatprep.subr.mxu0 0.0
    %5635 = vmatpush1.msra.mxu0 %v41
    %5636 = vmatprep.subr.mxu0 0.0
    %5637 = vmatpush1.msra.mxu0 %v40
    %5638 = vmatprep.subr.mxu0 0.0
    %5639 = vmatpush2.msra.mxu0 0.0
    %5640 = vmatprep.subr.mxu0 0.0
    %5641 = vmatpush2.msra.mxu0 0.0
    %5642 = vmatprep.subr.mxu0 0.0
    %5643 = vmatpush2.msra.mxu0 0.0
    %5644 = vmatprep.subr.mxu0 0.0
    %5645 = vmatpush2.msra.mxu0 0.0
    %5646 = vmatprep.subr.mxu0 0.0
    %5647 = vmatpush2.msra.mxu0 0.0
    %5648 = vmatprep.subr.mxu0 0.0
    %5649 = vmatpush2.msra.mxu0 0.0
    %5650 = vmatprep.subr.mxu0 0.0
    %5651 = vmatpush2.msra.mxu0 0.0
    %5652 = vmatprep.subr.mxu0 0.0
    %5653 = vmatpush2.msra.mxu0 0.0
    %5654 = vmatprep.subr.mxu0 0.0
    %5655 = vmatpush2.msra.mxu0 0.0
    %5656 = vmatprep.subr.mxu0 0.0
    %5657 = vmatpush2.msra.mxu0 0.0
    %5658 = vmatprep.subr.mxu0 0.0
    %5659 = vmatpush2.msra.mxu0 0.0
    %5660 = vmatprep.subr.mxu0 0.0
    %5661 = vmatpush2.msra.mxu0 0.0
    %5662 = vmatprep.subr.mxu0 0.0
    %5663 = vmatpush2.msra.mxu0 0.0
    %5664 = vmatprep.subr.mxu0 0.0
    %5665 = vmatpush2.msra.mxu0 0.0
    %5666 = vmatprep.subr.mxu0 0.0
    %5667 = vmatpush2.msra.mxu0 0.0
    %5668 = vmatprep.subr.mxu0 0.0
    %5669 = vmatpush2.msra.mxu0 0.0
    %5670 = vmatprep.mubr.f32.mxu0 0.0
    %5671 = vmatmul.mubr.f32.gmra.mxu0 %v5601
    %v5672 = vpop.f32.mrf.mxu0
    %v5673 = vadd.f32 %v5598, %v5672
    %v5674 = vpop.f32.mrf.mxu0
    %5675 = vmatprep.mubr.f32.mxu0 0.0
    %5676 = vmatmul.mubr.f32.gmra.mxu0 %v5604
    %v5677 = vpop.f32.mrf.mxu0
    %v5678 = vadd.f32 %v5598, %v5677
    %v5679 = vpop.f32.mrf.mxu0
    %5680 = vdwg.mxu0
    %v5681 = vmax.f32 %v5673, 0.0
    %v5682 = vmax.f32 %v5678, 0.0
    %v5683 = vlaneseq
    %v5684 = vshrl.u32 %v5683, 7
    %v5685 = vsub.s32 1, %v5684
    %v5686 = vrot.slane %v54, %v5685
    %vm5687 = vcmask 523264
    %v5689 = vsel %vm5687, %v5681, 0
    %v5692 = vsel %vm5687, %v5682, 0
    %5694 = vmatprep.subr.mxu0 0.0
    %5695 = vmatpush1.msra.mxu0 0.0
    %5696 = vmatprep.subr.mxu0 0.0
    %5697 = vmatpush1.msra.mxu0 0.0
    %5698 = vmatprep.subr.mxu0 0.0
    %5699 = vmatpush1.msra.mxu0 0.0
    %5700 = vmatprep.subr.mxu0 0.0
    %5701 = vmatpush1.msra.mxu0 0.0
    %5702 = vmatprep.subr.mxu0 0.0
    %5703 = vmatpush1.msra.mxu0 0.0
    %5704 = vmatprep.subr.mxu0 0.0
    %5705 = vmatpush1.msra.mxu0 0.0
    %5706 = vmatprep.subr.mxu0 0.0
    %5707 = vmatpush1.msra.mxu0 0.0
    %5708 = vmatprep.subr.mxu0 0.0
    %5709 = vmatpush1.msra.mxu0 0.0
    %5710 = vmatprep.subr.mxu0 0.0
    %5711 = vmatpush1.msra.mxu0 %v51
    %5712 = vmatprep.subr.mxu0 0.0
    %5713 = vmatpush1.msra.mxu0 %v50
    %5714 = vmatprep.subr.mxu0 0.0
    %5715 = vmatpush1.msra.mxu0 %v49
    %5716 = vmatprep.subr.mxu0 0.0
    %5717 = vmatpush1.msra.mxu0 %v48
    %5718 = vmatprep.subr.mxu0 0.0
    %5719 = vmatpush1.msra.mxu0 %v47
    %5720 = vmatprep.subr.mxu0 0.0
    %5721 = vmatpush1.msra.mxu0 %v46
    %5722 = vmatprep.subr.mxu0 0.0
    %5723 = vmatpush1.msra.mxu0 %v45
    %5724 = vmatprep.subr.mxu0 0.0
    %5725 = vmatpush1.msra.mxu0 %v44
    %5726 = vmatprep.subr.mxu0 0.0
    %5727 = vmatpush2.msra.mxu0 0.0
    %5728 = vmatprep.subr.mxu0 0.0
    %5729 = vmatpush2.msra.mxu0 0.0
    %5730 = vmatprep.subr.mxu0 0.0
    %5731 = vmatpush2.msra.mxu0 0.0
    %5732 = vmatprep.subr.mxu0 0.0
    %5733 = vmatpush2.msra.mxu0 0.0
    %5734 = vmatprep.subr.mxu0 0.0
    %5735 = vmatpush2.msra.mxu0 0.0
    %5736 = vmatprep.subr.mxu0 0.0
    %5737 = vmatpush2.msra.mxu0 0.0
    %5738 = vmatprep.subr.mxu0 0.0
    %5739 = vmatpush2.msra.mxu0 0.0
    %5740 = vmatprep.subr.mxu0 0.0
    %5741 = vmatpush2.msra.mxu0 0.0
    %5742 = vmatprep.subr.mxu0 0.0
    %5743 = vmatpush2.msra.mxu0 0.0
    %5744 = vmatprep.subr.mxu0 0.0
    %5745 = vmatpush2.msra.mxu0 0.0
    %5746 = vmatprep.subr.mxu0 0.0
    %5747 = vmatpush2.msra.mxu0 0.0
    %5748 = vmatprep.subr.mxu0 0.0
    %5749 = vmatpush2.msra.mxu0 0.0
    %5750 = vmatprep.subr.mxu0 0.0
    %5751 = vmatpush2.msra.mxu0 0.0
    %5752 = vmatprep.subr.mxu0 0.0
    %5753 = vmatpush2.msra.mxu0 0.0
    %5754 = vmatprep.subr.mxu0 0.0
    %5755 = vmatpush2.msra.mxu0 0.0
    %5756 = vmatprep.subr.mxu0 0.0
    %5757 = vmatpush2.msra.mxu0 0.0
    %5758 = vmatprep.mubr.f32.mxu0 0.0
    %5759 = vmatmul.mubr.f32.gmra.mxu0 %v5689
    %v5760 = vpop.f32.mrf.mxu0
    %v5761 = vadd.f32 %v5686, %v5760
    %v5762 = vpop.f32.mrf.mxu0
    %5763 = vmatprep.mubr.f32.mxu0 0.0
    %5764 = vmatmul.mubr.f32.gmra.mxu0 %v5692
    %v5765 = vpop.f32.mrf.mxu0
    %v5766 = vadd.f32 %v5686, %v5765
    %v5767 = vpop.f32.mrf.mxu0
    %5768 = vdwg.mxu0
    %v5769 = vadd.f32 %v5592, %v5761
    %v5770 = vadd.f32 %v5593, %v5766
    %v5771 = vsel %vm61, %v5769, 0.0
    %5772 = vadd.xlane.f32.xlu0 %v5771
    %v5773 = vpop.xlane.xlu0 %5772
    %v5774 = vsel %vm61, %v5770, 0.0
    %5775 = vadd.xlane.f32.xlu0 %v5774
    %v5776 = vpop.xlane.xlu0 %5775
    %v5777 = vmul.f32 %v5773, %v5561
    %v5778 = vmul.f32 %v5776, %v5561
    %v5779 = vsub.f32 %v5769, %v5777
    %v5780 = vsub.f32 %v5770, %v5778
    %v5781 = vmul.f32 %v5779, %v5779
    %v5782 = vmul.f32 %v5780, %v5780
    %v5783 = vsel %vm61, %v5781, 0.0
    %5784 = vadd.xlane.f32.xlu0 %v5783
    %v5785 = vpop.xlane.xlu0 %5784
    %v5786 = vsel %vm61, %v5782, 0.0
    %5787 = vadd.xlane.f32.xlu0 %v5786
    %v5788 = vpop.xlane.xlu0 %5787
    %v5789 = vmul.f32 %v5785, %v5561
    %v5790 = vmul.f32 %v5788, %v5561
    %v5791 = vadd.f32 %v5789, 1e-05
    %v5792 = vadd.f32 %v5790, 1e-05
    %v5793 = vrsqrt.pop %v5791
    %v5794 = vrsqrt.pop %v5792
    %v5795 = vmul.f32 %v5779, %v5793
    %v5796 = vmul.f32 %v5780, %v5794
    %v5797 = vlaneseq
    %v5798 = vshrl.u32 %v5797, 7
    %v5799 = vsub.s32 4, %v5798
    %v5800 = vrot.slane %v54, %v5799
    %v5801 = vmul.f32 %v5795, %v5800
    %v5802 = vmul.f32 %v5796, %v5800
    %v5803 = vlaneseq
    %v5804 = vshrl.u32 %v5803, 7
    %v5805 = vsub.s32 5, %v5804
    %v5806 = vrot.slane %v54, %v5805
    %v5807 = vadd.f32 %v5801, %v5806
    %v5808 = vadd.f32 %v5802, %v5806
    %s5809 = scalar_lea.vmem %s1, 32
    %v5810 = vld [vmem:[%s5809] sm:$0xff]
    %v5811 = vld [vmem:[%s5809 + $0x8] sm:$0xff]
    %v5812 = vld [vmem:[%s5809 + $0x10] sm:$0xff]
    %v5813 = vld [vmem:[%s5809 + $0x18] sm:$0xff]
    %s5814 = scalar_lea.vmem %s2, 32
    %v5815 = vld [vmem:[%s5814] sm:$0xff]
    %v5816 = vld [vmem:[%s5814 + $0x8] sm:$0xff]
    %v5817 = vld [vmem:[%s5814 + $0x10] sm:$0xff]
    %v5818 = vld [vmem:[%s5814 + $0x18] sm:$0xff]
    %s5819 = scalar_lea.vmem %s3, 32
    %v5820 = vld [vmem:[%s5819] sm:$0xff]
    %v5821 = vld [vmem:[%s5819 + $0x8] sm:$0xff]
    %v5822 = vld [vmem:[%s5819 + $0x10] sm:$0xff]
    %v5823 = vld [vmem:[%s5819 + $0x18] sm:$0xff]
    %s5824 = scalar_lea.vmem %s4, 64
    %v5825 = vld [vmem:[%s5824] sm:$0xff]
    %v5826 = vld [vmem:[%s5824 + $0x8] sm:$0xff]
    %v5827 = vld [vmem:[%s5824 + $0x10] sm:$0xff]
    %v5828 = vld [vmem:[%s5824 + $0x18] sm:$0xff]
    %v5829 = vld [vmem:[%s5824 + $0x20] sm:$0xff]
    %v5830 = vld [vmem:[%s5824 + $0x28] sm:$0xff]
    %v5831 = vld [vmem:[%s5824 + $0x30] sm:$0xff]
    %v5832 = vld [vmem:[%s5824 + $0x38] sm:$0xff]
    %s5833 = scalar_lea.vmem %s5, 1
    %v5834 = vld [vmem:[%s5833] sm:$0x1]
    %s5835 = scalar_lea.vmem %s6, 1
    %v5836 = vld [vmem:[%s5835] sm:$0x1]
    %s5837 = scalar_lea.vmem %s7, 8
    %v5838 = vld [vmem:[%s5837] sm:$0x3f]
    %v5840 = vlaneseq
    %v5841 = vshrl.u32 %v5840, 7
    %v5842 = vsub.s32 0, %v5841
    %v5843 = vrot.slane %v5834, %v5842
    %v5846 = vsel %vm61, %v5807, 0
    %v5849 = vsel %vm61, %v5808, 0
    %5851 = vmatprep.subr.mxu0 0.0
    %5852 = vmatpush1.msra.mxu0 0.0
    %5853 = vmatprep.subr.mxu0 0.0
    %5854 = vmatpush1.msra.mxu0 0.0
    %5855 = vmatprep.subr.mxu0 0.0
    %5856 = vmatpush1.msra.mxu0 0.0
    %5857 = vmatprep.subr.mxu0 0.0
    %5858 = vmatpush1.msra.mxu0 0.0
    %5859 = vmatprep.subr.mxu0 0.0
    %5860 = vmatpush1.msra.mxu0 0.0
    %5861 = vmatprep.subr.mxu0 0.0
    %5862 = vmatpush1.msra.mxu0 0.0
    %5863 = vmatprep.subr.mxu0 0.0
    %5864 = vmatpush1.msra.mxu0 0.0
    %5865 = vmatprep.subr.mxu0 0.0
    %5866 = vmatpush1.msra.mxu0 0.0
    %5867 = vmatprep.subr.mxu0 0.0
    %5868 = vmatpush1.msra.mxu0 0.0
    %5869 = vmatprep.subr.mxu0 0.0
    %5870 = vmatpush1.msra.mxu0 0.0
    %5871 = vmatprep.subr.mxu0 0.0
    %5872 = vmatpush1.msra.mxu0 0.0
    %5873 = vmatprep.subr.mxu0 0.0
    %5874 = vmatpush1.msra.mxu0 0.0
    %5875 = vmatprep.subr.mxu0 0.0
    %5876 = vmatpush1.msra.mxu0 %v5813
    %5877 = vmatprep.subr.mxu0 0.0
    %5878 = vmatpush1.msra.mxu0 %v5812
    %5879 = vmatprep.subr.mxu0 0.0
    %5880 = vmatpush1.msra.mxu0 %v5811
    %5881 = vmatprep.subr.mxu0 0.0
    %5882 = vmatpush1.msra.mxu0 %v5810
    %5883 = vmatprep.subr.mxu0 0.0
    %5884 = vmatpush2.msra.mxu0 0.0
    %5885 = vmatprep.subr.mxu0 0.0
    %5886 = vmatpush2.msra.mxu0 0.0
    %5887 = vmatprep.subr.mxu0 0.0
    %5888 = vmatpush2.msra.mxu0 0.0
    %5889 = vmatprep.subr.mxu0 0.0
    %5890 = vmatpush2.msra.mxu0 0.0
    %5891 = vmatprep.subr.mxu0 0.0
    %5892 = vmatpush2.msra.mxu0 0.0
    %5893 = vmatprep.subr.mxu0 0.0
    %5894 = vmatpush2.msra.mxu0 0.0
    %5895 = vmatprep.subr.mxu0 0.0
    %5896 = vmatpush2.msra.mxu0 0.0
    %5897 = vmatprep.subr.mxu0 0.0
    %5898 = vmatpush2.msra.mxu0 0.0
    %5899 = vmatprep.subr.mxu0 0.0
    %5900 = vmatpush2.msra.mxu0 0.0
    %5901 = vmatprep.subr.mxu0 0.0
    %5902 = vmatpush2.msra.mxu0 0.0
    %5903 = vmatprep.subr.mxu0 0.0
    %5904 = vmatpush2.msra.mxu0 0.0
    %5905 = vmatprep.subr.mxu0 0.0
    %5906 = vmatpush2.msra.mxu0 0.0
    %5907 = vmatprep.subr.mxu0 0.0
    %5908 = vmatpush2.msra.mxu0 0.0
    %5909 = vmatprep.subr.mxu0 0.0
    %5910 = vmatpush2.msra.mxu0 0.0
    %5911 = vmatprep.subr.mxu0 0.0
    %5912 = vmatpush2.msra.mxu0 0.0
    %5913 = vmatprep.subr.mxu0 0.0
    %5914 = vmatpush2.msra.mxu0 0.0
    %5915 = vmatprep.mubr.f32.mxu0 0.0
    %5916 = vmatmul.mubr.f32.gmra.mxu0 %v5846
    %v5917 = vpop.f32.mrf.mxu0
    %v5918 = vadd.f32 %v5843, %v5917
    %v5919 = vpop.f32.mrf.mxu0
    %5920 = vmatprep.mubr.f32.mxu0 0.0
    %5921 = vmatmul.mubr.f32.gmra.mxu0 %v5849
    %v5922 = vpop.f32.mrf.mxu0
    %v5923 = vadd.f32 %v5843, %v5922
    %v5924 = vpop.f32.mrf.mxu0
    %5925 = vdwg.mxu0
    %5928 = vrot.lane.b32.xlu0 %v5918, 120
    %v5929 = vpop.permute.xlu0 %5928
    %5930 = vrot.lane.b32.xlu0 %v5923, 120
    %v5931 = vpop.permute.xlu0 %5930
    %5934 = vrot.lane.b32.xlu0 %v5918, 112
    %v5935 = vpop.permute.xlu0 %5934
    %5936 = vrot.lane.b32.xlu0 %v5923, 112
    %v5937 = vpop.permute.xlu0 %5936
    %5940 = vrot.lane.b32.xlu0 %v5918, 104
    %v5941 = vpop.permute.xlu0 %5940
    %5942 = vrot.lane.b32.xlu0 %v5923, 104
    %v5943 = vpop.permute.xlu0 %5942
    %v5946 = vcombine.low %v5918, %v5935
    %v5947 = vcombine.high %v5918, %v5935
    %v5949 = vunpack.c.l.s4 1983009808
    %v5950 = vunpack.c.0.s8 %v5949
    %v5951 = vlaneseq
    %v5952 = vshrl.u32 %v5951, 7
    %v5953 = vsub.s32 %v5950, %v5952
    %v5954 = vrot.slane %v5946, %v5953
    %v5956 = vunpack.c.l.s4 1983009808
    %v5957 = vunpack.c.0.s8 %v5956
    %v5958 = vlaneseq
    %v5959 = vshrl.u32 %v5958, 7
    %v5960 = vsub.s32 %v5957, %v5959
    %v5961 = vrot.slane %v5947, %v5960
    %v5962 = vcombine.low %v5929, %v5941
    %v5963 = vcombine.high %v5929, %v5941
    %v5965 = vunpack.c.l.s4 1983009808
    %v5966 = vunpack.c.0.s8 %v5965
    %v5967 = vlaneseq
    %v5968 = vshrl.u32 %v5967, 7
    %v5969 = vsub.s32 %v5966, %v5968
    %v5970 = vrot.slane %v5962, %v5969
    %v5972 = vunpack.c.l.s4 1983009808
    %v5973 = vunpack.c.0.s8 %v5972
    %v5974 = vlaneseq
    %v5975 = vshrl.u32 %v5974, 7
    %v5976 = vsub.s32 %v5973, %v5975
    %v5977 = vrot.slane %v5963, %v5976
    %v5978 = vcombine.low %v5954, %v5970
    %v5979 = vcombine.high %v5954, %v5970
    %v5981 = vunpack.c.l.s4 1934713408
    %v5982 = vunpack.c.0.s8 %v5981
    %v5983 = vlaneseq
    %v5984 = vshrl.u32 %v5983, 7
    %v5985 = vsub.s32 %v5982, %v5984
    %v5986 = vrot.slane %v5978, %v5985
    %v5988 = vunpack.c.l.s4 1934713408
    %v5989 = vunpack.c.0.s8 %v5988
    %v5990 = vlaneseq
    %v5991 = vshrl.u32 %v5990, 7
    %v5992 = vsub.s32 %v5989, %v5991
    %v5993 = vrot.slane %v5979, %v5992
    %v5994 = vcombine.low %v5961, %v5977
    %v5995 = vcombine.high %v5961, %v5977
    %v5997 = vunpack.c.l.s4 1934713408
    %v5998 = vunpack.c.0.s8 %v5997
    %v5999 = vlaneseq
    %v6000 = vshrl.u32 %v5999, 7
    %v6001 = vsub.s32 %v5998, %v6000
    %v6002 = vrot.slane %v5994, %v6001
    %v6004 = vunpack.c.l.s4 1934713408
    %v6005 = vunpack.c.0.s8 %v6004
    %v6006 = vlaneseq
    %v6007 = vshrl.u32 %v6006, 7
    %v6008 = vsub.s32 %v6005, %v6007
    %v6009 = vrot.slane %v5995, %v6008
    %v6010 = vcombine.high %v5986, 0.0
    %v6011 = vcombine.high %v5993, 0.0
    %v6012 = vcombine.high %v6002, 0.0
    %v6013 = vcombine.high %v6009, 0.0
    %v6014 = vcombine.low %v5923, %v5937
    %v6015 = vcombine.high %v5923, %v5937
    %v6017 = vunpack.c.l.s4 1983009808
    %v6018 = vunpack.c.0.s8 %v6017
    %v6019 = vlaneseq
    %v6020 = vshrl.u32 %v6019, 7
    %v6021 = vsub.s32 %v6018, %v6020
    %v6022 = vrot.slane %v6014, %v6021
    %v6024 = vunpack.c.l.s4 1983009808
    %v6025 = vunpack.c.0.s8 %v6024
    %v6026 = vlaneseq
    %v6027 = vshrl.u32 %v6026, 7
    %v6028 = vsub.s32 %v6025, %v6027
    %v6029 = vrot.slane %v6015, %v6028
    %v6030 = vcombine.low %v5931, %v5943
    %v6031 = vcombine.high %v5931, %v5943
    %v6033 = vunpack.c.l.s4 1983009808
    %v6034 = vunpack.c.0.s8 %v6033
    %v6035 = vlaneseq
    %v6036 = vshrl.u32 %v6035, 7
    %v6037 = vsub.s32 %v6034, %v6036
    %v6038 = vrot.slane %v6030, %v6037
    %v6040 = vunpack.c.l.s4 1983009808
    %v6041 = vunpack.c.0.s8 %v6040
    %v6042 = vlaneseq
    %v6043 = vshrl.u32 %v6042, 7
    %v6044 = vsub.s32 %v6041, %v6043
    %v6045 = vrot.slane %v6031, %v6044
    %v6046 = vcombine.low %v6022, %v6038
    %v6047 = vcombine.high %v6022, %v6038
    %v6049 = vunpack.c.l.s4 1934713408
    %v6050 = vunpack.c.0.s8 %v6049
    %v6051 = vlaneseq
    %v6052 = vshrl.u32 %v6051, 7
    %v6053 = vsub.s32 %v6050, %v6052
    %v6054 = vrot.slane %v6046, %v6053
    %v6056 = vunpack.c.l.s4 1934713408
    %v6057 = vunpack.c.0.s8 %v6056
    %v6058 = vlaneseq
    %v6059 = vshrl.u32 %v6058, 7
    %v6060 = vsub.s32 %v6057, %v6059
    %v6061 = vrot.slane %v6047, %v6060
    %v6062 = vcombine.low %v6029, %v6045
    %v6063 = vcombine.high %v6029, %v6045
    %v6065 = vunpack.c.l.s4 1934713408
    %v6066 = vunpack.c.0.s8 %v6065
    %v6067 = vlaneseq
    %v6068 = vshrl.u32 %v6067, 7
    %v6069 = vsub.s32 %v6066, %v6068
    %v6070 = vrot.slane %v6062, %v6069
    %v6072 = vunpack.c.l.s4 1934713408
    %v6073 = vunpack.c.0.s8 %v6072
    %v6074 = vlaneseq
    %v6075 = vshrl.u32 %v6074, 7
    %v6076 = vsub.s32 %v6073, %v6075
    %v6077 = vrot.slane %v6063, %v6076
    %v6078 = vcombine.high %v6054, 0.0
    %v6079 = vcombine.high %v6061, 0.0
    %v6080 = vcombine.high %v6070, 0.0
    %v6081 = vcombine.high %v6077, 0.0
    %6082 = vrot.lane.b32.xlu0 %v5918, 96
    %v6083 = vpop.permute.xlu0 %6082
    %6084 = vrot.lane.b32.xlu0 %v5923, 96
    %v6085 = vpop.permute.xlu0 %6084
    %6086 = vrot.lane.b32.xlu0 %v5929, 96
    %v6087 = vpop.permute.xlu0 %6086
    %6088 = vrot.lane.b32.xlu0 %v5931, 96
    %v6089 = vpop.permute.xlu0 %6088
    %6090 = vrot.lane.b32.xlu0 %v5935, 96
    %v6091 = vpop.permute.xlu0 %6090
    %6092 = vrot.lane.b32.xlu0 %v5937, 96
    %v6093 = vpop.permute.xlu0 %6092
    %6094 = vrot.lane.b32.xlu0 %v5941, 96
    %v6095 = vpop.permute.xlu0 %6094
    %6096 = vrot.lane.b32.xlu0 %v5943, 96
    %v6097 = vpop.permute.xlu0 %6096
    %v6106 = vcombine.low %v6083, %v6091
    %v6107 = vcombine.high %v6083, %v6091
    %v6109 = vunpack.c.l.s4 1983009808
    %v6110 = vunpack.c.0.s8 %v6109
    %v6111 = vlaneseq
    %v6112 = vshrl.u32 %v6111, 7
    %v6113 = vsub.s32 %v6110, %v6112
    %v6114 = vrot.slane %v6106, %v6113
    %v6116 = vunpack.c.l.s4 1983009808
    %v6117 = vunpack.c.0.s8 %v6116
    %v6118 = vlaneseq
    %v6119 = vshrl.u32 %v6118, 7
    %v6120 = vsub.s32 %v6117, %v6119
    %v6121 = vrot.slane %v6107, %v6120
    %v6122 = vcombine.low %v6087, %v6095
    %v6123 = vcombine.high %v6087, %v6095
    %v6125 = vunpack.c.l.s4 1983009808
    %v6126 = vunpack.c.0.s8 %v6125
    %v6127 = vlaneseq
    %v6128 = vshrl.u32 %v6127, 7
    %v6129 = vsub.s32 %v6126, %v6128
    %v6130 = vrot.slane %v6122, %v6129
    %v6132 = vunpack.c.l.s4 1983009808
    %v6133 = vunpack.c.0.s8 %v6132
    %v6134 = vlaneseq
    %v6135 = vshrl.u32 %v6134, 7
    %v6136 = vsub.s32 %v6133, %v6135
    %v6137 = vrot.slane %v6123, %v6136
    %v6138 = vcombine.low %v6114, %v6130
    %v6139 = vcombine.high %v6114, %v6130
    %v6141 = vunpack.c.l.s4 1934713408
    %v6142 = vunpack.c.0.s8 %v6141
    %v6143 = vlaneseq
    %v6144 = vshrl.u32 %v6143, 7
    %v6145 = vsub.s32 %v6142, %v6144
    %v6146 = vrot.slane %v6138, %v6145
    %v6148 = vunpack.c.l.s4 1934713408
    %v6149 = vunpack.c.0.s8 %v6148
    %v6150 = vlaneseq
    %v6151 = vshrl.u32 %v6150, 7
    %v6152 = vsub.s32 %v6149, %v6151
    %v6153 = vrot.slane %v6139, %v6152
    %v6154 = vcombine.low %v6121, %v6137
    %v6155 = vcombine.high %v6121, %v6137
    %v6157 = vunpack.c.l.s4 1934713408
    %v6158 = vunpack.c.0.s8 %v6157
    %v6159 = vlaneseq
    %v6160 = vshrl.u32 %v6159, 7
    %v6161 = vsub.s32 %v6158, %v6160
    %v6162 = vrot.slane %v6154, %v6161
    %v6164 = vunpack.c.l.s4 1934713408
    %v6165 = vunpack.c.0.s8 %v6164
    %v6166 = vlaneseq
    %v6167 = vshrl.u32 %v6166, 7
    %v6168 = vsub.s32 %v6165, %v6167
    %v6169 = vrot.slane %v6155, %v6168
    %v6170 = vcombine.high %v6146, 0.0
    %v6171 = vcombine.high %v6153, 0.0
    %v6172 = vcombine.high %v6162, 0.0
    %v6173 = vcombine.high %v6169, 0.0
    %v6174 = vcombine.low %v6085, %v6093
    %v6175 = vcombine.high %v6085, %v6093
    %v6177 = vunpack.c.l.s4 1983009808
    %v6178 = vunpack.c.0.s8 %v6177
    %v6179 = vlaneseq
    %v6180 = vshrl.u32 %v6179, 7
    %v6181 = vsub.s32 %v6178, %v6180
    %v6182 = vrot.slane %v6174, %v6181
    %v6184 = vunpack.c.l.s4 1983009808
    %v6185 = vunpack.c.0.s8 %v6184
    %v6186 = vlaneseq
    %v6187 = vshrl.u32 %v6186, 7
    %v6188 = vsub.s32 %v6185, %v6187
    %v6189 = vrot.slane %v6175, %v6188
    %v6190 = vcombine.low %v6089, %v6097
    %v6191 = vcombine.high %v6089, %v6097
    %v6193 = vunpack.c.l.s4 1983009808
    %v6194 = vunpack.c.0.s8 %v6193
    %v6195 = vlaneseq
    %v6196 = vshrl.u32 %v6195, 7
    %v6197 = vsub.s32 %v6194, %v6196
    %v6198 = vrot.slane %v6190, %v6197
    %v6200 = vunpack.c.l.s4 1983009808
    %v6201 = vunpack.c.0.s8 %v6200
    %v6202 = vlaneseq
    %v6203 = vshrl.u32 %v6202, 7
    %v6204 = vsub.s32 %v6201, %v6203
    %v6205 = vrot.slane %v6191, %v6204
    %v6206 = vcombine.low %v6182, %v6198
    %v6207 = vcombine.high %v6182, %v6198
    %v6209 = vunpack.c.l.s4 1934713408
    %v6210 = vunpack.c.0.s8 %v6209
    %v6211 = vlaneseq
    %v6212 = vshrl.u32 %v6211, 7
    %v6213 = vsub.s32 %v6210, %v6212
    %v6214 = vrot.slane %v6206, %v6213
    %v6216 = vunpack.c.l.s4 1934713408
    %v6217 = vunpack.c.0.s8 %v6216
    %v6218 = vlaneseq
    %v6219 = vshrl.u32 %v6218, 7
    %v6220 = vsub.s32 %v6217, %v6219
    %v6221 = vrot.slane %v6207, %v6220
    %v6222 = vcombine.low %v6189, %v6205
    %v6223 = vcombine.high %v6189, %v6205
    %v6225 = vunpack.c.l.s4 1934713408
    %v6226 = vunpack.c.0.s8 %v6225
    %v6227 = vlaneseq
    %v6228 = vshrl.u32 %v6227, 7
    %v6229 = vsub.s32 %v6226, %v6228
    %v6230 = vrot.slane %v6222, %v6229
    %v6232 = vunpack.c.l.s4 1934713408
    %v6233 = vunpack.c.0.s8 %v6232
    %v6234 = vlaneseq
    %v6235 = vshrl.u32 %v6234, 7
    %v6236 = vsub.s32 %v6233, %v6235
    %v6237 = vrot.slane %v6223, %v6236
    %v6238 = vcombine.high %v6214, 0.0
    %v6239 = vcombine.high %v6221, 0.0
    %v6240 = vcombine.high %v6230, 0.0
    %v6241 = vcombine.high %v6237, 0.0
    %6242 = vrot.lane.b32.xlu0 %v5918, 64
    %v6243 = vpop.permute.xlu0 %6242
    %6244 = vrot.lane.b32.xlu0 %v5923, 64
    %v6245 = vpop.permute.xlu0 %6244
    %6246 = vrot.lane.b32.xlu0 %v5929, 64
    %v6247 = vpop.permute.xlu0 %6246
    %6248 = vrot.lane.b32.xlu0 %v5931, 64
    %v6249 = vpop.permute.xlu0 %6248
    %6250 = vrot.lane.b32.xlu0 %v5935, 64
    %v6251 = vpop.permute.xlu0 %6250
    %6252 = vrot.lane.b32.xlu0 %v5937, 64
    %v6253 = vpop.permute.xlu0 %6252
    %6254 = vrot.lane.b32.xlu0 %v5941, 64
    %v6255 = vpop.permute.xlu0 %6254
    %6256 = vrot.lane.b32.xlu0 %v5943, 64
    %v6257 = vpop.permute.xlu0 %6256
    %v6266 = vcombine.low %v6243, %v6251
    %v6267 = vcombine.high %v6243, %v6251
    %v6269 = vunpack.c.l.s4 1983009808
    %v6270 = vunpack.c.0.s8 %v6269
    %v6271 = vlaneseq
    %v6272 = vshrl.u32 %v6271, 7
    %v6273 = vsub.s32 %v6270, %v6272
    %v6274 = vrot.slane %v6266, %v6273
    %v6276 = vunpack.c.l.s4 1983009808
    %v6277 = vunpack.c.0.s8 %v6276
    %v6278 = vlaneseq
    %v6279 = vshrl.u32 %v6278, 7
    %v6280 = vsub.s32 %v6277, %v6279
    %v6281 = vrot.slane %v6267, %v6280
    %v6282 = vcombine.low %v6247, %v6255
    %v6283 = vcombine.high %v6247, %v6255
    %v6285 = vunpack.c.l.s4 1983009808
    %v6286 = vunpack.c.0.s8 %v6285
    %v6287 = vlaneseq
    %v6288 = vshrl.u32 %v6287, 7
    %v6289 = vsub.s32 %v6286, %v6288
    %v6290 = vrot.slane %v6282, %v6289
    %v6292 = vunpack.c.l.s4 1983009808
    %v6293 = vunpack.c.0.s8 %v6292
    %v6294 = vlaneseq
    %v6295 = vshrl.u32 %v6294, 7
    %v6296 = vsub.s32 %v6293, %v6295
    %v6297 = vrot.slane %v6283, %v6296
    %v6298 = vcombine.low %v6274, %v6290
    %v6299 = vcombine.high %v6274, %v6290
    %v6301 = vunpack.c.l.s4 1934713408
    %v6302 = vunpack.c.0.s8 %v6301
    %v6303 = vlaneseq
    %v6304 = vshrl.u32 %v6303, 7
    %v6305 = vsub.s32 %v6302, %v6304
    %v6306 = vrot.slane %v6298, %v6305
    %v6308 = vunpack.c.l.s4 1934713408
    %v6309 = vunpack.c.0.s8 %v6308
    %v6310 = vlaneseq
    %v6311 = vshrl.u32 %v6310, 7
    %v6312 = vsub.s32 %v6309, %v6311
    %v6313 = vrot.slane %v6299, %v6312
    %v6314 = vcombine.low %v6281, %v6297
    %v6315 = vcombine.high %v6281, %v6297
    %v6317 = vunpack.c.l.s4 1934713408
    %v6318 = vunpack.c.0.s8 %v6317
    %v6319 = vlaneseq
    %v6320 = vshrl.u32 %v6319, 7
    %v6321 = vsub.s32 %v6318, %v6320
    %v6322 = vrot.slane %v6314, %v6321
    %v6324 = vunpack.c.l.s4 1934713408
    %v6325 = vunpack.c.0.s8 %v6324
    %v6326 = vlaneseq
    %v6327 = vshrl.u32 %v6326, 7
    %v6328 = vsub.s32 %v6325, %v6327
    %v6329 = vrot.slane %v6315, %v6328
    %v6330 = vcombine.high %v6306, 0.0
    %v6331 = vcombine.high %v6313, 0.0
    %v6332 = vcombine.high %v6322, 0.0
    %v6333 = vcombine.high %v6329, 0.0
    %v6334 = vcombine.low %v6245, %v6253
    %v6335 = vcombine.high %v6245, %v6253
    %v6337 = vunpack.c.l.s4 1983009808
    %v6338 = vunpack.c.0.s8 %v6337
    %v6339 = vlaneseq
    %v6340 = vshrl.u32 %v6339, 7
    %v6341 = vsub.s32 %v6338, %v6340
    %v6342 = vrot.slane %v6334, %v6341
    %v6344 = vunpack.c.l.s4 1983009808
    %v6345 = vunpack.c.0.s8 %v6344
    %v6346 = vlaneseq
    %v6347 = vshrl.u32 %v6346, 7
    %v6348 = vsub.s32 %v6345, %v6347
    %v6349 = vrot.slane %v6335, %v6348
    %v6350 = vcombine.low %v6249, %v6257
    %v6351 = vcombine.high %v6249, %v6257
    %v6353 = vunpack.c.l.s4 1983009808
    %v6354 = vunpack.c.0.s8 %v6353
    %v6355 = vlaneseq
    %v6356 = vshrl.u32 %v6355, 7
    %v6357 = vsub.s32 %v6354, %v6356
    %v6358 = vrot.slane %v6350, %v6357
    %v6360 = vunpack.c.l.s4 1983009808
    %v6361 = vunpack.c.0.s8 %v6360
    %v6362 = vlaneseq
    %v6363 = vshrl.u32 %v6362, 7
    %v6364 = vsub.s32 %v6361, %v6363
    %v6365 = vrot.slane %v6351, %v6364
    %v6366 = vcombine.low %v6342, %v6358
    %v6367 = vcombine.high %v6342, %v6358
    %v6369 = vunpack.c.l.s4 1934713408
    %v6370 = vunpack.c.0.s8 %v6369
    %v6371 = vlaneseq
    %v6372 = vshrl.u32 %v6371, 7
    %v6373 = vsub.s32 %v6370, %v6372
    %v6374 = vrot.slane %v6366, %v6373
    %v6376 = vunpack.c.l.s4 1934713408
    %v6377 = vunpack.c.0.s8 %v6376
    %v6378 = vlaneseq
    %v6379 = vshrl.u32 %v6378, 7
    %v6380 = vsub.s32 %v6377, %v6379
    %v6381 = vrot.slane %v6367, %v6380
    %v6382 = vcombine.low %v6349, %v6365
    %v6383 = vcombine.high %v6349, %v6365
    %v6385 = vunpack.c.l.s4 1934713408
    %v6386 = vunpack.c.0.s8 %v6385
    %v6387 = vlaneseq
    %v6388 = vshrl.u32 %v6387, 7
    %v6389 = vsub.s32 %v6386, %v6388
    %v6390 = vrot.slane %v6382, %v6389
    %v6392 = vunpack.c.l.s4 1934713408
    %v6393 = vunpack.c.0.s8 %v6392
    %v6394 = vlaneseq
    %v6395 = vshrl.u32 %v6394, 7
    %v6396 = vsub.s32 %v6393, %v6395
    %v6397 = vrot.slane %v6383, %v6396
    %v6398 = vcombine.high %v6374, 0.0
    %v6399 = vcombine.high %v6381, 0.0
    %v6400 = vcombine.high %v6390, 0.0
    %v6401 = vcombine.high %v6397, 0.0
    %v6402 = vcombine.low %v5986, %v5993
    %v6404 = vunpack.c.l.s4 1983009808
    %v6405 = vunpack.c.0.s8 %v6404
    %v6406 = vlaneseq
    %v6407 = vshrl.u32 %v6406, 7
    %v6408 = vsub.s32 %v6405, %v6407
    %v6409 = vrot.slane %v6402, %v6408
    %v6410 = vcombine.low %v6010, %v6011
    %v6412 = vunpack.c.l.s4 1983009808
    %v6413 = vunpack.c.0.s8 %v6412
    %v6414 = vlaneseq
    %v6415 = vshrl.u32 %v6414, 7
    %v6416 = vsub.s32 %v6413, %v6415
    %v6417 = vrot.slane %v6410, %v6416
    %v6418 = vcombine.low %v6002, %v6009
    %v6420 = vunpack.c.l.s4 1983009808
    %v6421 = vunpack.c.0.s8 %v6420
    %v6422 = vlaneseq
    %v6423 = vshrl.u32 %v6422, 7
    %v6424 = vsub.s32 %v6421, %v6423
    %v6425 = vrot.slane %v6418, %v6424
    %v6426 = vcombine.low %v6012, %v6013
    %v6428 = vunpack.c.l.s4 1983009808
    %v6429 = vunpack.c.0.s8 %v6428
    %v6430 = vlaneseq
    %v6431 = vshrl.u32 %v6430, 7
    %v6432 = vsub.s32 %v6429, %v6431
    %v6433 = vrot.slane %v6426, %v6432
    %v6434 = vcombine.low %v6409, %v6417
    %v6435 = vcombine.high %v6409, %v6417
    %v6437 = vunpack.c.l.s4 1934713408
    %v6438 = vunpack.c.0.s8 %v6437
    %v6439 = vlaneseq
    %v6440 = vshrl.u32 %v6439, 7
    %v6441 = vsub.s32 %v6438, %v6440
    %v6442 = vrot.slane %v6434, %v6441
    %v6444 = vunpack.c.l.s4 1934713408
    %v6445 = vunpack.c.0.s8 %v6444
    %v6446 = vlaneseq
    %v6447 = vshrl.u32 %v6446, 7
    %v6448 = vsub.s32 %v6445, %v6447
    %v6449 = vrot.slane %v6435, %v6448
    %v6450 = vcombine.low %v6425, %v6433
    %v6451 = vcombine.high %v6425, %v6433
    %v6453 = vunpack.c.l.s4 1934713408
    %v6454 = vunpack.c.0.s8 %v6453
    %v6455 = vlaneseq
    %v6456 = vshrl.u32 %v6455, 7
    %v6457 = vsub.s32 %v6454, %v6456
    %v6458 = vrot.slane %v6450, %v6457
    %v6460 = vunpack.c.l.s4 1934713408
    %v6461 = vunpack.c.0.s8 %v6460
    %v6462 = vlaneseq
    %v6463 = vshrl.u32 %v6462, 7
    %v6464 = vsub.s32 %v6461, %v6463
    %v6465 = vrot.slane %v6451, %v6464
    %v6466 = vcombine.low %v6442, %v6458
    %v6467 = vcombine.high %v6442, %v6458
    %v6468 = vcombine.low %v6449, %v6465
    %v6469 = vcombine.high %v6449, %v6465
    %6470 = vxpose.xlu0.b32.start [1/16] %v6146, 128
    %6471 = vxpose.xlu0.b32.cont [2/16] 0.0, 128
    %6472 = vxpose.xlu0.b32.cont [3/16] 0.0, 128
    %6473 = vxpose.xlu0.b32.cont [4/16] 0.0, 128
    %6474 = vxpose.xlu0.b32.cont [5/16] 0.0, 128
    %6475 = vxpose.xlu0.b32.cont [6/16] 0.0, 128
    %6476 = vxpose.xlu0.b32.cont [7/16] 0.0, 128
    %6477 = vxpose.xlu0.b32.cont [8/16] 0.0, 128
    %6478 = vxpose.xlu0.b32.cont [9/16] 0.0, 128
    %6479 = vxpose.xlu0.b32.cont [10/16] 0.0, 128
    %6480 = vxpose.xlu0.b32.cont [11/16] 0.0, 128
    %6481 = vxpose.xlu0.b32.cont [12/16] 0.0, 128
    %6482 = vxpose.xlu0.b32.cont [13/16] 0.0, 128
    %6483 = vxpose.xlu0.b32.cont [14/16] 0.0, 128
    %6484 = vxpose.xlu0.b32.cont [15/16] 0.0, 128
    %6485 = vxpose.xlu0.b32.end [16/16] 0.0, 128
    %v6486 = vpop.trf.xlu0
    %v6487 = vpop.trf.xlu0
    %v6488 = vpop.trf.xlu0
    %v6489 = vpop.trf.xlu0
    %v6490 = vpop.trf.xlu0
    %v6491 = vpop.trf.xlu0
    %v6492 = vpop.trf.xlu0
    %v6493 = vpop.trf.xlu0
    %v6494 = vpop.trf.xlu0
    %v6495 = vpop.trf.xlu0
    %v6496 = vpop.trf.xlu0
    %v6497 = vpop.trf.xlu0
    %v6498 = vpop.trf.xlu0
    %v6499 = vpop.trf.xlu0
    %v6500 = vpop.trf.xlu0
    %v6501 = vpop.trf.xlu0
    %6502 = vxpose.xlu0.b32.start [1/16] %v6170, 128
    %6503 = vxpose.xlu0.b32.cont [2/16] 0.0, 128
    %6504 = vxpose.xlu0.b32.cont [3/16] 0.0, 128
    %6505 = vxpose.xlu0.b32.cont [4/16] 0.0, 128
    %6506 = vxpose.xlu0.b32.cont [5/16] 0.0, 128
    %6507 = vxpose.xlu0.b32.cont [6/16] 0.0, 128
    %6508 = vxpose.xlu0.b32.cont [7/16] 0.0, 128
    %6509 = vxpose.xlu0.b32.cont [8/16] 0.0, 128
    %6510 = vxpose.xlu0.b32.cont [9/16] 0.0, 128
    %6511 = vxpose.xlu0.b32.cont [10/16] 0.0, 128
    %6512 = vxpose.xlu0.b32.cont [11/16] 0.0, 128
    %6513 = vxpose.xlu0.b32.cont [12/16] 0.0, 128
    %6514 = vxpose.xlu0.b32.cont [13/16] 0.0, 128
    %6515 = vxpose.xlu0.b32.cont [14/16] 0.0, 128
    %6516 = vxpose.xlu0.b32.cont [15/16] 0.0, 128
    %6517 = vxpose.xlu0.b32.end [16/16] 0.0, 128
    %v6518 = vpop.trf.xlu0
    %v6519 = vpop.trf.xlu0
    %v6520 = vpop.trf.xlu0
    %v6521 = vpop.trf.xlu0
    %v6522 = vpop.trf.xlu0
    %v6523 = vpop.trf.xlu0
    %v6524 = vpop.trf.xlu0
    %v6525 = vpop.trf.xlu0
    %v6526 = vpop.trf.xlu0
    %v6527 = vpop.trf.xlu0
    %v6528 = vpop.trf.xlu0
    %v6529 = vpop.trf.xlu0
    %v6530 = vpop.trf.xlu0
    %v6531 = vpop.trf.xlu0
    %v6532 = vpop.trf.xlu0
    %v6533 = vpop.trf.xlu0
    %6534 = vxpose.xlu0.b32.start [1/16] %v6153, 128
    %6535 = vxpose.xlu0.b32.cont [2/16] 0.0, 128
    %6536 = vxpose.xlu0.b32.cont [3/16] 0.0, 128
    %6537 = vxpose.xlu0.b32.cont [4/16] 0.0, 128
    %6538 = vxpose.xlu0.b32.cont [5/16] 0.0, 128
    %6539 = vxpose.xlu0.b32.cont [6/16] 0.0, 128
    %6540 = vxpose.xlu0.b32.cont [7/16] 0.0, 128
    %6541 = vxpose.xlu0.b32.cont [8/16] 0.0, 128
    %6542 = vxpose.xlu0.b32.cont [9/16] 0.0, 128
    %6543 = vxpose.xlu0.b32.cont [10/16] 0.0, 128
    %6544 = vxpose.xlu0.b32.cont [11/16] 0.0, 128
    %6545 = vxpose.xlu0.b32.cont [12/16] 0.0, 128
    %6546 = vxpose.xlu0.b32.cont [13/16] 0.0, 128
    %6547 = vxpose.xlu0.b32.cont [14/16] 0.0, 128
    %6548 = vxpose.xlu0.b32.cont [15/16] 0.0, 128
    %6549 = vxpose.xlu0.b32.end [16/16] 0.0, 128
    %v6550 = vpop.trf.xlu0
    %v6551 = vpop.trf.xlu0
    %v6552 = vpop.trf.xlu0
    %v6553 = vpop.trf.xlu0
    %v6554 = vpop.trf.xlu0
    %v6555 = vpop.trf.xlu0
    %v6556 = vpop.trf.xlu0
    %v6557 = vpop.trf.xlu0
    %v6558 = vpop.trf.xlu0
    %v6559 = vpop.trf.xlu0
    %v6560 = vpop.trf.xlu0
    %v6561 = vpop.trf.xlu0
    %v6562 = vpop.trf.xlu0
    %v6563 = vpop.trf.xlu0
    %v6564 = vpop.trf.xlu0
    %v6565 = vpop.trf.xlu0
    %6566 = vxpose.xlu0.b32.start [1/16] %v6171, 128
    %6567 = vxpose.xlu0.b32.cont [2/16] 0.0, 128
    %6568 = vxpose.xlu0.b32.cont [3/16] 0.0, 128
    %6569 = vxpose.xlu0.b32.cont [4/16] 0.0, 128
    %6570 = vxpose.xlu0.b32.cont [5/16] 0.0, 128
    %6571 = vxpose.xlu0.b32.cont [6/16] 0.0, 128
    %6572 = vxpose.xlu0.b32.cont [7/16] 0.0, 128
    %6573 = vxpose.xlu0.b32.cont [8/16] 0.0, 128
    %6574 = vxpose.xlu0.b32.cont [9/16] 0.0, 128
    %6575 = vxpose.xlu0.b32.cont [10/16] 0.0, 128
    %6576 = vxpose.xlu0.b32.cont [11/16] 0.0, 128
    %6577 = vxpose.xlu0.b32.cont [12/16] 0.0, 128
    %6578 = vxpose.xlu0.b32.cont [13/16] 0.0, 128
    %6579 = vxpose.xlu0.b32.cont [14/16] 0.0, 128
    %6580 = vxpose.xlu0.b32.cont [15/16] 0.0, 128
    %6581 = vxpose.xlu0.b32.end [16/16] 0.0, 128
    %v6582 = vpop.trf.xlu0
    %v6583 = vpop.trf.xlu0
    %v6584 = vpop.trf.xlu0
    %v6585 = vpop.trf.xlu0
    %v6586 = vpop.trf.xlu0
    %v6587 = vpop.trf.xlu0
    %v6588 = vpop.trf.xlu0
    %v6589 = vpop.trf.xlu0
    %v6590 = vpop.trf.xlu0
    %v6591 = vpop.trf.xlu0
    %v6592 = vpop.trf.xlu0
    %v6593 = vpop.trf.xlu0
    %v6594 = vpop.trf.xlu0
    %v6595 = vpop.trf.xlu0
    %v6596 = vpop.trf.xlu0
    %v6597 = vpop.trf.xlu0
    %6598 = vxpose.xlu0.b32.start [1/16] %v6162, 128
    %6599 = vxpose.xlu0.b32.cont [2/16] 0.0, 128
    %6600 = vxpose.xlu0.b32.cont [3/16] 0.0, 128
    %6601 = vxpose.xlu0.b32.cont [4/16] 0.0, 128
    %6602 = vxpose.xlu0.b32.cont [5/16] 0.0, 128
    %6603 = vxpose.xlu0.b32.cont [6/16] 0.0, 128
    %6604 = vxpose.xlu0.b32.cont [7/16] 0.0, 128
    %6605 = vxpose.xlu0.b32.cont [8/16] 0.0, 128
    %6606 = vxpose.xlu0.b32.cont [9/16] 0.0, 128
    %6607 = vxpose.xlu0.b32.cont [10/16] 0.0, 128
    %6608 = vxpose.xlu0.b32.cont [11/16] 0.0, 128
    %6609 = vxpose.xlu0.b32.cont [12/16] 0.0, 128
    %6610 = vxpose.xlu0.b32.cont [13/16] 0.0, 128
    %6611 = vxpose.xlu0.b32.cont [14/16] 0.0, 128
    %6612 = vxpose.xlu0.b32.cont [15/16] 0.0, 128
    %6613 = vxpose.xlu0.b32.end [16/16] 0.0, 128
    %v6614 = vpop.trf.xlu0
    %v6615 = vpop.trf.xlu0
    %v6616 = vpop.trf.xlu0
    %v6617 = vpop.trf.xlu0
    %v6618 = vpop.trf.xlu0
    %v6619 = vpop.trf.xlu0
    %v6620 = vpop.trf.xlu0
    %v6621 = vpop.trf.xlu0
    %v6622 = vpop.trf.xlu0
    %v6623 = vpop.trf.xlu0
    %v6624 = vpop.trf.xlu0
    %v6625 = vpop.trf.xlu0
    %v6626 = vpop.trf.xlu0
    %v6627 = vpop.trf.xlu0
    %v6628 = vpop.trf.xlu0
    %v6629 = vpop.trf.xlu0
    %6630 = vxpose.xlu0.b32.start [1/16] %v6172, 128
    %6631 = vxpose.xlu0.b32.cont [2/16] 0.0, 128
    %6632 = vxpose.xlu0.b32.cont [3/16] 0.0, 128
    %6633 = vxpose.xlu0.b32.cont [4/16] 0.0, 128
    %6634 = vxpose.xlu0.b32.cont [5/16] 0.0, 128
    %6635 = vxpose.xlu0.b32.cont [6/16] 0.0, 128
    %6636 = vxpose.xlu0.b32.cont [7/16] 0.0, 128
    %6637 = vxpose.xlu0.b32.cont [8/16] 0.0, 128
    %6638 = vxpose.xlu0.b32.cont [9/16] 0.0, 128
    %6639 = vxpose.xlu0.b32.cont [10/16] 0.0, 128
    %6640 = vxpose.xlu0.b32.cont [11/16] 0.0, 128
    %6641 = vxpose.xlu0.b32.cont [12/16] 0.0, 128
    %6642 = vxpose.xlu0.b32.cont [13/16] 0.0, 128
    %6643 = vxpose.xlu0.b32.cont [14/16] 0.0, 128
    %6644 = vxpose.xlu0.b32.cont [15/16] 0.0, 128
    %6645 = vxpose.xlu0.b32.end [16/16] 0.0, 128
    %v6646 = vpop.trf.xlu0
    %v6647 = vpop.trf.xlu0
    %v6648 = vpop.trf.xlu0
    %v6649 = vpop.trf.xlu0
    %v6650 = vpop.trf.xlu0
    %v6651 = vpop.trf.xlu0
    %v6652 = vpop.trf.xlu0
    %v6653 = vpop.trf.xlu0
    %v6654 = vpop.trf.xlu0
    %v6655 = vpop.trf.xlu0
    %v6656 = vpop.trf.xlu0
    %v6657 = vpop.trf.xlu0
    %v6658 = vpop.trf.xlu0
    %v6659 = vpop.trf.xlu0
    %v6660 = vpop.trf.xlu0
    %v6661 = vpop.trf.xlu0
    %6662 = vxpose.xlu0.b32.start [1/16] %v6169, 128
    %6663 = vxpose.xlu0.b32.cont [2/16] 0.0, 128
    %6664 = vxpose.xlu0.b32.cont [3/16] 0.0, 128
    %6665 = vxpose.xlu0.b32.cont [4/16] 0.0, 128
    %6666 = vxpose.xlu0.b32.cont [5/16] 0.0, 128
    %6667 = vxpose.xlu0.b32.cont [6/16] 0.0, 128
    %6668 = vxpose.xlu0.b32.cont [7/16] 0.0, 128
    %6669 = vxpose.xlu0.b32.cont [8/16] 0.0, 128
    %6670 = vxpose.xlu0.b32.cont [9/16] 0.0, 128
    %6671 = vxpose.xlu0.b32.cont [10/16] 0.0, 128
    %6672 = vxpose.xlu0.b32.cont [11/16] 0.0, 128
    %6673 = vxpose.xlu0.b32.cont [12/16] 0.0, 128
    %6674 = vxpose.xlu0.b32.cont [13/16] 0.0, 128
    %6675 = vxpose.xlu0.b32.cont [14/16] 0.0, 128
    %6676 = vxpose.xlu0.b32.cont [15/16] 0.0, 128
    %6677 = vxpose.xlu0.b32.end [16/16] 0.0, 128
    %v6678 = vpop.trf.xlu0
    %v6679 = vpop.trf.xlu0
    %v6680 = vpop.trf.xlu0
    %v6681 = vpop.trf.xlu0
    %v6682 = vpop.trf.xlu0
    %v6683 = vpop.trf.xlu0
    %v6684 = vpop.trf.xlu0
    %v6685 = vpop.trf.xlu0
    %v6686 = vpop.trf.xlu0
    %v6687 = vpop.trf.xlu0
    %v6688 = vpop.trf.xlu0
    %v6689 = vpop.trf.xlu0
    %v6690 = vpop.trf.xlu0
    %v6691 = vpop.trf.xlu0
    %v6692 = vpop.trf.xlu0
    %v6693 = vpop.trf.xlu0
    %6694 = vxpose.xlu0.b32.start [1/16] %v6173, 128
    %6695 = vxpose.xlu0.b32.cont [2/16] 0.0, 128
    %6696 = vxpose.xlu0.b32.cont [3/16] 0.0, 128
    %6697 = vxpose.xlu0.b32.cont [4/16] 0.0, 128
    %6698 = vxpose.xlu0.b32.cont [5/16] 0.0, 128
    %6699 = vxpose.xlu0.b32.cont [6/16] 0.0, 128
    %6700 = vxpose.xlu0.b32.cont [7/16] 0.0, 128
    %6701 = vxpose.xlu0.b32.cont [8/16] 0.0, 128
    %6702 = vxpose.xlu0.b32.cont [9/16] 0.0, 128
    %6703 = vxpose.xlu0.b32.cont [10/16] 0.0, 128
    %6704 = vxpose.xlu0.b32.cont [11/16] 0.0, 128
    %6705 = vxpose.xlu0.b32.cont [12/16] 0.0, 128
    %6706 = vxpose.xlu0.b32.cont [13/16] 0.0, 128
    %6707 = vxpose.xlu0.b32.cont [14/16] 0.0, 128
    %6708 = vxpose.xlu0.b32.cont [15/16] 0.0, 128
    %6709 = vxpose.xlu0.b32.end [16/16] 0.0, 128
    %v6710 = vpop.trf.xlu0
    %v6711 = vpop.trf.xlu0
    %v6712 = vpop.trf.xlu0
    %v6713 = vpop.trf.xlu0
    %v6714 = vpop.trf.xlu0
    %v6715 = vpop.trf.xlu0
    %v6716 = vpop.trf.xlu0
    %v6717 = vpop.trf.xlu0
    %v6718 = vpop.trf.xlu0
    %v6719 = vpop.trf.xlu0
    %v6720 = vpop.trf.xlu0
    %v6721 = vpop.trf.xlu0
    %v6722 = vpop.trf.xlu0
    %v6723 = vpop.trf.xlu0
    %v6724 = vpop.trf.xlu0
    %v6725 = vpop.trf.xlu0
    %v6726 = vcombine.low %v6486, %v6550
    %v6727 = vcombine.high %v6486, %v6550
    %v6729 = vunpack.c.l.s4 1983009808
    %v6730 = vunpack.c.0.s8 %v6729
    %v6731 = vlaneseq
    %v6732 = vshrl.u32 %v6731, 7
    %v6733 = vsub.s32 %v6730, %v6732
    %v6734 = vrot.slane %v6726, %v6733
    %v6736 = vunpack.c.l.s4 1983009808
    %v6737 = vunpack.c.0.s8 %v6736
    %v6738 = vlaneseq
    %v6739 = vshrl.u32 %v6738, 7
    %v6740 = vsub.s32 %v6737, %v6739
    %v6741 = vrot.slane %v6727, %v6740
    %v6742 = vcombine.low %v6518, %v6582
    %v6743 = vcombine.high %v6518, %v6582
    %v6745 = vunpack.c.l.s4 1983009808
    %v6746 = vunpack.c.0.s8 %v6745
    %v6747 = vlaneseq
    %v6748 = vshrl.u32 %v6747, 7
    %v6749 = vsub.s32 %v6746, %v6748
    %v6750 = vrot.slane %v6742, %v6749
    %v6752 = vunpack.c.l.s4 1983009808
    %v6753 = vunpack.c.0.s8 %v6752
    %v6754 = vlaneseq
    %v6755 = vshrl.u32 %v6754, 7
    %v6756 = vsub.s32 %v6753, %v6755
    %v6757 = vrot.slane %v6743, %v6756
    %v6758 = vcombine.low %v6614, %v6678
    %v6759 = vcombine.high %v6614, %v6678
    %v6761 = vunpack.c.l.s4 1983009808
    %v6762 = vunpack.c.0.s8 %v6761
    %v6763 = vlaneseq
    %v6764 = vshrl.u32 %v6763, 7
    %v6765 = vsub.s32 %v6762, %v6764
    %v6766 = vrot.slane %v6758, %v6765
    %v6768 = vunpack.c.l.s4 1983009808
    %v6769 = vunpack.c.0.s8 %v6768
    %v6770 = vlaneseq
    %v6771 = vshrl.u32 %v6770, 7
    %v6772 = vsub.s32 %v6769, %v6771
    %v6773 = vrot.slane %v6759, %v6772
    %v6774 = vcombine.low %v6646, %v6710
    %v6775 = vcombine.high %v6646, %v6710
    %v6777 = vunpack.c.l.s4 1983009808
    %v6778 = vunpack.c.0.s8 %v6777
    %v6779 = vlaneseq
    %v6780 = vshrl.u32 %v6779, 7
    %v6781 = vsub.s32 %v6778, %v6780
    %v6782 = vrot.slane %v6774, %v6781
    %v6784 = vunpack.c.l.s4 1983009808
    %v6785 = vunpack.c.0.s8 %v6784
    %v6786 = vlaneseq
    %v6787 = vshrl.u32 %v6786, 7
    %v6788 = vsub.s32 %v6785, %v6787
    %v6789 = vrot.slane %v6775, %v6788
    %v6790 = vcombine.low %v6734, %v6750
    %v6791 = vcombine.high %v6734, %v6750
    %v6793 = vunpack.c.l.s4 1934713408
    %v6794 = vunpack.c.0.s8 %v6793
    %v6795 = vlaneseq
    %v6796 = vshrl.u32 %v6795, 7
    %v6797 = vsub.s32 %v6794, %v6796
    %v6798 = vrot.slane %v6790, %v6797
    %v6800 = vunpack.c.l.s4 1934713408
    %v6801 = vunpack.c.0.s8 %v6800
    %v6802 = vlaneseq
    %v6803 = vshrl.u32 %v6802, 7
    %v6804 = vsub.s32 %v6801, %v6803
    %v6805 = vrot.slane %v6791, %v6804
    %v6806 = vcombine.low %v6741, %v6757
    %v6807 = vcombine.high %v6741, %v6757
    %v6809 = vunpack.c.l.s4 1934713408
    %v6810 = vunpack.c.0.s8 %v6809
    %v6811 = vlaneseq
    %v6812 = vshrl.u32 %v6811, 7
    %v6813 = vsub.s32 %v6810, %v6812
    %v6814 = vrot.slane %v6806, %v6813
    %v6816 = vunpack.c.l.s4 1934713408
    %v6817 = vunpack.c.0.s8 %v6816
    %v6818 = vlaneseq
    %v6819 = vshrl.u32 %v6818, 7
    %v6820 = vsub.s32 %v6817, %v6819
    %v6821 = vrot.slane %v6807, %v6820
    %v6822 = vcombine.low %v6766, %v6782
    %v6823 = vcombine.high %v6766, %v6782
    %v6825 = vunpack.c.l.s4 1934713408
    %v6826 = vunpack.c.0.s8 %v6825
    %v6827 = vlaneseq
    %v6828 = vshrl.u32 %v6827, 7
    %v6829 = vsub.s32 %v6826, %v6828
    %v6830 = vrot.slane %v6822, %v6829
    %v6832 = vunpack.c.l.s4 1934713408
    %v6833 = vunpack.c.0.s8 %v6832
    %v6834 = vlaneseq
    %v6835 = vshrl.u32 %v6834, 7
    %v6836 = vsub.s32 %v6833, %v6835
    %v6837 = vrot.slane %v6823, %v6836
    %v6838 = vcombine.low %v6773, %v6789
    %v6839 = vcombine.high %v6773, %v6789
    %v6841 = vunpack.c.l.s4 1934713408
    %v6842 = vunpack.c.0.s8 %v6841
    %v6843 = vlaneseq
    %v6844 = vshrl.u32 %v6843, 7
    %v6845 = vsub.s32 %v6842, %v6844
    %v6846 = vrot.slane %v6838, %v6845
    %v6848 = vunpack.c.l.s4 1934713408
    %v6849 = vunpack.c.0.s8 %v6848
    %v6850 = vlaneseq
    %v6851 = vshrl.u32 %v6850, 7
    %v6852 = vsub.s32 %v6849, %v6851
    %v6853 = vrot.slane %v6839, %v6852
    %v6854 = vcombine.low %v6798, %v6830
    %v6855 = vcombine.high %v6798, %v6830
    %v6856 = vcombine.low %v6805, %v6837
    %v6857 = vcombine.high %v6805, %v6837
    %v6858 = vcombine.low %v6814, %v6846
    %v6859 = vcombine.high %v6814, %v6846
    %v6860 = vcombine.low %v6821, %v6853
    %v6861 = vcombine.high %v6821, %v6853
    %6862 = vxpose.xlu0.b32.start [1/16] %v6854, 128
    %6863 = vxpose.xlu0.b32.cont [2/16] 0.0, 128
    %6864 = vxpose.xlu0.b32.cont [3/16] 0.0, 128
    %6865 = vxpose.xlu0.b32.cont [4/16] 0.0, 128
    %6866 = vxpose.xlu0.b32.cont [5/16] 0.0, 128
    %6867 = vxpose.xlu0.b32.cont [6/16] 0.0, 128
    %6868 = vxpose.xlu0.b32.cont [7/16] 0.0, 128
    %6869 = vxpose.xlu0.b32.cont [8/16] 0.0, 128
    %6870 = vxpose.xlu0.b32.cont [9/16] 0.0, 128
    %6871 = vxpose.xlu0.b32.cont [10/16] 0.0, 128
    %6872 = vxpose.xlu0.b32.cont [11/16] 0.0, 128
    %6873 = vxpose.xlu0.b32.cont [12/16] 0.0, 128
    %6874 = vxpose.xlu0.b32.cont [13/16] 0.0, 128
    %6875 = vxpose.xlu0.b32.cont [14/16] 0.0, 128
    %6876 = vxpose.xlu0.b32.cont [15/16] 0.0, 128
    %6877 = vxpose.xlu0.b32.end [16/16] 0.0, 128
    %v6878 = vpop.trf.xlu0
    %v6879 = vpop.trf.xlu0
    %v6880 = vpop.trf.xlu0
    %v6881 = vpop.trf.xlu0
    %v6882 = vpop.trf.xlu0
    %v6883 = vpop.trf.xlu0
    %v6884 = vpop.trf.xlu0
    %v6885 = vpop.trf.xlu0
    %v6886 = vpop.trf.xlu0
    %v6887 = vpop.trf.xlu0
    %v6888 = vpop.trf.xlu0
    %v6889 = vpop.trf.xlu0
    %v6890 = vpop.trf.xlu0
    %v6891 = vpop.trf.xlu0
    %v6892 = vpop.trf.xlu0
    %v6893 = vpop.trf.xlu0
    %6894 = vxpose.xlu0.b32.start [1/16] %v6855, 128
    %6895 = vxpose.xlu0.b32.cont [2/16] 0.0, 128
    %6896 = vxpose.xlu0.b32.cont [3/16] 0.0, 128
    %6897 = vxpose.xlu0.b32.cont [4/16] 0.0, 128
    %6898 = vxpose.xlu0.b32.cont [5/16] 0.0, 128
    %6899 = vxpose.xlu0.b32.cont [6/16] 0.0, 128
    %6900 = vxpose.xlu0.b32.cont [7/16] 0.0, 128
    %6901 = vxpose.xlu0.b32.cont [8/16] 0.0, 128
    %6902 = vxpose.xlu0.b32.cont [9/16] 0.0, 128
    %6903 = vxpose.xlu0.b32.cont [10/16] 0.0, 128
    %6904 = vxpose.xlu0.b32.cont [11/16] 0.0, 128
    %6905 = vxpose.xlu0.b32.cont [12/16] 0.0, 128
    %6906 = vxpose.xlu0.b32.cont [13/16] 0.0, 128
    %6907 = vxpose.xlu0.b32.cont [14/16] 0.0, 128
    %6908 = vxpose.xlu0.b32.cont [15/16] 0.0, 128
    %6909 = vxpose.xlu0.b32.end [16/16] 0.0, 128
    %v6910 = vpop.trf.xlu0
    %v6911 = vpop.trf.xlu0
    %v6912 = vpop.trf.xlu0
    %v6913 = vpop.trf.xlu0
    %v6914 = vpop.trf.xlu0
    %v6915 = vpop.trf.xlu0
    %v6916 = vpop.trf.xlu0
    %v6917 = vpop.trf.xlu0
    %v6918 = vpop.trf.xlu0
    %v6919 = vpop.trf.xlu0
    %v6920 = vpop.trf.xlu0
    %v6921 = vpop.trf.xlu0
    %v6922 = vpop.trf.xlu0
    %v6923 = vpop.trf.xlu0
    %v6924 = vpop.trf.xlu0
    %v6925 = vpop.trf.xlu0
    %6926 = vxpose.xlu0.b32.start [1/16] %v6856, 128
    %6927 = vxpose.xlu0.b32.cont [2/16] 0.0, 128
    %6928 = vxpose.xlu0.b32.cont [3/16] 0.0, 128
    %6929 = vxpose.xlu0.b32.cont [4/16] 0.0, 128
    %6930 = vxpose.xlu0.b32.cont [5/16] 0.0, 128
    %6931 = vxpose.xlu0.b32.cont [6/16] 0.0, 128
    %6932 = vxpose.xlu0.b32.cont [7/16] 0.0, 128
    %6933 = vxpose.xlu0.b32.cont [8/16] 0.0, 128
    %6934 = vxpose.xlu0.b32.cont [9/16] 0.0, 128
    %6935 = vxpose.xlu0.b32.cont [10/16] 0.0, 128
    %6936 = vxpose.xlu0.b32.cont [11/16] 0.0, 128
    %6937 = vxpose.xlu0.b32.cont [12/16] 0.0, 128
    %6938 = vxpose.xlu0.b32.cont [13/16] 0.0, 128
    %6939 = vxpose.xlu0.b32.cont [14/16] 0.0, 128
    %6940 = vxpose.xlu0.b32.cont [15/16] 0.0, 128
    %6941 = vxpose.xlu0.b32.end [16/16] 0.0, 128
    %v6942 = vpop.trf.xlu0
    %v6943 = vpop.trf.xlu0
    %v6944 = vpop.trf.xlu0
    %v6945 = vpop.trf.xlu0
    %v6946 = vpop.trf.xlu0
    %v6947 = vpop.trf.xlu0
    %v6948 = vpop.trf.xlu0
    %v6949 = vpop.trf.xlu0
    %v6950 = vpop.trf.xlu0
    %v6951 = vpop.trf.xlu0
    %v6952 = vpop.trf.xlu0
    %v6953 = vpop.trf.xlu0
    %v6954 = vpop.trf.xlu0
    %v6955 = vpop.trf.xlu0
    %v6956 = vpop.trf.xlu0
    %v6957 = vpop.trf.xlu0
    %6958 = vxpose.xlu0.b32.start [1/16] %v6857, 128
    %6959 = vxpose.xlu0.b32.cont [2/16] 0.0, 128
    %6960 = vxpose.xlu0.b32.cont [3/16] 0.0, 128
    %6961 = vxpose.xlu0.b32.cont [4/16] 0.0, 128
    %6962 = vxpose.xlu0.b32.cont [5/16] 0.0, 128
    %6963 = vxpose.xlu0.b32.cont [6/16] 0.0, 128
    %6964 = vxpose.xlu0.b32.cont [7/16] 0.0, 128
    %6965 = vxpose.xlu0.b32.cont [8/16] 0.0, 128
    %6966 = vxpose.xlu0.b32.cont [9/16] 0.0, 128
    %6967 = vxpose.xlu0.b32.cont [10/16] 0.0, 128
    %6968 = vxpose.xlu0.b32.cont [11/16] 0.0, 128
    %6969 = vxpose.xlu0.b32.cont [12/16] 0.0, 128
    %6970 = vxpose.xlu0.b32.cont [13/16] 0.0, 128
    %6971 = vxpose.xlu0.b32.cont [14/16] 0.0, 128
    %6972 = vxpose.xlu0.b32.cont [15/16] 0.0, 128
    %6973 = vxpose.xlu0.b32.end [16/16] 0.0, 128
    %v6974 = vpop.trf.xlu0
    %v6975 = vpop.trf.xlu0
    %v6976 = vpop.trf.xlu0
    %v6977 = vpop.trf.xlu0
    %v6978 = vpop.trf.xlu0
    %v6979 = vpop.trf.xlu0
    %v6980 = vpop.trf.xlu0
    %v6981 = vpop.trf.xlu0
    %v6982 = vpop.trf.xlu0
    %v6983 = vpop.trf.xlu0
    %v6984 = vpop.trf.xlu0
    %v6985 = vpop.trf.xlu0
    %v6986 = vpop.trf.xlu0
    %v6987 = vpop.trf.xlu0
    %v6988 = vpop.trf.xlu0
    %v6989 = vpop.trf.xlu0
    %6990 = vxpose.xlu0.b32.start [1/16] %v6858, 128
    %6991 = vxpose.xlu0.b32.cont [2/16] 0.0, 128
    %6992 = vxpose.xlu0.b32.cont [3/16] 0.0, 128
    %6993 = vxpose.xlu0.b32.cont [4/16] 0.0, 128
    %6994 = vxpose.xlu0.b32.cont [5/16] 0.0, 128
    %6995 = vxpose.xlu0.b32.cont [6/16] 0.0, 128
    %6996 = vxpose.xlu0.b32.cont [7/16] 0.0, 128
    %6997 = vxpose.xlu0.b32.cont [8/16] 0.0, 128
    %6998 = vxpose.xlu0.b32.cont [9/16] 0.0, 128
    %6999 = vxpose.xlu0.b32.cont [10/16] 0.0, 128
    %7000 = vxpose.xlu0.b32.cont [11/16] 0.0, 128
    %7001 = vxpose.xlu0.b32.cont [12/16] 0.0, 128
    %7002 = vxpose.xlu0.b32.cont [13/16] 0.0, 128
    %7003 = vxpose.xlu0.b32.cont [14/16] 0.0, 128
    %7004 = vxpose.xlu0.b32.cont [15/16] 0.0, 128
    %7005 = vxpose.xlu0.b32.end [16/16] 0.0, 128
    %v7006 = vpop.trf.xlu0
    %v7007 = vpop.trf.xlu0
    %v7008 = vpop.trf.xlu0
    %v7009 = vpop.trf.xlu0
    %v7010 = vpop.trf.xlu0
    %v7011 = vpop.trf.xlu0
    %v7012 = vpop.trf.xlu0
    %v7013 = vpop.trf.xlu0
    %v7014 = vpop.trf.xlu0
    %v7015 = vpop.trf.xlu0
    %v7016 = vpop.trf.xlu0
    %v7017 = vpop.trf.xlu0
    %v7018 = vpop.trf.xlu0
    %v7019 = vpop.trf.xlu0
    %v7020 = vpop.trf.xlu0
    %v7021 = vpop.trf.xlu0
    %7022 = vxpose.xlu0.b32.start [1/16] %v6859, 128
    %7023 = vxpose.xlu0.b32.cont [2/16] 0.0, 128
    %7024 = vxpose.xlu0.b32.cont [3/16] 0.0, 128
    %7025 = vxpose.xlu0.b32.cont [4/16] 0.0, 128
    %7026 = vxpose.xlu0.b32.cont [5/16] 0.0, 128
    %7027 = vxpose.xlu0.b32.cont [6/16] 0.0, 128
    %7028 = vxpose.xlu0.b32.cont [7/16] 0.0, 128
    %7029 = vxpose.xlu0.b32.cont [8/16] 0.0, 128
    %7030 = vxpose.xlu0.b32.cont [9/16] 0.0, 128
    %7031 = vxpose.xlu0.b32.cont [10/16] 0.0, 128
    %7032 = vxpose.xlu0.b32.cont [11/16] 0.0, 128
    %7033 = vxpose.xlu0.b32.cont [12/16] 0.0, 128
    %7034 = vxpose.xlu0.b32.cont [13/16] 0.0, 128
    %7035 = vxpose.xlu0.b32.cont [14/16] 0.0, 128
    %7036 = vxpose.xlu0.b32.cont [15/16] 0.0, 128
    %7037 = vxpose.xlu0.b32.end [16/16] 0.0, 128
    %v7038 = vpop.trf.xlu0
    %v7039 = vpop.trf.xlu0
    %v7040 = vpop.trf.xlu0
    %v7041 = vpop.trf.xlu0
    %v7042 = vpop.trf.xlu0
    %v7043 = vpop.trf.xlu0
    %v7044 = vpop.trf.xlu0
    %v7045 = vpop.trf.xlu0
    %v7046 = vpop.trf.xlu0
    %v7047 = vpop.trf.xlu0
    %v7048 = vpop.trf.xlu0
    %v7049 = vpop.trf.xlu0
    %v7050 = vpop.trf.xlu0
    %v7051 = vpop.trf.xlu0
    %v7052 = vpop.trf.xlu0
    %v7053 = vpop.trf.xlu0
    %7054 = vxpose.xlu0.b32.start [1/16] %v6860, 128
    %7055 = vxpose.xlu0.b32.cont [2/16] 0.0, 128
    %7056 = vxpose.xlu0.b32.cont [3/16] 0.0, 128
    %7057 = vxpose.xlu0.b32.cont [4/16] 0.0, 128
    %7058 = vxpose.xlu0.b32.cont [5/16] 0.0, 128
    %7059 = vxpose.xlu0.b32.cont [6/16] 0.0, 128
    %7060 = vxpose.xlu0.b32.cont [7/16] 0.0, 128
    %7061 = vxpose.xlu0.b32.cont [8/16] 0.0, 128
    %7062 = vxpose.xlu0.b32.cont [9/16] 0.0, 128
    %7063 = vxpose.xlu0.b32.cont [10/16] 0.0, 128
    %7064 = vxpose.xlu0.b32.cont [11/16] 0.0, 128
    %7065 = vxpose.xlu0.b32.cont [12/16] 0.0, 128
    %7066 = vxpose.xlu0.b32.cont [13/16] 0.0, 128
    %7067 = vxpose.xlu0.b32.cont [14/16] 0.0, 128
    %7068 = vxpose.xlu0.b32.cont [15/16] 0.0, 128
    %7069 = vxpose.xlu0.b32.end [16/16] 0.0, 128
    %v7070 = vpop.trf.xlu0
    %v7071 = vpop.trf.xlu0
    %v7072 = vpop.trf.xlu0
    %v7073 = vpop.trf.xlu0
    %v7074 = vpop.trf.xlu0
    %v7075 = vpop.trf.xlu0
    %v7076 = vpop.trf.xlu0
    %v7077 = vpop.trf.xlu0
    %v7078 = vpop.trf.xlu0
    %v7079 = vpop.trf.xlu0
    %v7080 = vpop.trf.xlu0
    %v7081 = vpop.trf.xlu0
    %v7082 = vpop.trf.xlu0
    %v7083 = vpop.trf.xlu0
    %v7084 = vpop.trf.xlu0
    %v7085 = vpop.trf.xlu0
    %7086 = vxpose.xlu0.b32.start [1/16] %v6861, 128
    %7087 = vxpose.xlu0.b32.cont [2/16] 0.0, 128
    %7088 = vxpose.xlu0.b32.cont [3/16] 0.0, 128
    %7089 = vxpose.xlu0.b32.cont [4/16] 0.0, 128
    %7090 = vxpose.xlu0.b32.cont [5/16] 0.0, 128
    %7091 = vxpose.xlu0.b32.cont [6/16] 0.0, 128
    %7092 = vxpose.xlu0.b32.cont [7/16] 0.0, 128
    %7093 = vxpose.xlu0.b32.cont [8/16] 0.0, 128
    %7094 = vxpose.xlu0.b32.cont [9/16] 0.0, 128
    %7095 = vxpose.xlu0.b32.cont [10/16] 0.0, 128
    %7096 = vxpose.xlu0.b32.cont [11/16] 0.0, 128
    %7097 = vxpose.xlu0.b32.cont [12/16] 0.0, 128
    %7098 = vxpose.xlu0.b32.cont [13/16] 0.0, 128
    %7099 = vxpose.xlu0.b32.cont [14/16] 0.0, 128
    %7100 = vxpose.xlu0.b32.cont [15/16] 0.0, 128
    %7101 = vxpose.xlu0.b32.end [16/16] 0.0, 128
    %v7102 = vpop.trf.xlu0
    %v7103 = vpop.trf.xlu0
    %v7104 = vpop.trf.xlu0
    %v7105 = vpop.trf.xlu0
    %v7106 = vpop.trf.xlu0
    %v7107 = vpop.trf.xlu0
    %v7108 = vpop.trf.xlu0
    %v7109 = vpop.trf.xlu0
    %v7110 = vpop.trf.xlu0
    %v7111 = vpop.trf.xlu0
    %v7112 = vpop.trf.xlu0
    %v7113 = vpop.trf.xlu0
    %v7114 = vpop.trf.xlu0
    %v7115 = vpop.trf.xlu0
    %v7116 = vpop.trf.xlu0
    %v7117 = vpop.trf.xlu0
    %v7118 = vcombine.low %v6878, %v6942
    %v7120 = vunpack.c.l.s4 1983009808
    %v7121 = vunpack.c.0.s8 %v7120
    %v7122 = vlaneseq
    %v7123 = vshrl.u32 %v7122, 7
    %v7124 = vsub.s32 %v7121, %v7123
    %v7125 = vrot.slane %v7118, %v7124
    %v7126 = vcombine.low %v6910, %v6974
    %v7128 = vunpack.c.l.s4 1983009808
    %v7129 = vunpack.c.0.s8 %v7128
    %v7130 = vlaneseq
    %v7131 = vshrl.u32 %v7130, 7
    %v7132 = vsub.s32 %v7129, %v7131
    %v7133 = vrot.slane %v7126, %v7132
    %v7134 = vcombine.low %v7006, %v7070
    %v7136 = vunpack.c.l.s4 1983009808
    %v7137 = vunpack.c.0.s8 %v7136
    %v7138 = vlaneseq
    %v7139 = vshrl.u32 %v7138, 7
    %v7140 = vsub.s32 %v7137, %v7139
    %v7141 = vrot.slane %v7134, %v7140
    %v7142 = vcombine.low %v7038, %v7102
    %v7144 = vunpack.c.l.s4 1983009808
    %v7145 = vunpack.c.0.s8 %v7144
    %v7146 = vlaneseq
    %v7147 = vshrl.u32 %v7146, 7
    %v7148 = vsub.s32 %v7145, %v7147
    %v7149 = vrot.slane %v7142, %v7148
    %v7150 = vcombine.low %v7125, %v7133
    %v7151 = vcombine.high %v7125, %v7133
    %v7153 = vunpack.c.l.s4 1934713408
    %v7154 = vunpack.c.0.s8 %v7153
    %v7155 = vlaneseq
    %v7156 = vshrl.u32 %v7155, 7
    %v7157 = vsub.s32 %v7154, %v7156
    %v7158 = vrot.slane %v7150, %v7157
    %v7160 = vunpack.c.l.s4 1934713408
    %v7161 = vunpack.c.0.s8 %v7160
    %v7162 = vlaneseq
    %v7163 = vshrl.u32 %v7162, 7
    %v7164 = vsub.s32 %v7161, %v7163
    %v7165 = vrot.slane %v7151, %v7164
    %v7166 = vcombine.low %v7141, %v7149
    %v7167 = vcombine.high %v7141, %v7149
    %v7169 = vunpack.c.l.s4 1934713408
    %v7170 = vunpack.c.0.s8 %v7169
    %v7171 = vlaneseq
    %v7172 = vshrl.u32 %v7171, 7
    %v7173 = vsub.s32 %v7170, %v7172
    %v7174 = vrot.slane %v7166, %v7173
    %v7176 = vunpack.c.l.s4 1934713408
    %v7177 = vunpack.c.0.s8 %v7176
    %v7178 = vlaneseq
    %v7179 = vshrl.u32 %v7178, 7
    %v7180 = vsub.s32 %v7177, %v7179
    %v7181 = vrot.slane %v7167, %v7180
    %v7182 = vcombine.low %v7158, %v7174
    %v7183 = vcombine.high %v7158, %v7174
    %v7184 = vcombine.low %v7165, %v7181
    %v7185 = vcombine.high %v7165, %v7181
    %v7187 = vsel %vm1403, %v6466, 0
    %7189 = vmatprep.subr.mxu0 0.0
    %7190 = vmatpush1.msra.mxu0 0.0
    %7191 = vmatprep.subr.mxu0 0.0
    %7192 = vmatpush1.msra.mxu0 0.0
    %7193 = vmatprep.subr.mxu0 0.0
    %7194 = vmatpush1.msra.mxu0 0.0
    %7195 = vmatprep.subr.mxu0 0.0
    %7196 = vmatpush1.msra.mxu0 0.0
    %7197 = vmatprep.subr.mxu0 0.0
    %7198 = vmatpush1.msra.mxu0 0.0
    %7199 = vmatprep.subr.mxu0 0.0
    %7200 = vmatpush1.msra.mxu0 0.0
    %7201 = vmatprep.subr.mxu0 0.0
    %7202 = vmatpush1.msra.mxu0 0.0
    %7203 = vmatprep.subr.mxu0 0.0
    %7204 = vmatpush1.msra.mxu0 0.0
    %7205 = vmatprep.subr.mxu0 0.0
    %7206 = vmatpush1.msra.mxu0 0.0
    %7207 = vmatprep.subr.mxu0 0.0
    %7208 = vmatpush1.msra.mxu0 0.0
    %7209 = vmatprep.subr.mxu0 0.0
    %7210 = vmatpush1.msra.mxu0 0.0
    %7211 = vmatprep.subr.mxu0 0.0
    %7212 = vmatpush1.msra.mxu0 0.0
    %7213 = vmatprep.subr.mxu0 0.0
    %7214 = vmatpush1.msra.mxu0 0.0
    %7215 = vmatprep.subr.mxu0 0.0
    %7216 = vmatpush1.msra.mxu0 0.0
    %7217 = vmatprep.subr.mxu0 0.0
    %7218 = vmatpush1.msra.mxu0 0.0
    %7219 = vmatprep.subr.mxu0 0.0
    %7220 = vmatpush1.msra.mxu0 %v7182
    %7221 = vmatprep.subr.mxu0 0.0
    %7222 = vmatpush2.msra.mxu0 0.0
    %7223 = vmatprep.subr.mxu0 0.0
    %7224 = vmatpush2.msra.mxu0 0.0
    %7225 = vmatprep.subr.mxu0 0.0
    %7226 = vmatpush2.msra.mxu0 0.0
    %7227 = vmatprep.subr.mxu0 0.0
    %7228 = vmatpush2.msra.mxu0 0.0
    %7229 = vmatprep.subr.mxu0 0.0
    %7230 = vmatpush2.msra.mxu0 0.0
    %7231 = vmatprep.subr.mxu0 0.0
    %7232 = vmatpush2.msra.mxu0 0.0
    %7233 = vmatprep.subr.mxu0 0.0
    %7234 = vmatpush2.msra.mxu0 0.0
    %7235 = vmatprep.subr.mxu0 0.0
    %7236 = vmatpush2.msra.mxu0 0.0
    %7237 = vmatprep.subr.mxu0 0.0
    %7238 = vmatpush2.msra.mxu0 0.0
    %7239 = vmatprep.subr.mxu0 0.0
    %7240 = vmatpush2.msra.mxu0 0.0
    %7241 = vmatprep.subr.mxu0 0.0
    %7242 = vmatpush2.msra.mxu0 0.0
    %7243 = vmatprep.subr.mxu0 0.0
    %7244 = vmatpush2.msra.mxu0 0.0
    %7245 = vmatprep.subr.mxu0 0.0
    %7246 = vmatpush2.msra.mxu0 0.0
    %7247 = vmatprep.subr.mxu0 0.0
    %7248 = vmatpush2.msra.mxu0 0.0
    %7249 = vmatprep.subr.mxu0 0.0
    %7250 = vmatpush2.msra.mxu0 0.0
    %7251 = vmatprep.subr.mxu0 0.0
    %7252 = vmatpush2.msra.mxu0 0.0
    %7253 = vmatprep.mubr.f32.mxu0 0.0
    %7254 = vmatmul.mubr.f32.gmra.mxu0 %v7187
    %v7255 = vpop.f32.mrf.mxu0
    %v7256 = vadd.f32 0.0, %v7255
    %v7257 = vpop.f32.mrf.mxu0
    %7258 = vdwg.mxu0
    %v7260 = vsel %vm1403, %v6467, 0
    %7262 = vmatprep.subr.mxu0 0.0
    %7263 = vmatpush1.msra.mxu0 0.0
    %7264 = vmatprep.subr.mxu0 0.0
    %7265 = vmatpush1.msra.mxu0 0.0
    %7266 = vmatprep.subr.mxu0 0.0
    %7267 = vmatpush1.msra.mxu0 0.0
    %7268 = vmatprep.subr.mxu0 0.0
    %7269 = vmatpush1.msra.mxu0 0.0
    %7270 = vmatprep.subr.mxu0 0.0
    %7271 = vmatpush1.msra.mxu0 0.0
    %7272 = vmatprep.subr.mxu0 0.0
    %7273 = vmatpush1.msra.mxu0 0.0
    %7274 = vmatprep.subr.mxu0 0.0
    %7275 = vmatpush1.msra.mxu0 0.0
    %7276 = vmatprep.subr.mxu0 0.0
    %7277 = vmatpush1.msra.mxu0 0.0
    %7278 = vmatprep.subr.mxu0 0.0
    %7279 = vmatpush1.msra.mxu0 0.0
    %7280 = vmatprep.subr.mxu0 0.0
    %7281 = vmatpush1.msra.mxu0 0.0
    %7282 = vmatprep.subr.mxu0 0.0
    %7283 = vmatpush1.msra.mxu0 0.0
    %7284 = vmatprep.subr.mxu0 0.0
    %7285 = vmatpush1.msra.mxu0 0.0
    %7286 = vmatprep.subr.mxu0 0.0
    %7287 = vmatpush1.msra.mxu0 0.0
    %7288 = vmatprep.subr.mxu0 0.0
    %7289 = vmatpush1.msra.mxu0 0.0
    %7290 = vmatprep.subr.mxu0 0.0
    %7291 = vmatpush1.msra.mxu0 0.0
    %7292 = vmatprep.subr.mxu0 0.0
    %7293 = vmatpush1.msra.mxu0 %v7183
    %7294 = vmatprep.subr.mxu0 0.0
    %7295 = vmatpush2.msra.mxu0 0.0
    %7296 = vmatprep.subr.mxu0 0.0
    %7297 = vmatpush2.msra.mxu0 0.0
    %7298 = vmatprep.subr.mxu0 0.0
    %7299 = vmatpush2.msra.mxu0 0.0
    %7300 = vmatprep.subr.mxu0 0.0
    %7301 = vmatpush2.msra.mxu0 0.0
    %7302 = vmatprep.subr.mxu0 0.0
    %7303 = vmatpush2.msra.mxu0 0.0
    %7304 = vmatprep.subr.mxu0 0.0
    %7305 = vmatpush2.msra.mxu0 0.0
    %7306 = vmatprep.subr.mxu0 0.0
    %7307 = vmatpush2.msra.mxu0 0.0
    %7308 = vmatprep.subr.mxu0 0.0
    %7309 = vmatpush2.msra.mxu0 0.0
    %7310 = vmatprep.subr.mxu0 0.0
    %7311 = vmatpush2.msra.mxu0 0.0
    %7312 = vmatprep.subr.mxu0 0.0
    %7313 = vmatpush2.msra.mxu0 0.0
    %7314 = vmatprep.subr.mxu0 0.0
    %7315 = vmatpush2.msra.mxu0 0.0
    %7316 = vmatprep.subr.mxu0 0.0
    %7317 = vmatpush2.msra.mxu0 0.0
    %7318 = vmatprep.subr.mxu0 0.0
    %7319 = vmatpush2.msra.mxu0 0.0
    %7320 = vmatprep.subr.mxu0 0.0
    %7321 = vmatpush2.msra.mxu0 0.0
    %7322 = vmatprep.subr.mxu0 0.0
    %7323 = vmatpush2.msra.mxu0 0.0
    %7324 = vmatprep.subr.mxu0 0.0
    %7325 = vmatpush2.msra.mxu0 0.0
    %7326 = vmatprep.mubr.f32.mxu0 0.0
    %7327 = vmatmul.mubr.f32.gmra.mxu0 %v7260
    %v7328 = vpop.f32.mrf.mxu0
    %v7329 = vadd.f32 0.0, %v7328
    %v7330 = vpop.f32.mrf.mxu0
    %7331 = vdwg.mxu0
    %v7333 = vsel %vm1403, %v6468, 0
    %7335 = vmatprep.subr.mxu0 0.0
    %7336 = vmatpush1.msra.mxu0 0.0
    %7337 = vmatprep.subr.mxu0 0.0
    %7338 = vmatpush1.msra.mxu0 0.0
    %7339 = vmatprep.subr.mxu0 0.0
    %7340 = vmatpush1.msra.mxu0 0.0
    %7341 = vmatprep.subr.mxu0 0.0
    %7342 = vmatpush1.msra.mxu0 0.0
    %7343 = vmatprep.subr.mxu0 0.0
    %7344 = vmatpush1.msra.mxu0 0.0
    %7345 = vmatprep.subr.mxu0 0.0
    %7346 = vmatpush1.msra.mxu0 0.0
    %7347 = vmatprep.subr.mxu0 0.0
    %7348 = vmatpush1.msra.mxu0 0.0
    %7349 = vmatprep.subr.mxu0 0.0
    %7350 = vmatpush1.msra.mxu0 0.0
    %7351 = vmatprep.subr.mxu0 0.0
    %7352 = vmatpush1.msra.mxu0 0.0
    %7353 = vmatprep.subr.mxu0 0.0
    %7354 = vmatpush1.msra.mxu0 0.0
    %7355 = vmatprep.subr.mxu0 0.0
    %7356 = vmatpush1.msra.mxu0 0.0
    %7357 = vmatprep.subr.mxu0 0.0
    %7358 = vmatpush1.msra.mxu0 0.0
    %7359 = vmatprep.subr.mxu0 0.0
    %7360 = vmatpush1.msra.mxu0 0.0
    %7361 = vmatprep.subr.mxu0 0.0
    %7362 = vmatpush1.msra.mxu0 0.0
    %7363 = vmatprep.subr.mxu0 0.0
    %7364 = vmatpush1.msra.mxu0 0.0
    %7365 = vmatprep.subr.mxu0 0.0
    %7366 = vmatpush1.msra.mxu0 %v7184
    %7367 = vmatprep.subr.mxu0 0.0
    %7368 = vmatpush2.msra.mxu0 0.0
    %7369 = vmatprep.subr.mxu0 0.0
    %7370 = vmatpush2.msra.mxu0 0.0
    %7371 = vmatprep.subr.mxu0 0.0
    %7372 = vmatpush2.msra.mxu0 0.0
    %7373 = vmatprep.subr.mxu0 0.0
    %7374 = vmatpush2.msra.mxu0 0.0
    %7375 = vmatprep.subr.mxu0 0.0
    %7376 = vmatpush2.msra.mxu0 0.0
    %7377 = vmatprep.subr.mxu0 0.0
    %7378 = vmatpush2.msra.mxu0 0.0
    %7379 = vmatprep.subr.mxu0 0.0
    %7380 = vmatpush2.msra.mxu0 0.0
    %7381 = vmatprep.subr.mxu0 0.0
    %7382 = vmatpush2.msra.mxu0 0.0
    %7383 = vmatprep.subr.mxu0 0.0
    %7384 = vmatpush2.msra.mxu0 0.0
    %7385 = vmatprep.subr.mxu0 0.0
    %7386 = vmatpush2.msra.mxu0 0.0
    %7387 = vmatprep.subr.mxu0 0.0
    %7388 = vmatpush2.msra.mxu0 0.0
    %7389 = vmatprep.subr.mxu0 0.0
    %7390 = vmatpush2.msra.mxu0 0.0
    %7391 = vmatprep.subr.mxu0 0.0
    %7392 = vmatpush2.msra.mxu0 0.0
    %7393 = vmatprep.subr.mxu0 0.0
    %7394 = vmatpush2.msra.mxu0 0.0
    %7395 = vmatprep.subr.mxu0 0.0
    %7396 = vmatpush2.msra.mxu0 0.0
    %7397 = vmatprep.subr.mxu0 0.0
    %7398 = vmatpush2.msra.mxu0 0.0
    %7399 = vmatprep.mubr.f32.mxu0 0.0
    %7400 = vmatmul.mubr.f32.gmra.mxu0 %v7333
    %v7401 = vpop.f32.mrf.mxu0
    %v7402 = vadd.f32 0.0, %v7401
    %v7403 = vpop.f32.mrf.mxu0
    %7404 = vdwg.mxu0
    %v7406 = vsel %vm1403, %v6469, 0
    %7408 = vmatprep.subr.mxu0 0.0
    %7409 = vmatpush1.msra.mxu0 0.0
    %7410 = vmatprep.subr.mxu0 0.0
    %7411 = vmatpush1.msra.mxu0 0.0
    %7412 = vmatprep.subr.mxu0 0.0
    %7413 = vmatpush1.msra.mxu0 0.0
    %7414 = vmatprep.subr.mxu0 0.0
    %7415 = vmatpush1.msra.mxu0 0.0
    %7416 = vmatprep.subr.mxu0 0.0
    %7417 = vmatpush1.msra.mxu0 0.0
    %7418 = vmatprep.subr.mxu0 0.0
    %7419 = vmatpush1.msra.mxu0 0.0
    %7420 = vmatprep.subr.mxu0 0.0
    %7421 = vmatpush1.msra.mxu0 0.0
    %7422 = vmatprep.subr.mxu0 0.0
    %7423 = vmatpush1.msra.mxu0 0.0
    %7424 = vmatprep.subr.mxu0 0.0
    %7425 = vmatpush1.msra.mxu0 0.0
    %7426 = vmatprep.subr.mxu0 0.0
    %7427 = vmatpush1.msra.mxu0 0.0
    %7428 = vmatprep.subr.mxu0 0.0
    %7429 = vmatpush1.msra.mxu0 0.0
    %7430 = vmatprep.subr.mxu0 0.0
    %7431 = vmatpush1.msra.mxu0 0.0
    %7432 = vmatprep.subr.mxu0 0.0
    %7433 = vmatpush1.msra.mxu0 0.0
    %7434 = vmatprep.subr.mxu0 0.0
    %7435 = vmatpush1.msra.mxu0 0.0
    %7436 = vmatprep.subr.mxu0 0.0
    %7437 = vmatpush1.msra.mxu0 0.0
    %7438 = vmatprep.subr.mxu0 0.0
    %7439 = vmatpush1.msra.mxu0 %v7185
    %7440 = vmatprep.subr.mxu0 0.0
    %7441 = vmatpush2.msra.mxu0 0.0
    %7442 = vmatprep.subr.mxu0 0.0
    %7443 = vmatpush2.msra.mxu0 0.0
    %7444 = vmatprep.subr.mxu0 0.0
    %7445 = vmatpush2.msra.mxu0 0.0
    %7446 = vmatprep.subr.mxu0 0.0
    %7447 = vmatpush2.msra.mxu0 0.0
    %7448 = vmatprep.subr.mxu0 0.0
    %7449 = vmatpush2.msra.mxu0 0.0
    %7450 = vmatprep.subr.mxu0 0.0
    %7451 = vmatpush2.msra.mxu0 0.0
    %7452 = vmatprep.subr.mxu0 0.0
    %7453 = vmatpush2.msra.mxu0 0.0
    %7454 = vmatprep.subr.mxu0 0.0
    %7455 = vmatpush2.msra.mxu0 0.0
    %7456 = vmatprep.subr.mxu0 0.0
    %7457 = vmatpush2.msra.mxu0 0.0
    %7458 = vmatprep.subr.mxu0 0.0
    %7459 = vmatpush2.msra.mxu0 0.0
    %7460 = vmatprep.subr.mxu0 0.0
    %7461 = vmatpush2.msra.mxu0 0.0
    %7462 = vmatprep.subr.mxu0 0.0
    %7463 = vmatpush2.msra.mxu0 0.0
    %7464 = vmatprep.subr.mxu0 0.0
    %7465 = vmatpush2.msra.mxu0 0.0
    %7466 = vmatprep.subr.mxu0 0.0
    %7467 = vmatpush2.msra.mxu0 0.0
    %7468 = vmatprep.subr.mxu0 0.0
    %7469 = vmatpush2.msra.mxu0 0.0
    %7470 = vmatprep.subr.mxu0 0.0
    %7471 = vmatpush2.msra.mxu0 0.0
    %7472 = vmatprep.mubr.f32.mxu0 0.0
    %7473 = vmatmul.mubr.f32.gmra.mxu0 %v7406
    %v7474 = vpop.f32.mrf.mxu0
    %v7475 = vadd.f32 0.0, %v7474
    %v7476 = vpop.f32.mrf.mxu0
    %7477 = vdwg.mxu0
    %v7478 = vmul.f32 %v7256, 0.35355338
    %v7479 = vmul.f32 %v7329, 0.35355338
    %v7480 = vmul.f32 %v7402, 0.35355338
    %v7481 = vmul.f32 %v7475, 0.35355338
    %v7482 = vsel %vm1403, %v7478, -inf
    %7483 = vmax.xlane.f32.xlu0 %v7482
    %v7484 = vpop.xlane.xlu0 %7483
    %v7485 = vsel %vm1403, %v7479, -inf
    %7486 = vmax.xlane.f32.xlu0 %v7485
    %v7487 = vpop.xlane.xlu0 %7486
    %v7488 = vsel %vm1403, %v7480, -inf
    %7489 = vmax.xlane.f32.xlu0 %v7488
    %v7490 = vpop.xlane.xlu0 %7489
    %v7491 = vsel %vm1403, %v7481, -inf
    %7492 = vmax.xlane.f32.xlu0 %v7491
    %v7493 = vpop.xlane.xlu0 %7492
    %v7494 = vsub.f32 %v7478, %v7484
    %v7495 = vsub.f32 %v7479, %v7487
    %v7496 = vsub.f32 %v7480, %v7490
    %v7497 = vsub.f32 %v7481, %v7493
    %v7498 = vmul.f32 %v7494, 1.442695
    %v7499 = vpow.pop %v7498
    %v7500 = vmul.f32 %v7495, 1.442695
    %v7501 = vpow.pop %v7500
    %v7502 = vmul.f32 %v7496, 1.442695
    %v7503 = vpow.pop %v7502
    %v7504 = vmul.f32 %v7497, 1.442695
    %v7505 = vpow.pop %v7504
    %v7506 = vsel %vm1403, %v7499, 0.0
    %7507 = vadd.xlane.f32.xlu0 %v7506
    %v7508 = vpop.xlane.xlu0 %7507
    %v7509 = vsel %vm1403, %v7501, 0.0
    %7510 = vadd.xlane.f32.xlu0 %v7509
    %v7511 = vpop.xlane.xlu0 %7510
    %v7512 = vsel %vm1403, %v7503, 0.0
    %7513 = vadd.xlane.f32.xlu0 %v7512
    %v7514 = vpop.xlane.xlu0 %7513
    %v7515 = vsel %vm1403, %v7505, 0.0
    %7516 = vadd.xlane.f32.xlu0 %v7515
    %v7517 = vpop.xlane.xlu0 %7516
    %v7518 = vrcp.pop %v7508
    %v7519 = vrcp.pop %v7511
    %v7520 = vrcp.pop %v7514
    %v7521 = vrcp.pop %v7517
    %v7522 = vmul.f32 %v7499, %v7518
    %v7523 = vmul.f32 %v7501, %v7519
    %v7524 = vmul.f32 %v7503, %v7520
    %v7525 = vmul.f32 %v7505, %v7521
    %7526 = vxpose.xlu0.b32.start [1/16] %v6306, 128
    %7527 = vxpose.xlu0.b32.cont [2/16] 0.0, 128
    %7528 = vxpose.xlu0.b32.cont [3/16] 0.0, 128
    %7529 = vxpose.xlu0.b32.cont [4/16] 0.0, 128
    %7530 = vxpose.xlu0.b32.cont [5/16] 0.0, 128
    %7531 = vxpose.xlu0.b32.cont [6/16] 0.0, 128
    %7532 = vxpose.xlu0.b32.cont [7/16] 0.0, 128
    %7533 = vxpose.xlu0.b32.cont [8/16] 0.0, 128
    %7534 = vxpose.xlu0.b32.cont [9/16] 0.0, 128
    %7535 = vxpose.xlu0.b32.cont [10/16] 0.0, 128
    %7536 = vxpose.xlu0.b32.cont [11/16] 0.0, 128
    %7537 = vxpose.xlu0.b32.cont [12/16] 0.0, 128
    %7538 = vxpose.xlu0.b32.cont [13/16] 0.0, 128
    %7539 = vxpose.xlu0.b32.cont [14/16] 0.0, 128
    %7540 = vxpose.xlu0.b32.cont [15/16] 0.0, 128
    %7541 = vxpose.xlu0.b32.end [16/16] 0.0, 128
    %v7542 = vpop.trf.xlu0
    %v7543 = vpop.trf.xlu0
    %v7544 = vpop.trf.xlu0
    %v7545 = vpop.trf.xlu0
    %v7546 = vpop.trf.xlu0
    %v7547 = vpop.trf.xlu0
    %v7548 = vpop.trf.xlu0
    %v7549 = vpop.trf.xlu0
    %v7550 = vpop.trf.xlu0
    %v7551 = vpop.trf.xlu0
    %v7552 = vpop.trf.xlu0
    %v7553 = vpop.trf.xlu0
    %v7554 = vpop.trf.xlu0
    %v7555 = vpop.trf.xlu0
    %v7556 = vpop.trf.xlu0
    %v7557 = vpop.trf.xlu0
    %7558 = vxpose.xlu0.b32.start [1/16] %v6330, 128
    %7559 = vxpose.xlu0.b32.cont [2/16] 0.0, 128
    %7560 = vxpose.xlu0.b32.cont [3/16] 0.0, 128
    %7561 = vxpose.xlu0.b32.cont [4/16] 0.0, 128
    %7562 = vxpose.xlu0.b32.cont [5/16] 0.0, 128
    %7563 = vxpose.xlu0.b32.cont [6/16] 0.0, 128
    %7564 = vxpose.xlu0.b32.cont [7/16] 0.0, 128
    %7565 = vxpose.xlu0.b32.cont [8/16] 0.0, 128
    %7566 = vxpose.xlu0.b32.cont [9/16] 0.0, 128
    %7567 = vxpose.xlu0.b32.cont [10/16] 0.0, 128
    %7568 = vxpose.xlu0.b32.cont [11/16] 0.0, 128
    %7569 = vxpose.xlu0.b32.cont [12/16] 0.0, 128
    %7570 = vxpose.xlu0.b32.cont [13/16] 0.0, 128
    %7571 = vxpose.xlu0.b32.cont [14/16] 0.0, 128
    %7572 = vxpose.xlu0.b32.cont [15/16] 0.0, 128
    %7573 = vxpose.xlu0.b32.end [16/16] 0.0, 128
    %v7574 = vpop.trf.xlu0
    %v7575 = vpop.trf.xlu0
    %v7576 = vpop.trf.xlu0
    %v7577 = vpop.trf.xlu0
    %v7578 = vpop.trf.xlu0
    %v7579 = vpop.trf.xlu0
    %v7580 = vpop.trf.xlu0
    %v7581 = vpop.trf.xlu0
    %v7582 = vpop.trf.xlu0
    %v7583 = vpop.trf.xlu0
    %v7584 = vpop.trf.xlu0
    %v7585 = vpop.trf.xlu0
    %v7586 = vpop.trf.xlu0
    %v7587 = vpop.trf.xlu0
    %v7588 = vpop.trf.xlu0
    %v7589 = vpop.trf.xlu0
    %7590 = vxpose.xlu0.b32.start [1/16] %v6313, 128
    %7591 = vxpose.xlu0.b32.cont [2/16] 0.0, 128
    %7592 = vxpose.xlu0.b32.cont [3/16] 0.0, 128
    %7593 = vxpose.xlu0.b32.cont [4/16] 0.0, 128
    %7594 = vxpose.xlu0.b32.cont [5/16] 0.0, 128
    %7595 = vxpose.xlu0.b32.cont [6/16] 0.0, 128
    %7596 = vxpose.xlu0.b32.cont [7/16] 0.0, 128
    %7597 = vxpose.xlu0.b32.cont [8/16] 0.0, 128
    %7598 = vxpose.xlu0.b32.cont [9/16] 0.0, 128
    %7599 = vxpose.xlu0.b32.cont [10/16] 0.0, 128
    %7600 = vxpose.xlu0.b32.cont [11/16] 0.0, 128
    %7601 = vxpose.xlu0.b32.cont [12/16] 0.0, 128
    %7602 = vxpose.xlu0.b32.cont [13/16] 0.0, 128
    %7603 = vxpose.xlu0.b32.cont [14/16] 0.0, 128
    %7604 = vxpose.xlu0.b32.cont [15/16] 0.0, 128
    %7605 = vxpose.xlu0.b32.end [16/16] 0.0, 128
    %v7606 = vpop.trf.xlu0
    %v7607 = vpop.trf.xlu0
    %v7608 = vpop.trf.xlu0
    %v7609 = vpop.trf.xlu0
    %v7610 = vpop.trf.xlu0
    %v7611 = vpop.trf.xlu0
    %v7612 = vpop.trf.xlu0
    %v7613 = vpop.trf.xlu0
    %v7614 = vpop.trf.xlu0
    %v7615 = vpop.trf.xlu0
    %v7616 = vpop.trf.xlu0
    %v7617 = vpop.trf.xlu0
    %v7618 = vpop.trf.xlu0
    %v7619 = vpop.trf.xlu0
    %v7620 = vpop.trf.xlu0
    %v7621 = vpop.trf.xlu0
    %7622 = vxpose.xlu0.b32.start [1/16] %v6331, 128
    %7623 = vxpose.xlu0.b32.cont [2/16] 0.0, 128
    %7624 = vxpose.xlu0.b32.cont [3/16] 0.0, 128
    %7625 = vxpose.xlu0.b32.cont [4/16] 0.0, 128
    %7626 = vxpose.xlu0.b32.cont [5/16] 0.0, 128
    %7627 = vxpose.xlu0.b32.cont [6/16] 0.0, 128
    %7628 = vxpose.xlu0.b32.cont [7/16] 0.0, 128
    %7629 = vxpose.xlu0.b32.cont [8/16] 0.0, 128
    %7630 = vxpose.xlu0.b32.cont [9/16] 0.0, 128
    %7631 = vxpose.xlu0.b32.cont [10/16] 0.0, 128
    %7632 = vxpose.xlu0.b32.cont [11/16] 0.0, 128
    %7633 = vxpose.xlu0.b32.cont [12/16] 0.0, 128
    %7634 = vxpose.xlu0.b32.cont [13/16] 0.0, 128
    %7635 = vxpose.xlu0.b32.cont [14/16] 0.0, 128
    %7636 = vxpose.xlu0.b32.cont [15/16] 0.0, 128
    %7637 = vxpose.xlu0.b32.end [16/16] 0.0, 128
    %v7638 = vpop.trf.xlu0
    %v7639 = vpop.trf.xlu0
    %v7640 = vpop.trf.xlu0
    %v7641 = vpop.trf.xlu0
    %v7642 = vpop.trf.xlu0
    %v7643 = vpop.trf.xlu0
    %v7644 = vpop.trf.xlu0
    %v7645 = vpop.trf.xlu0
    %v7646 = vpop.trf.xlu0
    %v7647 = vpop.trf.xlu0
    %v7648 = vpop.trf.xlu0
    %v7649 = vpop.trf.xlu0
    %v7650 = vpop.trf.xlu0
    %v7651 = vpop.trf.xlu0
    %v7652 = vpop.trf.xlu0
    %v7653 = vpop.trf.xlu0
    %7654 = vxpose.xlu0.b32.start [1/16] %v6322, 128
    %7655 = vxpose.xlu0.b32.cont [2/16] 0.0, 128
    %7656 = vxpose.xlu0.b32.cont [3/16] 0.0, 128
    %7657 = vxpose.xlu0.b32.cont [4/16] 0.0, 128
    %7658 = vxpose.xlu0.b32.cont [5/16] 0.0, 128
    %7659 = vxpose.xlu0.b32.cont [6/16] 0.0, 128
    %7660 = vxpose.xlu0.b32.cont [7/16] 0.0, 128
    %7661 = vxpose.xlu0.b32.cont [8/16] 0.0, 128
    %7662 = vxpose.xlu0.b32.cont [9/16] 0.0, 128
    %7663 = vxpose.xlu0.b32.cont [10/16] 0.0, 128
    %7664 = vxpose.xlu0.b32.cont [11/16] 0.0, 128
    %7665 = vxpose.xlu0.b32.cont [12/16] 0.0, 128
    %7666 = vxpose.xlu0.b32.cont [13/16] 0.0, 128
    %7667 = vxpose.xlu0.b32.cont [14/16] 0.0, 128
    %7668 = vxpose.xlu0.b32.cont [15/16] 0.0, 128
    %7669 = vxpose.xlu0.b32.end [16/16] 0.0, 128
    %v7670 = vpop.trf.xlu0
    %v7671 = vpop.trf.xlu0
    %v7672 = vpop.trf.xlu0
    %v7673 = vpop.trf.xlu0
    %v7674 = vpop.trf.xlu0
    %v7675 = vpop.trf.xlu0
    %v7676 = vpop.trf.xlu0
    %v7677 = vpop.trf.xlu0
    %v7678 = vpop.trf.xlu0
    %v7679 = vpop.trf.xlu0
    %v7680 = vpop.trf.xlu0
    %v7681 = vpop.trf.xlu0
    %v7682 = vpop.trf.xlu0
    %v7683 = vpop.trf.xlu0
    %v7684 = vpop.trf.xlu0
    %v7685 = vpop.trf.xlu0
    %7686 = vxpose.xlu0.b32.start [1/16] %v6332, 128
    %7687 = vxpose.xlu0.b32.cont [2/16] 0.0, 128
    %7688 = vxpose.xlu0.b32.cont [3/16] 0.0, 128
    %7689 = vxpose.xlu0.b32.cont [4/16] 0.0, 128
    %7690 = vxpose.xlu0.b32.cont [5/16] 0.0, 128
    %7691 = vxpose.xlu0.b32.cont [6/16] 0.0, 128
    %7692 = vxpose.xlu0.b32.cont [7/16] 0.0, 128
    %7693 = vxpose.xlu0.b32.cont [8/16] 0.0, 128
    %7694 = vxpose.xlu0.b32.cont [9/16] 0.0, 128
    %7695 = vxpose.xlu0.b32.cont [10/16] 0.0, 128
    %7696 = vxpose.xlu0.b32.cont [11/16] 0.0, 128
    %7697 = vxpose.xlu0.b32.cont [12/16] 0.0, 128
    %7698 = vxpose.xlu0.b32.cont [13/16] 0.0, 128
    %7699 = vxpose.xlu0.b32.cont [14/16] 0.0, 128
    %7700 = vxpose.xlu0.b32.cont [15/16] 0.0, 128
    %7701 = vxpose.xlu0.b32.end [16/16] 0.0, 128
    %v7702 = vpop.trf.xlu0
    %v7703 = vpop.trf.xlu0
    %v7704 = vpop.trf.xlu0
    %v7705 = vpop.trf.xlu0
    %v7706 = vpop.trf.xlu0
    %v7707 = vpop.trf.xlu0
    %v7708 = vpop.trf.xlu0
    %v7709 = vpop.trf.xlu0
    %v7710 = vpop.trf.xlu0
    %v7711 = vpop.trf.xlu0
    %v7712 = vpop.trf.xlu0
    %v7713 = vpop.trf.xlu0
    %v7714 = vpop.trf.xlu0
    %v7715 = vpop.trf.xlu0
    %v7716 = vpop.trf.xlu0
    %v7717 = vpop.trf.xlu0
    %7718 = vxpose.xlu0.b32.start [1/16] %v6329, 128
    %7719 = vxpose.xlu0.b32.cont [2/16] 0.0, 128
    %7720 = vxpose.xlu0.b32.cont [3/16] 0.0, 128
    %7721 = vxpose.xlu0.b32.cont [4/16] 0.0, 128
    %7722 = vxpose.xlu0.b32.cont [5/16] 0.0, 128
    %7723 = vxpose.xlu0.b32.cont [6/16] 0.0, 128
    %7724 = vxpose.xlu0.b32.cont [7/16] 0.0, 128
    %7725 = vxpose.xlu0.b32.cont [8/16] 0.0, 128
    %7726 = vxpose.xlu0.b32.cont [9/16] 0.0, 128
    %7727 = vxpose.xlu0.b32.cont [10/16] 0.0, 128
    %7728 = vxpose.xlu0.b32.cont [11/16] 0.0, 128
    %7729 = vxpose.xlu0.b32.cont [12/16] 0.0, 128
    %7730 = vxpose.xlu0.b32.cont [13/16] 0.0, 128
    %7731 = vxpose.xlu0.b32.cont [14/16] 0.0, 128
    %7732 = vxpose.xlu0.b32.cont [15/16] 0.0, 128
    %7733 = vxpose.xlu0.b32.end [16/16] 0.0, 128
    %v7734 = vpop.trf.xlu0
    %v7735 = vpop.trf.xlu0
    %v7736 = vpop.trf.xlu0
    %v7737 = vpop.trf.xlu0
    %v7738 = vpop.trf.xlu0
    %v7739 = vpop.trf.xlu0
    %v7740 = vpop.trf.xlu0
    %v7741 = vpop.trf.xlu0
    %v7742 = vpop.trf.xlu0
    %v7743 = vpop.trf.xlu0
    %v7744 = vpop.trf.xlu0
    %v7745 = vpop.trf.xlu0
    %v7746 = vpop.trf.xlu0
    %v7747 = vpop.trf.xlu0
    %v7748 = vpop.trf.xlu0
    %v7749 = vpop.trf.xlu0
    %7750 = vxpose.xlu0.b32.start [1/16] %v6333, 128
    %7751 = vxpose.xlu0.b32.cont [2/16] 0.0, 128
    %7752 = vxpose.xlu0.b32.cont [3/16] 0.0, 128
    %7753 = vxpose.xlu0.b32.cont [4/16] 0.0, 128
    %7754 = vxpose.xlu0.b32.cont [5/16] 0.0, 128
    %7755 = vxpose.xlu0.b32.cont [6/16] 0.0, 128
    %7756 = vxpose.xlu0.b32.cont [7/16] 0.0, 128
    %7757 = vxpose.xlu0.b32.cont [8/16] 0.0, 128
    %7758 = vxpose.xlu0.b32.cont [9/16] 0.0, 128
    %7759 = vxpose.xlu0.b32.cont [10/16] 0.0, 128
    %7760 = vxpose.xlu0.b32.cont [11/16] 0.0, 128
    %7761 = vxpose.xlu0.b32.cont [12/16] 0.0, 128
    %7762 = vxpose.xlu0.b32.cont [13/16] 0.0, 128
    %7763 = vxpose.xlu0.b32.cont [14/16] 0.0, 128
    %7764 = vxpose.xlu0.b32.cont [15/16] 0.0, 128
    %7765 = vxpose.xlu0.b32.end [16/16] 0.0, 128
    %v7766 = vpop.trf.xlu0
    %v7767 = vpop.trf.xlu0
    %v7768 = vpop.trf.xlu0
    %v7769 = vpop.trf.xlu0
    %v7770 = vpop.trf.xlu0
    %v7771 = vpop.trf.xlu0
    %v7772 = vpop.trf.xlu0
    %v7773 = vpop.trf.xlu0
    %v7774 = vpop.trf.xlu0
    %v7775 = vpop.trf.xlu0
    %v7776 = vpop.trf.xlu0
    %v7777 = vpop.trf.xlu0
    %v7778 = vpop.trf.xlu0
    %v7779 = vpop.trf.xlu0
    %v7780 = vpop.trf.xlu0
    %v7781 = vpop.trf.xlu0
    %v7782 = vcombine.low %v7542, %v7606
    %v7783 = vcombine.high %v7542, %v7606
    %v7785 = vunpack.c.l.s4 1983009808
    %v7786 = vunpack.c.0.s8 %v7785
    %v7787 = vlaneseq
    %v7788 = vshrl.u32 %v7787, 7
    %v7789 = vsub.s32 %v7786, %v7788
    %v7790 = vrot.slane %v7782, %v7789
    %v7792 = vunpack.c.l.s4 1983009808
    %v7793 = vunpack.c.0.s8 %v7792
    %v7794 = vlaneseq
    %v7795 = vshrl.u32 %v7794, 7
    %v7796 = vsub.s32 %v7793, %v7795
    %v7797 = vrot.slane %v7783, %v7796
    %v7798 = vcombine.low %v7574, %v7638
    %v7799 = vcombine.high %v7574, %v7638
    %v7801 = vunpack.c.l.s4 1983009808
    %v7802 = vunpack.c.0.s8 %v7801
    %v7803 = vlaneseq
    %v7804 = vshrl.u32 %v7803, 7
    %v7805 = vsub.s32 %v7802, %v7804
    %v7806 = vrot.slane %v7798, %v7805
    %v7808 = vunpack.c.l.s4 1983009808
    %v7809 = vunpack.c.0.s8 %v7808
    %v7810 = vlaneseq
    %v7811 = vshrl.u32 %v7810, 7
    %v7812 = vsub.s32 %v7809, %v7811
    %v7813 = vrot.slane %v7799, %v7812
    %v7814 = vcombine.low %v7670, %v7734
    %v7815 = vcombine.high %v7670, %v7734
    %v7817 = vunpack.c.l.s4 1983009808
    %v7818 = vunpack.c.0.s8 %v7817
    %v7819 = vlaneseq
    %v7820 = vshrl.u32 %v7819, 7
    %v7821 = vsub.s32 %v7818, %v7820
    %v7822 = vrot.slane %v7814, %v7821
    %v7824 = vunpack.c.l.s4 1983009808
    %v7825 = vunpack.c.0.s8 %v7824
    %v7826 = vlaneseq
    %v7827 = vshrl.u32 %v7826, 7
    %v7828 = vsub.s32 %v7825, %v7827
    %v7829 = vrot.slane %v7815, %v7828
    %v7830 = vcombine.low %v7702, %v7766
    %v7831 = vcombine.high %v7702, %v7766
    %v7833 = vunpack.c.l.s4 1983009808
    %v7834 = vunpack.c.0.s8 %v7833
    %v7835 = vlaneseq
    %v7836 = vshrl.u32 %v7835, 7
    %v7837 = vsub.s32 %v7834, %v7836
    %v7838 = vrot.slane %v7830, %v7837
    %v7840 = vunpack.c.l.s4 1983009808
    %v7841 = vunpack.c.0.s8 %v7840
    %v7842 = vlaneseq
    %v7843 = vshrl.u32 %v7842, 7
    %v7844 = vsub.s32 %v7841, %v7843
    %v7845 = vrot.slane %v7831, %v7844
    %v7846 = vcombine.low %v7790, %v7806
    %v7847 = vcombine.high %v7790, %v7806
    %v7849 = vunpack.c.l.s4 1934713408
    %v7850 = vunpack.c.0.s8 %v7849
    %v7851 = vlaneseq
    %v7852 = vshrl.u32 %v7851, 7
    %v7853 = vsub.s32 %v7850, %v7852
    %v7854 = vrot.slane %v7846, %v7853
    %v7856 = vunpack.c.l.s4 1934713408
    %v7857 = vunpack.c.0.s8 %v7856
    %v7858 = vlaneseq
    %v7859 = vshrl.u32 %v7858, 7
    %v7860 = vsub.s32 %v7857, %v7859
    %v7861 = vrot.slane %v7847, %v7860
    %v7862 = vcombine.low %v7797, %v7813
    %v7863 = vcombine.high %v7797, %v7813
    %v7865 = vunpack.c.l.s4 1934713408
    %v7866 = vunpack.c.0.s8 %v7865
    %v7867 = vlaneseq
    %v7868 = vshrl.u32 %v7867, 7
    %v7869 = vsub.s32 %v7866, %v7868
    %v7870 = vrot.slane %v7862, %v7869
    %v7872 = vunpack.c.l.s4 1934713408
    %v7873 = vunpack.c.0.s8 %v7872
    %v7874 = vlaneseq
    %v7875 = vshrl.u32 %v7874, 7
    %v7876 = vsub.s32 %v7873, %v7875
    %v7877 = vrot.slane %v7863, %v7876
    %v7878 = vcombine.low %v7822, %v7838
    %v7879 = vcombine.high %v7822, %v7838
    %v7881 = vunpack.c.l.s4 1934713408
    %v7882 = vunpack.c.0.s8 %v7881
    %v7883 = vlaneseq
    %v7884 = vshrl.u32 %v7883, 7
    %v7885 = vsub.s32 %v7882, %v7884
    %v7886 = vrot.slane %v7878, %v7885
    %v7888 = vunpack.c.l.s4 1934713408
    %v7889 = vunpack.c.0.s8 %v7888
    %v7890 = vlaneseq
    %v7891 = vshrl.u32 %v7890, 7
    %v7892 = vsub.s32 %v7889, %v7891
    %v7893 = vrot.slane %v7879, %v7892
    %v7894 = vcombine.low %v7829, %v7845
    %v7895 = vcombine.high %v7829, %v7845
    %v7897 = vunpack.c.l.s4 1934713408
    %v7898 = vunpack.c.0.s8 %v7897
    %v7899 = vlaneseq
    %v7900 = vshrl.u32 %v7899, 7
    %v7901 = vsub.s32 %v7898, %v7900
    %v7902 = vrot.slane %v7894, %v7901
    %v7904 = vunpack.c.l.s4 1934713408
    %v7905 = vunpack.c.0.s8 %v7904
    %v7906 = vlaneseq
    %v7907 = vshrl.u32 %v7906, 7
    %v7908 = vsub.s32 %v7905, %v7907
    %v7909 = vrot.slane %v7895, %v7908
    %v7910 = vcombine.low %v7854, %v7886
    %v7911 = vcombine.high %v7854, %v7886
    %v7912 = vcombine.low %v7861, %v7893
    %v7913 = vcombine.high %v7861, %v7893
    %v7914 = vcombine.low %v7870, %v7902
    %v7915 = vcombine.high %v7870, %v7902
    %v7916 = vcombine.low %v7877, %v7909
    %v7917 = vcombine.high %v7877, %v7909
    %7918 = vxpose.xlu0.b32.start [1/16] %v7910, 128
    %7919 = vxpose.xlu0.b32.cont [2/16] 0.0, 128
    %7920 = vxpose.xlu0.b32.cont [3/16] 0.0, 128
    %7921 = vxpose.xlu0.b32.cont [4/16] 0.0, 128
    %7922 = vxpose.xlu0.b32.cont [5/16] 0.0, 128
    %7923 = vxpose.xlu0.b32.cont [6/16] 0.0, 128
    %7924 = vxpose.xlu0.b32.cont [7/16] 0.0, 128
    %7925 = vxpose.xlu0.b32.cont [8/16] 0.0, 128
    %7926 = vxpose.xlu0.b32.cont [9/16] 0.0, 128
    %7927 = vxpose.xlu0.b32.cont [10/16] 0.0, 128
    %7928 = vxpose.xlu0.b32.cont [11/16] 0.0, 128
    %7929 = vxpose.xlu0.b32.cont [12/16] 0.0, 128
    %7930 = vxpose.xlu0.b32.cont [13/16] 0.0, 128
    %7931 = vxpose.xlu0.b32.cont [14/16] 0.0, 128
    %7932 = vxpose.xlu0.b32.cont [15/16] 0.0, 128
    %7933 = vxpose.xlu0.b32.end [16/16] 0.0, 128
    %v7934 = vpop.trf.xlu0
    %v7935 = vpop.trf.xlu0
    %v7936 = vpop.trf.xlu0
    %v7937 = vpop.trf.xlu0
    %v7938 = vpop.trf.xlu0
    %v7939 = vpop.trf.xlu0
    %v7940 = vpop.trf.xlu0
    %v7941 = vpop.trf.xlu0
    %v7942 = vpop.trf.xlu0
    %v7943 = vpop.trf.xlu0
    %v7944 = vpop.trf.xlu0
    %v7945 = vpop.trf.xlu0
    %v7946 = vpop.trf.xlu0
    %v7947 = vpop.trf.xlu0
    %v7948 = vpop.trf.xlu0
    %v7949 = vpop.trf.xlu0
    %7950 = vxpose.xlu0.b32.start [1/16] %v7911, 128
    %7951 = vxpose.xlu0.b32.cont [2/16] 0.0, 128
    %7952 = vxpose.xlu0.b32.cont [3/16] 0.0, 128
    %7953 = vxpose.xlu0.b32.cont [4/16] 0.0, 128
    %7954 = vxpose.xlu0.b32.cont [5/16] 0.0, 128
    %7955 = vxpose.xlu0.b32.cont [6/16] 0.0, 128
    %7956 = vxpose.xlu0.b32.cont [7/16] 0.0, 128
    %7957 = vxpose.xlu0.b32.cont [8/16] 0.0, 128
    %7958 = vxpose.xlu0.b32.cont [9/16] 0.0, 128
    %7959 = vxpose.xlu0.b32.cont [10/16] 0.0, 128
    %7960 = vxpose.xlu0.b32.cont [11/16] 0.0, 128
    %7961 = vxpose.xlu0.b32.cont [12/16] 0.0, 128
    %7962 = vxpose.xlu0.b32.cont [13/16] 0.0, 128
    %7963 = vxpose.xlu0.b32.cont [14/16] 0.0, 128
    %7964 = vxpose.xlu0.b32.cont [15/16] 0.0, 128
    %7965 = vxpose.xlu0.b32.end [16/16] 0.0, 128
    %v7966 = vpop.trf.xlu0
    %v7967 = vpop.trf.xlu0
    %v7968 = vpop.trf.xlu0
    %v7969 = vpop.trf.xlu0
    %v7970 = vpop.trf.xlu0
    %v7971 = vpop.trf.xlu0
    %v7972 = vpop.trf.xlu0
    %v7973 = vpop.trf.xlu0
    %v7974 = vpop.trf.xlu0
    %v7975 = vpop.trf.xlu0
    %v7976 = vpop.trf.xlu0
    %v7977 = vpop.trf.xlu0
    %v7978 = vpop.trf.xlu0
    %v7979 = vpop.trf.xlu0
    %v7980 = vpop.trf.xlu0
    %v7981 = vpop.trf.xlu0
    %7982 = vxpose.xlu0.b32.start [1/16] %v7912, 128
    %7983 = vxpose.xlu0.b32.cont [2/16] 0.0, 128
    %7984 = vxpose.xlu0.b32.cont [3/16] 0.0, 128
    %7985 = vxpose.xlu0.b32.cont [4/16] 0.0, 128
    %7986 = vxpose.xlu0.b32.cont [5/16] 0.0, 128
    %7987 = vxpose.xlu0.b32.cont [6/16] 0.0, 128
    %7988 = vxpose.xlu0.b32.cont [7/16] 0.0, 128
    %7989 = vxpose.xlu0.b32.cont [8/16] 0.0, 128
    %7990 = vxpose.xlu0.b32.cont [9/16] 0.0, 128
    %7991 = vxpose.xlu0.b32.cont [10/16] 0.0, 128
    %7992 = vxpose.xlu0.b32.cont [11/16] 0.0, 128
    %7993 = vxpose.xlu0.b32.cont [12/16] 0.0, 128
    %7994 = vxpose.xlu0.b32.cont [13/16] 0.0, 128
    %7995 = vxpose.xlu0.b32.cont [14/16] 0.0, 128
    %7996 = vxpose.xlu0.b32.cont [15/16] 0.0, 128
    %7997 = vxpose.xlu0.b32.end [16/16] 0.0, 128
    %v7998 = vpop.trf.xlu0
    %v7999 = vpop.trf.xlu0
    %v8000 = vpop.trf.xlu0
    %v8001 = vpop.trf.xlu0
    %v8002 = vpop.trf.xlu0
    %v8003 = vpop.trf.xlu0
    %v8004 = vpop.trf.xlu0
    %v8005 = vpop.trf.xlu0
    %v8006 = vpop.trf.xlu0
    %v8007 = vpop.trf.xlu0
    %v8008 = vpop.trf.xlu0
    %v8009 = vpop.trf.xlu0
    %v8010 = vpop.trf.xlu0
    %v8011 = vpop.trf.xlu0
    %v8012 = vpop.trf.xlu0
    %v8013 = vpop.trf.xlu0
    %8014 = vxpose.xlu0.b32.start [1/16] %v7913, 128
    %8015 = vxpose.xlu0.b32.cont [2/16] 0.0, 128
    %8016 = vxpose.xlu0.b32.cont [3/16] 0.0, 128
    %8017 = vxpose.xlu0.b32.cont [4/16] 0.0, 128
    %8018 = vxpose.xlu0.b32.cont [5/16] 0.0, 128
    %8019 = vxpose.xlu0.b32.cont [6/16] 0.0, 128
    %8020 = vxpose.xlu0.b32.cont [7/16] 0.0, 128
    %8021 = vxpose.xlu0.b32.cont [8/16] 0.0, 128
    %8022 = vxpose.xlu0.b32.cont [9/16] 0.0, 128
    %8023 = vxpose.xlu0.b32.cont [10/16] 0.0, 128
    %8024 = vxpose.xlu0.b32.cont [11/16] 0.0, 128
    %8025 = vxpose.xlu0.b32.cont [12/16] 0.0, 128
    %8026 = vxpose.xlu0.b32.cont [13/16] 0.0, 128
    %8027 = vxpose.xlu0.b32.cont [14/16] 0.0, 128
    %8028 = vxpose.xlu0.b32.cont [15/16] 0.0, 128
    %8029 = vxpose.xlu0.b32.end [16/16] 0.0, 128
    %v8030 = vpop.trf.xlu0
    %v8031 = vpop.trf.xlu0
    %v8032 = vpop.trf.xlu0
    %v8033 = vpop.trf.xlu0
    %v8034 = vpop.trf.xlu0
    %v8035 = vpop.trf.xlu0
    %v8036 = vpop.trf.xlu0
    %v8037 = vpop.trf.xlu0
    %v8038 = vpop.trf.xlu0
    %v8039 = vpop.trf.xlu0
    %v8040 = vpop.trf.xlu0
    %v8041 = vpop.trf.xlu0
    %v8042 = vpop.trf.xlu0
    %v8043 = vpop.trf.xlu0
    %v8044 = vpop.trf.xlu0
    %v8045 = vpop.trf.xlu0
    %8046 = vxpose.xlu0.b32.start [1/16] %v7914, 128
    %8047 = vxpose.xlu0.b32.cont [2/16] 0.0, 128
    %8048 = vxpose.xlu0.b32.cont [3/16] 0.0, 128
    %8049 = vxpose.xlu0.b32.cont [4/16] 0.0, 128
    %8050 = vxpose.xlu0.b32.cont [5/16] 0.0, 128
    %8051 = vxpose.xlu0.b32.cont [6/16] 0.0, 128
    %8052 = vxpose.xlu0.b32.cont [7/16] 0.0, 128
    %8053 = vxpose.xlu0.b32.cont [8/16] 0.0, 128
    %8054 = vxpose.xlu0.b32.cont [9/16] 0.0, 128
    %8055 = vxpose.xlu0.b32.cont [10/16] 0.0, 128
    %8056 = vxpose.xlu0.b32.cont [11/16] 0.0, 128
    %8057 = vxpose.xlu0.b32.cont [12/16] 0.0, 128
    %8058 = vxpose.xlu0.b32.cont [13/16] 0.0, 128
    %8059 = vxpose.xlu0.b32.cont [14/16] 0.0, 128
    %8060 = vxpose.xlu0.b32.cont [15/16] 0.0, 128
    %8061 = vxpose.xlu0.b32.end [16/16] 0.0, 128
    %v8062 = vpop.trf.xlu0
    %v8063 = vpop.trf.xlu0
    %v8064 = vpop.trf.xlu0
    %v8065 = vpop.trf.xlu0
    %v8066 = vpop.trf.xlu0
    %v8067 = vpop.trf.xlu0
    %v8068 = vpop.trf.xlu0
    %v8069 = vpop.trf.xlu0
    %v8070 = vpop.trf.xlu0
    %v8071 = vpop.trf.xlu0
    %v8072 = vpop.trf.xlu0
    %v8073 = vpop.trf.xlu0
    %v8074 = vpop.trf.xlu0
    %v8075 = vpop.trf.xlu0
    %v8076 = vpop.trf.xlu0
    %v8077 = vpop.trf.xlu0
    %8078 = vxpose.xlu0.b32.start [1/16] %v7915, 128
    %8079 = vxpose.xlu0.b32.cont [2/16] 0.0, 128
    %8080 = vxpose.xlu0.b32.cont [3/16] 0.0, 128
    %8081 = vxpose.xlu0.b32.cont [4/16] 0.0, 128
    %8082 = vxpose.xlu0.b32.cont [5/16] 0.0, 128
    %8083 = vxpose.xlu0.b32.cont [6/16] 0.0, 128
    %8084 = vxpose.xlu0.b32.cont [7/16] 0.0, 128
    %8085 = vxpose.xlu0.b32.cont [8/16] 0.0, 128
    %8086 = vxpose.xlu0.b32.cont [9/16] 0.0, 128
    %8087 = vxpose.xlu0.b32.cont [10/16] 0.0, 128
    %8088 = vxpose.xlu0.b32.cont [11/16] 0.0, 128
    %8089 = vxpose.xlu0.b32.cont [12/16] 0.0, 128
    %8090 = vxpose.xlu0.b32.cont [13/16] 0.0, 128
    %8091 = vxpose.xlu0.b32.cont [14/16] 0.0, 128
    %8092 = vxpose.xlu0.b32.cont [15/16] 0.0, 128
    %8093 = vxpose.xlu0.b32.end [16/16] 0.0, 128
    %v8094 = vpop.trf.xlu0
    %v8095 = vpop.trf.xlu0
    %v8096 = vpop.trf.xlu0
    %v8097 = vpop.trf.xlu0
    %v8098 = vpop.trf.xlu0
    %v8099 = vpop.trf.xlu0
    %v8100 = vpop.trf.xlu0
    %v8101 = vpop.trf.xlu0
    %v8102 = vpop.trf.xlu0
    %v8103 = vpop.trf.xlu0
    %v8104 = vpop.trf.xlu0
    %v8105 = vpop.trf.xlu0
    %v8106 = vpop.trf.xlu0
    %v8107 = vpop.trf.xlu0
    %v8108 = vpop.trf.xlu0
    %v8109 = vpop.trf.xlu0
    %8110 = vxpose.xlu0.b32.start [1/16] %v7916, 128
    %8111 = vxpose.xlu0.b32.cont [2/16] 0.0, 128
    %8112 = vxpose.xlu0.b32.cont [3/16] 0.0, 128
    %8113 = vxpose.xlu0.b32.cont [4/16] 0.0, 128
    %8114 = vxpose.xlu0.b32.cont [5/16] 0.0, 128
    %8115 = vxpose.xlu0.b32.cont [6/16] 0.0, 128
    %8116 = vxpose.xlu0.b32.cont [7/16] 0.0, 128
    %8117 = vxpose.xlu0.b32.cont [8/16] 0.0, 128
    %8118 = vxpose.xlu0.b32.cont [9/16] 0.0, 128
    %8119 = vxpose.xlu0.b32.cont [10/16] 0.0, 128
    %8120 = vxpose.xlu0.b32.cont [11/16] 0.0, 128
    %8121 = vxpose.xlu0.b32.cont [12/16] 0.0, 128
    %8122 = vxpose.xlu0.b32.cont [13/16] 0.0, 128
    %8123 = vxpose.xlu0.b32.cont [14/16] 0.0, 128
    %8124 = vxpose.xlu0.b32.cont [15/16] 0.0, 128
    %8125 = vxpose.xlu0.b32.end [16/16] 0.0, 128
    %v8126 = vpop.trf.xlu0
    %v8127 = vpop.trf.xlu0
    %v8128 = vpop.trf.xlu0
    %v8129 = vpop.trf.xlu0
    %v8130 = vpop.trf.xlu0
    %v8131 = vpop.trf.xlu0
    %v8132 = vpop.trf.xlu0
    %v8133 = vpop.trf.xlu0
    %v8134 = vpop.trf.xlu0
    %v8135 = vpop.trf.xlu0
    %v8136 = vpop.trf.xlu0
    %v8137 = vpop.trf.xlu0
    %v8138 = vpop.trf.xlu0
    %v8139 = vpop.trf.xlu0
    %v8140 = vpop.trf.xlu0
    %v8141 = vpop.trf.xlu0
    %8142 = vxpose.xlu0.b32.start [1/16] %v7917, 128
    %8143 = vxpose.xlu0.b32.cont [2/16] 0.0, 128
    %8144 = vxpose.xlu0.b32.cont [3/16] 0.0, 128
    %8145 = vxpose.xlu0.b32.cont [4/16] 0.0, 128
    %8146 = vxpose.xlu0.b32.cont [5/16] 0.0, 128
    %8147 = vxpose.xlu0.b32.cont [6/16] 0.0, 128
    %8148 = vxpose.xlu0.b32.cont [7/16] 0.0, 128
    %8149 = vxpose.xlu0.b32.cont [8/16] 0.0, 128
    %8150 = vxpose.xlu0.b32.cont [9/16] 0.0, 128
    %8151 = vxpose.xlu0.b32.cont [10/16] 0.0, 128
    %8152 = vxpose.xlu0.b32.cont [11/16] 0.0, 128
    %8153 = vxpose.xlu0.b32.cont [12/16] 0.0, 128
    %8154 = vxpose.xlu0.b32.cont [13/16] 0.0, 128
    %8155 = vxpose.xlu0.b32.cont [14/16] 0.0, 128
    %8156 = vxpose.xlu0.b32.cont [15/16] 0.0, 128
    %8157 = vxpose.xlu0.b32.end [16/16] 0.0, 128
    %v8158 = vpop.trf.xlu0
    %v8159 = vpop.trf.xlu0
    %v8160 = vpop.trf.xlu0
    %v8161 = vpop.trf.xlu0
    %v8162 = vpop.trf.xlu0
    %v8163 = vpop.trf.xlu0
    %v8164 = vpop.trf.xlu0
    %v8165 = vpop.trf.xlu0
    %v8166 = vpop.trf.xlu0
    %v8167 = vpop.trf.xlu0
    %v8168 = vpop.trf.xlu0
    %v8169 = vpop.trf.xlu0
    %v8170 = vpop.trf.xlu0
    %v8171 = vpop.trf.xlu0
    %v8172 = vpop.trf.xlu0
    %v8173 = vpop.trf.xlu0
    %v8174 = vcombine.low %v7934, %v7998
    %v8176 = vunpack.c.l.s4 1983009808
    %v8177 = vunpack.c.0.s8 %v8176
    %v8178 = vlaneseq
    %v8179 = vshrl.u32 %v8178, 7
    %v8180 = vsub.s32 %v8177, %v8179
    %v8181 = vrot.slane %v8174, %v8180
    %v8182 = vcombine.low %v7966, %v8030
    %v8184 = vunpack.c.l.s4 1983009808
    %v8185 = vunpack.c.0.s8 %v8184
    %v8186 = vlaneseq
    %v8187 = vshrl.u32 %v8186, 7
    %v8188 = vsub.s32 %v8185, %v8187
    %v8189 = vrot.slane %v8182, %v8188
    %v8190 = vcombine.low %v8062, %v8126
    %v8192 = vunpack.c.l.s4 1983009808
    %v8193 = vunpack.c.0.s8 %v8192
    %v8194 = vlaneseq
    %v8195 = vshrl.u32 %v8194, 7
    %v8196 = vsub.s32 %v8193, %v8195
    %v8197 = vrot.slane %v8190, %v8196
    %v8198 = vcombine.low %v8094, %v8158
    %v8200 = vunpack.c.l.s4 1983009808
    %v8201 = vunpack.c.0.s8 %v8200
    %v8202 = vlaneseq
    %v8203 = vshrl.u32 %v8202, 7
    %v8204 = vsub.s32 %v8201, %v8203
    %v8205 = vrot.slane %v8198, %v8204
    %v8206 = vcombine.low %v8181, %v8189
    %v8207 = vcombine.high %v8181, %v8189
    %v8209 = vunpack.c.l.s4 1934713408
    %v8210 = vunpack.c.0.s8 %v8209
    %v8211 = vlaneseq
    %v8212 = vshrl.u32 %v8211, 7
    %v8213 = vsub.s32 %v8210, %v8212
    %v8214 = vrot.slane %v8206, %v8213
    %v8216 = vunpack.c.l.s4 1934713408
    %v8217 = vunpack.c.0.s8 %v8216
    %v8218 = vlaneseq
    %v8219 = vshrl.u32 %v8218, 7
    %v8220 = vsub.s32 %v8217, %v8219
    %v8221 = vrot.slane %v8207, %v8220
    %v8222 = vcombine.low %v8197, %v8205
    %v8223 = vcombine.high %v8197, %v8205
    %v8225 = vunpack.c.l.s4 1934713408
    %v8226 = vunpack.c.0.s8 %v8225
    %v8227 = vlaneseq
    %v8228 = vshrl.u32 %v8227, 7
    %v8229 = vsub.s32 %v8226, %v8228
    %v8230 = vrot.slane %v8222, %v8229
    %v8232 = vunpack.c.l.s4 1934713408
    %v8233 = vunpack.c.0.s8 %v8232
    %v8234 = vlaneseq
    %v8235 = vshrl.u32 %v8234, 7
    %v8236 = vsub.s32 %v8233, %v8235
    %v8237 = vrot.slane %v8223, %v8236
    %v8238 = vcombine.low %v8214, %v8230
    %v8239 = vcombine.high %v8214, %v8230
    %v8240 = vcombine.low %v8221, %v8237
    %v8241 = vcombine.high %v8221, %v8237
    %v8243 = vsel %vm1403, %v8238, 0
    %v8246 = vsel %vm1403, %v7522, 0
    %8248 = vmatprep.subr.mxu0 0.0
    %8249 = vmatpush1.xpose.msra.mxu0 0.0
    %8250 = vmatprep.subr.mxu0 0.0
    %8251 = vmatpush1.xpose.msra.mxu0 0.0
    %8252 = vmatprep.subr.mxu0 0.0
    %8253 = vmatpush1.xpose.msra.mxu0 0.0
    %8254 = vmatprep.subr.mxu0 0.0
    %8255 = vmatpush1.xpose.msra.mxu0 0.0
    %8256 = vmatprep.subr.mxu0 0.0
    %8257 = vmatpush1.xpose.msra.mxu0 0.0
    %8258 = vmatprep.subr.mxu0 0.0
    %8259 = vmatpush1.xpose.msra.mxu0 0.0
    %8260 = vmatprep.subr.mxu0 0.0
    %8261 = vmatpush1.xpose.msra.mxu0 0.0
    %8262 = vmatprep.subr.mxu0 0.0
    %8263 = vmatpush1.xpose.msra.mxu0 0.0
    %8264 = vmatprep.subr.mxu0 0.0
    %8265 = vmatpush1.xpose.msra.mxu0 0.0
    %8266 = vmatprep.subr.mxu0 0.0
    %8267 = vmatpush1.xpose.msra.mxu0 0.0
    %8268 = vmatprep.subr.mxu0 0.0
    %8269 = vmatpush1.xpose.msra.mxu0 0.0
    %8270 = vmatprep.subr.mxu0 0.0
    %8271 = vmatpush1.xpose.msra.mxu0 0.0
    %8272 = vmatprep.subr.mxu0 0.0
    %8273 = vmatpush1.xpose.msra.mxu0 0.0
    %8274 = vmatprep.subr.mxu0 0.0
    %8275 = vmatpush1.xpose.msra.mxu0 0.0
    %8276 = vmatprep.subr.mxu0 0.0
    %8277 = vmatpush1.xpose.msra.mxu0 0.0
    %8278 = vmatprep.subr.mxu0 0.0
    %8279 = vmatpush1.xpose.msra.mxu0 %v8246
    %8280 = vmatprep.subr.mxu0 0.0
    %8281 = vmatpush2.xpose.msra.mxu0 0.0
    %8282 = vmatprep.subr.mxu0 0.0
    %8283 = vmatpush2.xpose.msra.mxu0 0.0
    %8284 = vmatprep.subr.mxu0 0.0
    %8285 = vmatpush2.xpose.msra.mxu0 0.0
    %8286 = vmatprep.subr.mxu0 0.0
    %8287 = vmatpush2.xpose.msra.mxu0 0.0
    %8288 = vmatprep.subr.mxu0 0.0
    %8289 = vmatpush2.xpose.msra.mxu0 0.0
    %8290 = vmatprep.subr.mxu0 0.0
    %8291 = vmatpush2.xpose.msra.mxu0 0.0
    %8292 = vmatprep.subr.mxu0 0.0
    %8293 = vmatpush2.xpose.msra.mxu0 0.0
    %8294 = vmatprep.subr.mxu0 0.0
    %8295 = vmatpush2.xpose.msra.mxu0 0.0
    %8296 = vmatprep.subr.mxu0 0.0
    %8297 = vmatpush2.xpose.msra.mxu0 0.0
    %8298 = vmatprep.subr.mxu0 0.0
    %8299 = vmatpush2.xpose.msra.mxu0 0.0
    %8300 = vmatprep.subr.mxu0 0.0
    %8301 = vmatpush2.xpose.msra.mxu0 0.0
    %8302 = vmatprep.subr.mxu0 0.0
    %8303 = vmatpush2.xpose.msra.mxu0 0.0
    %8304 = vmatprep.subr.mxu0 0.0
    %8305 = vmatpush2.xpose.msra.mxu0 0.0
    %8306 = vmatprep.subr.mxu0 0.0
    %8307 = vmatpush2.xpose.msra.mxu0 0.0
    %8308 = vmatprep.subr.mxu0 0.0
    %8309 = vmatpush2.xpose.msra.mxu0 0.0
    %8310 = vmatprep.subr.mxu0 0.0
    %8311 = vmatpush2.xpose.msra.mxu0 0.0
    %8312 = vmatprep.mubr.f32.mxu0 0.0
    %8313 = vmatmul.mubr.f32.gmra.mxu0 %v8243
    %v8314 = vpop.f32.mrf.mxu0
    %v8315 = vadd.f32 0.0, %v8314
    %v8316 = vpop.f32.mrf.mxu0
    %8317 = vdwg.mxu0
    %v8319 = vsel %vm1403, %v8239, 0
    %v8322 = vsel %vm1403, %v7523, 0
    %8324 = vmatprep.subr.mxu0 0.0
    %8325 = vmatpush1.xpose.msra.mxu0 0.0
    %8326 = vmatprep.subr.mxu0 0.0
    %8327 = vmatpush1.xpose.msra.mxu0 0.0
    %8328 = vmatprep.subr.mxu0 0.0
    %8329 = vmatpush1.xpose.msra.mxu0 0.0
    %8330 = vmatprep.subr.mxu0 0.0
    %8331 = vmatpush1.xpose.msra.mxu0 0.0
    %8332 = vmatprep.subr.mxu0 0.0
    %8333 = vmatpush1.xpose.msra.mxu0 0.0
    %8334 = vmatprep.subr.mxu0 0.0
    %8335 = vmatpush1.xpose.msra.mxu0 0.0
    %8336 = vmatprep.subr.mxu0 0.0
    %8337 = vmatpush1.xpose.msra.mxu0 0.0
    %8338 = vmatprep.subr.mxu0 0.0
    %8339 = vmatpush1.xpose.msra.mxu0 0.0
    %8340 = vmatprep.subr.mxu0 0.0
    %8341 = vmatpush1.xpose.msra.mxu0 0.0
    %8342 = vmatprep.subr.mxu0 0.0
    %8343 = vmatpush1.xpose.msra.mxu0 0.0
    %8344 = vmatprep.subr.mxu0 0.0
    %8345 = vmatpush1.xpose.msra.mxu0 0.0
    %8346 = vmatprep.subr.mxu0 0.0
    %8347 = vmatpush1.xpose.msra.mxu0 0.0
    %8348 = vmatprep.subr.mxu0 0.0
    %8349 = vmatpush1.xpose.msra.mxu0 0.0
    %8350 = vmatprep.subr.mxu0 0.0
    %8351 = vmatpush1.xpose.msra.mxu0 0.0
    %8352 = vmatprep.subr.mxu0 0.0
    %8353 = vmatpush1.xpose.msra.mxu0 0.0
    %8354 = vmatprep.subr.mxu0 0.0
    %8355 = vmatpush1.xpose.msra.mxu0 %v8322
    %8356 = vmatprep.subr.mxu0 0.0
    %8357 = vmatpush2.xpose.msra.mxu0 0.0
    %8358 = vmatprep.subr.mxu0 0.0
    %8359 = vmatpush2.xpose.msra.mxu0 0.0
    %8360 = vmatprep.subr.mxu0 0.0
    %8361 = vmatpush2.xpose.msra.mxu0 0.0
    %8362 = vmatprep.subr.mxu0 0.0
    %8363 = vmatpush2.xpose.msra.mxu0 0.0
    %8364 = vmatprep.subr.mxu0 0.0
    %8365 = vmatpush2.xpose.msra.mxu0 0.0
    %8366 = vmatprep.subr.mxu0 0.0
    %8367 = vmatpush2.xpose.msra.mxu0 0.0
    %8368 = vmatprep.subr.mxu0 0.0
    %8369 = vmatpush2.xpose.msra.mxu0 0.0
    %8370 = vmatprep.subr.mxu0 0.0
    %8371 = vmatpush2.xpose.msra.mxu0 0.0
    %8372 = vmatprep.subr.mxu0 0.0
    %8373 = vmatpush2.xpose.msra.mxu0 0.0
    %8374 = vmatprep.subr.mxu0 0.0
    %8375 = vmatpush2.xpose.msra.mxu0 0.0
    %8376 = vmatprep.subr.mxu0 0.0
    %8377 = vmatpush2.xpose.msra.mxu0 0.0
    %8378 = vmatprep.subr.mxu0 0.0
    %8379 = vmatpush2.xpose.msra.mxu0 0.0
    %8380 = vmatprep.subr.mxu0 0.0
    %8381 = vmatpush2.xpose.msra.mxu0 0.0
    %8382 = vmatprep.subr.mxu0 0.0
    %8383 = vmatpush2.xpose.msra.mxu0 0.0
    %8384 = vmatprep.subr.mxu0 0.0
    %8385 = vmatpush2.xpose.msra.mxu0 0.0
    %8386 = vmatprep.subr.mxu0 0.0
    %8387 = vmatpush2.xpose.msra.mxu0 0.0
    %8388 = vmatprep.mubr.f32.mxu0 0.0
    %8389 = vmatmul.mubr.f32.gmra.mxu0 %v8319
    %v8390 = vpop.f32.mrf.mxu0
    %v8391 = vadd.f32 0.0, %v8390
    %v8392 = vpop.f32.mrf.mxu0
    %8393 = vdwg.mxu0
    %v8395 = vsel %vm1403, %v8240, 0
    %v8398 = vsel %vm1403, %v7524, 0
    %8400 = vmatprep.subr.mxu0 0.0
    %8401 = vmatpush1.xpose.msra.mxu0 0.0
    %8402 = vmatprep.subr.mxu0 0.0
    %8403 = vmatpush1.xpose.msra.mxu0 0.0
    %8404 = vmatprep.subr.mxu0 0.0
    %8405 = vmatpush1.xpose.msra.mxu0 0.0
    %8406 = vmatprep.subr.mxu0 0.0
    %8407 = vmatpush1.xpose.msra.mxu0 0.0
    %8408 = vmatprep.subr.mxu0 0.0
    %8409 = vmatpush1.xpose.msra.mxu0 0.0
    %8410 = vmatprep.subr.mxu0 0.0
    %8411 = vmatpush1.xpose.msra.mxu0 0.0
    %8412 = vmatprep.subr.mxu0 0.0
    %8413 = vmatpush1.xpose.msra.mxu0 0.0
    %8414 = vmatprep.subr.mxu0 0.0
    %8415 = vmatpush1.xpose.msra.mxu0 0.0
    %8416 = vmatprep.subr.mxu0 0.0
    %8417 = vmatpush1.xpose.msra.mxu0 0.0
    %8418 = vmatprep.subr.mxu0 0.0
    %8419 = vmatpush1.xpose.msra.mxu0 0.0
    %8420 = vmatprep.subr.mxu0 0.0
    %8421 = vmatpush1.xpose.msra.mxu0 0.0
    %8422 = vmatprep.subr.mxu0 0.0
    %8423 = vmatpush1.xpose.msra.mxu0 0.0
    %8424 = vmatprep.subr.mxu0 0.0
    %8425 = vmatpush1.xpose.msra.mxu0 0.0
    %8426 = vmatprep.subr.mxu0 0.0
    %8427 = vmatpush1.xpose.msra.mxu0 0.0
    %8428 = vmatprep.subr.mxu0 0.0
    %8429 = vmatpush1.xpose.msra.mxu0 0.0
    %8430 = vmatprep.subr.mxu0 0.0
    %8431 = vmatpush1.xpose.msra.mxu0 %v8398
    %8432 = vmatprep.subr.mxu0 0.0
    %8433 = vmatpush2.xpose.msra.mxu0 0.0
    %8434 = vmatprep.subr.mxu0 0.0
    %8435 = vmatpush2.xpose.msra.mxu0 0.0
    %8436 = vmatprep.subr.mxu0 0.0
    %8437 = vmatpush2.xpose.msra.mxu0 0.0
    %8438 = vmatprep.subr.mxu0 0.0
    %8439 = vmatpush2.xpose.msra.mxu0 0.0
    %8440 = vmatprep.subr.mxu0 0.0
    %8441 = vmatpush2.xpose.msra.mxu0 0.0
    %8442 = vmatprep.subr.mxu0 0.0
    %8443 = vmatpush2.xpose.msra.mxu0 0.0
    %8444 = vmatprep.subr.mxu0 0.0
    %8445 = vmatpush2.xpose.msra.mxu0 0.0
    %8446 = vmatprep.subr.mxu0 0.0
    %8447 = vmatpush2.xpose.msra.mxu0 0.0
    %8448 = vmatprep.subr.mxu0 0.0
    %8449 = vmatpush2.xpose.msra.mxu0 0.0
    %8450 = vmatprep.subr.mxu0 0.0
    %8451 = vmatpush2.xpose.msra.mxu0 0.0
    %8452 = vmatprep.subr.mxu0 0.0
    %8453 = vmatpush2.xpose.msra.mxu0 0.0
    %8454 = vmatprep.subr.mxu0 0.0
    %8455 = vmatpush2.xpose.msra.mxu0 0.0
    %8456 = vmatprep.subr.mxu0 0.0
    %8457 = vmatpush2.xpose.msra.mxu0 0.0
    %8458 = vmatprep.subr.mxu0 0.0
    %8459 = vmatpush2.xpose.msra.mxu0 0.0
    %8460 = vmatprep.subr.mxu0 0.0
    %8461 = vmatpush2.xpose.msra.mxu0 0.0
    %8462 = vmatprep.subr.mxu0 0.0
    %8463 = vmatpush2.xpose.msra.mxu0 0.0
    %8464 = vmatprep.mubr.f32.mxu0 0.0
    %8465 = vmatmul.mubr.f32.gmra.mxu0 %v8395
    %v8466 = vpop.f32.mrf.mxu0
    %v8467 = vadd.f32 0.0, %v8466
    %v8468 = vpop.f32.mrf.mxu0
    %8469 = vdwg.mxu0
    %v8471 = vsel %vm1403, %v8241, 0
    %v8474 = vsel %vm1403, %v7525, 0
    %8476 = vmatprep.subr.mxu0 0.0
    %8477 = vmatpush1.xpose.msra.mxu0 0.0
    %8478 = vmatprep.subr.mxu0 0.0
    %8479 = vmatpush1.xpose.msra.mxu0 0.0
    %8480 = vmatprep.subr.mxu0 0.0
    %8481 = vmatpush1.xpose.msra.mxu0 0.0
    %8482 = vmatprep.subr.mxu0 0.0
    %8483 = vmatpush1.xpose.msra.mxu0 0.0
    %8484 = vmatprep.subr.mxu0 0.0
    %8485 = vmatpush1.xpose.msra.mxu0 0.0
    %8486 = vmatprep.subr.mxu0 0.0
    %8487 = vmatpush1.xpose.msra.mxu0 0.0
    %8488 = vmatprep.subr.mxu0 0.0
    %8489 = vmatpush1.xpose.msra.mxu0 0.0
    %8490 = vmatprep.subr.mxu0 0.0
    %8491 = vmatpush1.xpose.msra.mxu0 0.0
    %8492 = vmatprep.subr.mxu0 0.0
    %8493 = vmatpush1.xpose.msra.mxu0 0.0
    %8494 = vmatprep.subr.mxu0 0.0
    %8495 = vmatpush1.xpose.msra.mxu0 0.0
    %8496 = vmatprep.subr.mxu0 0.0
    %8497 = vmatpush1.xpose.msra.mxu0 0.0
    %8498 = vmatprep.subr.mxu0 0.0
    %8499 = vmatpush1.xpose.msra.mxu0 0.0
    %8500 = vmatprep.subr.mxu0 0.0
    %8501 = vmatpush1.xpose.msra.mxu0 0.0
    %8502 = vmatprep.subr.mxu0 0.0
    %8503 = vmatpush1.xpose.msra.mxu0 0.0
    %8504 = vmatprep.subr.mxu0 0.0
    %8505 = vmatpush1.xpose.msra.mxu0 0.0
    %8506 = vmatprep.subr.mxu0 0.0
    %8507 = vmatpush1.xpose.msra.mxu0 %v8474
    %8508 = vmatprep.subr.mxu0 0.0
    %8509 = vmatpush2.xpose.msra.mxu0 0.0
    %8510 = vmatprep.subr.mxu0 0.0
    %8511 = vmatpush2.xpose.msra.mxu0 0.0
    %8512 = vmatprep.subr.mxu0 0.0
    %8513 = vmatpush2.xpose.msra.mxu0 0.0
    %8514 = vmatprep.subr.mxu0 0.0
    %8515 = vmatpush2.xpose.msra.mxu0 0.0
    %8516 = vmatprep.subr.mxu0 0.0
    %8517 = vmatpush2.xpose.msra.mxu0 0.0
    %8518 = vmatprep.subr.mxu0 0.0
    %8519 = vmatpush2.xpose.msra.mxu0 0.0
    %8520 = vmatprep.subr.mxu0 0.0
    %8521 = vmatpush2.xpose.msra.mxu0 0.0
    %8522 = vmatprep.subr.mxu0 0.0
    %8523 = vmatpush2.xpose.msra.mxu0 0.0
    %8524 = vmatprep.subr.mxu0 0.0
    %8525 = vmatpush2.xpose.msra.mxu0 0.0
    %8526 = vmatprep.subr.mxu0 0.0
    %8527 = vmatpush2.xpose.msra.mxu0 0.0
    %8528 = vmatprep.subr.mxu0 0.0
    %8529 = vmatpush2.xpose.msra.mxu0 0.0
    %8530 = vmatprep.subr.mxu0 0.0
    %8531 = vmatpush2.xpose.msra.mxu0 0.0
    %8532 = vmatprep.subr.mxu0 0.0
    %8533 = vmatpush2.xpose.msra.mxu0 0.0
    %8534 = vmatprep.subr.mxu0 0.0
    %8535 = vmatpush2.xpose.msra.mxu0 0.0
    %8536 = vmatprep.subr.mxu0 0.0
    %8537 = vmatpush2.xpose.msra.mxu0 0.0
    %8538 = vmatprep.subr.mxu0 0.0
    %8539 = vmatpush2.xpose.msra.mxu0 0.0
    %8540 = vmatprep.mubr.f32.mxu0 0.0
    %8541 = vmatmul.mubr.f32.gmra.mxu0 %v8471
    %v8542 = vpop.f32.mrf.mxu0
    %v8543 = vadd.f32 0.0, %v8542
    %v8544 = vpop.f32.mrf.mxu0
    %8545 = vdwg.mxu0
    %8546 = vxpose.xlu0.b32.start [1/16] %v8315, 128
    %8547 = vxpose.xlu0.b32.cont [2/16] 0.0, 128
    %8548 = vxpose.xlu0.b32.cont [3/16] 0.0, 128
    %8549 = vxpose.xlu0.b32.cont [4/16] 0.0, 128
    %8550 = vxpose.xlu0.b32.cont [5/16] 0.0, 128
    %8551 = vxpose.xlu0.b32.cont [6/16] 0.0, 128
    %8552 = vxpose.xlu0.b32.cont [7/16] 0.0, 128
    %8553 = vxpose.xlu0.b32.cont [8/16] 0.0, 128
    %8554 = vxpose.xlu0.b32.cont [9/16] 0.0, 128
    %8555 = vxpose.xlu0.b32.cont [10/16] 0.0, 128
    %8556 = vxpose.xlu0.b32.cont [11/16] 0.0, 128
    %8557 = vxpose.xlu0.b32.cont [12/16] 0.0, 128
    %8558 = vxpose.xlu0.b32.cont [13/16] 0.0, 128
    %8559 = vxpose.xlu0.b32.cont [14/16] 0.0, 128
    %8560 = vxpose.xlu0.b32.cont [15/16] 0.0, 128
    %8561 = vxpose.xlu0.b32.end [16/16] 0.0, 128
    %v8562 = vpop.trf.xlu0
    %v8563 = vpop.trf.xlu0
    %v8564 = vpop.trf.xlu0
    %v8565 = vpop.trf.xlu0
    %v8566 = vpop.trf.xlu0
    %v8567 = vpop.trf.xlu0
    %v8568 = vpop.trf.xlu0
    %v8569 = vpop.trf.xlu0
    %v8570 = vpop.trf.xlu0
    %v8571 = vpop.trf.xlu0
    %v8572 = vpop.trf.xlu0
    %v8573 = vpop.trf.xlu0
    %v8574 = vpop.trf.xlu0
    %v8575 = vpop.trf.xlu0
    %v8576 = vpop.trf.xlu0
    %v8577 = vpop.trf.xlu0
    %8578 = vxpose.xlu0.b32.start [1/16] %v8391, 128
    %8579 = vxpose.xlu0.b32.cont [2/16] 0.0, 128
    %8580 = vxpose.xlu0.b32.cont [3/16] 0.0, 128
    %8581 = vxpose.xlu0.b32.cont [4/16] 0.0, 128
    %8582 = vxpose.xlu0.b32.cont [5/16] 0.0, 128
    %8583 = vxpose.xlu0.b32.cont [6/16] 0.0, 128
    %8584 = vxpose.xlu0.b32.cont [7/16] 0.0, 128
    %8585 = vxpose.xlu0.b32.cont [8/16] 0.0, 128
    %8586 = vxpose.xlu0.b32.cont [9/16] 0.0, 128
    %8587 = vxpose.xlu0.b32.cont [10/16] 0.0, 128
    %8588 = vxpose.xlu0.b32.cont [11/16] 0.0, 128
    %8589 = vxpose.xlu0.b32.cont [12/16] 0.0, 128
    %8590 = vxpose.xlu0.b32.cont [13/16] 0.0, 128
    %8591 = vxpose.xlu0.b32.cont [14/16] 0.0, 128
    %8592 = vxpose.xlu0.b32.cont [15/16] 0.0, 128
    %8593 = vxpose.xlu0.b32.end [16/16] 0.0, 128
    %v8594 = vpop.trf.xlu0
    %v8595 = vpop.trf.xlu0
    %v8596 = vpop.trf.xlu0
    %v8597 = vpop.trf.xlu0
    %v8598 = vpop.trf.xlu0
    %v8599 = vpop.trf.xlu0
    %v8600 = vpop.trf.xlu0
    %v8601 = vpop.trf.xlu0
    %v8602 = vpop.trf.xlu0
    %v8603 = vpop.trf.xlu0
    %v8604 = vpop.trf.xlu0
    %v8605 = vpop.trf.xlu0
    %v8606 = vpop.trf.xlu0
    %v8607 = vpop.trf.xlu0
    %v8608 = vpop.trf.xlu0
    %v8609 = vpop.trf.xlu0
    %8610 = vxpose.xlu0.b32.start [1/16] %v8467, 128
    %8611 = vxpose.xlu0.b32.cont [2/16] 0.0, 128
    %8612 = vxpose.xlu0.b32.cont [3/16] 0.0, 128
    %8613 = vxpose.xlu0.b32.cont [4/16] 0.0, 128
    %8614 = vxpose.xlu0.b32.cont [5/16] 0.0, 128
    %8615 = vxpose.xlu0.b32.cont [6/16] 0.0, 128
    %8616 = vxpose.xlu0.b32.cont [7/16] 0.0, 128
    %8617 = vxpose.xlu0.b32.cont [8/16] 0.0, 128
    %8618 = vxpose.xlu0.b32.cont [9/16] 0.0, 128
    %8619 = vxpose.xlu0.b32.cont [10/16] 0.0, 128
    %8620 = vxpose.xlu0.b32.cont [11/16] 0.0, 128
    %8621 = vxpose.xlu0.b32.cont [12/16] 0.0, 128
    %8622 = vxpose.xlu0.b32.cont [13/16] 0.0, 128
    %8623 = vxpose.xlu0.b32.cont [14/16] 0.0, 128
    %8624 = vxpose.xlu0.b32.cont [15/16] 0.0, 128
    %8625 = vxpose.xlu0.b32.end [16/16] 0.0, 128
    %v8626 = vpop.trf.xlu0
    %v8627 = vpop.trf.xlu0
    %v8628 = vpop.trf.xlu0
    %v8629 = vpop.trf.xlu0
    %v8630 = vpop.trf.xlu0
    %v8631 = vpop.trf.xlu0
    %v8632 = vpop.trf.xlu0
    %v8633 = vpop.trf.xlu0
    %v8634 = vpop.trf.xlu0
    %v8635 = vpop.trf.xlu0
    %v8636 = vpop.trf.xlu0
    %v8637 = vpop.trf.xlu0
    %v8638 = vpop.trf.xlu0
    %v8639 = vpop.trf.xlu0
    %v8640 = vpop.trf.xlu0
    %v8641 = vpop.trf.xlu0
    %8642 = vxpose.xlu0.b32.start [1/16] %v8543, 128
    %8643 = vxpose.xlu0.b32.cont [2/16] 0.0, 128
    %8644 = vxpose.xlu0.b32.cont [3/16] 0.0, 128
    %8645 = vxpose.xlu0.b32.cont [4/16] 0.0, 128
    %8646 = vxpose.xlu0.b32.cont [5/16] 0.0, 128
    %8647 = vxpose.xlu0.b32.cont [6/16] 0.0, 128
    %8648 = vxpose.xlu0.b32.cont [7/16] 0.0, 128
    %8649 = vxpose.xlu0.b32.cont [8/16] 0.0, 128
    %8650 = vxpose.xlu0.b32.cont [9/16] 0.0, 128
    %8651 = vxpose.xlu0.b32.cont [10/16] 0.0, 128
    %8652 = vxpose.xlu0.b32.cont [11/16] 0.0, 128
    %8653 = vxpose.xlu0.b32.cont [12/16] 0.0, 128
    %8654 = vxpose.xlu0.b32.cont [13/16] 0.0, 128
    %8655 = vxpose.xlu0.b32.cont [14/16] 0.0, 128
    %8656 = vxpose.xlu0.b32.cont [15/16] 0.0, 128
    %8657 = vxpose.xlu0.b32.end [16/16] 0.0, 128
    %v8658 = vpop.trf.xlu0
    %v8659 = vpop.trf.xlu0
    %v8660 = vpop.trf.xlu0
    %v8661 = vpop.trf.xlu0
    %v8662 = vpop.trf.xlu0
    %v8663 = vpop.trf.xlu0
    %v8664 = vpop.trf.xlu0
    %v8665 = vpop.trf.xlu0
    %v8666 = vpop.trf.xlu0
    %v8667 = vpop.trf.xlu0
    %v8668 = vpop.trf.xlu0
    %v8669 = vpop.trf.xlu0
    %v8670 = vpop.trf.xlu0
    %v8671 = vpop.trf.xlu0
    %v8672 = vpop.trf.xlu0
    %v8673 = vpop.trf.xlu0
    %v8674 = vcombine.low %v8562, %v8626
    %v8675 = vcombine.high %v8562, %v8626
    %v8677 = vunpack.c.l.s4 1983009808
    %v8678 = vunpack.c.0.s8 %v8677
    %v8679 = vlaneseq
    %v8680 = vshrl.u32 %v8679, 7
    %v8681 = vsub.s32 %v8678, %v8680
    %v8682 = vrot.slane %v8674, %v8681
    %v8684 = vunpack.c.l.s4 1983009808
    %v8685 = vunpack.c.0.s8 %v8684
    %v8686 = vlaneseq
    %v8687 = vshrl.u32 %v8686, 7
    %v8688 = vsub.s32 %v8685, %v8687
    %v8689 = vrot.slane %v8675, %v8688
    %v8690 = vcombine.low %v8594, %v8658
    %v8691 = vcombine.high %v8594, %v8658
    %v8693 = vunpack.c.l.s4 1983009808
    %v8694 = vunpack.c.0.s8 %v8693
    %v8695 = vlaneseq
    %v8696 = vshrl.u32 %v8695, 7
    %v8697 = vsub.s32 %v8694, %v8696
    %v8698 = vrot.slane %v8690, %v8697
    %v8700 = vunpack.c.l.s4 1983009808
    %v8701 = vunpack.c.0.s8 %v8700
    %v8702 = vlaneseq
    %v8703 = vshrl.u32 %v8702, 7
    %v8704 = vsub.s32 %v8701, %v8703
    %v8705 = vrot.slane %v8691, %v8704
    %v8706 = vcombine.low %v8682, %v8698
    %v8707 = vcombine.high %v8682, %v8698
    %v8709 = vunpack.c.l.s4 1934713408
    %v8710 = vunpack.c.0.s8 %v8709
    %v8711 = vlaneseq
    %v8712 = vshrl.u32 %v8711, 7
    %v8713 = vsub.s32 %v8710, %v8712
    %v8714 = vrot.slane %v8706, %v8713
    %v8716 = vunpack.c.l.s4 1934713408
    %v8717 = vunpack.c.0.s8 %v8716
    %v8718 = vlaneseq
    %v8719 = vshrl.u32 %v8718, 7
    %v8720 = vsub.s32 %v8717, %v8719
    %v8721 = vrot.slane %v8707, %v8720
    %v8722 = vcombine.low %v8689, %v8705
    %v8723 = vcombine.high %v8689, %v8705
    %v8725 = vunpack.c.l.s4 1934713408
    %v8726 = vunpack.c.0.s8 %v8725
    %v8727 = vlaneseq
    %v8728 = vshrl.u32 %v8727, 7
    %v8729 = vsub.s32 %v8726, %v8728
    %v8730 = vrot.slane %v8722, %v8729
    %v8732 = vunpack.c.l.s4 1934713408
    %v8733 = vunpack.c.0.s8 %v8732
    %v8734 = vlaneseq
    %v8735 = vshrl.u32 %v8734, 7
    %v8736 = vsub.s32 %v8733, %v8735
    %v8737 = vrot.slane %v8723, %v8736
    %v8738 = vcombine.high %v8714, 0.0
    %v8739 = vcombine.high %v8721, 0.0
    %v8740 = vcombine.high %v8730, 0.0
    %v8741 = vcombine.high %v8737, 0.0
    %v8742 = vcombine.low %v8714, %v8721
    %v8744 = vunpack.c.l.s4 1983009808
    %v8745 = vunpack.c.0.s8 %v8744
    %v8746 = vlaneseq
    %v8747 = vshrl.u32 %v8746, 7
    %v8748 = vsub.s32 %v8745, %v8747
    %v8749 = vrot.slane %v8742, %v8748
    %v8750 = vcombine.low %v8738, %v8739
    %v8752 = vunpack.c.l.s4 1983009808
    %v8753 = vunpack.c.0.s8 %v8752
    %v8754 = vlaneseq
    %v8755 = vshrl.u32 %v8754, 7
    %v8756 = vsub.s32 %v8753, %v8755
    %v8757 = vrot.slane %v8750, %v8756
    %v8758 = vcombine.low %v8730, %v8737
    %v8760 = vunpack.c.l.s4 1983009808
    %v8761 = vunpack.c.0.s8 %v8760
    %v8762 = vlaneseq
    %v8763 = vshrl.u32 %v8762, 7
    %v8764 = vsub.s32 %v8761, %v8763
    %v8765 = vrot.slane %v8758, %v8764
    %v8766 = vcombine.low %v8740, %v8741
    %v8768 = vunpack.c.l.s4 1983009808
    %v8769 = vunpack.c.0.s8 %v8768
    %v8770 = vlaneseq
    %v8771 = vshrl.u32 %v8770, 7
    %v8772 = vsub.s32 %v8769, %v8771
    %v8773 = vrot.slane %v8766, %v8772
    %v8774 = vcombine.low %v8749, %v8757
    %v8775 = vcombine.high %v8749, %v8757
    %v8777 = vunpack.c.l.s4 1934713408
    %v8778 = vunpack.c.0.s8 %v8777
    %v8779 = vlaneseq
    %v8780 = vshrl.u32 %v8779, 7
    %v8781 = vsub.s32 %v8778, %v8780
    %v8782 = vrot.slane %v8774, %v8781
    %v8784 = vunpack.c.l.s4 1934713408
    %v8785 = vunpack.c.0.s8 %v8784
    %v8786 = vlaneseq
    %v8787 = vshrl.u32 %v8786, 7
    %v8788 = vsub.s32 %v8785, %v8787
    %v8789 = vrot.slane %v8775, %v8788
    %v8790 = vcombine.low %v8765, %v8773
    %v8791 = vcombine.high %v8765, %v8773
    %v8793 = vunpack.c.l.s4 1934713408
    %v8794 = vunpack.c.0.s8 %v8793
    %v8795 = vlaneseq
    %v8796 = vshrl.u32 %v8795, 7
    %v8797 = vsub.s32 %v8794, %v8796
    %v8798 = vrot.slane %v8790, %v8797
    %v8800 = vunpack.c.l.s4 1934713408
    %v8801 = vunpack.c.0.s8 %v8800
    %v8802 = vlaneseq
    %v8803 = vshrl.u32 %v8802, 7
    %v8804 = vsub.s32 %v8801, %v8803
    %v8805 = vrot.slane %v8791, %v8804
    %v8806 = vcombine.low %v8782, %v8798
    %v8807 = vcombine.high %v8782, %v8798
    %v8808 = vcombine.low %v8789, %v8805
    %v8809 = vcombine.high %v8789, %v8805
    %8811 = vrot.lane.b32.xlu0 %v8807, 8
    %v8812 = vpop.permute.xlu0 %8811
    %8815 = vrot.lane.b32.xlu0 %v8808, 16
    %v8816 = vpop.permute.xlu0 %8815
    %8819 = vrot.lane.b32.xlu0 %v8809, 24
    %v8820 = vpop.permute.xlu0 %8819
    %v8822 = vsel %vm1403, %v8806, %v8812
    %v8823 = vsel %vm3041, %v8822, %v8816
    %v8824 = vsel %vm3043, %v8823, %v8820
    %v8825 = vcombine.low %v6054, %v6061
    %v8827 = vunpack.c.l.s4 1983009808
    %v8828 = vunpack.c.0.s8 %v8827
    %v8829 = vlaneseq
    %v8830 = vshrl.u32 %v8829, 7
    %v8831 = vsub.s32 %v8828, %v8830
    %v8832 = vrot.slane %v8825, %v8831
    %v8833 = vcombine.low %v6078, %v6079
    %v8835 = vunpack.c.l.s4 1983009808
    %v8836 = vunpack.c.0.s8 %v8835
    %v8837 = vlaneseq
    %v8838 = vshrl.u32 %v8837, 7
    %v8839 = vsub.s32 %v8836, %v8838
    %v8840 = vrot.slane %v8833, %v8839
    %v8841 = vcombine.low %v6070, %v6077
    %v8843 = vunpack.c.l.s4 1983009808
    %v8844 = vunpack.c.0.s8 %v8843
    %v8845 = vlaneseq
    %v8846 = vshrl.u32 %v8845, 7
    %v8847 = vsub.s32 %v8844, %v8846
    %v8848 = vrot.slane %v8841, %v8847
    %v8849 = vcombine.low %v6080, %v6081
    %v8851 = vunpack.c.l.s4 1983009808
    %v8852 = vunpack.c.0.s8 %v8851
    %v8853 = vlaneseq
    %v8854 = vshrl.u32 %v8853, 7
    %v8855 = vsub.s32 %v8852, %v8854
    %v8856 = vrot.slane %v8849, %v8855
    %v8857 = vcombine.low %v8832, %v8840
    %v8858 = vcombine.high %v8832, %v8840
    %v8860 = vunpack.c.l.s4 1934713408
    %v8861 = vunpack.c.0.s8 %v8860
    %v8862 = vlaneseq
    %v8863 = vshrl.u32 %v8862, 7
    %v8864 = vsub.s32 %v8861, %v8863
    %v8865 = vrot.slane %v8857, %v8864
    %v8867 = vunpack.c.l.s4 1934713408
    %v8868 = vunpack.c.0.s8 %v8867
    %v8869 = vlaneseq
    %v8870 = vshrl.u32 %v8869, 7
    %v8871 = vsub.s32 %v8868, %v8870
    %v8872 = vrot.slane %v8858, %v8871
    %v8873 = vcombine.low %v8848, %v8856
    %v8874 = vcombine.high %v8848, %v8856
    %v8876 = vunpack.c.l.s4 1934713408
    %v8877 = vunpack.c.0.s8 %v8876
    %v8878 = vlaneseq
    %v8879 = vshrl.u32 %v8878, 7
    %v8880 = vsub.s32 %v8877, %v8879
    %v8881 = vrot.slane %v8873, %v8880
    %v8883 = vunpack.c.l.s4 1934713408
    %v8884 = vunpack.c.0.s8 %v8883
    %v8885 = vlaneseq
    %v8886 = vshrl.u32 %v8885, 7
    %v8887 = vsub.s32 %v8884, %v8886
    %v8888 = vrot.slane %v8874, %v8887
    %v8889 = vcombine.low %v8865, %v8881
    %v8890 = vcombine.high %v8865, %v8881
    %v8891 = vcombine.low %v8872, %v8888
    %v8892 = vcombine.high %v8872, %v8888
    %8893 = vxpose.xlu0.b32.start [1/16] %v6214, 128
    %8894 = vxpose.xlu0.b32.cont [2/16] 0.0, 128
    %8895 = vxpose.xlu0.b32.cont [3/16] 0.0, 128
    %8896 = vxpose.xlu0.b32.cont [4/16] 0.0, 128
    %8897 = vxpose.xlu0.b32.cont [5/16] 0.0, 128
    %8898 = vxpose.xlu0.b32.cont [6/16] 0.0, 128
    %8899 = vxpose.xlu0.b32.cont [7/16] 0.0, 128
    %8900 = vxpose.xlu0.b32.cont [8/16] 0.0, 128
    %8901 = vxpose.xlu0.b32.cont [9/16] 0.0, 128
    %8902 = vxpose.xlu0.b32.cont [10/16] 0.0, 128
    %8903 = vxpose.xlu0.b32.cont [11/16] 0.0, 128
    %8904 = vxpose.xlu0.b32.cont [12/16] 0.0, 128
    %8905 = vxpose.xlu0.b32.cont [13/16] 0.0, 128
    %8906 = vxpose.xlu0.b32.cont [14/16] 0.0, 128
    %8907 = vxpose.xlu0.b32.cont [15/16] 0.0, 128
    %8908 = vxpose.xlu0.b32.end [16/16] 0.0, 128
    %v8909 = vpop.trf.xlu0
    %v8910 = vpop.trf.xlu0
    %v8911 = vpop.trf.xlu0
    %v8912 = vpop.trf.xlu0
    %v8913 = vpop.trf.xlu0
    %v8914 = vpop.trf.xlu0
    %v8915 = vpop.trf.xlu0
    %v8916 = vpop.trf.xlu0
    %v8917 = vpop.trf.xlu0
    %v8918 = vpop.trf.xlu0
    %v8919 = vpop.trf.xlu0
    %v8920 = vpop.trf.xlu0
    %v8921 = vpop.trf.xlu0
    %v8922 = vpop.trf.xlu0
    %v8923 = vpop.trf.xlu0
    %v8924 = vpop.trf.xlu0
    %8925 = vxpose.xlu0.b32.start [1/16] %v6238, 128
    %8926 = vxpose.xlu0.b32.cont [2/16] 0.0, 128
    %8927 = vxpose.xlu0.b32.cont [3/16] 0.0, 128
    %8928 = vxpose.xlu0.b32.cont [4/16] 0.0, 128
    %8929 = vxpose.xlu0.b32.cont [5/16] 0.0, 128
    %8930 = vxpose.xlu0.b32.cont [6/16] 0.0, 128
    %8931 = vxpose.xlu0.b32.cont [7/16] 0.0, 128
    %8932 = vxpose.xlu0.b32.cont [8/16] 0.0, 128
    %8933 = vxpose.xlu0.b32.cont [9/16] 0.0, 128
    %8934 = vxpose.xlu0.b32.cont [10/16] 0.0, 128
    %8935 = vxpose.xlu0.b32.cont [11/16] 0.0, 128
    %8936 = vxpose.xlu0.b32.cont [12/16] 0.0, 128
    %8937 = vxpose.xlu0.b32.cont [13/16] 0.0, 128
    %8938 = vxpose.xlu0.b32.cont [14/16] 0.0, 128
    %8939 = vxpose.xlu0.b32.cont [15/16] 0.0, 128
    %8940 = vxpose.xlu0.b32.end [16/16] 0.0, 128
    %v8941 = vpop.trf.xlu0
    %v8942 = vpop.trf.xlu0
    %v8943 = vpop.trf.xlu0
    %v8944 = vpop.trf.xlu0
    %v8945 = vpop.trf.xlu0
    %v8946 = vpop.trf.xlu0
    %v8947 = vpop.trf.xlu0
    %v8948 = vpop.trf.xlu0
    %v8949 = vpop.trf.xlu0
    %v8950 = vpop.trf.xlu0
    %v8951 = vpop.trf.xlu0
    %v8952 = vpop.trf.xlu0
    %v8953 = vpop.trf.xlu0
    %v8954 = vpop.trf.xlu0
    %v8955 = vpop.trf.xlu0
    %v8956 = vpop.trf.xlu0
    %8957 = vxpose.xlu0.b32.start [1/16] %v6221, 128
    %8958 = vxpose.xlu0.b32.cont [2/16] 0.0, 128
    %8959 = vxpose.xlu0.b32.cont [3/16] 0.0, 128
    %8960 = vxpose.xlu0.b32.cont [4/16] 0.0, 128
    %8961 = vxpose.xlu0.b32.cont [5/16] 0.0, 128
    %8962 = vxpose.xlu0.b32.cont [6/16] 0.0, 128
    %8963 = vxpose.xlu0.b32.cont [7/16] 0.0, 128
    %8964 = vxpose.xlu0.b32.cont [8/16] 0.0, 128
    %8965 = vxpose.xlu0.b32.cont [9/16] 0.0, 128
    %8966 = vxpose.xlu0.b32.cont [10/16] 0.0, 128
    %8967 = vxpose.xlu0.b32.cont [11/16] 0.0, 128
    %8968 = vxpose.xlu0.b32.cont [12/16] 0.0, 128
    %8969 = vxpose.xlu0.b32.cont [13/16] 0.0, 128
    %8970 = vxpose.xlu0.b32.cont [14/16] 0.0, 128
    %8971 = vxpose.xlu0.b32.cont [15/16] 0.0, 128
    %8972 = vxpose.xlu0.b32.end [16/16] 0.0, 128
    %v8973 = vpop.trf.xlu0
    %v8974 = vpop.trf.xlu0
    %v8975 = vpop.trf.xlu0
    %v8976 = vpop.trf.xlu0
    %v8977 = vpop.trf.xlu0
    %v8978 = vpop.trf.xlu0
    %v8979 = vpop.trf.xlu0
    %v8980 = vpop.trf.xlu0
    %v8981 = vpop.trf.xlu0
    %v8982 = vpop.trf.xlu0
    %v8983 = vpop.trf.xlu0
    %v8984 = vpop.trf.xlu0
    %v8985 = vpop.trf.xlu0
    %v8986 = vpop.trf.xlu0
    %v8987 = vpop.trf.xlu0
    %v8988 = vpop.trf.xlu0
    %8989 = vxpose.xlu0.b32.start [1/16] %v6239, 128
    %8990 = vxpose.xlu0.b32.cont [2/16] 0.0, 128
    %8991 = vxpose.xlu0.b32.cont [3/16] 0.0, 128
    %8992 = vxpose.xlu0.b32.cont [4/16] 0.0, 128
    %8993 = vxpose.xlu0.b32.cont [5/16] 0.0, 128
    %8994 = vxpose.xlu0.b32.cont [6/16] 0.0, 128
    %8995 = vxpose.xlu0.b32.cont [7/16] 0.0, 128
    %8996 = vxpose.xlu0.b32.cont [8/16] 0.0, 128
    %8997 = vxpose.xlu0.b32.cont [9/16] 0.0, 128
    %8998 = vxpose.xlu0.b32.cont [10/16] 0.0, 128
    %8999 = vxpose.xlu0.b32.cont [11/16] 0.0, 128
    %9000 = vxpose.xlu0.b32.cont [12/16] 0.0, 128
    %9001 = vxpose.xlu0.b32.cont [13/16] 0.0, 128
    %9002 = vxpose.xlu0.b32.cont [14/16] 0.0, 128
    %9003 = vxpose.xlu0.b32.cont [15/16] 0.0, 128
    %9004 = vxpose.xlu0.b32.end [16/16] 0.0, 128
    %v9005 = vpop.trf.xlu0
    %v9006 = vpop.trf.xlu0
    %v9007 = vpop.trf.xlu0
    %v9008 = vpop.trf.xlu0
    %v9009 = vpop.trf.xlu0
    %v9010 = vpop.trf.xlu0
    %v9011 = vpop.trf.xlu0
    %v9012 = vpop.trf.xlu0
    %v9013 = vpop.trf.xlu0
    %v9014 = vpop.trf.xlu0
    %v9015 = vpop.trf.xlu0
    %v9016 = vpop.trf.xlu0
    %v9017 = vpop.trf.xlu0
    %v9018 = vpop.trf.xlu0
    %v9019 = vpop.trf.xlu0
    %v9020 = vpop.trf.xlu0
    %9021 = vxpose.xlu0.b32.start [1/16] %v6230, 128
    %9022 = vxpose.xlu0.b32.cont [2/16] 0.0, 128
    %9023 = vxpose.xlu0.b32.cont [3/16] 0.0, 128
    %9024 = vxpose.xlu0.b32.cont [4/16] 0.0, 128
    %9025 = vxpose.xlu0.b32.cont [5/16] 0.0, 128
    %9026 = vxpose.xlu0.b32.cont [6/16] 0.0, 128
    %9027 = vxpose.xlu0.b32.cont [7/16] 0.0, 128
    %9028 = vxpose.xlu0.b32.cont [8/16] 0.0, 128
    %9029 = vxpose.xlu0.b32.cont [9/16] 0.0, 128
    %9030 = vxpose.xlu0.b32.cont [10/16] 0.0, 128
    %9031 = vxpose.xlu0.b32.cont [11/16] 0.0, 128
    %9032 = vxpose.xlu0.b32.cont [12/16] 0.0, 128
    %9033 = vxpose.xlu0.b32.cont [13/16] 0.0, 128
    %9034 = vxpose.xlu0.b32.cont [14/16] 0.0, 128
    %9035 = vxpose.xlu0.b32.cont [15/16] 0.0, 128
    %9036 = vxpose.xlu0.b32.end [16/16] 0.0, 128
    %v9037 = vpop.trf.xlu0
    %v9038 = vpop.trf.xlu0
    %v9039 = vpop.trf.xlu0
    %v9040 = vpop.trf.xlu0
    %v9041 = vpop.trf.xlu0
    %v9042 = vpop.trf.xlu0
    %v9043 = vpop.trf.xlu0
    %v9044 = vpop.trf.xlu0
    %v9045 = vpop.trf.xlu0
    %v9046 = vpop.trf.xlu0
    %v9047 = vpop.trf.xlu0
    %v9048 = vpop.trf.xlu0
    %v9049 = vpop.trf.xlu0
    %v9050 = vpop.trf.xlu0
    %v9051 = vpop.trf.xlu0
    %v9052 = vpop.trf.xlu0
    %9053 = vxpose.xlu0.b32.start [1/16] %v6240, 128
    %9054 = vxpose.xlu0.b32.cont [2/16] 0.0, 128
    %9055 = vxpose.xlu0.b32.cont [3/16] 0.0, 128
    %9056 = vxpose.xlu0.b32.cont [4/16] 0.0, 128
    %9057 = vxpose.xlu0.b32.cont [5/16] 0.0, 128
    %9058 = vxpose.xlu0.b32.cont [6/16] 0.0, 128
    %9059 = vxpose.xlu0.b32.cont [7/16] 0.0, 128
    %9060 = vxpose.xlu0.b32.cont [8/16] 0.0, 128
    %9061 = vxpose.xlu0.b32.cont [9/16] 0.0, 128
    %9062 = vxpose.xlu0.b32.cont [10/16] 0.0, 128
    %9063 = vxpose.xlu0.b32.cont [11/16] 0.0, 128
    %9064 = vxpose.xlu0.b32.cont [12/16] 0.0, 128
    %9065 = vxpose.xlu0.b32.cont [13/16] 0.0, 128
    %9066 = vxpose.xlu0.b32.cont [14/16] 0.0, 128
    %9067 = vxpose.xlu0.b32.cont [15/16] 0.0, 128
    %9068 = vxpose.xlu0.b32.end [16/16] 0.0, 128
    %v9069 = vpop.trf.xlu0
    %v9070 = vpop.trf.xlu0
    %v9071 = vpop.trf.xlu0
    %v9072 = vpop.trf.xlu0
    %v9073 = vpop.trf.xlu0
    %v9074 = vpop.trf.xlu0
    %v9075 = vpop.trf.xlu0
    %v9076 = vpop.trf.xlu0
    %v9077 = vpop.trf.xlu0
    %v9078 = vpop.trf.xlu0
    %v9079 = vpop.trf.xlu0
    %v9080 = vpop.trf.xlu0
    %v9081 = vpop.trf.xlu0
    %v9082 = vpop.trf.xlu0
    %v9083 = vpop.trf.xlu0
    %v9084 = vpop.trf.xlu0
    %9085 = vxpose.xlu0.b32.start [1/16] %v6237, 128
    %9086 = vxpose.xlu0.b32.cont [2/16] 0.0, 128
    %9087 = vxpose.xlu0.b32.cont [3/16] 0.0, 128
    %9088 = vxpose.xlu0.b32.cont [4/16] 0.0, 128
    %9089 = vxpose.xlu0.b32.cont [5/16] 0.0, 128
    %9090 = vxpose.xlu0.b32.cont [6/16] 0.0, 128
    %9091 = vxpose.xlu0.b32.cont [7/16] 0.0, 128
    %9092 = vxpose.xlu0.b32.cont [8/16] 0.0, 128
    %9093 = vxpose.xlu0.b32.cont [9/16] 0.0, 128
    %9094 = vxpose.xlu0.b32.cont [10/16] 0.0, 128
    %9095 = vxpose.xlu0.b32.cont [11/16] 0.0, 128
    %9096 = vxpose.xlu0.b32.cont [12/16] 0.0, 128
    %9097 = vxpose.xlu0.b32.cont [13/16] 0.0, 128
    %9098 = vxpose.xlu0.b32.cont [14/16] 0.0, 128
    %9099 = vxpose.xlu0.b32.cont [15/16] 0.0, 128
    %9100 = vxpose.xlu0.b32.end [16/16] 0.0, 128
    %v9101 = vpop.trf.xlu0
    %v9102 = vpop.trf.xlu0
    %v9103 = vpop.trf.xlu0
    %v9104 = vpop.trf.xlu0
    %v9105 = vpop.trf.xlu0
    %v9106 = vpop.trf.xlu0
    %v9107 = vpop.trf.xlu0
    %v9108 = vpop.trf.xlu0
    %v9109 = vpop.trf.xlu0
    %v9110 = vpop.trf.xlu0
    %v9111 = vpop.trf.xlu0
    %v9112 = vpop.trf.xlu0
    %v9113 = vpop.trf.xlu0
    %v9114 = vpop.trf.xlu0
    %v9115 = vpop.trf.xlu0
    %v9116 = vpop.trf.xlu0
    %9117 = vxpose.xlu0.b32.start [1/16] %v6241, 128
    %9118 = vxpose.xlu0.b32.cont [2/16] 0.0, 128
    %9119 = vxpose.xlu0.b32.cont [3/16] 0.0, 128
    %9120 = vxpose.xlu0.b32.cont [4/16] 0.0, 128
    %9121 = vxpose.xlu0.b32.cont [5/16] 0.0, 128
    %9122 = vxpose.xlu0.b32.cont [6/16] 0.0, 128
    %9123 = vxpose.xlu0.b32.cont [7/16] 0.0, 128
    %9124 = vxpose.xlu0.b32.cont [8/16] 0.0, 128
    %9125 = vxpose.xlu0.b32.cont [9/16] 0.0, 128
    %9126 = vxpose.xlu0.b32.cont [10/16] 0.0, 128
    %9127 = vxpose.xlu0.b32.cont [11/16] 0.0, 128
    %9128 = vxpose.xlu0.b32.cont [12/16] 0.0, 128
    %9129 = vxpose.xlu0.b32.cont [13/16] 0.0, 128
    %9130 = vxpose.xlu0.b32.cont [14/16] 0.0, 128
    %9131 = vxpose.xlu0.b32.cont [15/16] 0.0, 128
    %9132 = vxpose.xlu0.b32.end [16/16] 0.0, 128
    %v9133 = vpop.trf.xlu0
    %v9134 = vpop.trf.xlu0
    %v9135 = vpop.trf.xlu0
    %v9136 = vpop.trf.xlu0
    %v9137 = vpop.trf.xlu0
    %v9138 = vpop.trf.xlu0
    %v9139 = vpop.trf.xlu0
    %v9140 = vpop.trf.xlu0
    %v9141 = vpop.trf.xlu0
    %v9142 = vpop.trf.xlu0
    %v9143 = vpop.trf.xlu0
    %v9144 = vpop.trf.xlu0
    %v9145 = vpop.trf.xlu0
    %v9146 = vpop.trf.xlu0
    %v9147 = vpop.trf.xlu0
    %v9148 = vpop.trf.xlu0
    %v9149 = vcombine.low %v8909, %v8973
    %v9150 = vcombine.high %v8909, %v8973
    %v9152 = vunpack.c.l.s4 1983009808
    %v9153 = vunpack.c.0.s8 %v9152
    %v9154 = vlaneseq
    %v9155 = vshrl.u32 %v9154, 7
    %v9156 = vsub.s32 %v9153, %v9155
    %v9157 = vrot.slane %v9149, %v9156
    %v9159 = vunpack.c.l.s4 1983009808
    %v9160 = vunpack.c.0.s8 %v9159
    %v9161 = vlaneseq
    %v9162 = vshrl.u32 %v9161, 7
    %v9163 = vsub.s32 %v9160, %v9162
    %v9164 = vrot.slane %v9150, %v9163
    %v9165 = vcombine.low %v8941, %v9005
    %v9166 = vcombine.high %v8941, %v9005
    %v9168 = vunpack.c.l.s4 1983009808
    %v9169 = vunpack.c.0.s8 %v9168
    %v9170 = vlaneseq
    %v9171 = vshrl.u32 %v9170, 7
    %v9172 = vsub.s32 %v9169, %v9171
    %v9173 = vrot.slane %v9165, %v9172
    %v9175 = vunpack.c.l.s4 1983009808
    %v9176 = vunpack.c.0.s8 %v9175
    %v9177 = vlaneseq
    %v9178 = vshrl.u32 %v9177, 7
    %v9179 = vsub.s32 %v9176, %v9178
    %v9180 = vrot.slane %v9166, %v9179
    %v9181 = vcombine.low %v9037, %v9101
    %v9182 = vcombine.high %v9037, %v9101
    %v9184 = vunpack.c.l.s4 1983009808
    %v9185 = vunpack.c.0.s8 %v9184
    %v9186 = vlaneseq
    %v9187 = vshrl.u32 %v9186, 7
    %v9188 = vsub.s32 %v9185, %v9187
    %v9189 = vrot.slane %v9181, %v9188
    %v9191 = vunpack.c.l.s4 1983009808
    %v9192 = vunpack.c.0.s8 %v9191
    %v9193 = vlaneseq
    %v9194 = vshrl.u32 %v9193, 7
    %v9195 = vsub.s32 %v9192, %v9194
    %v9196 = vrot.slane %v9182, %v9195
    %v9197 = vcombine.low %v9069, %v9133
    %v9198 = vcombine.high %v9069, %v9133
    %v9200 = vunpack.c.l.s4 1983009808
    %v9201 = vunpack.c.0.s8 %v9200
    %v9202 = vlaneseq
    %v9203 = vshrl.u32 %v9202, 7
    %v9204 = vsub.s32 %v9201, %v9203
    %v9205 = vrot.slane %v9197, %v9204
    %v9207 = vunpack.c.l.s4 1983009808
    %v9208 = vunpack.c.0.s8 %v9207
    %v9209 = vlaneseq
    %v9210 = vshrl.u32 %v9209, 7
    %v9211 = vsub.s32 %v9208, %v9210
    %v9212 = vrot.slane %v9198, %v9211
    %v9213 = vcombine.low %v9157, %v9173
    %v9214 = vcombine.high %v9157, %v9173
    %v9216 = vunpack.c.l.s4 1934713408
    %v9217 = vunpack.c.0.s8 %v9216
    %v9218 = vlaneseq
    %v9219 = vshrl.u32 %v9218, 7
    %v9220 = vsub.s32 %v9217, %v9219
    %v9221 = vrot.slane %v9213, %v9220
    %v9223 = vunpack.c.l.s4 1934713408
    %v9224 = vunpack.c.0.s8 %v9223
    %v9225 = vlaneseq
    %v9226 = vshrl.u32 %v9225, 7
    %v9227 = vsub.s32 %v9224, %v9226
    %v9228 = vrot.slane %v9214, %v9227
    %v9229 = vcombine.low %v9164, %v9180
    %v9230 = vcombine.high %v9164, %v9180
    %v9232 = vunpack.c.l.s4 1934713408
    %v9233 = vunpack.c.0.s8 %v9232
    %v9234 = vlaneseq
    %v9235 = vshrl.u32 %v9234, 7
    %v9236 = vsub.s32 %v9233, %v9235
    %v9237 = vrot.slane %v9229, %v9236
    %v9239 = vunpack.c.l.s4 1934713408
    %v9240 = vunpack.c.0.s8 %v9239
    %v9241 = vlaneseq
    %v9242 = vshrl.u32 %v9241, 7
    %v9243 = vsub.s32 %v9240, %v9242
    %v9244 = vrot.slane %v9230, %v9243
    %v9245 = vcombine.low %v9189, %v9205
    %v9246 = vcombine.high %v9189, %v9205
    %v9248 = vunpack.c.l.s4 1934713408
    %v9249 = vunpack.c.0.s8 %v9248
    %v9250 = vlaneseq
    %v9251 = vshrl.u32 %v9250, 7
    %v9252 = vsub.s32 %v9249, %v9251
    %v9253 = vrot.slane %v9245, %v9252
    %v9255 = vunpack.c.l.s4 1934713408
    %v9256 = vunpack.c.0.s8 %v9255
    %v9257 = vlaneseq
    %v9258 = vshrl.u32 %v9257, 7
    %v9259 = vsub.s32 %v9256, %v9258
    %v9260 = vrot.slane %v9246, %v9259
    %v9261 = vcombine.low %v9196, %v9212
    %v9262 = vcombine.high %v9196, %v9212
    %v9264 = vunpack.c.l.s4 1934713408
    %v9265 = vunpack.c.0.s8 %v9264
    %v9266 = vlaneseq
    %v9267 = vshrl.u32 %v9266, 7
    %v9268 = vsub.s32 %v9265, %v9267
    %v9269 = vrot.slane %v9261, %v9268
    %v9271 = vunpack.c.l.s4 1934713408
    %v9272 = vunpack.c.0.s8 %v9271
    %v9273 = vlaneseq
    %v9274 = vshrl.u32 %v9273, 7
    %v9275 = vsub.s32 %v9272, %v9274
    %v9276 = vrot.slane %v9262, %v9275
    %v9277 = vcombine.low %v9221, %v9253
    %v9278 = vcombine.high %v9221, %v9253
    %v9279 = vcombine.low %v9228, %v9260
    %v9280 = vcombine.high %v9228, %v9260
    %v9281 = vcombine.low %v9237, %v9269
    %v9282 = vcombine.high %v9237, %v9269
    %v9283 = vcombine.low %v9244, %v9276
    %v9284 = vcombine.high %v9244, %v9276
    %9285 = vxpose.xlu0.b32.start [1/16] %v9277, 128
    %9286 = vxpose.xlu0.b32.cont [2/16] 0.0, 128
    %9287 = vxpose.xlu0.b32.cont [3/16] 0.0, 128
    %9288 = vxpose.xlu0.b32.cont [4/16] 0.0, 128
    %9289 = vxpose.xlu0.b32.cont [5/16] 0.0, 128
    %9290 = vxpose.xlu0.b32.cont [6/16] 0.0, 128
    %9291 = vxpose.xlu0.b32.cont [7/16] 0.0, 128
    %9292 = vxpose.xlu0.b32.cont [8/16] 0.0, 128
    %9293 = vxpose.xlu0.b32.cont [9/16] 0.0, 128
    %9294 = vxpose.xlu0.b32.cont [10/16] 0.0, 128
    %9295 = vxpose.xlu0.b32.cont [11/16] 0.0, 128
    %9296 = vxpose.xlu0.b32.cont [12/16] 0.0, 128
    %9297 = vxpose.xlu0.b32.cont [13/16] 0.0, 128
    %9298 = vxpose.xlu0.b32.cont [14/16] 0.0, 128
    %9299 = vxpose.xlu0.b32.cont [15/16] 0.0, 128
    %9300 = vxpose.xlu0.b32.end [16/16] 0.0, 128
    %v9301 = vpop.trf.xlu0
    %v9302 = vpop.trf.xlu0
    %v9303 = vpop.trf.xlu0
    %v9304 = vpop.trf.xlu0
    %v9305 = vpop.trf.xlu0
    %v9306 = vpop.trf.xlu0
    %v9307 = vpop.trf.xlu0
    %v9308 = vpop.trf.xlu0
    %v9309 = vpop.trf.xlu0
    %v9310 = vpop.trf.xlu0
    %v9311 = vpop.trf.xlu0
    %v9312 = vpop.trf.xlu0
    %v9313 = vpop.trf.xlu0
    %v9314 = vpop.trf.xlu0
    %v9315 = vpop.trf.xlu0
    %v9316 = vpop.trf.xlu0
    %9317 = vxpose.xlu0.b32.start [1/16] %v9278, 128
    %9318 = vxpose.xlu0.b32.cont [2/16] 0.0, 128
    %9319 = vxpose.xlu0.b32.cont [3/16] 0.0, 128
    %9320 = vxpose.xlu0.b32.cont [4/16] 0.0, 128
    %9321 = vxpose.xlu0.b32.cont [5/16] 0.0, 128
    %9322 = vxpose.xlu0.b32.cont [6/16] 0.0, 128
    %9323 = vxpose.xlu0.b32.cont [7/16] 0.0, 128
    %9324 = vxpose.xlu0.b32.cont [8/16] 0.0, 128
    %9325 = vxpose.xlu0.b32.cont [9/16] 0.0, 128
    %9326 = vxpose.xlu0.b32.cont [10/16] 0.0, 128
    %9327 = vxpose.xlu0.b32.cont [11/16] 0.0, 128
    %9328 = vxpose.xlu0.b32.cont [12/16] 0.0, 128
    %9329 = vxpose.xlu0.b32.cont [13/16] 0.0, 128
    %9330 = vxpose.xlu0.b32.cont [14/16] 0.0, 128
    %9331 = vxpose.xlu0.b32.cont [15/16] 0.0, 128
    %9332 = vxpose.xlu0.b32.end [16/16] 0.0, 128
    %v9333 = vpop.trf.xlu0
    %v9334 = vpop.trf.xlu0
    %v9335 = vpop.trf.xlu0
    %v9336 = vpop.trf.xlu0
    %v9337 = vpop.trf.xlu0
    %v9338 = vpop.trf.xlu0
    %v9339 = vpop.trf.xlu0
    %v9340 = vpop.trf.xlu0
    %v9341 = vpop.trf.xlu0
    %v9342 = vpop.trf.xlu0
    %v9343 = vpop.trf.xlu0
    %v9344 = vpop.trf.xlu0
    %v9345 = vpop.trf.xlu0
    %v9346 = vpop.trf.xlu0
    %v9347 = vpop.trf.xlu0
    %v9348 = vpop.trf.xlu0
    %9349 = vxpose.xlu0.b32.start [1/16] %v9279, 128
    %9350 = vxpose.xlu0.b32.cont [2/16] 0.0, 128
    %9351 = vxpose.xlu0.b32.cont [3/16] 0.0, 128
    %9352 = vxpose.xlu0.b32.cont [4/16] 0.0, 128
    %9353 = vxpose.xlu0.b32.cont [5/16] 0.0, 128
    %9354 = vxpose.xlu0.b32.cont [6/16] 0.0, 128
    %9355 = vxpose.xlu0.b32.cont [7/16] 0.0, 128
    %9356 = vxpose.xlu0.b32.cont [8/16] 0.0, 128
    %9357 = vxpose.xlu0.b32.cont [9/16] 0.0, 128
    %9358 = vxpose.xlu0.b32.cont [10/16] 0.0, 128
    %9359 = vxpose.xlu0.b32.cont [11/16] 0.0, 128
    %9360 = vxpose.xlu0.b32.cont [12/16] 0.0, 128
    %9361 = vxpose.xlu0.b32.cont [13/16] 0.0, 128
    %9362 = vxpose.xlu0.b32.cont [14/16] 0.0, 128
    %9363 = vxpose.xlu0.b32.cont [15/16] 0.0, 128
    %9364 = vxpose.xlu0.b32.end [16/16] 0.0, 128
    %v9365 = vpop.trf.xlu0
    %v9366 = vpop.trf.xlu0
    %v9367 = vpop.trf.xlu0
    %v9368 = vpop.trf.xlu0
    %v9369 = vpop.trf.xlu0
    %v9370 = vpop.trf.xlu0
    %v9371 = vpop.trf.xlu0
    %v9372 = vpop.trf.xlu0
    %v9373 = vpop.trf.xlu0
    %v9374 = vpop.trf.xlu0
    %v9375 = vpop.trf.xlu0
    %v9376 = vpop.trf.xlu0
    %v9377 = vpop.trf.xlu0
    %v9378 = vpop.trf.xlu0
    %v9379 = vpop.trf.xlu0
    %v9380 = vpop.trf.xlu0
    %9381 = vxpose.xlu0.b32.start [1/16] %v9280, 128
    %9382 = vxpose.xlu0.b32.cont [2/16] 0.0, 128
    %9383 = vxpose.xlu0.b32.cont [3/16] 0.0, 128
    %9384 = vxpose.xlu0.b32.cont [4/16] 0.0, 128
    %9385 = vxpose.xlu0.b32.cont [5/16] 0.0, 128
    %9386 = vxpose.xlu0.b32.cont [6/16] 0.0, 128
    %9387 = vxpose.xlu0.b32.cont [7/16] 0.0, 128
    %9388 = vxpose.xlu0.b32.cont [8/16] 0.0, 128
    %9389 = vxpose.xlu0.b32.cont [9/16] 0.0, 128
    %9390 = vxpose.xlu0.b32.cont [10/16] 0.0, 128
    %9391 = vxpose.xlu0.b32.cont [11/16] 0.0, 128
    %9392 = vxpose.xlu0.b32.cont [12/16] 0.0, 128
    %9393 = vxpose.xlu0.b32.cont [13/16] 0.0, 128
    %9394 = vxpose.xlu0.b32.cont [14/16] 0.0, 128
    %9395 = vxpose.xlu0.b32.cont [15/16] 0.0, 128
    %9396 = vxpose.xlu0.b32.end [16/16] 0.0, 128
    %v9397 = vpop.trf.xlu0
    %v9398 = vpop.trf.xlu0
    %v9399 = vpop.trf.xlu0
    %v9400 = vpop.trf.xlu0
    %v9401 = vpop.trf.xlu0
    %v9402 = vpop.trf.xlu0
    %v9403 = vpop.trf.xlu0
    %v9404 = vpop.trf.xlu0
    %v9405 = vpop.trf.xlu0
    %v9406 = vpop.trf.xlu0
    %v9407 = vpop.trf.xlu0
    %v9408 = vpop.trf.xlu0
    %v9409 = vpop.trf.xlu0
    %v9410 = vpop.trf.xlu0
    %v9411 = vpop.trf.xlu0
    %v9412 = vpop.trf.xlu0
    %9413 = vxpose.xlu0.b32.start [1/16] %v9281, 128
    %9414 = vxpose.xlu0.b32.cont [2/16] 0.0, 128
    %9415 = vxpose.xlu0.b32.cont [3/16] 0.0, 128
    %9416 = vxpose.xlu0.b32.cont [4/16] 0.0, 128
    %9417 = vxpose.xlu0.b32.cont [5/16] 0.0, 128
    %9418 = vxpose.xlu0.b32.cont [6/16] 0.0, 128
    %9419 = vxpose.xlu0.b32.cont [7/16] 0.0, 128
    %9420 = vxpose.xlu0.b32.cont [8/16] 0.0, 128
    %9421 = vxpose.xlu0.b32.cont [9/16] 0.0, 128
    %9422 = vxpose.xlu0.b32.cont [10/16] 0.0, 128
    %9423 = vxpose.xlu0.b32.cont [11/16] 0.0, 128
    %9424 = vxpose.xlu0.b32.cont [12/16] 0.0, 128
    %9425 = vxpose.xlu0.b32.cont [13/16] 0.0, 128
    %9426 = vxpose.xlu0.b32.cont [14/16] 0.0, 128
    %9427 = vxpose.xlu0.b32.cont [15/16] 0.0, 128
    %9428 = vxpose.xlu0.b32.end [16/16] 0.0, 128
    %v9429 = vpop.trf.xlu0
    %v9430 = vpop.trf.xlu0
    %v9431 = vpop.trf.xlu0
    %v9432 = vpop.trf.xlu0
    %v9433 = vpop.trf.xlu0
    %v9434 = vpop.trf.xlu0
    %v9435 = vpop.trf.xlu0
    %v9436 = vpop.trf.xlu0
    %v9437 = vpop.trf.xlu0
    %v9438 = vpop.trf.xlu0
    %v9439 = vpop.trf.xlu0
    %v9440 = vpop.trf.xlu0
    %v9441 = vpop.trf.xlu0
    %v9442 = vpop.trf.xlu0
    %v9443 = vpop.trf.xlu0
    %v9444 = vpop.trf.xlu0
    %9445 = vxpose.xlu0.b32.start [1/16] %v9282, 128
    %9446 = vxpose.xlu0.b32.cont [2/16] 0.0, 128
    %9447 = vxpose.xlu0.b32.cont [3/16] 0.0, 128
    %9448 = vxpose.xlu0.b32.cont [4/16] 0.0, 128
    %9449 = vxpose.xlu0.b32.cont [5/16] 0.0, 128
    %9450 = vxpose.xlu0.b32.cont [6/16] 0.0, 128
    %9451 = vxpose.xlu0.b32.cont [7/16] 0.0, 128
    %9452 = vxpose.xlu0.b32.cont [8/16] 0.0, 128
    %9453 = vxpose.xlu0.b32.cont [9/16] 0.0, 128
    %9454 = vxpose.xlu0.b32.cont [10/16] 0.0, 128
    %9455 = vxpose.xlu0.b32.cont [11/16] 0.0, 128
    %9456 = vxpose.xlu0.b32.cont [12/16] 0.0, 128
    %9457 = vxpose.xlu0.b32.cont [13/16] 0.0, 128
    %9458 = vxpose.xlu0.b32.cont [14/16] 0.0, 128
    %9459 = vxpose.xlu0.b32.cont [15/16] 0.0, 128
    %9460 = vxpose.xlu0.b32.end [16/16] 0.0, 128
    %v9461 = vpop.trf.xlu0
    %v9462 = vpop.trf.xlu0
    %v9463 = vpop.trf.xlu0
    %v9464 = vpop.trf.xlu0
    %v9465 = vpop.trf.xlu0
    %v9466 = vpop.trf.xlu0
    %v9467 = vpop.trf.xlu0
    %v9468 = vpop.trf.xlu0
    %v9469 = vpop.trf.xlu0
    %v9470 = vpop.trf.xlu0
    %v9471 = vpop.trf.xlu0
    %v9472 = vpop.trf.xlu0
    %v9473 = vpop.trf.xlu0
    %v9474 = vpop.trf.xlu0
    %v9475 = vpop.trf.xlu0
    %v9476 = vpop.trf.xlu0
    %9477 = vxpose.xlu0.b32.start [1/16] %v9283, 128
    %9478 = vxpose.xlu0.b32.cont [2/16] 0.0, 128
    %9479 = vxpose.xlu0.b32.cont [3/16] 0.0, 128
    %9480 = vxpose.xlu0.b32.cont [4/16] 0.0, 128
    %9481 = vxpose.xlu0.b32.cont [5/16] 0.0, 128
    %9482 = vxpose.xlu0.b32.cont [6/16] 0.0, 128
    %9483 = vxpose.xlu0.b32.cont [7/16] 0.0, 128
    %9484 = vxpose.xlu0.b32.cont [8/16] 0.0, 128
    %9485 = vxpose.xlu0.b32.cont [9/16] 0.0, 128
    %9486 = vxpose.xlu0.b32.cont [10/16] 0.0, 128
    %9487 = vxpose.xlu0.b32.cont [11/16] 0.0, 128
    %9488 = vxpose.xlu0.b32.cont [12/16] 0.0, 128
    %9489 = vxpose.xlu0.b32.cont [13/16] 0.0, 128
    %9490 = vxpose.xlu0.b32.cont [14/16] 0.0, 128
    %9491 = vxpose.xlu0.b32.cont [15/16] 0.0, 128
    %9492 = vxpose.xlu0.b32.end [16/16] 0.0, 128
    %v9493 = vpop.trf.xlu0
    %v9494 = vpop.trf.xlu0
    %v9495 = vpop.trf.xlu0
    %v9496 = vpop.trf.xlu0
    %v9497 = vpop.trf.xlu0
    %v9498 = vpop.trf.xlu0
    %v9499 = vpop.trf.xlu0
    %v9500 = vpop.trf.xlu0
    %v9501 = vpop.trf.xlu0
    %v9502 = vpop.trf.xlu0
    %v9503 = vpop.trf.xlu0
    %v9504 = vpop.trf.xlu0
    %v9505 = vpop.trf.xlu0
    %v9506 = vpop.trf.xlu0
    %v9507 = vpop.trf.xlu0
    %v9508 = vpop.trf.xlu0
    %9509 = vxpose.xlu0.b32.start [1/16] %v9284, 128
    %9510 = vxpose.xlu0.b32.cont [2/16] 0.0, 128
    %9511 = vxpose.xlu0.b32.cont [3/16] 0.0, 128
    %9512 = vxpose.xlu0.b32.cont [4/16] 0.0, 128
    %9513 = vxpose.xlu0.b32.cont [5/16] 0.0, 128
    %9514 = vxpose.xlu0.b32.cont [6/16] 0.0, 128
    %9515 = vxpose.xlu0.b32.cont [7/16] 0.0, 128
    %9516 = vxpose.xlu0.b32.cont [8/16] 0.0, 128
    %9517 = vxpose.xlu0.b32.cont [9/16] 0.0, 128
    %9518 = vxpose.xlu0.b32.cont [10/16] 0.0, 128
    %9519 = vxpose.xlu0.b32.cont [11/16] 0.0, 128
    %9520 = vxpose.xlu0.b32.cont [12/16] 0.0, 128
    %9521 = vxpose.xlu0.b32.cont [13/16] 0.0, 128
    %9522 = vxpose.xlu0.b32.cont [14/16] 0.0, 128
    %9523 = vxpose.xlu0.b32.cont [15/16] 0.0, 128
    %9524 = vxpose.xlu0.b32.end [16/16] 0.0, 128
    %v9525 = vpop.trf.xlu0
    %v9526 = vpop.trf.xlu0
    %v9527 = vpop.trf.xlu0
    %v9528 = vpop.trf.xlu0
    %v9529 = vpop.trf.xlu0
    %v9530 = vpop.trf.xlu0
    %v9531 = vpop.trf.xlu0
    %v9532 = vpop.trf.xlu0
    %v9533 = vpop.trf.xlu0
    %v9534 = vpop.trf.xlu0
    %v9535 = vpop.trf.xlu0
    %v9536 = vpop.trf.xlu0
    %v9537 = vpop.trf.xlu0
    %v9538 = vpop.trf.xlu0
    %v9539 = vpop.trf.xlu0
    %v9540 = vpop.trf.xlu0
    %v9541 = vcombine.low %v9301, %v9365
    %v9543 = vunpack.c.l.s4 1983009808
    %v9544 = vunpack.c.0.s8 %v9543
    %v9545 = vlaneseq
    %v9546 = vshrl.u32 %v9545, 7
    %v9547 = vsub.s32 %v9544, %v9546
    %v9548 = vrot.slane %v9541, %v9547
    %v9549 = vcombine.low %v9333, %v9397
    %v9551 = vunpack.c.l.s4 1983009808
    %v9552 = vunpack.c.0.s8 %v9551
    %v9553 = vlaneseq
    %v9554 = vshrl.u32 %v9553, 7
    %v9555 = vsub.s32 %v9552, %v9554
    %v9556 = vrot.slane %v9549, %v9555
    %v9557 = vcombine.low %v9429, %v9493
    %v9559 = vunpack.c.l.s4 1983009808
    %v9560 = vunpack.c.0.s8 %v9559
    %v9561 = vlaneseq
    %v9562 = vshrl.u32 %v9561, 7
    %v9563 = vsub.s32 %v9560, %v9562
    %v9564 = vrot.slane %v9557, %v9563
    %v9565 = vcombine.low %v9461, %v9525
    %v9567 = vunpack.c.l.s4 1983009808
    %v9568 = vunpack.c.0.s8 %v9567
    %v9569 = vlaneseq
    %v9570 = vshrl.u32 %v9569, 7
    %v9571 = vsub.s32 %v9568, %v9570
    %v9572 = vrot.slane %v9565, %v9571
    %v9573 = vcombine.low %v9548, %v9556
    %v9574 = vcombine.high %v9548, %v9556
    %v9576 = vunpack.c.l.s4 1934713408
    %v9577 = vunpack.c.0.s8 %v9576
    %v9578 = vlaneseq
    %v9579 = vshrl.u32 %v9578, 7
    %v9580 = vsub.s32 %v9577, %v9579
    %v9581 = vrot.slane %v9573, %v9580
    %v9583 = vunpack.c.l.s4 1934713408
    %v9584 = vunpack.c.0.s8 %v9583
    %v9585 = vlaneseq
    %v9586 = vshrl.u32 %v9585, 7
    %v9587 = vsub.s32 %v9584, %v9586
    %v9588 = vrot.slane %v9574, %v9587
    %v9589 = vcombine.low %v9564, %v9572
    %v9590 = vcombine.high %v9564, %v9572
    %v9592 = vunpack.c.l.s4 1934713408
    %v9593 = vunpack.c.0.s8 %v9592
    %v9594 = vlaneseq
    %v9595 = vshrl.u32 %v9594, 7
    %v9596 = vsub.s32 %v9593, %v9595
    %v9597 = vrot.slane %v9589, %v9596
    %v9599 = vunpack.c.l.s4 1934713408
    %v9600 = vunpack.c.0.s8 %v9599
    %v9601 = vlaneseq
    %v9602 = vshrl.u32 %v9601, 7
    %v9603 = vsub.s32 %v9600, %v9602
    %v9604 = vrot.slane %v9590, %v9603
    %v9605 = vcombine.low %v9581, %v9597
    %v9606 = vcombine.high %v9581, %v9597
    %v9607 = vcombine.low %v9588, %v9604
    %v9608 = vcombine.high %v9588, %v9604
    %v9610 = vsel %vm1403, %v8889, 0
    %9612 = vmatprep.subr.mxu0 0.0
    %9613 = vmatpush1.msra.mxu0 0.0
    %9614 = vmatprep.subr.mxu0 0.0
    %9615 = vmatpush1.msra.mxu0 0.0
    %9616 = vmatprep.subr.mxu0 0.0
    %9617 = vmatpush1.msra.mxu0 0.0
    %9618 = vmatprep.subr.mxu0 0.0
    %9619 = vmatpush1.msra.mxu0 0.0
    %9620 = vmatprep.subr.mxu0 0.0
    %9621 = vmatpush1.msra.mxu0 0.0
    %9622 = vmatprep.subr.mxu0 0.0
    %9623 = vmatpush1.msra.mxu0 0.0
    %9624 = vmatprep.subr.mxu0 0.0
    %9625 = vmatpush1.msra.mxu0 0.0
    %9626 = vmatprep.subr.mxu0 0.0
    %9627 = vmatpush1.msra.mxu0 0.0
    %9628 = vmatprep.subr.mxu0 0.0
    %9629 = vmatpush1.msra.mxu0 0.0
    %9630 = vmatprep.subr.mxu0 0.0
    %9631 = vmatpush1.msra.mxu0 0.0
    %9632 = vmatprep.subr.mxu0 0.0
    %9633 = vmatpush1.msra.mxu0 0.0
    %9634 = vmatprep.subr.mxu0 0.0
    %9635 = vmatpush1.msra.mxu0 0.0
    %9636 = vmatprep.subr.mxu0 0.0
    %9637 = vmatpush1.msra.mxu0 0.0
    %9638 = vmatprep.subr.mxu0 0.0
    %9639 = vmatpush1.msra.mxu0 0.0
    %9640 = vmatprep.subr.mxu0 0.0
    %9641 = vmatpush1.msra.mxu0 0.0
    %9642 = vmatprep.subr.mxu0 0.0
    %9643 = vmatpush1.msra.mxu0 %v9605
    %9644 = vmatprep.subr.mxu0 0.0
    %9645 = vmatpush2.msra.mxu0 0.0
    %9646 = vmatprep.subr.mxu0 0.0
    %9647 = vmatpush2.msra.mxu0 0.0
    %9648 = vmatprep.subr.mxu0 0.0
    %9649 = vmatpush2.msra.mxu0 0.0
    %9650 = vmatprep.subr.mxu0 0.0
    %9651 = vmatpush2.msra.mxu0 0.0
    %9652 = vmatprep.subr.mxu0 0.0
    %9653 = vmatpush2.msra.mxu0 0.0
    %9654 = vmatprep.subr.mxu0 0.0
    %9655 = vmatpush2.msra.mxu0 0.0
    %9656 = vmatprep.subr.mxu0 0.0
    %9657 = vmatpush2.msra.mxu0 0.0
    %9658 = vmatprep.subr.mxu0 0.0
    %9659 = vmatpush2.msra.mxu0 0.0
    %9660 = vmatprep.subr.mxu0 0.0
    %9661 = vmatpush2.msra.mxu0 0.0
    %9662 = vmatprep.subr.mxu0 0.0
    %9663 = vmatpush2.msra.mxu0 0.0
    %9664 = vmatprep.subr.mxu0 0.0
    %9665 = vmatpush2.msra.mxu0 0.0
    %9666 = vmatprep.subr.mxu0 0.0
    %9667 = vmatpush2.msra.mxu0 0.0
    %9668 = vmatprep.subr.mxu0 0.0
    %9669 = vmatpush2.msra.mxu0 0.0
    %9670 = vmatprep.subr.mxu0 0.0
    %9671 = vmatpush2.msra.mxu0 0.0
    %9672 = vmatprep.subr.mxu0 0.0
    %9673 = vmatpush2.msra.mxu0 0.0
    %9674 = vmatprep.subr.mxu0 0.0
    %9675 = vmatpush2.msra.mxu0 0.0
    %9676 = vmatprep.mubr.f32.mxu0 0.0
    %9677 = vmatmul.mubr.f32.gmra.mxu0 %v9610
    %v9678 = vpop.f32.mrf.mxu0
    %v9679 = vadd.f32 0.0, %v9678
    %v9680 = vpop.f32.mrf.mxu0
    %9681 = vdwg.mxu0
    %v9683 = vsel %vm1403, %v8890, 0
    %9685 = vmatprep.subr.mxu0 0.0
    %9686 = vmatpush1.msra.mxu0 0.0
    %9687 = vmatprep.subr.mxu0 0.0
    %9688 = vmatpush1.msra.mxu0 0.0
    %9689 = vmatprep.subr.mxu0 0.0
    %9690 = vmatpush1.msra.mxu0 0.0
    %9691 = vmatprep.subr.mxu0 0.0
    %9692 = vmatpush1.msra.mxu0 0.0
    %9693 = vmatprep.subr.mxu0 0.0
    %9694 = vmatpush1.msra.mxu0 0.0
    %9695 = vmatprep.subr.mxu0 0.0
    %9696 = vmatpush1.msra.mxu0 0.0
    %9697 = vmatprep.subr.mxu0 0.0
    %9698 = vmatpush1.msra.mxu0 0.0
    %9699 = vmatprep.subr.mxu0 0.0
    %9700 = vmatpush1.msra.mxu0 0.0
    %9701 = vmatprep.subr.mxu0 0.0
    %9702 = vmatpush1.msra.mxu0 0.0
    %9703 = vmatprep.subr.mxu0 0.0
    %9704 = vmatpush1.msra.mxu0 0.0
    %9705 = vmatprep.subr.mxu0 0.0
    %9706 = vmatpush1.msra.mxu0 0.0
    %9707 = vmatprep.subr.mxu0 0.0
    %9708 = vmatpush1.msra.mxu0 0.0
    %9709 = vmatprep.subr.mxu0 0.0
    %9710 = vmatpush1.msra.mxu0 0.0
    %9711 = vmatprep.subr.mxu0 0.0
    %9712 = vmatpush1.msra.mxu0 0.0
    %9713 = vmatprep.subr.mxu0 0.0
    %9714 = vmatpush1.msra.mxu0 0.0
    %9715 = vmatprep.subr.mxu0 0.0
    %9716 = vmatpush1.msra.mxu0 %v9606
    %9717 = vmatprep.subr.mxu0 0.0
    %9718 = vmatpush2.msra.mxu0 0.0
    %9719 = vmatprep.subr.mxu0 0.0
    %9720 = vmatpush2.msra.mxu0 0.0
    %9721 = vmatprep.subr.mxu0 0.0
    %9722 = vmatpush2.msra.mxu0 0.0
    %9723 = vmatprep.subr.mxu0 0.0
    %9724 = vmatpush2.msra.mxu0 0.0
    %9725 = vmatprep.subr.mxu0 0.0
    %9726 = vmatpush2.msra.mxu0 0.0
    %9727 = vmatprep.subr.mxu0 0.0
    %9728 = vmatpush2.msra.mxu0 0.0
    %9729 = vmatprep.subr.mxu0 0.0
    %9730 = vmatpush2.msra.mxu0 0.0
    %9731 = vmatprep.subr.mxu0 0.0
    %9732 = vmatpush2.msra.mxu0 0.0
    %9733 = vmatprep.subr.mxu0 0.0
    %9734 = vmatpush2.msra.mxu0 0.0
    %9735 = vmatprep.subr.mxu0 0.0
    %9736 = vmatpush2.msra.mxu0 0.0
    %9737 = vmatprep.subr.mxu0 0.0
    %9738 = vmatpush2.msra.mxu0 0.0
    %9739 = vmatprep.subr.mxu0 0.0
    %9740 = vmatpush2.msra.mxu0 0.0
    %9741 = vmatprep.subr.mxu0 0.0
    %9742 = vmatpush2.msra.mxu0 0.0
    %9743 = vmatprep.subr.mxu0 0.0
    %9744 = vmatpush2.msra.mxu0 0.0
    %9745 = vmatprep.subr.mxu0 0.0
    %9746 = vmatpush2.msra.mxu0 0.0
    %9747 = vmatprep.subr.mxu0 0.0
    %9748 = vmatpush2.msra.mxu0 0.0
    %9749 = vmatprep.mubr.f32.mxu0 0.0
    %9750 = vmatmul.mubr.f32.gmra.mxu0 %v9683
    %v9751 = vpop.f32.mrf.mxu0
    %v9752 = vadd.f32 0.0, %v9751
    %v9753 = vpop.f32.mrf.mxu0
    %9754 = vdwg.mxu0
    %v9756 = vsel %vm1403, %v8891, 0
    %9758 = vmatprep.subr.mxu0 0.0
    %9759 = vmatpush1.msra.mxu0 0.0
    %9760 = vmatprep.subr.mxu0 0.0
    %9761 = vmatpush1.msra.mxu0 0.0
    %9762 = vmatprep.subr.mxu0 0.0
    %9763 = vmatpush1.msra.mxu0 0.0
    %9764 = vmatprep.subr.mxu0 0.0
    %9765 = vmatpush1.msra.mxu0 0.0
    %9766 = vmatprep.subr.mxu0 0.0
    %9767 = vmatpush1.msra.mxu0 0.0
    %9768 = vmatprep.subr.mxu0 0.0
    %9769 = vmatpush1.msra.mxu0 0.0
    %9770 = vmatprep.subr.mxu0 0.0
    %9771 = vmatpush1.msra.mxu0 0.0
    %9772 = vmatprep.subr.mxu0 0.0
    %9773 = vmatpush1.msra.mxu0 0.0
    %9774 = vmatprep.subr.mxu0 0.0
    %9775 = vmatpush1.msra.mxu0 0.0
    %9776 = vmatprep.subr.mxu0 0.0
    %9777 = vmatpush1.msra.mxu0 0.0
    %9778 = vmatprep.subr.mxu0 0.0
    %9779 = vmatpush1.msra.mxu0 0.0
    %9780 = vmatprep.subr.mxu0 0.0
    %9781 = vmatpush1.msra.mxu0 0.0
    %9782 = vmatprep.subr.mxu0 0.0
    %9783 = vmatpush1.msra.mxu0 0.0
    %9784 = vmatprep.subr.mxu0 0.0
    %9785 = vmatpush1.msra.mxu0 0.0
    %9786 = vmatprep.subr.mxu0 0.0
    %9787 = vmatpush1.msra.mxu0 0.0
    %9788 = vmatprep.subr.mxu0 0.0
    %9789 = vmatpush1.msra.mxu0 %v9607
    %9790 = vmatprep.subr.mxu0 0.0
    %9791 = vmatpush2.msra.mxu0 0.0
    %9792 = vmatprep.subr.mxu0 0.0
    %9793 = vmatpush2.msra.mxu0 0.0
    %9794 = vmatprep.subr.mxu0 0.0
    %9795 = vmatpush2.msra.mxu0 0.0
    %9796 = vmatprep.subr.mxu0 0.0
    %9797 = vmatpush2.msra.mxu0 0.0
    %9798 = vmatprep.subr.mxu0 0.0
    %9799 = vmatpush2.msra.mxu0 0.0
    %9800 = vmatprep.subr.mxu0 0.0
    %9801 = vmatpush2.msra.mxu0 0.0
    %9802 = vmatprep.subr.mxu0 0.0
    %9803 = vmatpush2.msra.mxu0 0.0
    %9804 = vmatprep.subr.mxu0 0.0
    %9805 = vmatpush2.msra.mxu0 0.0
    %9806 = vmatprep.subr.mxu0 0.0
    %9807 = vmatpush2.msra.mxu0 0.0
    %9808 = vmatprep.subr.mxu0 0.0
    %9809 = vmatpush2.msra.mxu0 0.0
    %9810 = vmatprep.subr.mxu0 0.0
    %9811 = vmatpush2.msra.mxu0 0.0
    %9812 = vmatprep.subr.mxu0 0.0
    %9813 = vmatpush2.msra.mxu0 0.0
    %9814 = vmatprep.subr.mxu0 0.0
    %9815 = vmatpush2.msra.mxu0 0.0
    %9816 = vmatprep.subr.mxu0 0.0
    %9817 = vmatpush2.msra.mxu0 0.0
    %9818 = vmatprep.subr.mxu0 0.0
    %9819 = vmatpush2.msra.mxu0 0.0
    %9820 = vmatprep.subr.mxu0 0.0
    %9821 = vmatpush2.msra.mxu0 0.0
    %9822 = vmatprep.mubr.f32.mxu0 0.0
    %9823 = vmatmul.mubr.f32.gmra.mxu0 %v9756
    %v9824 = vpop.f32.mrf.mxu0
    %v9825 = vadd.f32 0.0, %v9824
    %v9826 = vpop.f32.mrf.mxu0
    %9827 = vdwg.mxu0
    %v9829 = vsel %vm1403, %v8892, 0
    %9831 = vmatprep.subr.mxu0 0.0
    %9832 = vmatpush1.msra.mxu0 0.0
    %9833 = vmatprep.subr.mxu0 0.0
    %9834 = vmatpush1.msra.mxu0 0.0
    %9835 = vmatprep.subr.mxu0 0.0
    %9836 = vmatpush1.msra.mxu0 0.0
    %9837 = vmatprep.subr.mxu0 0.0
    %9838 = vmatpush1.msra.mxu0 0.0
    %9839 = vmatprep.subr.mxu0 0.0
    %9840 = vmatpush1.msra.mxu0 0.0
    %9841 = vmatprep.subr.mxu0 0.0
    %9842 = vmatpush1.msra.mxu0 0.0
    %9843 = vmatprep.subr.mxu0 0.0
    %9844 = vmatpush1.msra.mxu0 0.0
    %9845 = vmatprep.subr.mxu0 0.0
    %9846 = vmatpush1.msra.mxu0 0.0
    %9847 = vmatprep.subr.mxu0 0.0
    %9848 = vmatpush1.msra.mxu0 0.0
    %9849 = vmatprep.subr.mxu0 0.0
    %9850 = vmatpush1.msra.mxu0 0.0
    %9851 = vmatprep.subr.mxu0 0.0
    %9852 = vmatpush1.msra.mxu0 0.0
    %9853 = vmatprep.subr.mxu0 0.0
    %9854 = vmatpush1.msra.mxu0 0.0
    %9855 = vmatprep.subr.mxu0 0.0
    %9856 = vmatpush1.msra.mxu0 0.0
    %9857 = vmatprep.subr.mxu0 0.0
    %9858 = vmatpush1.msra.mxu0 0.0
    %9859 = vmatprep.subr.mxu0 0.0
    %9860 = vmatpush1.msra.mxu0 0.0
    %9861 = vmatprep.subr.mxu0 0.0
    %9862 = vmatpush1.msra.mxu0 %v9608
    %9863 = vmatprep.subr.mxu0 0.0
    %9864 = vmatpush2.msra.mxu0 0.0
    %9865 = vmatprep.subr.mxu0 0.0
    %9866 = vmatpush2.msra.mxu0 0.0
    %9867 = vmatprep.subr.mxu0 0.0
    %9868 = vmatpush2.msra.mxu0 0.0
    %9869 = vmatprep.subr.mxu0 0.0
    %9870 = vmatpush2.msra.mxu0 0.0
    %9871 = vmatprep.subr.mxu0 0.0
    %9872 = vmatpush2.msra.mxu0 0.0
    %9873 = vmatprep.subr.mxu0 0.0
    %9874 = vmatpush2.msra.mxu0 0.0
    %9875 = vmatprep.subr.mxu0 0.0
    %9876 = vmatpush2.msra.mxu0 0.0
    %9877 = vmatprep.subr.mxu0 0.0
    %9878 = vmatpush2.msra.mxu0 0.0
    %9879 = vmatprep.subr.mxu0 0.0
    %9880 = vmatpush2.msra.mxu0 0.0
    %9881 = vmatprep.subr.mxu0 0.0
    %9882 = vmatpush2.msra.mxu0 0.0
    %9883 = vmatprep.subr.mxu0 0.0
    %9884 = vmatpush2.msra.mxu0 0.0
    %9885 = vmatprep.subr.mxu0 0.0
    %9886 = vmatpush2.msra.mxu0 0.0
    %9887 = vmatprep.subr.mxu0 0.0
    %9888 = vmatpush2.msra.mxu0 0.0
    %9889 = vmatprep.subr.mxu0 0.0
    %9890 = vmatpush2.msra.mxu0 0.0
    %9891 = vmatprep.subr.mxu0 0.0
    %9892 = vmatpush2.msra.mxu0 0.0
    %9893 = vmatprep.subr.mxu0 0.0
    %9894 = vmatpush2.msra.mxu0 0.0
    %9895 = vmatprep.mubr.f32.mxu0 0.0
    %9896 = vmatmul.mubr.f32.gmra.mxu0 %v9829
    %v9897 = vpop.f32.mrf.mxu0
    %v9898 = vadd.f32 0.0, %v9897
    %v9899 = vpop.f32.mrf.mxu0
    %9900 = vdwg.mxu0
    %v9901 = vmul.f32 %v9679, 0.35355338
    %v9902 = vmul.f32 %v9752, 0.35355338
    %v9903 = vmul.f32 %v9825, 0.35355338
    %v9904 = vmul.f32 %v9898, 0.35355338
    %v9905 = vsel %vm1403, %v9901, -inf
    %9906 = vmax.xlane.f32.xlu0 %v9905
    %v9907 = vpop.xlane.xlu0 %9906
    %v9908 = vsel %vm1403, %v9902, -inf
    %9909 = vmax.xlane.f32.xlu0 %v9908
    %v9910 = vpop.xlane.xlu0 %9909
    %v9911 = vsel %vm1403, %v9903, -inf
    %9912 = vmax.xlane.f32.xlu0 %v9911
    %v9913 = vpop.xlane.xlu0 %9912
    %v9914 = vsel %vm1403, %v9904, -inf
    %9915 = vmax.xlane.f32.xlu0 %v9914
    %v9916 = vpop.xlane.xlu0 %9915
    %v9917 = vsub.f32 %v9901, %v9907
    %v9918 = vsub.f32 %v9902, %v9910
    %v9919 = vsub.f32 %v9903, %v9913
    %v9920 = vsub.f32 %v9904, %v9916
    %v9921 = vmul.f32 %v9917, 1.442695
    %v9922 = vpow.pop %v9921
    %v9923 = vmul.f32 %v9918, 1.442695
    %v9924 = vpow.pop %v9923
    %v9925 = vmul.f32 %v9919, 1.442695
    %v9926 = vpow.pop %v9925
    %v9927 = vmul.f32 %v9920, 1.442695
    %v9928 = vpow.pop %v9927
    %v9929 = vsel %vm1403, %v9922, 0.0
    %9930 = vadd.xlane.f32.xlu0 %v9929
    %v9931 = vpop.xlane.xlu0 %9930
    %v9932 = vsel %vm1403, %v9924, 0.0
    %9933 = vadd.xlane.f32.xlu0 %v9932
    %v9934 = vpop.xlane.xlu0 %9933
    %v9935 = vsel %vm1403, %v9926, 0.0
    %9936 = vadd.xlane.f32.xlu0 %v9935
    %v9937 = vpop.xlane.xlu0 %9936
    %v9938 = vsel %vm1403, %v9928, 0.0
    %9939 = vadd.xlane.f32.xlu0 %v9938
    %v9940 = vpop.xlane.xlu0 %9939
    %v9941 = vrcp.pop %v9931
    %v9942 = vrcp.pop %v9934
    %v9943 = vrcp.pop %v9937
    %v9944 = vrcp.pop %v9940
    %v9945 = vmul.f32 %v9922, %v9941
    %v9946 = vmul.f32 %v9924, %v9942
    %v9947 = vmul.f32 %v9926, %v9943
    %v9948 = vmul.f32 %v9928, %v9944
    %9949 = vxpose.xlu0.b32.start [1/16] %v6374, 128
    %9950 = vxpose.xlu0.b32.cont [2/16] 0.0, 128
    %9951 = vxpose.xlu0.b32.cont [3/16] 0.0, 128
    %9952 = vxpose.xlu0.b32.cont [4/16] 0.0, 128
    %9953 = vxpose.xlu0.b32.cont [5/16] 0.0, 128
    %9954 = vxpose.xlu0.b32.cont [6/16] 0.0, 128
    %9955 = vxpose.xlu0.b32.cont [7/16] 0.0, 128
    %9956 = vxpose.xlu0.b32.cont [8/16] 0.0, 128
    %9957 = vxpose.xlu0.b32.cont [9/16] 0.0, 128
    %9958 = vxpose.xlu0.b32.cont [10/16] 0.0, 128
    %9959 = vxpose.xlu0.b32.cont [11/16] 0.0, 128
    %9960 = vxpose.xlu0.b32.cont [12/16] 0.0, 128
    %9961 = vxpose.xlu0.b32.cont [13/16] 0.0, 128
    %9962 = vxpose.xlu0.b32.cont [14/16] 0.0, 128
    %9963 = vxpose.xlu0.b32.cont [15/16] 0.0, 128
    %9964 = vxpose.xlu0.b32.end [16/16] 0.0, 128
    %v9965 = vpop.trf.xlu0
    %v9966 = vpop.trf.xlu0
    %v9967 = vpop.trf.xlu0
    %v9968 = vpop.trf.xlu0
    %v9969 = vpop.trf.xlu0
    %v9970 = vpop.trf.xlu0
    %v9971 = vpop.trf.xlu0
    %v9972 = vpop.trf.xlu0
    %v9973 = vpop.trf.xlu0
    %v9974 = vpop.trf.xlu0
    %v9975 = vpop.trf.xlu0
    %v9976 = vpop.trf.xlu0
    %v9977 = vpop.trf.xlu0
    %v9978 = vpop.trf.xlu0
    %v9979 = vpop.trf.xlu0
    %v9980 = vpop.trf.xlu0
    %9981 = vxpose.xlu0.b32.start [1/16] %v6398, 128
    %9982 = vxpose.xlu0.b32.cont [2/16] 0.0, 128
    %9983 = vxpose.xlu0.b32.cont [3/16] 0.0, 128
    %9984 = vxpose.xlu0.b32.cont [4/16] 0.0, 128
    %9985 = vxpose.xlu0.b32.cont [5/16] 0.0, 128
    %9986 = vxpose.xlu0.b32.cont [6/16] 0.0, 128
    %9987 = vxpose.xlu0.b32.cont [7/16] 0.0, 128
    %9988 = vxpose.xlu0.b32.cont [8/16] 0.0, 128
    %9989 = vxpose.xlu0.b32.cont [9/16] 0.0, 128
    %9990 = vxpose.xlu0.b32.cont [10/16] 0.0, 128
    %9991 = vxpose.xlu0.b32.cont [11/16] 0.0, 128
    %9992 = vxpose.xlu0.b32.cont [12/16] 0.0, 128
    %9993 = vxpose.xlu0.b32.cont [13/16] 0.0, 128
    %9994 = vxpose.xlu0.b32.cont [14/16] 0.0, 128
    %9995 = vxpose.xlu0.b32.cont [15/16] 0.0, 128
    %9996 = vxpose.xlu0.b32.end [16/16] 0.0, 128
    %v9997 = vpop.trf.xlu0
    %v9998 = vpop.trf.xlu0
    %v9999 = vpop.trf.xlu0
    %v10000 = vpop.trf.xlu0
    %v10001 = vpop.trf.xlu0
    %v10002 = vpop.trf.xlu0
    %v10003 = vpop.trf.xlu0
    %v10004 = vpop.trf.xlu0
    %v10005 = vpop.trf.xlu0
    %v10006 = vpop.trf.xlu0
    %v10007 = vpop.trf.xlu0
    %v10008 = vpop.trf.xlu0
    %v10009 = vpop.trf.xlu0
    %v10010 = vpop.trf.xlu0
    %v10011 = vpop.trf.xlu0
    %v10012 = vpop.trf.xlu0
    %10013 = vxpose.xlu0.b32.start [1/16] %v6381, 128
    %10014 = vxpose.xlu0.b32.cont [2/16] 0.0, 128
    %10015 = vxpose.xlu0.b32.cont [3/16] 0.0, 128
    %10016 = vxpose.xlu0.b32.cont [4/16] 0.0, 128
    %10017 = vxpose.xlu0.b32.cont [5/16] 0.0, 128
    %10018 = vxpose.xlu0.b32.cont [6/16] 0.0, 128
    %10019 = vxpose.xlu0.b32.cont [7/16] 0.0, 128
    %10020 = vxpose.xlu0.b32.cont [8/16] 0.0, 128
    %10021 = vxpose.xlu0.b32.cont [9/16] 0.0, 128
    %10022 = vxpose.xlu0.b32.cont [10/16] 0.0, 128
    %10023 = vxpose.xlu0.b32.cont [11/16] 0.0, 128
    %10024 = vxpose.xlu0.b32.cont [12/16] 0.0, 128
    %10025 = vxpose.xlu0.b32.cont [13/16] 0.0, 128
    %10026 = vxpose.xlu0.b32.cont [14/16] 0.0, 128
    %10027 = vxpose.xlu0.b32.cont [15/16] 0.0, 128
    %10028 = vxpose.xlu0.b32.end [16/16] 0.0, 128
    %v10029 = vpop.trf.xlu0
    %v10030 = vpop.trf.xlu0
    %v10031 = vpop.trf.xlu0
    %v10032 = vpop.trf.xlu0
    %v10033 = vpop.trf.xlu0
    %v10034 = vpop.trf.xlu0
    %v10035 = vpop.trf.xlu0
    %v10036 = vpop.trf.xlu0
    %v10037 = vpop.trf.xlu0
    %v10038 = vpop.trf.xlu0
    %v10039 = vpop.trf.xlu0
    %v10040 = vpop.trf.xlu0
    %v10041 = vpop.trf.xlu0
    %v10042 = vpop.trf.xlu0
    %v10043 = vpop.trf.xlu0
    %v10044 = vpop.trf.xlu0
    %10045 = vxpose.xlu0.b32.start [1/16] %v6399, 128
    %10046 = vxpose.xlu0.b32.cont [2/16] 0.0, 128
    %10047 = vxpose.xlu0.b32.cont [3/16] 0.0, 128
    %10048 = vxpose.xlu0.b32.cont [4/16] 0.0, 128
    %10049 = vxpose.xlu0.b32.cont [5/16] 0.0, 128
    %10050 = vxpose.xlu0.b32.cont [6/16] 0.0, 128
    %10051 = vxpose.xlu0.b32.cont [7/16] 0.0, 128
    %10052 = vxpose.xlu0.b32.cont [8/16] 0.0, 128
    %10053 = vxpose.xlu0.b32.cont [9/16] 0.0, 128
    %10054 = vxpose.xlu0.b32.cont [10/16] 0.0, 128
    %10055 = vxpose.xlu0.b32.cont [11/16] 0.0, 128
    %10056 = vxpose.xlu0.b32.cont [12/16] 0.0, 128
    %10057 = vxpose.xlu0.b32.cont [13/16] 0.0, 128
    %10058 = vxpose.xlu0.b32.cont [14/16] 0.0, 128
    %10059 = vxpose.xlu0.b32.cont [15/16] 0.0, 128
    %10060 = vxpose.xlu0.b32.end [16/16] 0.0, 128
    %v10061 = vpop.trf.xlu0
    %v10062 = vpop.trf.xlu0
    %v10063 = vpop.trf.xlu0
    %v10064 = vpop.trf.xlu0
    %v10065 = vpop.trf.xlu0
    %v10066 = vpop.trf.xlu0
    %v10067 = vpop.trf.xlu0
    %v10068 = vpop.trf.xlu0
    %v10069 = vpop.trf.xlu0
    %v10070 = vpop.trf.xlu0
    %v10071 = vpop.trf.xlu0
    %v10072 = vpop.trf.xlu0
    %v10073 = vpop.trf.xlu0
    %v10074 = vpop.trf.xlu0
    %v10075 = vpop.trf.xlu0
    %v10076 = vpop.trf.xlu0
    %10077 = vxpose.xlu0.b32.start [1/16] %v6390, 128
    %10078 = vxpose.xlu0.b32.cont [2/16] 0.0, 128
    %10079 = vxpose.xlu0.b32.cont [3/16] 0.0, 128
    %10080 = vxpose.xlu0.b32.cont [4/16] 0.0, 128
    %10081 = vxpose.xlu0.b32.cont [5/16] 0.0, 128
    %10082 = vxpose.xlu0.b32.cont [6/16] 0.0, 128
    %10083 = vxpose.xlu0.b32.cont [7/16] 0.0, 128
    %10084 = vxpose.xlu0.b32.cont [8/16] 0.0, 128
    %10085 = vxpose.xlu0.b32.cont [9/16] 0.0, 128
    %10086 = vxpose.xlu0.b32.cont [10/16] 0.0, 128
    %10087 = vxpose.xlu0.b32.cont [11/16] 0.0, 128
    %10088 = vxpose.xlu0.b32.cont [12/16] 0.0, 128
    %10089 = vxpose.xlu0.b32.cont [13/16] 0.0, 128
    %10090 = vxpose.xlu0.b32.cont [14/16] 0.0, 128
    %10091 = vxpose.xlu0.b32.cont [15/16] 0.0, 128
    %10092 = vxpose.xlu0.b32.end [16/16] 0.0, 128
    %v10093 = vpop.trf.xlu0
    %v10094 = vpop.trf.xlu0
    %v10095 = vpop.trf.xlu0
    %v10096 = vpop.trf.xlu0
    %v10097 = vpop.trf.xlu0
    %v10098 = vpop.trf.xlu0
    %v10099 = vpop.trf.xlu0
    %v10100 = vpop.trf.xlu0
    %v10101 = vpop.trf.xlu0
    %v10102 = vpop.trf.xlu0
    %v10103 = vpop.trf.xlu0
    %v10104 = vpop.trf.xlu0
    %v10105 = vpop.trf.xlu0
    %v10106 = vpop.trf.xlu0
    %v10107 = vpop.trf.xlu0
    %v10108 = vpop.trf.xlu0
    %10109 = vxpose.xlu0.b32.start [1/16] %v6400, 128
    %10110 = vxpose.xlu0.b32.cont [2/16] 0.0, 128
    %10111 = vxpose.xlu0.b32.cont [3/16] 0.0, 128
    %10112 = vxpose.xlu0.b32.cont [4/16] 0.0, 128
    %10113 = vxpose.xlu0.b32.cont [5/16] 0.0, 128
    %10114 = vxpose.xlu0.b32.cont [6/16] 0.0, 128
    %10115 = vxpose.xlu0.b32.cont [7/16] 0.0, 128
    %10116 = vxpose.xlu0.b32.cont [8/16] 0.0, 128
    %10117 = vxpose.xlu0.b32.cont [9/16] 0.0, 128
    %10118 = vxpose.xlu0.b32.cont [10/16] 0.0, 128
    %10119 = vxpose.xlu0.b32.cont [11/16] 0.0, 128
    %10120 = vxpose.xlu0.b32.cont [12/16] 0.0, 128
    %10121 = vxpose.xlu0.b32.cont [13/16] 0.0, 128
    %10122 = vxpose.xlu0.b32.cont [14/16] 0.0, 128
    %10123 = vxpose.xlu0.b32.cont [15/16] 0.0, 128
    %10124 = vxpose.xlu0.b32.end [16/16] 0.0, 128
    %v10125 = vpop.trf.xlu0
    %v10126 = vpop.trf.xlu0
    %v10127 = vpop.trf.xlu0
    %v10128 = vpop.trf.xlu0
    %v10129 = vpop.trf.xlu0
    %v10130 = vpop.trf.xlu0
    %v10131 = vpop.trf.xlu0
    %v10132 = vpop.trf.xlu0
    %v10133 = vpop.trf.xlu0
    %v10134 = vpop.trf.xlu0
    %v10135 = vpop.trf.xlu0
    %v10136 = vpop.trf.xlu0
    %v10137 = vpop.trf.xlu0
    %v10138 = vpop.trf.xlu0
    %v10139 = vpop.trf.xlu0
    %v10140 = vpop.trf.xlu0
    %10141 = vxpose.xlu0.b32.start [1/16] %v6397, 128
    %10142 = vxpose.xlu0.b32.cont [2/16] 0.0, 128
    %10143 = vxpose.xlu0.b32.cont [3/16] 0.0, 128
    %10144 = vxpose.xlu0.b32.cont [4/16] 0.0, 128
    %10145 = vxpose.xlu0.b32.cont [5/16] 0.0, 128
    %10146 = vxpose.xlu0.b32.cont [6/16] 0.0, 128
    %10147 = vxpose.xlu0.b32.cont [7/16] 0.0, 128
    %10148 = vxpose.xlu0.b32.cont [8/16] 0.0, 128
    %10149 = vxpose.xlu0.b32.cont [9/16] 0.0, 128
    %10150 = vxpose.xlu0.b32.cont [10/16] 0.0, 128
    %10151 = vxpose.xlu0.b32.cont [11/16] 0.0, 128
    %10152 = vxpose.xlu0.b32.cont [12/16] 0.0, 128
    %10153 = vxpose.xlu0.b32.cont [13/16] 0.0, 128
    %10154 = vxpose.xlu0.b32.cont [14/16] 0.0, 128
    %10155 = vxpose.xlu0.b32.cont [15/16] 0.0, 128
    %10156 = vxpose.xlu0.b32.end [16/16] 0.0, 128
    %v10157 = vpop.trf.xlu0
    %v10158 = vpop.trf.xlu0
    %v10159 = vpop.trf.xlu0
    %v10160 = vpop.trf.xlu0
    %v10161 = vpop.trf.xlu0
    %v10162 = vpop.trf.xlu0
    %v10163 = vpop.trf.xlu0
    %v10164 = vpop.trf.xlu0
    %v10165 = vpop.trf.xlu0
    %v10166 = vpop.trf.xlu0
    %v10167 = vpop.trf.xlu0
    %v10168 = vpop.trf.xlu0
    %v10169 = vpop.trf.xlu0
    %v10170 = vpop.trf.xlu0
    %v10171 = vpop.trf.xlu0
    %v10172 = vpop.trf.xlu0
    %10173 = vxpose.xlu0.b32.start [1/16] %v6401, 128
    %10174 = vxpose.xlu0.b32.cont [2/16] 0.0, 128
    %10175 = vxpose.xlu0.b32.cont [3/16] 0.0, 128
    %10176 = vxpose.xlu0.b32.cont [4/16] 0.0, 128
    %10177 = vxpose.xlu0.b32.cont [5/16] 0.0, 128
    %10178 = vxpose.xlu0.b32.cont [6/16] 0.0, 128
    %10179 = vxpose.xlu0.b32.cont [7/16] 0.0, 128
    %10180 = vxpose.xlu0.b32.cont [8/16] 0.0, 128
    %10181 = vxpose.xlu0.b32.cont [9/16] 0.0, 128
    %10182 = vxpose.xlu0.b32.cont [10/16] 0.0, 128
    %10183 = vxpose.xlu0.b32.cont [11/16] 0.0, 128
    %10184 = vxpose.xlu0.b32.cont [12/16] 0.0, 128
    %10185 = vxpose.xlu0.b32.cont [13/16] 0.0, 128
    %10186 = vxpose.xlu0.b32.cont [14/16] 0.0, 128
    %10187 = vxpose.xlu0.b32.cont [15/16] 0.0, 128
    %10188 = vxpose.xlu0.b32.end [16/16] 0.0, 128
    %v10189 = vpop.trf.xlu0
    %v10190 = vpop.trf.xlu0
    %v10191 = vpop.trf.xlu0
    %v10192 = vpop.trf.xlu0
    %v10193 = vpop.trf.xlu0
    %v10194 = vpop.trf.xlu0
    %v10195 = vpop.trf.xlu0
    %v10196 = vpop.trf.xlu0
    %v10197 = vpop.trf.xlu0
    %v10198 = vpop.trf.xlu0
    %v10199 = vpop.trf.xlu0
    %v10200 = vpop.trf.xlu0
    %v10201 = vpop.trf.xlu0
    %v10202 = vpop.trf.xlu0
    %v10203 = vpop.trf.xlu0
    %v10204 = vpop.trf.xlu0
    %v10205 = vcombine.low %v9965, %v10029
    %v10206 = vcombine.high %v9965, %v10029
    %v10208 = vunpack.c.l.s4 1983009808
    %v10209 = vunpack.c.0.s8 %v10208
    %v10210 = vlaneseq
    %v10211 = vshrl.u32 %v10210, 7
    %v10212 = vsub.s32 %v10209, %v10211
    %v10213 = vrot.slane %v10205, %v10212
    %v10215 = vunpack.c.l.s4 1983009808
    %v10216 = vunpack.c.0.s8 %v10215
    %v10217 = vlaneseq
    %v10218 = vshrl.u32 %v10217, 7
    %v10219 = vsub.s32 %v10216, %v10218
    %v10220 = vrot.slane %v10206, %v10219
    %v10221 = vcombine.low %v9997, %v10061
    %v10222 = vcombine.high %v9997, %v10061
    %v10224 = vunpack.c.l.s4 1983009808
    %v10225 = vunpack.c.0.s8 %v10224
    %v10226 = vlaneseq
    %v10227 = vshrl.u32 %v10226, 7
    %v10228 = vsub.s32 %v10225, %v10227
    %v10229 = vrot.slane %v10221, %v10228
    %v10231 = vunpack.c.l.s4 1983009808
    %v10232 = vunpack.c.0.s8 %v10231
    %v10233 = vlaneseq
    %v10234 = vshrl.u32 %v10233, 7
    %v10235 = vsub.s32 %v10232, %v10234
    %v10236 = vrot.slane %v10222, %v10235
    %v10237 = vcombine.low %v10093, %v10157
    %v10238 = vcombine.high %v10093, %v10157
    %v10240 = vunpack.c.l.s4 1983009808
    %v10241 = vunpack.c.0.s8 %v10240
    %v10242 = vlaneseq
    %v10243 = vshrl.u32 %v10242, 7
    %v10244 = vsub.s32 %v10241, %v10243
    %v10245 = vrot.slane %v10237, %v10244
    %v10247 = vunpack.c.l.s4 1983009808
    %v10248 = vunpack.c.0.s8 %v10247
    %v10249 = vlaneseq
    %v10250 = vshrl.u32 %v10249, 7
    %v10251 = vsub.s32 %v10248, %v10250
    %v10252 = vrot.slane %v10238, %v10251
    %v10253 = vcombine.low %v10125, %v10189
    %v10254 = vcombine.high %v10125, %v10189
    %v10256 = vunpack.c.l.s4 1983009808
    %v10257 = vunpack.c.0.s8 %v10256
    %v10258 = vlaneseq
    %v10259 = vshrl.u32 %v10258, 7
    %v10260 = vsub.s32 %v10257, %v10259
    %v10261 = vrot.slane %v10253, %v10260
    %v10263 = vunpack.c.l.s4 1983009808
    %v10264 = vunpack.c.0.s8 %v10263
    %v10265 = vlaneseq
    %v10266 = vshrl.u32 %v10265, 7
    %v10267 = vsub.s32 %v10264, %v10266
    %v10268 = vrot.slane %v10254, %v10267
    %v10269 = vcombine.low %v10213, %v10229
    %v10270 = vcombine.high %v10213, %v10229
    %v10272 = vunpack.c.l.s4 1934713408
    %v10273 = vunpack.c.0.s8 %v10272
    %v10274 = vlaneseq
    %v10275 = vshrl.u32 %v10274, 7
    %v10276 = vsub.s32 %v10273, %v10275
    %v10277 = vrot.slane %v10269, %v10276
    %v10279 = vunpack.c.l.s4 1934713408
    %v10280 = vunpack.c.0.s8 %v10279
    %v10281 = vlaneseq
    %v10282 = vshrl.u32 %v10281, 7
    %v10283 = vsub.s32 %v10280, %v10282
    %v10284 = vrot.slane %v10270, %v10283
    %v10285 = vcombine.low %v10220, %v10236
    %v10286 = vcombine.high %v10220, %v10236
    %v10288 = vunpack.c.l.s4 1934713408
    %v10289 = vunpack.c.0.s8 %v10288
    %v10290 = vlaneseq
    %v10291 = vshrl.u32 %v10290, 7
    %v10292 = vsub.s32 %v10289, %v10291
    %v10293 = vrot.slane %v10285, %v10292
    %v10295 = vunpack.c.l.s4 1934713408
    %v10296 = vunpack.c.0.s8 %v10295
    %v10297 = vlaneseq
    %v10298 = vshrl.u32 %v10297, 7
    %v10299 = vsub.s32 %v10296, %v10298
    %v10300 = vrot.slane %v10286, %v10299
    %v10301 = vcombine.low %v10245, %v10261
    %v10302 = vcombine.high %v10245, %v10261
    %v10304 = vunpack.c.l.s4 1934713408
    %v10305 = vunpack.c.0.s8 %v10304
    %v10306 = vlaneseq
    %v10307 = vshrl.u32 %v10306, 7
    %v10308 = vsub.s32 %v10305, %v10307
    %v10309 = vrot.slane %v10301, %v10308
    %v10311 = vunpack.c.l.s4 1934713408
    %v10312 = vunpack.c.0.s8 %v10311
    %v10313 = vlaneseq
    %v10314 = vshrl.u32 %v10313, 7
    %v10315 = vsub.s32 %v10312, %v10314
    %v10316 = vrot.slane %v10302, %v10315
    %v10317 = vcombine.low %v10252, %v10268
    %v10318 = vcombine.high %v10252, %v10268
    %v10320 = vunpack.c.l.s4 1934713408
    %v10321 = vunpack.c.0.s8 %v10320
    %v10322 = vlaneseq
    %v10323 = vshrl.u32 %v10322, 7
    %v10324 = vsub.s32 %v10321, %v10323
    %v10325 = vrot.slane %v10317, %v10324
    %v10327 = vunpack.c.l.s4 1934713408
    %v10328 = vunpack.c.0.s8 %v10327
    %v10329 = vlaneseq
    %v10330 = vshrl.u32 %v10329, 7
    %v10331 = vsub.s32 %v10328, %v10330
    %v10332 = vrot.slane %v10318, %v10331
    %v10333 = vcombine.low %v10277, %v10309
    %v10334 = vcombine.high %v10277, %v10309
    %v10335 = vcombine.low %v10284, %v10316
    %v10336 = vcombine.high %v10284, %v10316
    %v10337 = vcombine.low %v10293, %v10325
    %v10338 = vcombine.high %v10293, %v10325
    %v10339 = vcombine.low %v10300, %v10332
    %v10340 = vcombine.high %v10300, %v10332
    %10341 = vxpose.xlu0.b32.start [1/16] %v10333, 128
    %10342 = vxpose.xlu0.b32.cont [2/16] 0.0, 128
    %10343 = vxpose.xlu0.b32.cont [3/16] 0.0, 128
    %10344 = vxpose.xlu0.b32.cont [4/16] 0.0, 128
    %10345 = vxpose.xlu0.b32.cont [5/16] 0.0, 128
    %10346 = vxpose.xlu0.b32.cont [6/16] 0.0, 128
    %10347 = vxpose.xlu0.b32.cont [7/16] 0.0, 128
    %10348 = vxpose.xlu0.b32.cont [8/16] 0.0, 128
    %10349 = vxpose.xlu0.b32.cont [9/16] 0.0, 128
    %10350 = vxpose.xlu0.b32.cont [10/16] 0.0, 128
    %10351 = vxpose.xlu0.b32.cont [11/16] 0.0, 128
    %10352 = vxpose.xlu0.b32.cont [12/16] 0.0, 128
    %10353 = vxpose.xlu0.b32.cont [13/16] 0.0, 128
    %10354 = vxpose.xlu0.b32.cont [14/16] 0.0, 128
    %10355 = vxpose.xlu0.b32.cont [15/16] 0.0, 128
    %10356 = vxpose.xlu0.b32.end [16/16] 0.0, 128
    %v10357 = vpop.trf.xlu0
    %v10358 = vpop.trf.xlu0
    %v10359 = vpop.trf.xlu0
    %v10360 = vpop.trf.xlu0
    %v10361 = vpop.trf.xlu0
    %v10362 = vpop.trf.xlu0
    %v10363 = vpop.trf.xlu0
    %v10364 = vpop.trf.xlu0
    %v10365 = vpop.trf.xlu0
    %v10366 = vpop.trf.xlu0
    %v10367 = vpop.trf.xlu0
    %v10368 = vpop.trf.xlu0
    %v10369 = vpop.trf.xlu0
    %v10370 = vpop.trf.xlu0
    %v10371 = vpop.trf.xlu0
    %v10372 = vpop.trf.xlu0
    %10373 = vxpose.xlu0.b32.start [1/16] %v10334, 128
    %10374 = vxpose.xlu0.b32.cont [2/16] 0.0, 128
    %10375 = vxpose.xlu0.b32.cont [3/16] 0.0, 128
    %10376 = vxpose.xlu0.b32.cont [4/16] 0.0, 128
    %10377 = vxpose.xlu0.b32.cont [5/16] 0.0, 128
    %10378 = vxpose.xlu0.b32.cont [6/16] 0.0, 128
    %10379 = vxpose.xlu0.b32.cont [7/16] 0.0, 128
    %10380 = vxpose.xlu0.b32.cont [8/16] 0.0, 128
    %10381 = vxpose.xlu0.b32.cont [9/16] 0.0, 128
    %10382 = vxpose.xlu0.b32.cont [10/16] 0.0, 128
    %10383 = vxpose.xlu0.b32.cont [11/16] 0.0, 128
    %10384 = vxpose.xlu0.b32.cont [12/16] 0.0, 128
    %10385 = vxpose.xlu0.b32.cont [13/16] 0.0, 128
    %10386 = vxpose.xlu0.b32.cont [14/16] 0.0, 128
    %10387 = vxpose.xlu0.b32.cont [15/16] 0.0, 128
    %10388 = vxpose.xlu0.b32.end [16/16] 0.0, 128
    %v10389 = vpop.trf.xlu0
    %v10390 = vpop.trf.xlu0
    %v10391 = vpop.trf.xlu0
    %v10392 = vpop.trf.xlu0
    %v10393 = vpop.trf.xlu0
    %v10394 = vpop.trf.xlu0
    %v10395 = vpop.trf.xlu0
    %v10396 = vpop.trf.xlu0
    %v10397 = vpop.trf.xlu0
    %v10398 = vpop.trf.xlu0
    %v10399 = vpop.trf.xlu0
    %v10400 = vpop.trf.xlu0
    %v10401 = vpop.trf.xlu0
    %v10402 = vpop.trf.xlu0
    %v10403 = vpop.trf.xlu0
    %v10404 = vpop.trf.xlu0
    %10405 = vxpose.xlu0.b32.start [1/16] %v10335, 128
    %10406 = vxpose.xlu0.b32.cont [2/16] 0.0, 128
    %10407 = vxpose.xlu0.b32.cont [3/16] 0.0, 128
    %10408 = vxpose.xlu0.b32.cont [4/16] 0.0, 128
    %10409 = vxpose.xlu0.b32.cont [5/16] 0.0, 128
    %10410 = vxpose.xlu0.b32.cont [6/16] 0.0, 128
    %10411 = vxpose.xlu0.b32.cont [7/16] 0.0, 128
    %10412 = vxpose.xlu0.b32.cont [8/16] 0.0, 128
    %10413 = vxpose.xlu0.b32.cont [9/16] 0.0, 128
    %10414 = vxpose.xlu0.b32.cont [10/16] 0.0, 128
    %10415 = vxpose.xlu0.b32.cont [11/16] 0.0, 128
    %10416 = vxpose.xlu0.b32.cont [12/16] 0.0, 128
    %10417 = vxpose.xlu0.b32.cont [13/16] 0.0, 128
    %10418 = vxpose.xlu0.b32.cont [14/16] 0.0, 128
    %10419 = vxpose.xlu0.b32.cont [15/16] 0.0, 128
    %10420 = vxpose.xlu0.b32.end [16/16] 0.0, 128
    %v10421 = vpop.trf.xlu0
    %v10422 = vpop.trf.xlu0
    %v10423 = vpop.trf.xlu0
    %v10424 = vpop.trf.xlu0
    %v10425 = vpop.trf.xlu0
    %v10426 = vpop.trf.xlu0
    %v10427 = vpop.trf.xlu0
    %v10428 = vpop.trf.xlu0
    %v10429 = vpop.trf.xlu0
    %v10430 = vpop.trf.xlu0
    %v10431 = vpop.trf.xlu0
    %v10432 = vpop.trf.xlu0
    %v10433 = vpop.trf.xlu0
    %v10434 = vpop.trf.xlu0
    %v10435 = vpop.trf.xlu0
    %v10436 = vpop.trf.xlu0
    %10437 = vxpose.xlu0.b32.start [1/16] %v10336, 128
    %10438 = vxpose.xlu0.b32.cont [2/16] 0.0, 128
    %10439 = vxpose.xlu0.b32.cont [3/16] 0.0, 128
    %10440 = vxpose.xlu0.b32.cont [4/16] 0.0, 128
    %10441 = vxpose.xlu0.b32.cont [5/16] 0.0, 128
    %10442 = vxpose.xlu0.b32.cont [6/16] 0.0, 128
    %10443 = vxpose.xlu0.b32.cont [7/16] 0.0, 128
    %10444 = vxpose.xlu0.b32.cont [8/16] 0.0, 128
    %10445 = vxpose.xlu0.b32.cont [9/16] 0.0, 128
    %10446 = vxpose.xlu0.b32.cont [10/16] 0.0, 128
    %10447 = vxpose.xlu0.b32.cont [11/16] 0.0, 128
    %10448 = vxpose.xlu0.b32.cont [12/16] 0.0, 128
    %10449 = vxpose.xlu0.b32.cont [13/16] 0.0, 128
    %10450 = vxpose.xlu0.b32.cont [14/16] 0.0, 128
    %10451 = vxpose.xlu0.b32.cont [15/16] 0.0, 128
    %10452 = vxpose.xlu0.b32.end [16/16] 0.0, 128
    %v10453 = vpop.trf.xlu0
    %v10454 = vpop.trf.xlu0
    %v10455 = vpop.trf.xlu0
    %v10456 = vpop.trf.xlu0
    %v10457 = vpop.trf.xlu0
    %v10458 = vpop.trf.xlu0
    %v10459 = vpop.trf.xlu0
    %v10460 = vpop.trf.xlu0
    %v10461 = vpop.trf.xlu0
    %v10462 = vpop.trf.xlu0
    %v10463 = vpop.trf.xlu0
    %v10464 = vpop.trf.xlu0
    %v10465 = vpop.trf.xlu0
    %v10466 = vpop.trf.xlu0
    %v10467 = vpop.trf.xlu0
    %v10468 = vpop.trf.xlu0
    %10469 = vxpose.xlu0.b32.start [1/16] %v10337, 128
    %10470 = vxpose.xlu0.b32.cont [2/16] 0.0, 128
    %10471 = vxpose.xlu0.b32.cont [3/16] 0.0, 128
    %10472 = vxpose.xlu0.b32.cont [4/16] 0.0, 128
    %10473 = vxpose.xlu0.b32.cont [5/16] 0.0, 128
    %10474 = vxpose.xlu0.b32.cont [6/16] 0.0, 128
    %10475 = vxpose.xlu0.b32.cont [7/16] 0.0, 128
    %10476 = vxpose.xlu0.b32.cont [8/16] 0.0, 128
    %10477 = vxpose.xlu0.b32.cont [9/16] 0.0, 128
    %10478 = vxpose.xlu0.b32.cont [10/16] 0.0, 128
    %10479 = vxpose.xlu0.b32.cont [11/16] 0.0, 128
    %10480 = vxpose.xlu0.b32.cont [12/16] 0.0, 128
    %10481 = vxpose.xlu0.b32.cont [13/16] 0.0, 128
    %10482 = vxpose.xlu0.b32.cont [14/16] 0.0, 128
    %10483 = vxpose.xlu0.b32.cont [15/16] 0.0, 128
    %10484 = vxpose.xlu0.b32.end [16/16] 0.0, 128
    %v10485 = vpop.trf.xlu0
    %v10486 = vpop.trf.xlu0
    %v10487 = vpop.trf.xlu0
    %v10488 = vpop.trf.xlu0
    %v10489 = vpop.trf.xlu0
    %v10490 = vpop.trf.xlu0
    %v10491 = vpop.trf.xlu0
    %v10492 = vpop.trf.xlu0
    %v10493 = vpop.trf.xlu0
    %v10494 = vpop.trf.xlu0
    %v10495 = vpop.trf.xlu0
    %v10496 = vpop.trf.xlu0
    %v10497 = vpop.trf.xlu0
    %v10498 = vpop.trf.xlu0
    %v10499 = vpop.trf.xlu0
    %v10500 = vpop.trf.xlu0
    %10501 = vxpose.xlu0.b32.start [1/16] %v10338, 128
    %10502 = vxpose.xlu0.b32.cont [2/16] 0.0, 128
    %10503 = vxpose.xlu0.b32.cont [3/16] 0.0, 128
    %10504 = vxpose.xlu0.b32.cont [4/16] 0.0, 128
    %10505 = vxpose.xlu0.b32.cont [5/16] 0.0, 128
    %10506 = vxpose.xlu0.b32.cont [6/16] 0.0, 128
    %10507 = vxpose.xlu0.b32.cont [7/16] 0.0, 128
    %10508 = vxpose.xlu0.b32.cont [8/16] 0.0, 128
    %10509 = vxpose.xlu0.b32.cont [9/16] 0.0, 128
    %10510 = vxpose.xlu0.b32.cont [10/16] 0.0, 128
    %10511 = vxpose.xlu0.b32.cont [11/16] 0.0, 128
    %10512 = vxpose.xlu0.b32.cont [12/16] 0.0, 128
    %10513 = vxpose.xlu0.b32.cont [13/16] 0.0, 128
    %10514 = vxpose.xlu0.b32.cont [14/16] 0.0, 128
    %10515 = vxpose.xlu0.b32.cont [15/16] 0.0, 128
    %10516 = vxpose.xlu0.b32.end [16/16] 0.0, 128
    %v10517 = vpop.trf.xlu0
    %v10518 = vpop.trf.xlu0
    %v10519 = vpop.trf.xlu0
    %v10520 = vpop.trf.xlu0
    %v10521 = vpop.trf.xlu0
    %v10522 = vpop.trf.xlu0
    %v10523 = vpop.trf.xlu0
    %v10524 = vpop.trf.xlu0
    %v10525 = vpop.trf.xlu0
    %v10526 = vpop.trf.xlu0
    %v10527 = vpop.trf.xlu0
    %v10528 = vpop.trf.xlu0
    %v10529 = vpop.trf.xlu0
    %v10530 = vpop.trf.xlu0
    %v10531 = vpop.trf.xlu0
    %v10532 = vpop.trf.xlu0
    %10533 = vxpose.xlu0.b32.start [1/16] %v10339, 128
    %10534 = vxpose.xlu0.b32.cont [2/16] 0.0, 128
    %10535 = vxpose.xlu0.b32.cont [3/16] 0.0, 128
    %10536 = vxpose.xlu0.b32.cont [4/16] 0.0, 128
    %10537 = vxpose.xlu0.b32.cont [5/16] 0.0, 128
    %10538 = vxpose.xlu0.b32.cont [6/16] 0.0, 128
    %10539 = vxpose.xlu0.b32.cont [7/16] 0.0, 128
    %10540 = vxpose.xlu0.b32.cont [8/16] 0.0, 128
    %10541 = vxpose.xlu0.b32.cont [9/16] 0.0, 128
    %10542 = vxpose.xlu0.b32.cont [10/16] 0.0, 128
    %10543 = vxpose.xlu0.b32.cont [11/16] 0.0, 128
    %10544 = vxpose.xlu0.b32.cont [12/16] 0.0, 128
    %10545 = vxpose.xlu0.b32.cont [13/16] 0.0, 128
    %10546 = vxpose.xlu0.b32.cont [14/16] 0.0, 128
    %10547 = vxpose.xlu0.b32.cont [15/16] 0.0, 128
    %10548 = vxpose.xlu0.b32.end [16/16] 0.0, 128
    %v10549 = vpop.trf.xlu0
    %v10550 = vpop.trf.xlu0
    %v10551 = vpop.trf.xlu0
    %v10552 = vpop.trf.xlu0
    %v10553 = vpop.trf.xlu0
    %v10554 = vpop.trf.xlu0
    %v10555 = vpop.trf.xlu0
    %v10556 = vpop.trf.xlu0
    %v10557 = vpop.trf.xlu0
    %v10558 = vpop.trf.xlu0
    %v10559 = vpop.trf.xlu0
    %v10560 = vpop.trf.xlu0
    %v10561 = vpop.trf.xlu0
    %v10562 = vpop.trf.xlu0
    %v10563 = vpop.trf.xlu0
    %v10564 = vpop.trf.xlu0
    %10565 = vxpose.xlu0.b32.start [1/16] %v10340, 128
    %10566 = vxpose.xlu0.b32.cont [2/16] 0.0, 128
    %10567 = vxpose.xlu0.b32.cont [3/16] 0.0, 128
    %10568 = vxpose.xlu0.b32.cont [4/16] 0.0, 128
    %10569 = vxpose.xlu0.b32.cont [5/16] 0.0, 128
    %10570 = vxpose.xlu0.b32.cont [6/16] 0.0, 128
    %10571 = vxpose.xlu0.b32.cont [7/16] 0.0, 128
    %10572 = vxpose.xlu0.b32.cont [8/16] 0.0, 128
    %10573 = vxpose.xlu0.b32.cont [9/16] 0.0, 128
    %10574 = vxpose.xlu0.b32.cont [10/16] 0.0, 128
    %10575 = vxpose.xlu0.b32.cont [11/16] 0.0, 128
    %10576 = vxpose.xlu0.b32.cont [12/16] 0.0, 128
    %10577 = vxpose.xlu0.b32.cont [13/16] 0.0, 128
    %10578 = vxpose.xlu0.b32.cont [14/16] 0.0, 128
    %10579 = vxpose.xlu0.b32.cont [15/16] 0.0, 128
    %10580 = vxpose.xlu0.b32.end [16/16] 0.0, 128
    %v10581 = vpop.trf.xlu0
    %v10582 = vpop.trf.xlu0
    %v10583 = vpop.trf.xlu0
    %v10584 = vpop.trf.xlu0
    %v10585 = vpop.trf.xlu0
    %v10586 = vpop.trf.xlu0
    %v10587 = vpop.trf.xlu0
    %v10588 = vpop.trf.xlu0
    %v10589 = vpop.trf.xlu0
    %v10590 = vpop.trf.xlu0
    %v10591 = vpop.trf.xlu0
    %v10592 = vpop.trf.xlu0
    %v10593 = vpop.trf.xlu0
    %v10594 = vpop.trf.xlu0
    %v10595 = vpop.trf.xlu0
    %v10596 = vpop.trf.xlu0
    %v10597 = vcombine.low %v10357, %v10421
    %v10599 = vunpack.c.l.s4 1983009808
    %v10600 = vunpack.c.0.s8 %v10599
    %v10601 = vlaneseq
    %v10602 = vshrl.u32 %v10601, 7
    %v10603 = vsub.s32 %v10600, %v10602
    %v10604 = vrot.slane %v10597, %v10603
    %v10605 = vcombine.low %v10389, %v10453
    %v10607 = vunpack.c.l.s4 1983009808
    %v10608 = vunpack.c.0.s8 %v10607
    %v10609 = vlaneseq
    %v10610 = vshrl.u32 %v10609, 7
    %v10611 = vsub.s32 %v10608, %v10610
    %v10612 = vrot.slane %v10605, %v10611
    %v10613 = vcombine.low %v10485, %v10549
    %v10615 = vunpack.c.l.s4 1983009808
    %v10616 = vunpack.c.0.s8 %v10615
    %v10617 = vlaneseq
    %v10618 = vshrl.u32 %v10617, 7
    %v10619 = vsub.s32 %v10616, %v10618
    %v10620 = vrot.slane %v10613, %v10619
    %v10621 = vcombine.low %v10517, %v10581
    %v10623 = vunpack.c.l.s4 1983009808
    %v10624 = vunpack.c.0.s8 %v10623
    %v10625 = vlaneseq
    %v10626 = vshrl.u32 %v10625, 7
    %v10627 = vsub.s32 %v10624, %v10626
    %v10628 = vrot.slane %v10621, %v10627
    %v10629 = vcombine.low %v10604, %v10612
    %v10630 = vcombine.high %v10604, %v10612
    %v10632 = vunpack.c.l.s4 1934713408
    %v10633 = vunpack.c.0.s8 %v10632
    %v10634 = vlaneseq
    %v10635 = vshrl.u32 %v10634, 7
    %v10636 = vsub.s32 %v10633, %v10635
    %v10637 = vrot.slane %v10629, %v10636
    %v10639 = vunpack.c.l.s4 1934713408
    %v10640 = vunpack.c.0.s8 %v10639
    %v10641 = vlaneseq
    %v10642 = vshrl.u32 %v10641, 7
    %v10643 = vsub.s32 %v10640, %v10642
    %v10644 = vrot.slane %v10630, %v10643
    %v10645 = vcombine.low %v10620, %v10628
    %v10646 = vcombine.high %v10620, %v10628
    %v10648 = vunpack.c.l.s4 1934713408
    %v10649 = vunpack.c.0.s8 %v10648
    %v10650 = vlaneseq
    %v10651 = vshrl.u32 %v10650, 7
    %v10652 = vsub.s32 %v10649, %v10651
    %v10653 = vrot.slane %v10645, %v10652
    %v10655 = vunpack.c.l.s4 1934713408
    %v10656 = vunpack.c.0.s8 %v10655
    %v10657 = vlaneseq
    %v10658 = vshrl.u32 %v10657, 7
    %v10659 = vsub.s32 %v10656, %v10658
    %v10660 = vrot.slane %v10646, %v10659
    %v10661 = vcombine.low %v10637, %v10653
    %v10662 = vcombine.high %v10637, %v10653
    %v10663 = vcombine.low %v10644, %v10660
    %v10664 = vcombine.high %v10644, %v10660
    %v10666 = vsel %vm1403, %v10661, 0
    %v10669 = vsel %vm1403, %v9945, 0
    %10671 = vmatprep.subr.mxu0 0.0
    %10672 = vmatpush1.xpose.msra.mxu0 0.0
    %10673 = vmatprep.subr.mxu0 0.0
    %10674 = vmatpush1.xpose.msra.mxu0 0.0
    %10675 = vmatprep.subr.mxu0 0.0
    %10676 = vmatpush1.xpose.msra.mxu0 0.0
    %10677 = vmatprep.subr.mxu0 0.0
    %10678 = vmatpush1.xpose.msra.mxu0 0.0
    %10679 = vmatprep.subr.mxu0 0.0
    %10680 = vmatpush1.xpose.msra.mxu0 0.0
    %10681 = vmatprep.subr.mxu0 0.0
    %10682 = vmatpush1.xpose.msra.mxu0 0.0
    %10683 = vmatprep.subr.mxu0 0.0
    %10684 = vmatpush1.xpose.msra.mxu0 0.0
    %10685 = vmatprep.subr.mxu0 0.0
    %10686 = vmatpush1.xpose.msra.mxu0 0.0
    %10687 = vmatprep.subr.mxu0 0.0
    %10688 = vmatpush1.xpose.msra.mxu0 0.0
    %10689 = vmatprep.subr.mxu0 0.0
    %10690 = vmatpush1.xpose.msra.mxu0 0.0
    %10691 = vmatprep.subr.mxu0 0.0
    %10692 = vmatpush1.xpose.msra.mxu0 0.0
    %10693 = vmatprep.subr.mxu0 0.0
    %10694 = vmatpush1.xpose.msra.mxu0 0.0
    %10695 = vmatprep.subr.mxu0 0.0
    %10696 = vmatpush1.xpose.msra.mxu0 0.0
    %10697 = vmatprep.subr.mxu0 0.0
    %10698 = vmatpush1.xpose.msra.mxu0 0.0
    %10699 = vmatprep.subr.mxu0 0.0
    %10700 = vmatpush1.xpose.msra.mxu0 0.0
    %10701 = vmatprep.subr.mxu0 0.0
    %10702 = vmatpush1.xpose.msra.mxu0 %v10669
    %10703 = vmatprep.subr.mxu0 0.0
    %10704 = vmatpush2.xpose.msra.mxu0 0.0
    %10705 = vmatprep.subr.mxu0 0.0
    %10706 = vmatpush2.xpose.msra.mxu0 0.0
    %10707 = vmatprep.subr.mxu0 0.0
    %10708 = vmatpush2.xpose.msra.mxu0 0.0
    %10709 = vmatprep.subr.mxu0 0.0
    %10710 = vmatpush2.xpose.msra.mxu0 0.0
    %10711 = vmatprep.subr.mxu0 0.0
    %10712 = vmatpush2.xpose.msra.mxu0 0.0
    %10713 = vmatprep.subr.mxu0 0.0
    %10714 = vmatpush2.xpose.msra.mxu0 0.0
    %10715 = vmatprep.subr.mxu0 0.0
    %10716 = vmatpush2.xpose.msra.mxu0 0.0
    %10717 = vmatprep.subr.mxu0 0.0
    %10718 = vmatpush2.xpose.msra.mxu0 0.0
    %10719 = vmatprep.subr.mxu0 0.0
    %10720 = vmatpush2.xpose.msra.mxu0 0.0
    %10721 = vmatprep.subr.mxu0 0.0
    %10722 = vmatpush2.xpose.msra.mxu0 0.0
    %10723 = vmatprep.subr.mxu0 0.0
    %10724 = vmatpush2.xpose.msra.mxu0 0.0
    %10725 = vmatprep.subr.mxu0 0.0
    %10726 = vmatpush2.xpose.msra.mxu0 0.0
    %10727 = vmatprep.subr.mxu0 0.0
    %10728 = vmatpush2.xpose.msra.mxu0 0.0
    %10729 = vmatprep.subr.mxu0 0.0
    %10730 = vmatpush2.xpose.msra.mxu0 0.0
    %10731 = vmatprep.subr.mxu0 0.0
    %10732 = vmatpush2.xpose.msra.mxu0 0.0
    %10733 = vmatprep.subr.mxu0 0.0
    %10734 = vmatpush2.xpose.msra.mxu0 0.0
    %10735 = vmatprep.mubr.f32.mxu0 0.0
    %10736 = vmatmul.mubr.f32.gmra.mxu0 %v10666
    %v10737 = vpop.f32.mrf.mxu0
    %v10738 = vadd.f32 0.0, %v10737
    %v10739 = vpop.f32.mrf.mxu0
    %10740 = vdwg.mxu0
    %v10742 = vsel %vm1403, %v10662, 0
    %v10745 = vsel %vm1403, %v9946, 0
    %10747 = vmatprep.subr.mxu0 0.0
    %10748 = vmatpush1.xpose.msra.mxu0 0.0
    %10749 = vmatprep.subr.mxu0 0.0
    %10750 = vmatpush1.xpose.msra.mxu0 0.0
    %10751 = vmatprep.subr.mxu0 0.0
    %10752 = vmatpush1.xpose.msra.mxu0 0.0
    %10753 = vmatprep.subr.mxu0 0.0
    %10754 = vmatpush1.xpose.msra.mxu0 0.0
    %10755 = vmatprep.subr.mxu0 0.0
    %10756 = vmatpush1.xpose.msra.mxu0 0.0
    %10757 = vmatprep.subr.mxu0 0.0
    %10758 = vmatpush1.xpose.msra.mxu0 0.0
    %10759 = vmatprep.subr.mxu0 0.0
    %10760 = vmatpush1.xpose.msra.mxu0 0.0
    %10761 = vmatprep.subr.mxu0 0.0
    %10762 = vmatpush1.xpose.msra.mxu0 0.0
    %10763 = vmatprep.subr.mxu0 0.0
    %10764 = vmatpush1.xpose.msra.mxu0 0.0
    %10765 = vmatprep.subr.mxu0 0.0
    %10766 = vmatpush1.xpose.msra.mxu0 0.0
    %10767 = vmatprep.subr.mxu0 0.0
    %10768 = vmatpush1.xpose.msra.mxu0 0.0
    %10769 = vmatprep.subr.mxu0 0.0
    %10770 = vmatpush1.xpose.msra.mxu0 0.0
    %10771 = vmatprep.subr.mxu0 0.0
    %10772 = vmatpush1.xpose.msra.mxu0 0.0
    %10773 = vmatprep.subr.mxu0 0.0
    %10774 = vmatpush1.xpose.msra.mxu0 0.0
    %10775 = vmatprep.subr.mxu0 0.0
    %10776 = vmatpush1.xpose.msra.mxu0 0.0
    %10777 = vmatprep.subr.mxu0 0.0
    %10778 = vmatpush1.xpose.msra.mxu0 %v10745
    %10779 = vmatprep.subr.mxu0 0.0
    %10780 = vmatpush2.xpose.msra.mxu0 0.0
    %10781 = vmatprep.subr.mxu0 0.0
    %10782 = vmatpush2.xpose.msra.mxu0 0.0
    %10783 = vmatprep.subr.mxu0 0.0
    %10784 = vmatpush2.xpose.msra.mxu0 0.0
    %10785 = vmatprep.subr.mxu0 0.0
    %10786 = vmatpush2.xpose.msra.mxu0 0.0
    %10787 = vmatprep.subr.mxu0 0.0
    %10788 = vmatpush2.xpose.msra.mxu0 0.0
    %10789 = vmatprep.subr.mxu0 0.0
    %10790 = vmatpush2.xpose.msra.mxu0 0.0
    %10791 = vmatprep.subr.mxu0 0.0
    %10792 = vmatpush2.xpose.msra.mxu0 0.0
    %10793 = vmatprep.subr.mxu0 0.0
    %10794 = vmatpush2.xpose.msra.mxu0 0.0
    %10795 = vmatprep.subr.mxu0 0.0
    %10796 = vmatpush2.xpose.msra.mxu0 0.0
    %10797 = vmatprep.subr.mxu0 0.0
    %10798 = vmatpush2.xpose.msra.mxu0 0.0
    %10799 = vmatprep.subr.mxu0 0.0
    %10800 = vmatpush2.xpose.msra.mxu0 0.0
    %10801 = vmatprep.subr.mxu0 0.0
    %10802 = vmatpush2.xpose.msra.mxu0 0.0
    %10803 = vmatprep.subr.mxu0 0.0
    %10804 = vmatpush2.xpose.msra.mxu0 0.0
    %10805 = vmatprep.subr.mxu0 0.0
    %10806 = vmatpush2.xpose.msra.mxu0 0.0
    %10807 = vmatprep.subr.mxu0 0.0
    %10808 = vmatpush2.xpose.msra.mxu0 0.0
    %10809 = vmatprep.subr.mxu0 0.0
    %10810 = vmatpush2.xpose.msra.mxu0 0.0
    %10811 = vmatprep.mubr.f32.mxu0 0.0
    %10812 = vmatmul.mubr.f32.gmra.mxu0 %v10742
    %v10813 = vpop.f32.mrf.mxu0
    %v10814 = vadd.f32 0.0, %v10813
    %v10815 = vpop.f32.mrf.mxu0
    %10816 = vdwg.mxu0
    %v10818 = vsel %vm1403, %v10663, 0
    %v10821 = vsel %vm1403, %v9947, 0
    %10823 = vmatprep.subr.mxu0 0.0
    %10824 = vmatpush1.xpose.msra.mxu0 0.0
    %10825 = vmatprep.subr.mxu0 0.0
    %10826 = vmatpush1.xpose.msra.mxu0 0.0
    %10827 = vmatprep.subr.mxu0 0.0
    %10828 = vmatpush1.xpose.msra.mxu0 0.0
    %10829 = vmatprep.subr.mxu0 0.0
    %10830 = vmatpush1.xpose.msra.mxu0 0.0
    %10831 = vmatprep.subr.mxu0 0.0
    %10832 = vmatpush1.xpose.msra.mxu0 0.0
    %10833 = vmatprep.subr.mxu0 0.0
    %10834 = vmatpush1.xpose.msra.mxu0 0.0
    %10835 = vmatprep.subr.mxu0 0.0
    %10836 = vmatpush1.xpose.msra.mxu0 0.0
    %10837 = vmatprep.subr.mxu0 0.0
    %10838 = vmatpush1.xpose.msra.mxu0 0.0
    %10839 = vmatprep.subr.mxu0 0.0
    %10840 = vmatpush1.xpose.msra.mxu0 0.0
    %10841 = vmatprep.subr.mxu0 0.0
    %10842 = vmatpush1.xpose.msra.mxu0 0.0
    %10843 = vmatprep.subr.mxu0 0.0
    %10844 = vmatpush1.xpose.msra.mxu0 0.0
    %10845 = vmatprep.subr.mxu0 0.0
    %10846 = vmatpush1.xpose.msra.mxu0 0.0
    %10847 = vmatprep.subr.mxu0 0.0
    %10848 = vmatpush1.xpose.msra.mxu0 0.0
    %10849 = vmatprep.subr.mxu0 0.0
    %10850 = vmatpush1.xpose.msra.mxu0 0.0
    %10851 = vmatprep.subr.mxu0 0.0
    %10852 = vmatpush1.xpose.msra.mxu0 0.0
    %10853 = vmatprep.subr.mxu0 0.0
    %10854 = vmatpush1.xpose.msra.mxu0 %v10821
    %10855 = vmatprep.subr.mxu0 0.0
    %10856 = vmatpush2.xpose.msra.mxu0 0.0
    %10857 = vmatprep.subr.mxu0 0.0
    %10858 = vmatpush2.xpose.msra.mxu0 0.0
    %10859 = vmatprep.subr.mxu0 0.0
    %10860 = vmatpush2.xpose.msra.mxu0 0.0
    %10861 = vmatprep.subr.mxu0 0.0
    %10862 = vmatpush2.xpose.msra.mxu0 0.0
    %10863 = vmatprep.subr.mxu0 0.0
    %10864 = vmatpush2.xpose.msra.mxu0 0.0
    %10865 = vmatprep.subr.mxu0 0.0
    %10866 = vmatpush2.xpose.msra.mxu0 0.0
    %10867 = vmatprep.subr.mxu0 0.0
    %10868 = vmatpush2.xpose.msra.mxu0 0.0
    %10869 = vmatprep.subr.mxu0 0.0
    %10870 = vmatpush2.xpose.msra.mxu0 0.0
    %10871 = vmatprep.subr.mxu0 0.0
    %10872 = vmatpush2.xpose.msra.mxu0 0.0
    %10873 = vmatprep.subr.mxu0 0.0
    %10874 = vmatpush2.xpose.msra.mxu0 0.0
    %10875 = vmatprep.subr.mxu0 0.0
    %10876 = vmatpush2.xpose.msra.mxu0 0.0
    %10877 = vmatprep.subr.mxu0 0.0
    %10878 = vmatpush2.xpose.msra.mxu0 0.0
    %10879 = vmatprep.subr.mxu0 0.0
    %10880 = vmatpush2.xpose.msra.mxu0 0.0
    %10881 = vmatprep.subr.mxu0 0.0
    %10882 = vmatpush2.xpose.msra.mxu0 0.0
    %10883 = vmatprep.subr.mxu0 0.0
    %10884 = vmatpush2.xpose.msra.mxu0 0.0
    %10885 = vmatprep.subr.mxu0 0.0
    %10886 = vmatpush2.xpose.msra.mxu0 0.0
    %10887 = vmatprep.mubr.f32.mxu0 0.0
    %10888 = vmatmul.mubr.f32.gmra.mxu0 %v10818
    %v10889 = vpop.f32.mrf.mxu0
    %v10890 = vadd.f32 0.0, %v10889
    %v10891 = vpop.f32.mrf.mxu0
    %10892 = vdwg.mxu0
    %v10894 = vsel %vm1403, %v10664, 0
    %v10897 = vsel %vm1403, %v9948, 0
    %10899 = vmatprep.subr.mxu0 0.0
    %10900 = vmatpush1.xpose.msra.mxu0 0.0
    %10901 = vmatprep.subr.mxu0 0.0
    %10902 = vmatpush1.xpose.msra.mxu0 0.0
    %10903 = vmatprep.subr.mxu0 0.0
    %10904 = vmatpush1.xpose.msra.mxu0 0.0
    %10905 = vmatprep.subr.mxu0 0.0
    %10906 = vmatpush1.xpose.msra.mxu0 0.0
    %10907 = vmatprep.subr.mxu0 0.0
    %10908 = vmatpush1.xpose.msra.mxu0 0.0
    %10909 = vmatprep.subr.mxu0 0.0
    %10910 = vmatpush1.xpose.msra.mxu0 0.0
    %10911 = vmatprep.subr.mxu0 0.0
    %10912 = vmatpush1.xpose.msra.mxu0 0.0
    %10913 = vmatprep.subr.mxu0 0.0
    %10914 = vmatpush1.xpose.msra.mxu0 0.0
    %10915 = vmatprep.subr.mxu0 0.0
    %10916 = vmatpush1.xpose.msra.mxu0 0.0
    %10917 = vmatprep.subr.mxu0 0.0
    %10918 = vmatpush1.xpose.msra.mxu0 0.0
    %10919 = vmatprep.subr.mxu0 0.0
    %10920 = vmatpush1.xpose.msra.mxu0 0.0
    %10921 = vmatprep.subr.mxu0 0.0
    %10922 = vmatpush1.xpose.msra.mxu0 0.0
    %10923 = vmatprep.subr.mxu0 0.0
    %10924 = vmatpush1.xpose.msra.mxu0 0.0
    %10925 = vmatprep.subr.mxu0 0.0
    %10926 = vmatpush1.xpose.msra.mxu0 0.0
    %10927 = vmatprep.subr.mxu0 0.0
    %10928 = vmatpush1.xpose.msra.mxu0 0.0
    %10929 = vmatprep.subr.mxu0 0.0
    %10930 = vmatpush1.xpose.msra.mxu0 %v10897
    %10931 = vmatprep.subr.mxu0 0.0
    %10932 = vmatpush2.xpose.msra.mxu0 0.0
    %10933 = vmatprep.subr.mxu0 0.0
    %10934 = vmatpush2.xpose.msra.mxu0 0.0
    %10935 = vmatprep.subr.mxu0 0.0
    %10936 = vmatpush2.xpose.msra.mxu0 0.0
    %10937 = vmatprep.subr.mxu0 0.0
    %10938 = vmatpush2.xpose.msra.mxu0 0.0
    %10939 = vmatprep.subr.mxu0 0.0
    %10940 = vmatpush2.xpose.msra.mxu0 0.0
    %10941 = vmatprep.subr.mxu0 0.0
    %10942 = vmatpush2.xpose.msra.mxu0 0.0
    %10943 = vmatprep.subr.mxu0 0.0
    %10944 = vmatpush2.xpose.msra.mxu0 0.0
    %10945 = vmatprep.subr.mxu0 0.0
    %10946 = vmatpush2.xpose.msra.mxu0 0.0
    %10947 = vmatprep.subr.mxu0 0.0
    %10948 = vmatpush2.xpose.msra.mxu0 0.0
    %10949 = vmatprep.subr.mxu0 0.0
    %10950 = vmatpush2.xpose.msra.mxu0 0.0
    %10951 = vmatprep.subr.mxu0 0.0
    %10952 = vmatpush2.xpose.msra.mxu0 0.0
    %10953 = vmatprep.subr.mxu0 0.0
    %10954 = vmatpush2.xpose.msra.mxu0 0.0
    %10955 = vmatprep.subr.mxu0 0.0
    %10956 = vmatpush2.xpose.msra.mxu0 0.0
    %10957 = vmatprep.subr.mxu0 0.0
    %10958 = vmatpush2.xpose.msra.mxu0 0.0
    %10959 = vmatprep.subr.mxu0 0.0
    %10960 = vmatpush2.xpose.msra.mxu0 0.0
    %10961 = vmatprep.subr.mxu0 0.0
    %10962 = vmatpush2.xpose.msra.mxu0 0.0
    %10963 = vmatprep.mubr.f32.mxu0 0.0
    %10964 = vmatmul.mubr.f32.gmra.mxu0 %v10894
    %v10965 = vpop.f32.mrf.mxu0
    %v10966 = vadd.f32 0.0, %v10965
    %v10967 = vpop.f32.mrf.mxu0
    %10968 = vdwg.mxu0
    %10969 = vxpose.xlu0.b32.start [1/16] %v10738, 128
    %10970 = vxpose.xlu0.b32.cont [2/16] 0.0, 128
    %10971 = vxpose.xlu0.b32.cont [3/16] 0.0, 128
    %10972 = vxpose.xlu0.b32.cont [4/16] 0.0, 128
    %10973 = vxpose.xlu0.b32.cont [5/16] 0.0, 128
    %10974 = vxpose.xlu0.b32.cont [6/16] 0.0, 128
    %10975 = vxpose.xlu0.b32.cont [7/16] 0.0, 128
    %10976 = vxpose.xlu0.b32.cont [8/16] 0.0, 128
    %10977 = vxpose.xlu0.b32.cont [9/16] 0.0, 128
    %10978 = vxpose.xlu0.b32.cont [10/16] 0.0, 128
    %10979 = vxpose.xlu0.b32.cont [11/16] 0.0, 128
    %10980 = vxpose.xlu0.b32.cont [12/16] 0.0, 128
    %10981 = vxpose.xlu0.b32.cont [13/16] 0.0, 128
    %10982 = vxpose.xlu0.b32.cont [14/16] 0.0, 128
    %10983 = vxpose.xlu0.b32.cont [15/16] 0.0, 128
    %10984 = vxpose.xlu0.b32.end [16/16] 0.0, 128
    %v10985 = vpop.trf.xlu0
    %v10986 = vpop.trf.xlu0
    %v10987 = vpop.trf.xlu0
    %v10988 = vpop.trf.xlu0
    %v10989 = vpop.trf.xlu0
    %v10990 = vpop.trf.xlu0
    %v10991 = vpop.trf.xlu0
    %v10992 = vpop.trf.xlu0
    %v10993 = vpop.trf.xlu0
    %v10994 = vpop.trf.xlu0
    %v10995 = vpop.trf.xlu0
    %v10996 = vpop.trf.xlu0
    %v10997 = vpop.trf.xlu0
    %v10998 = vpop.trf.xlu0
    %v10999 = vpop.trf.xlu0
    %v11000 = vpop.trf.xlu0
    %11001 = vxpose.xlu0.b32.start [1/16] %v10814, 128
    %11002 = vxpose.xlu0.b32.cont [2/16] 0.0, 128
    %11003 = vxpose.xlu0.b32.cont [3/16] 0.0, 128
    %11004 = vxpose.xlu0.b32.cont [4/16] 0.0, 128
    %11005 = vxpose.xlu0.b32.cont [5/16] 0.0, 128
    %11006 = vxpose.xlu0.b32.cont [6/16] 0.0, 128
    %11007 = vxpose.xlu0.b32.cont [7/16] 0.0, 128
    %11008 = vxpose.xlu0.b32.cont [8/16] 0.0, 128
    %11009 = vxpose.xlu0.b32.cont [9/16] 0.0, 128
    %11010 = vxpose.xlu0.b32.cont [10/16] 0.0, 128
    %11011 = vxpose.xlu0.b32.cont [11/16] 0.0, 128
    %11012 = vxpose.xlu0.b32.cont [12/16] 0.0, 128
    %11013 = vxpose.xlu0.b32.cont [13/16] 0.0, 128
    %11014 = vxpose.xlu0.b32.cont [14/16] 0.0, 128
    %11015 = vxpose.xlu0.b32.cont [15/16] 0.0, 128
    %11016 = vxpose.xlu0.b32.end [16/16] 0.0, 128
    %v11017 = vpop.trf.xlu0
    %v11018 = vpop.trf.xlu0
    %v11019 = vpop.trf.xlu0
    %v11020 = vpop.trf.xlu0
    %v11021 = vpop.trf.xlu0
    %v11022 = vpop.trf.xlu0
    %v11023 = vpop.trf.xlu0
    %v11024 = vpop.trf.xlu0
    %v11025 = vpop.trf.xlu0
    %v11026 = vpop.trf.xlu0
    %v11027 = vpop.trf.xlu0
    %v11028 = vpop.trf.xlu0
    %v11029 = vpop.trf.xlu0
    %v11030 = vpop.trf.xlu0
    %v11031 = vpop.trf.xlu0
    %v11032 = vpop.trf.xlu0
    %11033 = vxpose.xlu0.b32.start [1/16] %v10890, 128
    %11034 = vxpose.xlu0.b32.cont [2/16] 0.0, 128
    %11035 = vxpose.xlu0.b32.cont [3/16] 0.0, 128
    %11036 = vxpose.xlu0.b32.cont [4/16] 0.0, 128
    %11037 = vxpose.xlu0.b32.cont [5/16] 0.0, 128
    %11038 = vxpose.xlu0.b32.cont [6/16] 0.0, 128
    %11039 = vxpose.xlu0.b32.cont [7/16] 0.0, 128
    %11040 = vxpose.xlu0.b32.cont [8/16] 0.0, 128
    %11041 = vxpose.xlu0.b32.cont [9/16] 0.0, 128
    %11042 = vxpose.xlu0.b32.cont [10/16] 0.0, 128
    %11043 = vxpose.xlu0.b32.cont [11/16] 0.0, 128
    %11044 = vxpose.xlu0.b32.cont [12/16] 0.0, 128
    %11045 = vxpose.xlu0.b32.cont [13/16] 0.0, 128
    %11046 = vxpose.xlu0.b32.cont [14/16] 0.0, 128
    %11047 = vxpose.xlu0.b32.cont [15/16] 0.0, 128
    %11048 = vxpose.xlu0.b32.end [16/16] 0.0, 128
    %v11049 = vpop.trf.xlu0
    %v11050 = vpop.trf.xlu0
    %v11051 = vpop.trf.xlu0
    %v11052 = vpop.trf.xlu0
    %v11053 = vpop.trf.xlu0
    %v11054 = vpop.trf.xlu0
    %v11055 = vpop.trf.xlu0
    %v11056 = vpop.trf.xlu0
    %v11057 = vpop.trf.xlu0
    %v11058 = vpop.trf.xlu0
    %v11059 = vpop.trf.xlu0
    %v11060 = vpop.trf.xlu0
    %v11061 = vpop.trf.xlu0
    %v11062 = vpop.trf.xlu0
    %v11063 = vpop.trf.xlu0
    %v11064 = vpop.trf.xlu0
    %11065 = vxpose.xlu0.b32.start [1/16] %v10966, 128
    %11066 = vxpose.xlu0.b32.cont [2/16] 0.0, 128
    %11067 = vxpose.xlu0.b32.cont [3/16] 0.0, 128
    %11068 = vxpose.xlu0.b32.cont [4/16] 0.0, 128
    %11069 = vxpose.xlu0.b32.cont [5/16] 0.0, 128
    %11070 = vxpose.xlu0.b32.cont [6/16] 0.0, 128
    %11071 = vxpose.xlu0.b32.cont [7/16] 0.0, 128
    %11072 = vxpose.xlu0.b32.cont [8/16] 0.0, 128
    %11073 = vxpose.xlu0.b32.cont [9/16] 0.0, 128
    %11074 = vxpose.xlu0.b32.cont [10/16] 0.0, 128
    %11075 = vxpose.xlu0.b32.cont [11/16] 0.0, 128
    %11076 = vxpose.xlu0.b32.cont [12/16] 0.0, 128
    %11077 = vxpose.xlu0.b32.cont [13/16] 0.0, 128
    %11078 = vxpose.xlu0.b32.cont [14/16] 0.0, 128
    %11079 = vxpose.xlu0.b32.cont [15/16] 0.0, 128
    %11080 = vxpose.xlu0.b32.end [16/16] 0.0, 128
    %v11081 = vpop.trf.xlu0
    %v11082 = vpop.trf.xlu0
    %v11083 = vpop.trf.xlu0
    %v11084 = vpop.trf.xlu0
    %v11085 = vpop.trf.xlu0
    %v11086 = vpop.trf.xlu0
    %v11087 = vpop.trf.xlu0
    %v11088 = vpop.trf.xlu0
    %v11089 = vpop.trf.xlu0
    %v11090 = vpop.trf.xlu0
    %v11091 = vpop.trf.xlu0
    %v11092 = vpop.trf.xlu0
    %v11093 = vpop.trf.xlu0
    %v11094 = vpop.trf.xlu0
    %v11095 = vpop.trf.xlu0
    %v11096 = vpop.trf.xlu0
    %v11097 = vcombine.low %v10985, %v11049
    %v11098 = vcombine.high %v10985, %v11049
    %v11100 = vunpack.c.l.s4 1983009808
    %v11101 = vunpack.c.0.s8 %v11100
    %v11102 = vlaneseq
    %v11103 = vshrl.u32 %v11102, 7
    %v11104 = vsub.s32 %v11101, %v11103
    %v11105 = vrot.slane %v11097, %v11104
    %v11107 = vunpack.c.l.s4 1983009808
    %v11108 = vunpack.c.0.s8 %v11107
    %v11109 = vlaneseq
    %v11110 = vshrl.u32 %v11109, 7
    %v11111 = vsub.s32 %v11108, %v11110
    %v11112 = vrot.slane %v11098, %v11111
    %v11113 = vcombine.low %v11017, %v11081
    %v11114 = vcombine.high %v11017, %v11081
    %v11116 = vunpack.c.l.s4 1983009808
    %v11117 = vunpack.c.0.s8 %v11116
    %v11118 = vlaneseq
    %v11119 = vshrl.u32 %v11118, 7
    %v11120 = vsub.s32 %v11117, %v11119
    %v11121 = vrot.slane %v11113, %v11120
    %v11123 = vunpack.c.l.s4 1983009808
    %v11124 = vunpack.c.0.s8 %v11123
    %v11125 = vlaneseq
    %v11126 = vshrl.u32 %v11125, 7
    %v11127 = vsub.s32 %v11124, %v11126
    %v11128 = vrot.slane %v11114, %v11127
    %v11129 = vcombine.low %v11105, %v11121
    %v11130 = vcombine.high %v11105, %v11121
    %v11132 = vunpack.c.l.s4 1934713408
    %v11133 = vunpack.c.0.s8 %v11132
    %v11134 = vlaneseq
    %v11135 = vshrl.u32 %v11134, 7
    %v11136 = vsub.s32 %v11133, %v11135
    %v11137 = vrot.slane %v11129, %v11136
    %v11139 = vunpack.c.l.s4 1934713408
    %v11140 = vunpack.c.0.s8 %v11139
    %v11141 = vlaneseq
    %v11142 = vshrl.u32 %v11141, 7
    %v11143 = vsub.s32 %v11140, %v11142
    %v11144 = vrot.slane %v11130, %v11143
    %v11145 = vcombine.low %v11112, %v11128
    %v11146 = vcombine.high %v11112, %v11128
    %v11148 = vunpack.c.l.s4 1934713408
    %v11149 = vunpack.c.0.s8 %v11148
    %v11150 = vlaneseq
    %v11151 = vshrl.u32 %v11150, 7
    %v11152 = vsub.s32 %v11149, %v11151
    %v11153 = vrot.slane %v11145, %v11152
    %v11155 = vunpack.c.l.s4 1934713408
    %v11156 = vunpack.c.0.s8 %v11155
    %v11157 = vlaneseq
    %v11158 = vshrl.u32 %v11157, 7
    %v11159 = vsub.s32 %v11156, %v11158
    %v11160 = vrot.slane %v11146, %v11159
    %v11161 = vcombine.high %v11137, 0.0
    %v11162 = vcombine.high %v11144, 0.0
    %v11163 = vcombine.high %v11153, 0.0
    %v11164 = vcombine.high %v11160, 0.0
    %v11165 = vcombine.low %v11137, %v11144
    %v11167 = vunpack.c.l.s4 1983009808
    %v11168 = vunpack.c.0.s8 %v11167
    %v11169 = vlaneseq
    %v11170 = vshrl.u32 %v11169, 7
    %v11171 = vsub.s32 %v11168, %v11170
    %v11172 = vrot.slane %v11165, %v11171
    %v11173 = vcombine.low %v11161, %v11162
    %v11175 = vunpack.c.l.s4 1983009808
    %v11176 = vunpack.c.0.s8 %v11175
    %v11177 = vlaneseq
    %v11178 = vshrl.u32 %v11177, 7
    %v11179 = vsub.s32 %v11176, %v11178
    %v11180 = vrot.slane %v11173, %v11179
    %v11181 = vcombine.low %v11153, %v11160
    %v11183 = vunpack.c.l.s4 1983009808
    %v11184 = vunpack.c.0.s8 %v11183
    %v11185 = vlaneseq
    %v11186 = vshrl.u32 %v11185, 7
    %v11187 = vsub.s32 %v11184, %v11186
    %v11188 = vrot.slane %v11181, %v11187
    %v11189 = vcombine.low %v11163, %v11164
    %v11191 = vunpack.c.l.s4 1983009808
    %v11192 = vunpack.c.0.s8 %v11191
    %v11193 = vlaneseq
    %v11194 = vshrl.u32 %v11193, 7
    %v11195 = vsub.s32 %v11192, %v11194
    %v11196 = vrot.slane %v11189, %v11195
    %v11197 = vcombine.low %v11172, %v11180
    %v11198 = vcombine.high %v11172, %v11180
    %v11200 = vunpack.c.l.s4 1934713408
    %v11201 = vunpack.c.0.s8 %v11200
    %v11202 = vlaneseq
    %v11203 = vshrl.u32 %v11202, 7
    %v11204 = vsub.s32 %v11201, %v11203
    %v11205 = vrot.slane %v11197, %v11204
    %v11207 = vunpack.c.l.s4 1934713408
    %v11208 = vunpack.c.0.s8 %v11207
    %v11209 = vlaneseq
    %v11210 = vshrl.u32 %v11209, 7
    %v11211 = vsub.s32 %v11208, %v11210
    %v11212 = vrot.slane %v11198, %v11211
    %v11213 = vcombine.low %v11188, %v11196
    %v11214 = vcombine.high %v11188, %v11196
    %v11216 = vunpack.c.l.s4 1934713408
    %v11217 = vunpack.c.0.s8 %v11216
    %v11218 = vlaneseq
    %v11219 = vshrl.u32 %v11218, 7
    %v11220 = vsub.s32 %v11217, %v11219
    %v11221 = vrot.slane %v11213, %v11220
    %v11223 = vunpack.c.l.s4 1934713408
    %v11224 = vunpack.c.0.s8 %v11223
    %v11225 = vlaneseq
    %v11226 = vshrl.u32 %v11225, 7
    %v11227 = vsub.s32 %v11224, %v11226
    %v11228 = vrot.slane %v11214, %v11227
    %v11229 = vcombine.low %v11205, %v11221
    %v11230 = vcombine.high %v11205, %v11221
    %v11231 = vcombine.low %v11212, %v11228
    %v11232 = vcombine.high %v11212, %v11228
    %11234 = vrot.lane.b32.xlu0 %v11230, 8
    %v11235 = vpop.permute.xlu0 %11234
    %11238 = vrot.lane.b32.xlu0 %v11231, 16
    %v11239 = vpop.permute.xlu0 %11238
    %11242 = vrot.lane.b32.xlu0 %v11232, 24
    %v11243 = vpop.permute.xlu0 %11242
    %v11245 = vsel %vm1403, %v11229, %v11235
    %v11246 = vsel %vm3041, %v11245, %v11239
    %v11247 = vsel %vm3043, %v11246, %v11243
    %v11248 = vlaneseq
    %v11249 = vshrl.u32 %v11248, 7
    %v11250 = vsub.s32 0, %v11249
    %v11251 = vrot.slane %v5838, %v11250
    %v11253 = vsel %vm61, %v8824, 0
    %v11256 = vsel %vm61, %v11247, 0
    %11258 = vmatprep.subr.mxu0 0.0
    %11259 = vmatpush1.msra.mxu0 0.0
    %11260 = vmatprep.subr.mxu0 0.0
    %11261 = vmatpush1.msra.mxu0 0.0
    %11262 = vmatprep.subr.mxu0 0.0
    %11263 = vmatpush1.msra.mxu0 0.0
    %11264 = vmatprep.subr.mxu0 0.0
    %11265 = vmatpush1.msra.mxu0 0.0
    %11266 = vmatprep.subr.mxu0 0.0
    %11267 = vmatpush1.msra.mxu0 0.0
    %11268 = vmatprep.subr.mxu0 0.0
    %11269 = vmatpush1.msra.mxu0 0.0
    %11270 = vmatprep.subr.mxu0 0.0
    %11271 = vmatpush1.msra.mxu0 0.0
    %11272 = vmatprep.subr.mxu0 0.0
    %11273 = vmatpush1.msra.mxu0 0.0
    %11274 = vmatprep.subr.mxu0 0.0
    %11275 = vmatpush1.msra.mxu0 0.0
    %11276 = vmatprep.subr.mxu0 0.0
    %11277 = vmatpush1.msra.mxu0 0.0
    %11278 = vmatprep.subr.mxu0 0.0
    %11279 = vmatpush1.msra.mxu0 0.0
    %11280 = vmatprep.subr.mxu0 0.0
    %11281 = vmatpush1.msra.mxu0 0.0
    %11282 = vmatprep.subr.mxu0 0.0
    %11283 = vmatpush1.msra.mxu0 %v5818
    %11284 = vmatprep.subr.mxu0 0.0
    %11285 = vmatpush1.msra.mxu0 %v5817
    %11286 = vmatprep.subr.mxu0 0.0
    %11287 = vmatpush1.msra.mxu0 %v5816
    %11288 = vmatprep.subr.mxu0 0.0
    %11289 = vmatpush1.msra.mxu0 %v5815
    %11290 = vmatprep.subr.mxu0 0.0
    %11291 = vmatpush2.msra.mxu0 0.0
    %11292 = vmatprep.subr.mxu0 0.0
    %11293 = vmatpush2.msra.mxu0 0.0
    %11294 = vmatprep.subr.mxu0 0.0
    %11295 = vmatpush2.msra.mxu0 0.0
    %11296 = vmatprep.subr.mxu0 0.0
    %11297 = vmatpush2.msra.mxu0 0.0
    %11298 = vmatprep.subr.mxu0 0.0
    %11299 = vmatpush2.msra.mxu0 0.0
    %11300 = vmatprep.subr.mxu0 0.0
    %11301 = vmatpush2.msra.mxu0 0.0
    %11302 = vmatprep.subr.mxu0 0.0
    %11303 = vmatpush2.msra.mxu0 0.0
    %11304 = vmatprep.subr.mxu0 0.0
    %11305 = vmatpush2.msra.mxu0 0.0
    %11306 = vmatprep.subr.mxu0 0.0
    %11307 = vmatpush2.msra.mxu0 0.0
    %11308 = vmatprep.subr.mxu0 0.0
    %11309 = vmatpush2.msra.mxu0 0.0
    %11310 = vmatprep.subr.mxu0 0.0
    %11311 = vmatpush2.msra.mxu0 0.0
    %11312 = vmatprep.subr.mxu0 0.0
    %11313 = vmatpush2.msra.mxu0 0.0
    %11314 = vmatprep.subr.mxu0 0.0
    %11315 = vmatpush2.msra.mxu0 0.0
    %11316 = vmatprep.subr.mxu0 0.0
    %11317 = vmatpush2.msra.mxu0 0.0
    %11318 = vmatprep.subr.mxu0 0.0
    %11319 = vmatpush2.msra.mxu0 0.0
    %11320 = vmatprep.subr.mxu0 0.0
    %11321 = vmatpush2.msra.mxu0 0.0
    %11322 = vmatprep.mubr.f32.mxu0 0.0
    %11323 = vmatmul.mubr.f32.gmra.mxu0 %v11253
    %v11324 = vpop.f32.mrf.mxu0
    %v11325 = vadd.f32 %v11251, %v11324
    %v11326 = vpop.f32.mrf.mxu0
    %11327 = vmatprep.mubr.f32.mxu0 0.0
    %11328 = vmatmul.mubr.f32.gmra.mxu0 %v11256
    %v11329 = vpop.f32.mrf.mxu0
    %v11330 = vadd.f32 %v11251, %v11329
    %v11331 = vpop.f32.mrf.mxu0
    %11332 = vdwg.mxu0
    %v11333 = vadd.f32 %v5807, %v11325
    %v11334 = vadd.f32 %v5808, %v11330
    %v11335 = vsel %vm61, %v11333, 0.0
    %11336 = vadd.xlane.f32.xlu0 %v11335
    %v11337 = vpop.xlane.xlu0 %11336
    %v11338 = vsel %vm61, %v11334, 0.0
    %11339 = vadd.xlane.f32.xlu0 %v11338
    %v11340 = vpop.xlane.xlu0 %11339
    %v11341 = vmul.f32 %v11337, %v5561
    %v11342 = vmul.f32 %v11340, %v5561
    %v11343 = vsub.f32 %v11333, %v11341
    %v11344 = vsub.f32 %v11334, %v11342
    %v11345 = vmul.f32 %v11343, %v11343
    %v11346 = vmul.f32 %v11344, %v11344
    %v11347 = vsel %vm61, %v11345, 0.0
    %11348 = vadd.xlane.f32.xlu0 %v11347
    %v11349 = vpop.xlane.xlu0 %11348
    %v11350 = vsel %vm61, %v11346, 0.0
    %11351 = vadd.xlane.f32.xlu0 %v11350
    %v11352 = vpop.xlane.xlu0 %11351
    %v11353 = vmul.f32 %v11349, %v5561
    %v11354 = vmul.f32 %v11352, %v5561
    %v11355 = vadd.f32 %v11353, 1e-05
    %v11356 = vadd.f32 %v11354, 1e-05
    %v11357 = vrsqrt.pop %v11355
    %v11358 = vrsqrt.pop %v11356
    %v11359 = vmul.f32 %v11343, %v11357
    %v11360 = vmul.f32 %v11344, %v11358
    %v11361 = vlaneseq
    %v11362 = vshrl.u32 %v11361, 7
    %v11363 = vsub.s32 2, %v11362
    %v11364 = vrot.slane %v5838, %v11363
    %v11365 = vmul.f32 %v11359, %v11364
    %v11366 = vmul.f32 %v11360, %v11364
    %v11367 = vlaneseq
    %v11368 = vshrl.u32 %v11367, 7
    %v11369 = vsub.s32 3, %v11368
    %v11370 = vrot.slane %v5838, %v11369
    %v11371 = vadd.f32 %v11365, %v11370
    %v11372 = vadd.f32 %v11366, %v11370
    %v11374 = vlaneseq
    %v11375 = vshrl.u32 %v11374, 7
    %v11376 = vsub.s32 0, %v11375
    %v11377 = vrot.slane %v5836, %v11376
    %v11380 = vsel %vm61, %v11371, 0
    %v11383 = vsel %vm61, %v11372, 0
    %11385 = vmatprep.subr.mxu0 0.0
    %11386 = vmatpush1.msra.mxu0 0.0
    %11387 = vmatprep.subr.mxu0 0.0
    %11388 = vmatpush1.msra.mxu0 0.0
    %11389 = vmatprep.subr.mxu0 0.0
    %11390 = vmatpush1.msra.mxu0 0.0
    %11391 = vmatprep.subr.mxu0 0.0
    %11392 = vmatpush1.msra.mxu0 0.0
    %11393 = vmatprep.subr.mxu0 0.0
    %11394 = vmatpush1.msra.mxu0 0.0
    %11395 = vmatprep.subr.mxu0 0.0
    %11396 = vmatpush1.msra.mxu0 0.0
    %11397 = vmatprep.subr.mxu0 0.0
    %11398 = vmatpush1.msra.mxu0 0.0
    %11399 = vmatprep.subr.mxu0 0.0
    %11400 = vmatpush1.msra.mxu0 0.0
    %11401 = vmatprep.subr.mxu0 0.0
    %11402 = vmatpush1.msra.mxu0 0.0
    %11403 = vmatprep.subr.mxu0 0.0
    %11404 = vmatpush1.msra.mxu0 0.0
    %11405 = vmatprep.subr.mxu0 0.0
    %11406 = vmatpush1.msra.mxu0 0.0
    %11407 = vmatprep.subr.mxu0 0.0
    %11408 = vmatpush1.msra.mxu0 0.0
    %11409 = vmatprep.subr.mxu0 0.0
    %11410 = vmatpush1.msra.mxu0 %v5823
    %11411 = vmatprep.subr.mxu0 0.0
    %11412 = vmatpush1.msra.mxu0 %v5822
    %11413 = vmatprep.subr.mxu0 0.0
    %11414 = vmatpush1.msra.mxu0 %v5821
    %11415 = vmatprep.subr.mxu0 0.0
    %11416 = vmatpush1.msra.mxu0 %v5820
    %11417 = vmatprep.subr.mxu0 0.0
    %11418 = vmatpush2.msra.mxu0 0.0
    %11419 = vmatprep.subr.mxu0 0.0
    %11420 = vmatpush2.msra.mxu0 0.0
    %11421 = vmatprep.subr.mxu0 0.0
    %11422 = vmatpush2.msra.mxu0 0.0
    %11423 = vmatprep.subr.mxu0 0.0
    %11424 = vmatpush2.msra.mxu0 0.0
    %11425 = vmatprep.subr.mxu0 0.0
    %11426 = vmatpush2.msra.mxu0 0.0
    %11427 = vmatprep.subr.mxu0 0.0
    %11428 = vmatpush2.msra.mxu0 0.0
    %11429 = vmatprep.subr.mxu0 0.0
    %11430 = vmatpush2.msra.mxu0 0.0
    %11431 = vmatprep.subr.mxu0 0.0
    %11432 = vmatpush2.msra.mxu0 0.0
    %11433 = vmatprep.subr.mxu0 0.0
    %11434 = vmatpush2.msra.mxu0 0.0
    %11435 = vmatprep.subr.mxu0 0.0
    %11436 = vmatpush2.msra.mxu0 0.0
    %11437 = vmatprep.subr.mxu0 0.0
    %11438 = vmatpush2.msra.mxu0 0.0
    %11439 = vmatprep.subr.mxu0 0.0
    %11440 = vmatpush2.msra.mxu0 0.0
    %11441 = vmatprep.subr.mxu0 0.0
    %11442 = vmatpush2.msra.mxu0 0.0
    %11443 = vmatprep.subr.mxu0 0.0
    %11444 = vmatpush2.msra.mxu0 0.0
    %11445 = vmatprep.subr.mxu0 0.0
    %11446 = vmatpush2.msra.mxu0 0.0
    %11447 = vmatprep.subr.mxu0 0.0
    %11448 = vmatpush2.msra.mxu0 0.0
    %11449 = vmatprep.mubr.f32.mxu0 0.0
    %11450 = vmatmul.mubr.f32.gmra.mxu0 %v11380
    %v11451 = vpop.f32.mrf.mxu0
    %v11452 = vadd.f32 %v11377, %v11451
    %v11453 = vpop.f32.mrf.mxu0
    %11454 = vmatprep.mubr.f32.mxu0 0.0
    %11455 = vmatmul.mubr.f32.gmra.mxu0 %v11383
    %v11456 = vpop.f32.mrf.mxu0
    %v11457 = vadd.f32 %v11377, %v11456
    %v11458 = vpop.f32.mrf.mxu0
    %11459 = vdwg.mxu0
    %v11460 = vmax.f32 %v11452, 0.0
    %v11461 = vmax.f32 %v11457, 0.0
    %v11462 = vlaneseq
    %v11463 = vshrl.u32 %v11462, 7
    %v11464 = vsub.s32 1, %v11463
    %v11465 = vrot.slane %v5838, %v11464
    %v11467 = vsel %vm5687, %v11460, 0
    %v11470 = vsel %vm5687, %v11461, 0
    %11472 = vmatprep.subr.mxu0 0.0
    %11473 = vmatpush1.msra.mxu0 0.0
    %11474 = vmatprep.subr.mxu0 0.0
    %11475 = vmatpush1.msra.mxu0 0.0
    %11476 = vmatprep.subr.mxu0 0.0
    %11477 = vmatpush1.msra.mxu0 0.0
    %11478 = vmatprep.subr.mxu0 0.0
    %11479 = vmatpush1.msra.mxu0 0.0
    %11480 = vmatprep.subr.mxu0 0.0
    %11481 = vmatpush1.msra.mxu0 0.0
    %11482 = vmatprep.subr.mxu0 0.0
    %11483 = vmatpush1.msra.mxu0 0.0
    %11484 = vmatprep.subr.mxu0 0.0
    %11485 = vmatpush1.msra.mxu0 0.0
    %11486 = vmatprep.subr.mxu0 0.0
    %11487 = vmatpush1.msra.mxu0 0.0
    %11488 = vmatprep.subr.mxu0 0.0
    %11489 = vmatpush1.msra.mxu0 %v5832
    %11490 = vmatprep.subr.mxu0 0.0
    %11491 = vmatpush1.msra.mxu0 %v5831
    %11492 = vmatprep.subr.mxu0 0.0
    %11493 = vmatpush1.msra.mxu0 %v5830
    %11494 = vmatprep.subr.mxu0 0.0
    %11495 = vmatpush1.msra.mxu0 %v5829
    %11496 = vmatprep.subr.mxu0 0.0
    %11497 = vmatpush1.msra.mxu0 %v5828
    %11498 = vmatprep.subr.mxu0 0.0
    %11499 = vmatpush1.msra.mxu0 %v5827
    %11500 = vmatprep.subr.mxu0 0.0
    %11501 = vmatpush1.msra.mxu0 %v5826
    %11502 = vmatprep.subr.mxu0 0.0
    %11503 = vmatpush1.msra.mxu0 %v5825
    %11504 = vmatprep.subr.mxu0 0.0
    %11505 = vmatpush2.msra.mxu0 0.0
    %11506 = vmatprep.subr.mxu0 0.0
    %11507 = vmatpush2.msra.mxu0 0.0
    %11508 = vmatprep.subr.mxu0 0.0
    %11509 = vmatpush2.msra.mxu0 0.0
    %11510 = vmatprep.subr.mxu0 0.0
    %11511 = vmatpush2.msra.mxu0 0.0
    %11512 = vmatprep.subr.mxu0 0.0
    %11513 = vmatpush2.msra.mxu0 0.0
    %11514 = vmatprep.subr.mxu0 0.0
    %11515 = vmatpush2.msra.mxu0 0.0
    %11516 = vmatprep.subr.mxu0 0.0
    %11517 = vmatpush2.msra.mxu0 0.0
    %11518 = vmatprep.subr.mxu0 0.0
    %11519 = vmatpush2.msra.mxu0 0.0
    %11520 = vmatprep.subr.mxu0 0.0
    %11521 = vmatpush2.msra.mxu0 0.0
    %11522 = vmatprep.subr.mxu0 0.0
    %11523 = vmatpush2.msra.mxu0 0.0
    %11524 = vmatprep.subr.mxu0 0.0
    %11525 = vmatpush2.msra.mxu0 0.0
    %11526 = vmatprep.subr.mxu0 0.0
    %11527 = vmatpush2.msra.mxu0 0.0
    %11528 = vmatprep.subr.mxu0 0.0
    %11529 = vmatpush2.msra.mxu0 0.0
    %11530 = vmatprep.subr.mxu0 0.0
    %11531 = vmatpush2.msra.mxu0 0.0
    %11532 = vmatprep.subr.mxu0 0.0
    %11533 = vmatpush2.msra.mxu0 0.0
    %11534 = vmatprep.subr.mxu0 0.0
    %11535 = vmatpush2.msra.mxu0 0.0
    %11536 = vmatprep.mubr.f32.mxu0 0.0
    %11537 = vmatmul.mubr.f32.gmra.mxu0 %v11467
    %v11538 = vpop.f32.mrf.mxu0
    %v11539 = vadd.f32 %v11465, %v11538
    %v11540 = vpop.f32.mrf.mxu0
    %11541 = vmatprep.mubr.f32.mxu0 0.0
    %11542 = vmatmul.mubr.f32.gmra.mxu0 %v11470
    %v11543 = vpop.f32.mrf.mxu0
    %v11544 = vadd.f32 %v11465, %v11543
    %v11545 = vpop.f32.mrf.mxu0
    %11546 = vdwg.mxu0
    %v11547 = vadd.f32 %v11371, %v11539
    %v11548 = vadd.f32 %v11372, %v11544
    %v11549 = vsel %vm61, %v11547, 0.0
    %11550 = vadd.xlane.f32.xlu0 %v11549
    %v11551 = vpop.xlane.xlu0 %11550
    %v11552 = vsel %vm61, %v11548, 0.0
    %11553 = vadd.xlane.f32.xlu0 %v11552
    %v11554 = vpop.xlane.xlu0 %11553
    %v11555 = vmul.f32 %v11551, %v5561
    %v11556 = vmul.f32 %v11554, %v5561
    %v11557 = vsub.f32 %v11547, %v11555
    %v11558 = vsub.f32 %v11548, %v11556
    %v11559 = vmul.f32 %v11557, %v11557
    %v11560 = vmul.f32 %v11558, %v11558
    %v11561 = vsel %vm61, %v11559, 0.0
    %11562 = vadd.xlane.f32.xlu0 %v11561
    %v11563 = vpop.xlane.xlu0 %11562
    %v11564 = vsel %vm61, %v11560, 0.0
    %11565 = vadd.xlane.f32.xlu0 %v11564
    %v11566 = vpop.xlane.xlu0 %11565
    %v11567 = vmul.f32 %v11563, %v5561
    %v11568 = vmul.f32 %v11566, %v5561
    %v11569 = vadd.f32 %v11567, 1e-05
    %v11570 = vadd.f32 %v11568, 1e-05
    %v11571 = vrsqrt.pop %v11569
    %v11572 = vrsqrt.pop %v11570
    %v11573 = vmul.f32 %v11557, %v11571
    %v11574 = vmul.f32 %v11558, %v11572
    %v11575 = vlaneseq
    %v11576 = vshrl.u32 %v11575, 7
    %v11577 = vsub.s32 4, %v11576
    %v11578 = vrot.slane %v5838, %v11577
    %v11579 = vmul.f32 %v11573, %v11578
    %v11580 = vmul.f32 %v11574, %v11578
    %v11581 = vlaneseq
    %v11582 = vshrl.u32 %v11581, 7
    %v11583 = vsub.s32 5, %v11582
    %v11584 = vrot.slane %v5838, %v11583
    %v11585 = vadd.f32 %v11579, %v11584
    %v11586 = vadd.f32 %v11580, %v11584
    %v11587 = vsel %vm61, %v11585, 0.0
    %v11588 = vrot.slane %v11587, 4
    %v11589 = vadd.f32 %v11587, %v11588
    %v11590 = vrot.slane %v11589, 2
    %v11591 = vadd.f32 %v11589, %v11590
    %v11592 = vrot.slane %v11591, 1
    %v11593 = vadd.f32 %v11591, %v11592
    %v11594 = vsel %vm61, %v11586, 0.0
    %v11595 = vrot.slane %v11594, 4
    %v11596 = vadd.f32 %v11594, %v11595
    %v11597 = vrot.slane %v11596, 2
    %v11598 = vadd.f32 %v11596, %v11597
    %v11599 = vrot.slane %v11598, 1
    %v11600 = vadd.f32 %v11598, %v11599
    %v11601 = vrcp.pop 8.0
    %v11602 = vmul.f32 %v11593, %v11601
    %v11603 = vmul.f32 %v11600, %v11601
    %vm11606 = vcmask 1041409
    %v11607 = vsel %vm11606, %v11603, %v11602
    %vm11609 = vcmask 254976
    %11610 = vst.msk [vmem:[#allocation2] sm:$0x3] %vm11609, %v11607
    // Predicated region
    $region34: #{tpu_custom_call.1} parent=1 // pred_check
      _
    $region35: #{tpu_custom_call.1} parent=1 // pred_check_branch
      %11612 = sbr.rel (0) target = $region37
    $region36: #{tpu_custom_call.1} parent=1 // pred_region
      %s11614 = ssub.s32 32, 32
      %11615 = vsyncadd [#allocation3], %s11614
      %s11617 = sshll.u32 [#allocation2], 4
      %s11618 = int_to_ptr.vmem [resolvable:$true] %s11617
      %11620 = dma.vmem_to_hbm [thread:$0]  %s11618, 32, %s8, [#allocation3]
    $region37: #{tpu_custom_call.1} parent=1 // pred_fallthru
      _
    // Predicated region
    $region38: #{tpu_custom_call.1} parent=1 // pred_check
      _
    $region39: #{tpu_custom_call.1} parent=1 // pred_check_branch
      %11622 = sbr.rel (0) target = $region41
    $region40: #{tpu_custom_call.1} parent=1 // pred_region
      %11623 = dma.done [#allocation3], 32
    $region41: #{tpu_custom_call.1} parent=1 // pred_fallthru
      _
    %11624 = vsyncpa [#allocation3], 1

</llo_original>
